<compile_context>
chip_gen: v5e
topology: v5e:2x2
jax: 0.10.0
libtpu: 0.0.40
codegen_flags: <defaults>
</compile_context>

<pallas_src>
import functools

import jax
import jax.numpy as jnp
from jax import lax
from jax.experimental import pallas as pl
from jax.experimental.pallas import tpu as pltpu


def _fp_kernel(num_layers, mt, u8_ref, ubid_ref, k8_ref, kbid_ref, kf_ref, uf_ref, *args):
    n_params = 3 + 2 * (num_layers - 1)          # [W0a, W0b, b0, (W, b) * (L-1)]
    params = args[:n_params]
    o_ref = args[n_params]
    d0_ref, d1_ref, d2_ref, i0_ref, i1_ref, i2_ref, acc_ref = args[n_params + 1:]

    j = pl.program_id(1)
    BIG = jnp.float32(1e30)

    # ---- init running top-3 state at the start of every point tile ----------------
    @pl.when(j == 0)
    def _init():
        inf = jnp.full(d0_ref.shape, jnp.inf, jnp.float32)
        d0_ref[...] = inf
        d1_ref[...] = inf
        d2_ref[...] = inf
        neg1 = jnp.full(i0_ref.shape, -1, jnp.int32)
        i0_ref[...] = neg1
        i1_ref[...] = neg1
        i2_ref[...] = neg1

    # ---- phase 1: three_nn, streamed over known-point blocks ----------------------
    @pl.when(j < mt)
    def _three_nn():
        u8 = u8_ref[...]                          # (T, 8)  f32, xyz in cols 0:3
        ub = ubid_ref[...]                        # (T, 1)  int32 batch ids
        k8 = k8_ref[...]                          # (8, Mb) f32, known xyz^T block
        kb = kbid_ref[...]                        # (1, Mb) int32 (padding rows = -1)
        mb = k8.shape[1]

        un2 = jnp.sum(u8 * u8, axis=1, keepdims=True)                  # (T, 1)
        kn2 = jnp.sum(k8 * k8, axis=0, keepdims=True)                  # (1, Mb)
        cross = jnp.dot(u8, k8, preferred_element_type=jnp.float32)    # (T, Mb), K=8
        dsq = jnp.maximum(un2 + kn2 - 2.0 * cross, 0.0)
        d = jnp.where(ub == kb, dsq, BIG)                              # per-batch mask

        ids = lax.broadcasted_iota(jnp.int32, d.shape, 1)
        base = j * mb

        a0 = d0_ref[...]; a1 = d1_ref[...]; a2 = d2_ref[...]
        b0 = i0_ref[...]; b1 = i1_ref[...]; b2 = i2_ref[...]
        for _ in range(3):
            mval = jnp.min(d, axis=1, keepdims=True)                           # (T, 1)
            cm = d == mval
            arg = jnp.min(jnp.where(cm, ids, mb), axis=1, keepdims=True)       # first occ.
            d = jnp.where(ids == arg, BIG, d)                                  # drop picked
            gidx = arg + base                                                  # global idx
            # insertion-merge of one candidate into the running sorted top-3 (per-row)
            c0 = mval < a0
            c1 = mval < a1
            c2 = mval < a2
            a2 = jnp.where(c1, a1, jnp.where(c2, mval, a2))
            b2 = jnp.where(c1, b1, jnp.where(c2, gidx, b2))
            a1 = jnp.where(c0, a0, jnp.where(c1, mval, a1))
            b1 = jnp.where(c0, b0, jnp.where(c1, gidx, b1))
            a0 = jnp.where(c0, mval, a0)
            b0 = jnp.where(c0, gidx, b0)
        d0_ref[...] = a0; d1_ref[...] = a1; d2_ref[...] = a2
        i0_ref[...] = b0; i1_ref[...] = b1; i2_ref[...] = b2

    # ---- phase boundary: normalized inverse-distance weights, clear accumulator ----
    @pl.when(j == mt)
    def _weights():
        r0 = pl.reciprocal(jnp.sqrt(d0_ref[...]) + 1e-8, approx=True)
        r1 = pl.reciprocal(jnp.sqrt(d1_ref[...]) + 1e-8, approx=True)
        r2 = pl.reciprocal(jnp.sqrt(d2_ref[...]) + 1e-8, approx=True)
        inv_norm = pl.reciprocal(r0 + r1 + r2, approx=True)
        d0_ref[...] = r0 * inv_norm               # reuse distance scratch as weights
        d1_ref[...] = r1 * inv_norm
        d2_ref[...] = r2 * inv_norm
        acc_ref[...] = jnp.zeros_like(acc_ref)

    # ---- phase 2: three_interpolate, streamed over known-feature blocks -------------
    @pl.when(j >= mt)
    def _interp():
        kf = kf_ref[...]                          # (Mb, C2) bf16
        mb = kf.shape[0]
        t = acc_ref.shape[0]
        base = (j - mt) * mb
        ids = base + lax.broadcasted_iota(jnp.int32, (t, mb), 1)
        w = jnp.where(ids == i0_ref[...], d0_ref[...], 0.0)
        w = jnp.where(ids == i1_ref[...], d1_ref[...], w)
        w = jnp.where(ids == i2_ref[...], d2_ref[...], w)
        acc_ref[...] += jnp.dot(w.astype(jnp.bfloat16), kf,
                                preferred_element_type=jnp.float32)

    # ---- final step: shared MLP (conv1x1 + folded eval-BN + ReLU), lane-dense store -
    @pl.when(j == 2 * mt - 1)
    def _mlp():
        uf = uf_ref[...]                          # (T, C1) bf16
        w0a = params[0][...]                      # (C2, H1) bf16   (scale folded)
        w0b = params[1][...]                      # (C1, H1) bf16
        b0 = params[2][...]                       # (1, H1)  f32    (BN shift)
        x = (jnp.dot(acc_ref[...].astype(jnp.bfloat16), w0a,
                     preferred_element_type=jnp.float32)
             + jnp.dot(uf, w0b, preferred_element_type=jnp.float32))
        x = jnp.maximum(x + b0, 0.0)
        for l in range(1, num_layers):
            w = params[3 + 2 * (l - 1)][...]      # (Cin, Cout) bf16 (scale folded)
            b = params[3 + 2 * (l - 1) + 1][...]  # (1, Cout)   f32
            x = jnp.dot(x.astype(jnp.bfloat16), w, preferred_element_type=jnp.float32)
            x = jnp.maximum(x + b, 0.0)
        o_ref[...] = x.astype(o_ref.dtype)


def stack_pointnet_fp(unknown, unknown_bid, known, known_bid,
                      unknown_feats, known_feats, layer_params,
                      *, tile=256, known_block=512):
    """layer_params: list of (W^T (Cin, Cout) f32, bn_scale (1, Cout), bn_shift (1, Cout)).

    Returns bf16 (N, C_out) features (lane-dense stores inside the kernel; slice+cast
    outside if f32 is needed)."""
    N = unknown.shape[0]
    M = known.shape[0]
    C1 = unknown_feats.shape[1]
    C2 = known_feats.shape[1]
    L = len(layer_params)
    c_out = layer_params[-1][0].shape[1]

    # Lane-dense output: pad final out-channels up to a multiple of 128.
    c_out_pad = pl.cdiv(c_out, 128) * 128
    # Remainder-safe grids: pad point count to a tile multiple, known count to a
    # known_block multiple (padded knowns get batch id -1 -> always masked out).
    n_pad = pl.cdiv(N, tile) * tile
    known_block = pl.cdiv(known_block, 128) * 128
    mb = min(known_block, max(128, pl.cdiv(M, 128) * 128))
    m_pad = pl.cdiv(M, mb) * mb
    mt = m_pad // mb

    # jnp.pad (fusable) instead of zeros().at[].set() repacks.
    u8 = jnp.pad(unknown.astype(jnp.float32), ((0, n_pad - N), (0, 5)))        # (n_pad, 8)
    ubid_col = jnp.pad(unknown_bid.astype(jnp.int32), (0, n_pad - N)).reshape(n_pad, 1)
    uf_pad = jnp.pad(unknown_feats.astype(jnp.bfloat16), ((0, n_pad - N), (0, 0)))
    k8 = jnp.pad(known.astype(jnp.float32).T, ((0, 5), (0, m_pad - M)))        # (8, m_pad)
    kbid_row = jnp.pad(known_bid.astype(jnp.int32), (0, m_pad - M),
                       constant_values=-1).reshape(1, m_pad)
    kf_bf16 = jnp.pad(known_feats.astype(jnp.bfloat16), ((0, m_pad - M), (0, 0)))

    # Fold eval-BN scale into the conv weights; keep only the shift in-kernel.
    folded = [(wt * s, b) for (wt, s, b) in layer_params]
    if c_out_pad != c_out:
        wtL, bL = folded[-1]
        pad = c_out_pad - c_out
        folded[-1] = (jnp.pad(wtL, ((0, 0), (0, pad))),
                      jnp.pad(bL, ((0, 0), (0, pad))))

    flat_params = []
    param_specs = []

    def const_spec(shape):
        return pl.BlockSpec(shape, lambda i, j: (0, 0))

    # First layer: split the (C2+C1, H) weight so the concat is never materialized.
    wt0, b0 = folded[0]
    w0a = wt0[:C2].astype(jnp.bfloat16)
    w0b = wt0[C2:].astype(jnp.bfloat16)
    for p in (w0a, w0b, b0):
        flat_params.append(p)
        param_specs.append(const_spec(p.shape))
    for l in range(1, L):
        wt, b = folded[l]
        for p in (wt.astype(jnp.bfloat16), b):
            flat_params.append(p)
            param_specs.append(const_spec(p.shape))

    kernel = functools.partial(_fp_kernel, L, mt)
    out = pl.pallas_call(
        kernel,
        out_shape=jax.ShapeDtypeStruct((n_pad, c_out_pad), jnp.bfloat16),
        grid_spec=pltpu.PrefetchScalarGridSpec(
            num_scalar_prefetch=0,
            grid=(n_pad // tile, 2 * mt),                       # j < mt: nn, j >= mt: interp
            in_specs=[
                pl.BlockSpec((tile, 8), lambda i, j: (i, 0)),   # unknown xyz slab
                pl.BlockSpec((tile, 1), lambda i, j: (i, 0)),   # unknown batch ids
                # known xyz / batch-id blocks stream in phase 1, freeze in phase 2
                pl.BlockSpec((8, mb), lambda i, j: (0, jnp.minimum(j, mt - 1))),
                pl.BlockSpec((1, mb), lambda i, j: (0, jnp.minimum(j, mt - 1))),
                # known feature blocks freeze in phase 1, stream in phase 2
                pl.BlockSpec((mb, C2), lambda i, j: (jnp.maximum(j - mt, 0), 0)),
                pl.BlockSpec((tile, C1), lambda i, j: (i, 0)),  # unknown feats tile
            ] + param_specs,
            out_specs=pl.BlockSpec((tile, c_out_pad), lambda i, j: (i, 0)),
            scratch_shapes=[
                pltpu.VMEM((tile, 1), jnp.float32),   # d0 / w0
                pltpu.VMEM((tile, 1), jnp.float32),   # d1 / w1
                pltpu.VMEM((tile, 1), jnp.float32),   # d2 / w2
                pltpu.VMEM((tile, 1), jnp.int32),     # i0
                pltpu.VMEM((tile, 1), jnp.int32),     # i1
                pltpu.VMEM((tile, 1), jnp.int32),     # i2
                pltpu.VMEM((tile, C2), jnp.float32),  # interp accumulator
            ],
        ),
        compiler_params=pltpu.CompilerParams(
            dimension_semantics=("parallel", "arbitrary"),
            # 48 MiB: above the 16/32 MiB scoped defaults, below v7x's 64 MiB/TC.
            vmem_limit_bytes=48 * 1024 * 1024,
        ),
    )(u8, ubid_col, k8, kbid_row, kf_bf16, uf_pad, *flat_params)

    return out[:N, :c_out]


def reference(unknown, ubid, known, kbid, uf, kf, layer_params):
    """Pure-JAX f32 reference of the PyTorch forward (eval-mode BN)."""
    un2 = jnp.sum(unknown ** 2, axis=1, keepdims=True)
    kn2 = jnp.sum(known ** 2, axis=1, keepdims=True).T
    d2 = jnp.maximum(un2 + kn2 - 2.0 * (unknown @ known.T), 0.0)
    d2 = jnp.where(ubid[:, None] == kbid[None, :], d2, 1e30)
    neg_top, idx = lax.top_k(-d2, 3)
    dist = jnp.sqrt(-neg_top)
    recip = 1.0 / (dist + 1e-8)
    w = recip / jnp.sum(recip, axis=-1, keepdims=True)
    interp = jnp.sum(kf[idx] * w[..., None], axis=1)
    x = jnp.concatenate([interp, uf], axis=1)
    for (wt, s, b) in layer_params:
        x = jnp.maximum((x @ wt) * s + b, 0.0)
    return x


if __name__ == "__main__":
    key = jax.random.PRNGKey(0)
    B = 2
    N_per, M_per = 200, 190          # N, M not tile/block multiples -> padding paths
    N, M = B * N_per, B * M_per
    C1, C2 = 16, 32                  # unknown_feats / known_feats channels
    mlp = [C2 + C1, 64, 32]          # StackPointnetFPModule(mlp=[48, 64, 32])

    ks = jax.random.split(key, 6)
    unknown = jax.random.uniform(ks[0], (N, 3), jnp.float32)
    known = jax.random.uniform(ks[1], (M, 3), jnp.float32)
    unknown_feats = jax.random.normal(ks[2], (N, C1), jnp.float32)
    known_feats = jax.random.normal(ks[3], (M, C2), jnp.float32)
    unknown_bid = jnp.repeat(jnp.arange(B, dtype=jnp.int32), N_per)
    known_bid = jnp.repeat(jnp.arange(B, dtype=jnp.int32), M_per)

    # Deterministic Conv2d(1x1, bias=False) weights + eval-mode BatchNorm fold.
    layer_params = []
    bn_eps = 1e-5
    wkeys = jax.random.split(ks[4], len(mlp) - 1)
    for l in range(len(mlp) - 1):
        cin, cout = mlp[l], mlp[l + 1]
        w = 0.1 * jax.random.normal(wkeys[l], (cout, cin), jnp.float32)  # (Cout, Cin, 1, 1)
        gamma = 1.0 + 0.05 * jnp.arange(cout, dtype=jnp.float32) / cout
        beta = 0.01 * jnp.arange(cout, dtype=jnp.float32)
        running_mean = 0.01 * jnp.arange(cout, dtype=jnp.float32)
        running_var = jnp.ones((cout,), jnp.float32)
        scale = gamma / jnp.sqrt(running_var + bn_eps)
        shift = beta - running_mean * scale
        layer_params.append((w.T, scale.reshape(1, cout), shift.reshape(1, cout)))

    # known_block=128 -> 3 known blocks after padding: exercises the M-streaming path.
    out = stack_pointnet_fp(unknown, unknown_bid, known, known_bid,
                            unknown_feats, known_feats, layer_params,
                            tile=256, known_block=128)
    out = jax.block_until_ready(out)

    ref = reference(unknown, unknown_bid, known, known_bid,
                    unknown_feats, known_feats, layer_params)
    assert out.shape == (N, mlp[-1]), out.shape
    out_f32 = out.astype(jnp.float32)
    max_err = float(jnp.max(jnp.abs(out_f32 - ref)))
    # bf16 MXU operands / bf16 output + EUP approx reciprocals -> 2e-2 tolerance.
    assert jnp.allclose(out_f32, ref, rtol=2e-2, atol=2e-2), max_err
    print("KERNEL_OK")
</pallas_src>

<mosaic_0001>
module attributes {stable_mosaic.version = 11 : i64} {
  func.func @_fp_kernel(%arg0: i32, %arg1: i32, %arg2: memref<256x8xf32, #tpu.memory_space<vmem>>, %arg3: memref<256x1xi32, #tpu.memory_space<vmem>>, %arg4: memref<8x128xf32, #tpu.memory_space<vmem>>, %arg5: memref<1x128xi32, #tpu.memory_space<vmem>>, %arg6: memref<128x32xbf16, #tpu.memory_space<vmem>>, %arg7: memref<256x16xbf16, #tpu.memory_space<vmem>>, %arg8: memref<32x64xbf16, #tpu.memory_space<vmem>>, %arg9: memref<16x64xbf16, #tpu.memory_space<vmem>>, %arg10: memref<1x64xf32, #tpu.memory_space<vmem>>, %arg11: memref<64x128xbf16, #tpu.memory_space<vmem>>, %arg12: memref<1x128xf32, #tpu.memory_space<vmem>>, %arg13: memref<256x128xbf16, #tpu.memory_space<vmem>>, %arg14: memref<256x1xf32, #tpu.memory_space<vmem>>, %arg15: memref<256x1xf32, #tpu.memory_space<vmem>>, %arg16: memref<256x1xf32, #tpu.memory_space<vmem>>, %arg17: memref<256x1xi32, #tpu.memory_space<vmem>>, %arg18: memref<256x1xi32, #tpu.memory_space<vmem>>, %arg19: memref<256x1xi32, #tpu.memory_space<vmem>>, %arg20: memref<256x32xf32, #tpu.memory_space<vmem>>) attributes {dimension_semantics = [#tpu.dimension_semantics<parallel>, #tpu.dimension_semantics<arbitrary>], iteration_bounds = array<i64: 2, 6>, scalar_prefetch = 0 : i64, scratch_operands = 7 : i64, tpu.core_type = #tpu.core_type<tc>, window_params = [{transform_indices = @transform_0, window_bounds = array<i64: 256, 8>}, {transform_indices = @transform_1, window_bounds = array<i64: 256, 1>}, {transform_indices = @transform_2, window_bounds = array<i64: 8, 128>}, {transform_indices = @transform_3, window_bounds = array<i64: 1, 128>}, {transform_indices = @transform_4, window_bounds = array<i64: 128, 32>}, {transform_indices = @transform_5, window_bounds = array<i64: 256, 16>}, {pipeline_mode = #tpu.pipeline_mode<synchronous>, transform_indices = @transform_6, window_bounds = array<i64: 32, 64>}, {pipeline_mode = #tpu.pipeline_mode<synchronous>, transform_indices = @transform_7, window_bounds = array<i64: 16, 64>}, {pipeline_mode = #tpu.pipeline_mode<synchronous>, transform_indices = @transform_8, window_bounds = array<i64: 1, 64>}, {pipeline_mode = #tpu.pipeline_mode<synchronous>, transform_indices = @transform_9, window_bounds = array<i64: 64, 128>}, {pipeline_mode = #tpu.pipeline_mode<synchronous>, transform_indices = @transform_10, window_bounds = array<i64: 1, 128>}, {transform_indices = @transform_11, window_bounds = array<i64: 256, 128>}]} {
    %c0_i32 = arith.constant 0 : i32
    %0 = arith.cmpi eq, %arg1, %c0_i32 : i32
    %1 = arith.extui %0 : i1 to i32
    %c0_i32_0 = arith.constant 0 : i32
    %2 = arith.cmpi ne, %1, %c0_i32_0 : i32
    scf.if %2 {
      %cst_7 = arith.constant 0x7F800000 : f32
      %15 = vector.broadcast %cst_7 : f32 to vector<256x1xf32>
      %c0 = arith.constant 0 : index
      %c0_8 = arith.constant 0 : index
      %16 = vector.load %arg14[%c0, %c0_8] : memref<256x1xf32, #tpu.memory_space<vmem>>, vector<256x1xf32>
      tpu.vector_store %arg14[%c0, %c0_8], %15 {strides = array<i32>} : memref<256x1xf32, #tpu.memory_space<vmem>>, vector<256x1xf32>,
      %c0_9 = arith.constant 0 : index
      %c0_10 = arith.constant 0 : index
      %17 = vector.load %arg15[%c0_9, %c0_10] : memref<256x1xf32, #tpu.memory_space<vmem>>, vector<256x1xf32>
      tpu.vector_store %arg15[%c0_9, %c0_10], %15 {strides = array<i32>} : memref<256x1xf32, #tpu.memory_space<vmem>>, vector<256x1xf32>,
      %c0_11 = arith.constant 0 : index
      %c0_12 = arith.constant 0 : index
      %18 = vector.load %arg16[%c0_11, %c0_12] : memref<256x1xf32, #tpu.memory_space<vmem>>, vector<256x1xf32>
      tpu.vector_store %arg16[%c0_11, %c0_12], %15 {strides = array<i32>} : memref<256x1xf32, #tpu.memory_space<vmem>>, vector<256x1xf32>,
      %c-1_i32 = arith.constant -1 : i32
      %19 = vector.broadcast %c-1_i32 : i32 to vector<256x1xi32>
      %c0_13 = arith.constant 0 : index
      %c0_14 = arith.constant 0 : index
      %20 = vector.load %arg17[%c0_13, %c0_14] : memref<256x1xi32, #tpu.memory_space<vmem>>, vector<256x1xi32>
      tpu.vector_store %arg17[%c0_13, %c0_14], %19 {strides = array<i32>} : memref<256x1xi32, #tpu.memory_space<vmem>>, vector<256x1xi32>,
      %c0_15 = arith.constant 0 : index
      %c0_16 = arith.constant 0 : index
      %21 = vector.load %arg18[%c0_15, %c0_16] : memref<256x1xi32, #tpu.memory_space<vmem>>, vector<256x1xi32>
      tpu.vector_store %arg18[%c0_15, %c0_16], %19 {strides = array<i32>} : memref<256x1xi32, #tpu.memory_space<vmem>>, vector<256x1xi32>,
      %c0_17 = arith.constant 0 : index
      %c0_18 = arith.constant 0 : index
      %22 = vector.load %arg19[%c0_17, %c0_18] : memref<256x1xi32, #tpu.memory_space<vmem>>, vector<256x1xi32>
      tpu.vector_store %arg19[%c0_17, %c0_18], %19 {strides = array<i32>} : memref<256x1xi32, #tpu.memory_space<vmem>>, vector<256x1xi32>,
    } else {
    }
    %c3_i32 = arith.constant 3 : i32
    %3 = arith.cmpi slt, %arg1, %c3_i32 : i32
    %4 = arith.extui %3 : i1 to i32
    %cst = arith.constant 1.000000e+30 : f32
    %c0_i32_1 = arith.constant 0 : i32
    %5 = arith.cmpi ne, %4, %c0_i32_1 : i32
    scf.if %5 {
      %c0 = arith.constant 0 : index
      %c0_7 = arith.constant 0 : index
      %15 = vector.load %arg2[%c0, %c0_7] : memref<256x8xf32, #tpu.memory_space<vmem>>, vector<256x8xf32>
      %c0_8 = arith.constant 0 : index
      %c0_9 = arith.constant 0 : index
      %16 = vector.load %arg3[%c0_8, %c0_9] : memref<256x1xi32, #tpu.memory_space<vmem>>, vector<256x1xi32>
      %c0_10 = arith.constant 0 : index
      %c0_11 = arith.constant 0 : index
      %17 = vector.load %arg4[%c0_10, %c0_11] : memref<8x128xf32, #tpu.memory_space<vmem>>, vector<8x128xf32>
      %c0_12 = arith.constant 0 : index
      %c0_13 = arith.constant 0 : index
      %18 = vector.load %arg5[%c0_12, %c0_13] : memref<1x128xi32, #tpu.memory_space<vmem>>, vector<1x128xi32>
      %19 = arith.mulf %15, %15 : vector<256x8xf32>
      %cst_14 = arith.constant dense<0.000000e+00> : vector<256xf32>
      %20 = vector.multi_reduction <add>, %19, %cst_14 [1] : vector<256x8xf32> to vector<256xf32>
      %21 = vector.shape_cast %20 : vector<256xf32> to vector<256x1xf32>
      %22 = arith.mulf %17, %17 : vector<8x128xf32>
      %cst_15 = arith.constant dense<0.000000e+00> : vector<128xf32>
      %23 = vector.multi_reduction <add>, %22, %cst_15 [0] : vector<8x128xf32> to vector<128xf32>
      %24 = vector.shape_cast %23 : vector<128xf32> to vector<1x128xf32>
      %cst_16 = arith.constant dense<0.000000e+00> : vector<256x128xf32>
      %25 = tpu.matmul %15, %17, %cst_16 {dimension_numbers = #tpu.dot_dimension_numbers<[1], [0], [0], [1], [0, 0, 1, 1], [], []>} : vector<256x8xf32>, vector<8x128xf32>, vector<256x128xf32> -> vector<256x128xf32>
      %26 = vector.broadcast %21 : vector<256x1xf32> to vector<256x128xf32>
      %27 = vector.broadcast %24 : vector<1x128xf32> to vector<256x128xf32>
      %28 = arith.addf %26, %27 : vector<256x128xf32>
      %cst_17 = arith.constant 2.000000e+00 : f32
      %29 = vector.broadcast %cst_17 : f32 to vector<256x128xf32>
      %30 = arith.mulf %29, %25 : vector<256x128xf32>
      %31 = arith.subf %28, %30 : vector<256x128xf32>
      %cst_18 = arith.constant 0.000000e+00 : f32
      %32 = vector.broadcast %cst_18 : f32 to vector<256x128xf32>
      %33 = arith.maximumf %31, %32 : vector<256x128xf32>
      %34 = vector.broadcast %16 : vector<256x1xi32> to vector<256x128xi32>
      %35 = vector.broadcast %18 : vector<1x128xi32> to vector<256x128xi32>
      %36 = arith.cmpi eq, %34, %35 : vector<256x128xi32>
      %37 = vector.broadcast %cst : f32 to vector<256x128xf32>
      %38 = arith.select %36, %33, %37 : vector<256x128xi1>, vector<256x128xf32>
      %39 = tpu.iota {dimensions = array<i32: 1>} : vector<256x128xi32>
      %c128_i32 = arith.constant 128 : i32
      %40 = arith.muli %arg1, %c128_i32 : i32
      %c0_19 = arith.constant 0 : index
      %c0_20 = arith.constant 0 : index
      %41 = vector.load %arg14[%c0_19, %c0_20] : memref<256x1xf32, #tpu.memory_space<vmem>>, vector<256x1xf32>
      %c0_21 = arith.constant 0 : index
      %c0_22 = arith.constant 0 : index
      %42 = vector.load %arg15[%c0_21, %c0_22] : memref<256x1xf32, #tpu.memory_space<vmem>>, vector<256x1xf32>
      %c0_23 = arith.constant 0 : index
      %c0_24 = arith.constant 0 : index
      %43 = vector.load %arg16[%c0_23, %c0_24] : memref<256x1xf32, #tpu.memory_space<vmem>>, vector<256x1xf32>
      %c0_25 = arith.constant 0 : index
      %c0_26 = arith.constant 0 : index
      %44 = vector.load %arg17[%c0_25, %c0_26] : memref<256x1xi32, #tpu.memory_space<vmem>>, vector<256x1xi32>
      %c0_27 = arith.constant 0 : index
      %c0_28 = arith.constant 0 : index
      %45 = vector.load %arg18[%c0_27, %c0_28] : memref<256x1xi32, #tpu.memory_space<vmem>>, vector<256x1xi32>
      %c0_29 = arith.constant 0 : index
      %c0_30 = arith.constant 0 : index
      %46 = vector.load %arg19[%c0_29, %c0_30] : memref<256x1xi32, #tpu.memory_space<vmem>>, vector<256x1xi32>
      %cst_31 = arith.constant dense<0x7F800000> : vector<256xf32>
      %47 = vector.multi_reduction <minimumf>, %38, %cst_31 [1] : vector<256x128xf32> to vector<256xf32>
      %48 = vector.shape_cast %47 : vector<256xf32> to vector<256x1xf32>
      %49 = vector.broadcast %48 : vector<256x1xf32> to vector<256x128xf32>
      %50 = arith.cmpf oeq, %38, %49 : vector<256x128xf32>
      %c128_i32_32 = arith.constant 128 : i32
      %51 = vector.broadcast %c128_i32_32 : i32 to vector<256x128xi32>
      %52 = arith.select %50, %39, %51 : vector<256x128xi1>, vector<256x128xi32>
      %cst_33 = arith.constant dense<2147483647> : vector<256xi32>
      %53 = vector.multi_reduction <minsi>, %52, %cst_33 [1] : vector<256x128xi32> to vector<256xi32>
      %54 = vector.shape_cast %53 : vector<256xi32> to vector<256x1xi32>
      %55 = vector.broadcast %54 : vector<256x1xi32> to vector<256x128xi32>
      %56 = arith.cmpi eq, %39, %55 : vector<256x128xi32>
      %57 = vector.broadcast %cst : f32 to vector<256x128xf32>
      %58 = arith.select %56, %57, %38 : vector<256x128xi1>, vector<256x128xf32>
      %59 = vector.broadcast %40 : i32 to vector<256x1xi32>
      %60 = arith.addi %54, %59 : vector<256x1xi32>
      %61 = arith.cmpf olt, %48, %41 : vector<256x1xf32>
      %62 = arith.cmpf olt, %48, %42 : vector<256x1xf32>
      %63 = arith.cmpf olt, %48, %43 : vector<256x1xf32>
      %64 = arith.select %63, %48, %43 : vector<256x1xi1>, vector<256x1xf32>
      %65 = arith.select %62, %42, %64 : vector<256x1xi1>, vector<256x1xf32>
      %66 = arith.select %63, %60, %46 : vector<256x1xi1>, vector<256x1xi32>
      %67 = arith.select %62, %45, %66 : vector<256x1xi1>, vector<256x1xi32>
      %68 = arith.select %62, %48, %42 : vector<256x1xi1>, vector<256x1xf32>
      %69 = arith.select %61, %41, %68 : vector<256x1xi1>, vector<256x1xf32>
      %70 = arith.select %62, %60, %45 : vector<256x1xi1>, vector<256x1xi32>
      %71 = arith.select %61, %44, %70 : vector<256x1xi1>, vector<256x1xi32>
      %72 = arith.select %61, %48, %41 : vector<256x1xi1>, vector<256x1xf32>
      %73 = arith.select %61, %60, %44 : vector<256x1xi1>, vector<256x1xi32>
      %cst_34 = arith.constant dense<0x7F800000> : vector<256xf32>
      %74 = vector.multi_reduction <minimumf>, %58, %cst_34 [1] : vector<256x128xf32> to vector<256xf32>
      %75 = vector.shape_cast %74 : vector<256xf32> to vector<256x1xf32>
      %76 = vector.broadcast %75 : vector<256x1xf32> to vector<256x128xf32>
      %77 = arith.cmpf oeq, %58, %76 : vector<256x128xf32>
      %c128_i32_35 = arith.constant 128 : i32
      %78 = vector.broadcast %c128_i32_35 : i32 to vector<256x128xi32>
      %79 = arith.select %77, %39, %78 : vector<256x128xi1>, vector<256x128xi32>
      %cst_36 = arith.constant dense<2147483647> : vector<256xi32>
      %80 = vector.multi_reduction <minsi>, %79, %cst_36 [1] : vector<256x128xi32> to vector<256xi32>
      %81 = vector.shape_cast %80 : vector<256xi32> to vector<256x1xi32>
      %82 = vector.broadcast %81 : vector<256x1xi32> to vector<256x128xi32>
      %83 = arith.cmpi eq, %39, %82 : vector<256x128xi32>
      %84 = vector.broadcast %cst : f32 to vector<256x128xf32>
      %85 = arith.select %83, %84, %58 : vector<256x128xi1>, vector<256x128xf32>
      %86 = vector.broadcast %40 : i32 to vector<256x1xi32>
      %87 = arith.addi %81, %86 : vector<256x1xi32>
      %88 = arith.cmpf olt, %75, %72 : vector<256x1xf32>
      %89 = arith.cmpf olt, %75, %69 : vector<256x1xf32>
      %90 = arith.cmpf olt, %75, %65 : vector<256x1xf32>
      %91 = arith.select %90, %75, %65 : vector<256x1xi1>, vector<256x1xf32>
      %92 = arith.select %89, %69, %91 : vector<256x1xi1>, vector<256x1xf32>
      %93 = arith.select %90, %87, %67 : vector<256x1xi1>, vector<256x1xi32>
      %94 = arith.select %89, %71, %93 : vector<256x1xi1>, vector<256x1xi32>
      %95 = arith.select %89, %75, %69 : vector<256x1xi1>, vector<256x1xf32>
      %96 = arith.select %88, %72, %95 : vector<256x1xi1>, vector<256x1xf32>
      %97 = arith.select %89, %87, %71 : vector<256x1xi1>, vector<256x1xi32>
      %98 = arith.select %88, %73, %97 : vector<256x1xi1>, vector<256x1xi32>
      %99 = arith.select %88, %75, %72 : vector<256x1xi1>, vector<256x1xf32>
      %100 = arith.select %88, %87, %73 : vector<256x1xi1>, vector<256x1xi32>
      %cst_37 = arith.constant dense<0x7F800000> : vector<256xf32>
      %101 = vector.multi_reduction <minimumf>, %85, %cst_37 [1] : vector<256x128xf32> to vector<256xf32>
      %102 = vector.shape_cast %101 : vector<256xf32> to vector<256x1xf32>
      %103 = vector.broadcast %102 : vector<256x1xf32> to vector<256x128xf32>
      %104 = arith.cmpf oeq, %85, %103 : vector<256x128xf32>
      %c128_i32_38 = arith.constant 128 : i32
      %105 = vector.broadcast %c128_i32_38 : i32 to vector<256x128xi32>
      %106 = arith.select %104, %39, %105 : vector<256x128xi1>, vector<256x128xi32>
      %cst_39 = arith.constant dense<2147483647> : vector<256xi32>
      %107 = vector.multi_reduction <minsi>, %106, %cst_39 [1] : vector<256x128xi32> to vector<256xi32>
      %108 = vector.shape_cast %107 : vector<256xi32> to vector<256x1xi32>
      %109 = vector.broadcast %40 : i32 to vector<256x1xi32>
      %110 = arith.addi %108, %109 : vector<256x1xi32>
      %111 = arith.cmpf olt, %102, %99 : vector<256x1xf32>
      %112 = arith.cmpf olt, %102, %96 : vector<256x1xf32>
      %113 = arith.cmpf olt, %102, %92 : vector<256x1xf32>
      %114 = arith.select %113, %102, %92 : vector<256x1xi1>, vector<256x1xf32>
      %115 = arith.select %112, %96, %114 : vector<256x1xi1>, vector<256x1xf32>
      %116 = arith.select %113, %110, %94 : vector<256x1xi1>, vector<256x1xi32>
      %117 = arith.select %112, %98, %116 : vector<256x1xi1>, vector<256x1xi32>
      %118 = arith.select %112, %102, %96 : vector<256x1xi1>, vector<256x1xf32>
      %119 = arith.select %111, %99, %118 : vector<256x1xi1>, vector<256x1xf32>
      %120 = arith.select %112, %110, %98 : vector<256x1xi1>, vector<256x1xi32>
      %121 = arith.select %111, %100, %120 : vector<256x1xi1>, vector<256x1xi32>
      %122 = arith.select %111, %102, %99 : vector<256x1xi1>, vector<256x1xf32>
      %123 = arith.select %111, %110, %100 : vector<256x1xi1>, vector<256x1xi32>
      %c0_40 = arith.constant 0 : index
      %c0_41 = arith.constant 0 : index
      %124 = vector.load %arg14[%c0_40, %c0_41] : memref<256x1xf32, #tpu.memory_space<vmem>>, vector<256x1xf32>
      tpu.vector_store %arg14[%c0_40, %c0_41], %122 {strides = array<i32>} : memref<256x1xf32, #tpu.memory_space<vmem>>, vector<256x1xf32>,
      %c0_42 = arith.constant 0 : index
      %c0_43 = arith.constant 0 : index
      %125 = vector.load %arg15[%c0_42, %c0_43] : memref<256x1xf32, #tpu.memory_space<vmem>>, vector<256x1xf32>
      tpu.vector_store %arg15[%c0_42, %c0_43], %119 {strides = array<i32>} : memref<256x1xf32, #tpu.memory_space<vmem>>, vector<256x1xf32>,
      %c0_44 = arith.constant 0 : index
      %c0_45 = arith.constant 0 : index
      %126 = vector.load %arg16[%c0_44, %c0_45] : memref<256x1xf32, #tpu.memory_space<vmem>>, vector<256x1xf32>
      tpu.vector_store %arg16[%c0_44, %c0_45], %115 {strides = array<i32>} : memref<256x1xf32, #tpu.memory_space<vmem>>, vector<256x1xf32>,
      %c0_46 = arith.constant 0 : index
      %c0_47 = arith.constant 0 : index
      %127 = vector.load %arg17[%c0_46, %c0_47] : memref<256x1xi32, #tpu.memory_space<vmem>>, vector<256x1xi32>
      tpu.vector_store %arg17[%c0_46, %c0_47], %123 {strides = array<i32>} : memref<256x1xi32, #tpu.memory_space<vmem>>, vector<256x1xi32>,
      %c0_48 = arith.constant 0 : index
      %c0_49 = arith.constant 0 : index
      %128 = vector.load %arg18[%c0_48, %c0_49] : memref<256x1xi32, #tpu.memory_space<vmem>>, vector<256x1xi32>
      tpu.vector_store %arg18[%c0_48, %c0_49], %121 {strides = array<i32>} : memref<256x1xi32, #tpu.memory_space<vmem>>, vector<256x1xi32>,
      %c0_50 = arith.constant 0 : index
      %c0_51 = arith.constant 0 : index
      %129 = vector.load %arg19[%c0_50, %c0_51] : memref<256x1xi32, #tpu.memory_space<vmem>>, vector<256x1xi32>
      tpu.vector_store %arg19[%c0_50, %c0_51], %117 {strides = array<i32>} : memref<256x1xi32, #tpu.memory_space<vmem>>, vector<256x1xi32>,
    } else {
    }
    %c3_i32_2 = arith.constant 3 : i32
    %6 = arith.cmpi eq, %arg1, %c3_i32_2 : i32
    %7 = arith.extui %6 : i1 to i32
    %c0_i32_3 = arith.constant 0 : i32
    %8 = arith.cmpi ne, %7, %c0_i32_3 : i32
    scf.if %8 {
      %c0 = arith.constant 0 : index
      %c0_7 = arith.constant 0 : index
      %15 = vector.load %arg14[%c0, %c0_7] : memref<256x1xf32, #tpu.memory_space<vmem>>, vector<256x1xf32>
      %16 = math.sqrt %15 : vector<256x1xf32>
      %cst_8 = arith.constant 9.99999993E-9 : f32
      %17 = vector.broadcast %cst_8 : f32 to vector<256x1xf32>
      %18 = arith.addf %16, %17 : vector<256x1xf32>
      %19 = tpu.reciprocal %18 {approx = true} : vector<256x1xf32> -> vector<256x1xf32>
      %c0_9 = arith.constant 0 : index
      %c0_10 = arith.constant 0 : index
      %20 = vector.load %arg15[%c0_9, %c0_10] : memref<256x1xf32, #tpu.memory_space<vmem>>, vector<256x1xf32>
      %21 = math.sqrt %20 : vector<256x1xf32>
      %cst_11 = arith.constant 9.99999993E-9 : f32
      %22 = vector.broadcast %cst_11 : f32 to vector<256x1xf32>
      %23 = arith.addf %21, %22 : vector<256x1xf32>
      %24 = tpu.reciprocal %23 {approx = true} : vector<256x1xf32> -> vector<256x1xf32>
      %c0_12 = arith.constant 0 : index
      %c0_13 = arith.constant 0 : index
      %25 = vector.load %arg16[%c0_12, %c0_13] : memref<256x1xf32, #tpu.memory_space<vmem>>, vector<256x1xf32>
      %26 = math.sqrt %25 : vector<256x1xf32>
      %cst_14 = arith.constant 9.99999993E-9 : f32
      %27 = vector.broadcast %cst_14 : f32 to vector<256x1xf32>
      %28 = arith.addf %26, %27 : vector<256x1xf32>
      %29 = tpu.reciprocal %28 {approx = true} : vector<256x1xf32> -> vector<256x1xf32>
      %30 = arith.addf %19, %24 : vector<256x1xf32>
      %31 = arith.addf %30, %29 : vector<256x1xf32>
      %32 = tpu.reciprocal %31 {approx = true} : vector<256x1xf32> -> vector<256x1xf32>
      %33 = arith.mulf %19, %32 : vector<256x1xf32>
      %c0_15 = arith.constant 0 : index
      %c0_16 = arith.constant 0 : index
      %34 = vector.load %arg14[%c0_15, %c0_16] : memref<256x1xf32, #tpu.memory_space<vmem>>, vector<256x1xf32>
      tpu.vector_store %arg14[%c0_15, %c0_16], %33 {strides = array<i32>} : memref<256x1xf32, #tpu.memory_space<vmem>>, vector<256x1xf32>,
      %35 = arith.mulf %24, %32 : vector<256x1xf32>
      %c0_17 = arith.constant 0 : index
      %c0_18 = arith.constant 0 : index
      %36 = vector.load %arg15[%c0_17, %c0_18] : memref<256x1xf32, #tpu.memory_space<vmem>>, vector<256x1xf32>
      tpu.vector_store %arg15[%c0_17, %c0_18], %35 {strides = array<i32>} : memref<256x1xf32, #tpu.memory_space<vmem>>, vector<256x1xf32>,
      %37 = arith.mulf %29, %32 : vector<256x1xf32>
      %c0_19 = arith.constant 0 : index
      %c0_20 = arith.constant 0 : index
      %38 = vector.load %arg16[%c0_19, %c0_20] : memref<256x1xf32, #tpu.memory_space<vmem>>, vector<256x1xf32>
      tpu.vector_store %arg16[%c0_19, %c0_20], %37 {strides = array<i32>} : memref<256x1xf32, #tpu.memory_space<vmem>>, vector<256x1xf32>,
      %cst_21 = arith.constant 0.000000e+00 : f32
      %39 = vector.broadcast %cst_21 : f32 to vector<256x32xf32>
      %c0_22 = arith.constant 0 : index
      %c0_23 = arith.constant 0 : index
      %40 = vector.load %arg20[%c0_22, %c0_23] : memref<256x32xf32, #tpu.memory_space<vmem>>, vector<256x32xf32>
      tpu.vector_store %arg20[%c0_22, %c0_23], %39 {strides = array<i32>} : memref<256x32xf32, #tpu.memory_space<vmem>>, vector<256x32xf32>,
    } else {
    }
    %c3_i32_4 = arith.constant 3 : i32
    %9 = arith.cmpi sge, %arg1, %c3_i32_4 : i32
    %10 = arith.extui %9 : i1 to i32
    %c0_i32_5 = arith.constant 0 : i32
    %11 = arith.cmpi ne, %10, %c0_i32_5 : i32
    scf.if %11 {
      %c0 = arith.constant 0 : index
      %c0_7 = arith.constant 0 : index
      %15 = vector.load %arg6[%c0, %c0_7] : memref<128x32xbf16, #tpu.memory_space<vmem>>, vector<128x32xbf16>
      %c3_i32_8 = arith.constant 3 : i32
      %16 = arith.subi %arg1, %c3_i32_8 : i32
      %c128_i32 = arith.constant 128 : i32
      %17 = arith.muli %16, %c128_i32 : i32
      %18 = tpu.iota {dimensions = array<i32: 1>} : vector<256x128xi32>
      %19 = vector.broadcast %17 : i32 to vector<256x128xi32>
      %20 = arith.addi %19, %18 : vector<256x128xi32>
      %c0_9 = arith.constant 0 : index
      %c0_10 = arith.constant 0 : index
      %21 = vector.load %arg17[%c0_9, %c0_10] : memref<256x1xi32, #tpu.memory_space<vmem>>, vector<256x1xi32>
      %22 = vector.broadcast %21 : vector<256x1xi32> to vector<256x128xi32>
      %23 = arith.cmpi eq, %20, %22 : vector<256x128xi32>
      %c0_11 = arith.constant 0 : index
      %c0_12 = arith.constant 0 : index
      %24 = vector.load %arg14[%c0_11, %c0_12] : memref<256x1xf32, #tpu.memory_space<vmem>>, vector<256x1xf32>
      %cst_13 = arith.constant 0.000000e+00 : f32
      %25 = vector.shape_cast %24 : vector<256x1xf32> to vector<256x1xf32>
      %26 = vector.broadcast %25 : vector<256x1xf32> to vector<256x128xf32>
      %27 = vector.broadcast %cst_13 : f32 to vector<256x128xf32>
      %28 = arith.select %23, %26, %27 : vector<256x128xi1>, vector<256x128xf32>
      %c0_14 = arith.constant 0 : index
      %c0_15 = arith.constant 0 : index
      %29 = vector.load %arg18[%c0_14, %c0_15] : memref<256x1xi32, #tpu.memory_space<vmem>>, vector<256x1xi32>
      %30 = vector.broadcast %29 : vector<256x1xi32> to vector<256x128xi32>
      %31 = arith.cmpi eq, %20, %30 : vector<256x128xi32>
      %c0_16 = arith.constant 0 : index
      %c0_17 = arith.constant 0 : index
      %32 = vector.load %arg15[%c0_16, %c0_17] : memref<256x1xf32, #tpu.memory_space<vmem>>, vector<256x1xf32>
      %33 = vector.shape_cast %32 : vector<256x1xf32> to vector<256x1xf32>
      %34 = vector.broadcast %33 : vector<256x1xf32> to vector<256x128xf32>
      %35 = arith.select %31, %34, %28 : vector<256x128xi1>, vector<256x128xf32>
      %c0_18 = arith.constant 0 : index
      %c0_19 = arith.constant 0 : index
      %36 = vector.load %arg19[%c0_18, %c0_19] : memref<256x1xi32, #tpu.memory_space<vmem>>, vector<256x1xi32>
      %37 = vector.broadcast %36 : vector<256x1xi32> to vector<256x128xi32>
      %38 = arith.cmpi eq, %20, %37 : vector<256x128xi32>
      %c0_20 = arith.constant 0 : index
      %c0_21 = arith.constant 0 : index
      %39 = vector.load %arg16[%c0_20, %c0_21] : memref<256x1xf32, #tpu.memory_space<vmem>>, vector<256x1xf32>
      %40 = vector.shape_cast %39 : vector<256x1xf32> to vector<256x1xf32>
      %41 = vector.broadcast %40 : vector<256x1xf32> to vector<256x128xf32>
      %42 = arith.select %38, %41, %35 : vector<256x128xi1>, vector<256x128xf32>
      %c0_22 = arith.constant 0 : index
      %c0_23 = arith.constant 0 : index
      %43 = vector.load %arg20[%c0_22, %c0_23] : memref<256x32xf32, #tpu.memory_space<vmem>>, vector<256x32xf32>
      %44 = arith.truncf %42 : vector<256x128xf32> to vector<256x128xbf16>
      %cst_24 = arith.constant dense<0.000000e+00> : vector<256x32xf32>
      %45 = tpu.matmul %44, %15, %cst_24 {dimension_numbers = #tpu.dot_dimension_numbers<[1], [0], [0], [1], [0, 0, 1, 1], [], []>} : vector<256x128xbf16>, vector<128x32xbf16>, vector<256x32xf32> -> vector<256x32xf32>
      %46 = arith.addf %43, %45 : vector<256x32xf32>
      %c0_25 = arith.constant 0 : index
      %c0_26 = arith.constant 0 : index
      %47 = vector.load %arg20[%c0_25, %c0_26] : memref<256x32xf32, #tpu.memory_space<vmem>>, vector<256x32xf32>
      tpu.vector_store %arg20[%c0_25, %c0_26], %46 {strides = array<i32>} : memref<256x32xf32, #tpu.memory_space<vmem>>, vector<256x32xf32>,
    } else {
    }
    %c5_i32 = arith.constant 5 : i32
    %12 = arith.cmpi eq, %arg1, %c5_i32 : i32
    %13 = arith.extui %12 : i1 to i32
    %c0_i32_6 = arith.constant 0 : i32
    %14 = arith.cmpi ne, %13, %c0_i32_6 : i32
    scf.if %14 {
      %c0 = arith.constant 0 : index
      %c0_7 = arith.constant 0 : index
      %15 = vector.load %arg7[%c0, %c0_7] : memref<256x16xbf16, #tpu.memory_space<vmem>>, vector<256x16xbf16>
      %c0_8 = arith.constant 0 : index
      %c0_9 = arith.constant 0 : index
      %16 = vector.load %arg8[%c0_8, %c0_9] : memref<32x64xbf16, #tpu.memory_space<vmem>>, vector<32x64xbf16>
      %c0_10 = arith.constant 0 : index
      %c0_11 = arith.constant 0 : index
      %17 = vector.load %arg9[%c0_10, %c0_11] : memref<16x64xbf16, #tpu.memory_space<vmem>>, vector<16x64xbf16>
      %c0_12 = arith.constant 0 : index
      %c0_13 = arith.constant 0 : index
      %18 = vector.load %arg10[%c0_12, %c0_13] : memref<1x64xf32, #tpu.memory_space<vmem>>, vector<1x64xf32>
      %c0_14 = arith.constant 0 : index
      %c0_15 = arith.constant 0 : index
      %19 = vector.load %arg20[%c0_14, %c0_15] : memref<256x32xf32, #tpu.memory_space<vmem>>, vector<256x32xf32>
      %20 = arith.truncf %19 : vector<256x32xf32> to vector<256x32xbf16>
      %cst_16 = arith.constant dense<0.000000e+00> : vector<256x64xf32>
      %21 = tpu.matmul %20, %16, %cst_16 {dimension_numbers = #tpu.dot_dimension_numbers<[1], [0], [0], [1], [0, 0, 1, 1], [], []>} : vector<256x32xbf16>, vector<32x64xbf16>, vector<256x64xf32> -> vector<256x64xf32>
      %cst_17 = arith.constant dense<0.000000e+00> : vector<256x64xf32>
      %22 = tpu.matmul %15, %17, %cst_17 {dimension_numbers = #tpu.dot_dimension_numbers<[1], [0], [0], [1], [0, 0, 1, 1], [], []>} : vector<256x16xbf16>, vector<16x64xbf16>, vector<256x64xf32> -> vector<256x64xf32>
      %23 = arith.addf %21, %22 : vector<256x64xf32>
      %24 = vector.broadcast %18 : vector<1x64xf32> to vector<256x64xf32>
      %25 = arith.addf %23, %24 : vector<256x64xf32>
      %cst_18 = arith.constant 0.000000e+00 : f32
      %26 = vector.broadcast %cst_18 : f32 to vector<256x64xf32>
      %27 = arith.maximumf %25, %26 : vector<256x64xf32>
      %c0_19 = arith.constant 0 : index
      %c0_20 = arith.constant 0 : index
      %28 = vector.load %arg11[%c0_19, %c0_20] : memref<64x128xbf16, #tpu.memory_space<vmem>>, vector<64x128xbf16>
      %c0_21 = arith.constant 0 : index
      %c0_22 = arith.constant 0 : index
      %29 = vector.load %arg12[%c0_21, %c0_22] : memref<1x128xf32, #tpu.memory_space<vmem>>, vector<1x128xf32>
      %30 = arith.truncf %27 : vector<256x64xf32> to vector<256x64xbf16>
      %cst_23 = arith.constant dense<0.000000e+00> : vector<256x128xf32>
      %31 = tpu.matmul %30, %28, %cst_23 {dimension_numbers = #tpu.dot_dimension_numbers<[1], [0], [0], [1], [0, 0, 1, 1], [], []>} : vector<256x64xbf16>, vector<64x128xbf16>, vector<256x128xf32> -> vector<256x128xf32>
      %32 = vector.broadcast %29 : vector<1x128xf32> to vector<256x128xf32>
      %33 = arith.addf %31, %32 : vector<256x128xf32>
      %cst_24 = arith.constant 0.000000e+00 : f32
      %34 = vector.broadcast %cst_24 : f32 to vector<256x128xf32>
      %35 = arith.maximumf %33, %34 : vector<256x128xf32>
      %36 = arith.truncf %35 : vector<256x128xf32> to vector<256x128xbf16>
      %c0_25 = arith.constant 0 : index
      %c0_26 = arith.constant 0 : index
      %37 = vector.load %arg13[%c0_25, %c0_26] : memref<256x128xbf16, #tpu.memory_space<vmem>>, vector<256x128xbf16>
      tpu.vector_store %arg13[%c0_25, %c0_26], %36 {strides = array<i32>} : memref<256x128xbf16, #tpu.memory_space<vmem>>, vector<256x128xbf16>,
    } else {
    }
    return
  }
  func.func @transform_0(%arg0: i32, %arg1: i32) -> (i32, i32) {
    %c0_i32 = arith.constant 0 : i32
    %c0_i32_0 = arith.constant 0 : i32
    return %arg0, %c0_i32 : i32, i32
  }
  func.func @transform_1(%arg0: i32, %arg1: i32) -> (i32, i32) {
    %c0_i32 = arith.constant 0 : i32
    %c0_i32_0 = arith.constant 0 : i32
    return %arg0, %c0_i32 : i32, i32
  }
  func.func @transform_2(%arg0: i32, %arg1: i32) -> (i32, i32) {
    %c2_i32 = arith.constant 2 : i32
    %0 = arith.minsi %arg1, %c2_i32 : i32
    %c0_i32 = arith.constant 0 : i32
    %c0_i32_0 = arith.constant 0 : i32
    return %c0_i32, %0 : i32, i32
  }
  func.func @transform_3(%arg0: i32, %arg1: i32) -> (i32, i32) {
    %c2_i32 = arith.constant 2 : i32
    %0 = arith.minsi %arg1, %c2_i32 : i32
    %c0_i32 = arith.constant 0 : i32
    %c0_i32_0 = arith.constant 0 : i32
    return %c0_i32, %0 : i32, i32
  }
  func.func @transform_4(%arg0: i32, %arg1: i32) -> (i32, i32) {
    %c3_i32 = arith.constant 3 : i32
    %0 = arith.subi %arg1, %c3_i32 : i32
    %c0_i32 = arith.constant 0 : i32
    %1 = arith.maxsi %0, %c0_i32 : i32
    %c0_i32_0 = arith.constant 0 : i32
    %c0_i32_1 = arith.constant 0 : i32
    return %1, %c0_i32_0 : i32, i32
  }
  func.func @transform_5(%arg0: i32, %arg1: i32) -> (i32, i32) {
    %c0_i32 = arith.constant 0 : i32
    %c0_i32_0 = arith.constant 0 : i32
    return %arg0, %c0_i32 : i32, i32
  }
  func.func @transform_6(%arg0: i32, %arg1: i32) -> (i32, i32) {
    %c0_i32 = arith.constant 0 : i32
    %c0_i32_0 = arith.constant 0 : i32
    %c0_i32_1 = arith.constant 0 : i32
    return %c0_i32, %c0_i32_0 : i32, i32
  }
  func.func @transform_7(%arg0: i32, %arg1: i32) -> (i32, i32) {
    %c0_i32 = arith.constant 0 : i32
    %c0_i32_0 = arith.constant 0 : i32
    %c0_i32_1 = arith.constant 0 : i32
    return %c0_i32, %c0_i32_0 : i32, i32
  }
  func.func @transform_8(%arg0: i32, %arg1: i32) -> (i32, i32) {
    %c0_i32 = arith.constant 0 : i32
    %c0_i32_0 = arith.constant 0 : i32
    %c0_i32_1 = arith.constant 0 : i32
    return %c0_i32, %c0_i32_0 : i32, i32
  }
  func.func @transform_9(%arg0: i32, %arg1: i32) -> (i32, i32) {
    %c0_i32 = arith.constant 0 : i32
    %c0_i32_0 = arith.constant 0 : i32
    %c0_i32_1 = arith.constant 0 : i32
    return %c0_i32, %c0_i32_0 : i32, i32
  }
  func.func @transform_10(%arg0: i32, %arg1: i32) -> (i32, i32) {
    %c0_i32 = arith.constant 0 : i32
    %c0_i32_0 = arith.constant 0 : i32
    %c0_i32_1 = arith.constant 0 : i32
    return %c0_i32, %c0_i32_0 : i32, i32
  }
  func.func @transform_11(%arg0: i32, %arg1: i32) -> (i32, i32) {
    %c0_i32 = arith.constant 0 : i32
    %c0_i32_0 = arith.constant 0 : i32
    return %arg0, %c0_i32 : i32, i32
  }
}

</mosaic_0001>

<llo_original>
// kernel: tpu_custom_call.1
$region0: #{tpu_custom_call.1}
  #allocation0 [shape = 'u32[]', space=smem, size = 0x4, offset = 0x4, fixed_abs, tag = 'smem constant byte address 0x4 - core index']
  #allocation1 [shape = 'u32[72,128]{1,0:T(1,128)}', space=vmem, size = 0x9000, scoped, tag = 'internal scratch']
  #allocation2 [shape = 'f32[256,1]{1,0:T(8,128)}', space=vmem, size = 0x20000, scoped, tag = 'scratch operand']
  #allocation3 [shape = 'f32[256,1]{1,0:T(8,128)}', space=vmem, size = 0x20000, scoped, tag = 'scratch operand']
  #allocation4 [shape = 'f32[256,1]{1,0:T(8,128)}', space=vmem, size = 0x20000, scoped, tag = 'scratch operand']
  #allocation5 [shape = 's32[256,1]{1,0:T(8,128)}', space=vmem, size = 0x20000, scoped, tag = 'scratch operand']
  #allocation6 [shape = 's32[256,1]{1,0:T(8,128)}', space=vmem, size = 0x20000, scoped, tag = 'scratch operand']
  #allocation7 [shape = 's32[256,1]{1,0:T(8,128)}', space=vmem, size = 0x20000, scoped, tag = 'scratch operand']
  #allocation8 [shape = 'f32[256,32]{1,0:T(8,128)}', space=vmem, size = 0x20000, scoped, tag = 'scratch operand']
  %s0 = inlined_call_operand.vmem [shape: f32[512,8], index: 0, kind: input, shape index: {}]
  %s1 = inlined_call_operand.vmem [shape: s32[512,1], index: 1, kind: input, shape index: {}]
  %s2 = inlined_call_operand.vmem [shape: f32[8,384], index: 2, kind: input, shape index: {}]
  %s3 = inlined_call_operand.vmem [shape: s32[1,384], index: 3, kind: input, shape index: {}]
  %s4 = inlined_call_operand.vmem [shape: bf16[384,32], index: 4, kind: input, shape index: {}]
  %s5 = inlined_call_operand.vmem [shape: bf16[512,16], index: 5, kind: input, shape index: {}]
  %s6 = inlined_call_operand.vmem [shape: bf16[32,64], index: 6, kind: input, shape index: {}]
  %s7 = inlined_call_operand.vmem [shape: bf16[16,64], index: 7, kind: input, shape index: {}]
  %s8 = inlined_call_operand.vmem [shape: f32[1,64], index: 8, kind: input, shape index: {}]
  %s9 = inlined_call_operand.vmem [shape: bf16[64,128], index: 9, kind: input, shape index: {}]
  %s10 = inlined_call_operand.vmem [shape: f32[1,128], index: 10, kind: input, shape index: {}]
  %s11 = inlined_call_operand.hbm [shape: bf16[512,128], index: 11, kind: output, shape index: {}]
  %s12 = sld [smem:[#allocation0]]
  $region97: #{tpu_custom_call.1} parent=0
    _
  %s14 = ssub.s32 1, %s12
  %s15 = scalar_select 0, %s14, %s12
  $region1: #{tpu_custom_call.1} parent=0
    #allocation9 [shape = 'u8[131072]{0}', space=vmem, size = 0x20000, scoped, tag = 'output window, operand 0']
    #allocation10 [shape = 's32[2]{0}', space=sflag, size = 0x8, scoped, tag = 'scoped memory for tpu_custom_call.1']
    %16 = vsyncpa [#allocation10], 0
    %s17 = scalar_lea.sflag [#allocation10], 1
    %18 = vsyncpa %s17, 0
    loop: start=0, step=1, limit=14
    $region2: #{tpu_custom_call.1} parent=1 // loop_pre_header
      _
    $region3: #{tpu_custom_call.1} parent=1 // loop_header
      %s20 = sphi 0, %s24
      %p21 = scmp.ge.s32.totalorder %s20, 14
      %s27 = sphi 0, %s39
      %s28 = sphi 0, %s35
      %s29 = sphi 0, %s27
      %s30 = sphi 0, %s28
      %s31 = sphi 0, %s29
      %s32 = sphi 0, %s30
      %s42 = sphi 0, %s44
      %s45 = sphi 0, %s42
      %s46 = sphi 0, %s45
      %s62 = sphi 0, %s46
      %s68 = sphi 0, %s70
      %s71 = sphi 0, %s68
      %s72 = sphi 0, %s71
      %s88 = sphi 0, %s72
      %s98 = sphi 0, %s100
      %s101 = sphi 0, %s98
      %s102 = sphi 0, %s101
      %s118 = sphi 0, %s102
      %s128 = sphi 0, %s130
      %s131 = sphi 0, %s128
      %s132 = sphi 0, %s131
      %s148 = sphi 0, %s132
      %s160 = sphi 0, %s162
      %s163 = sphi 0, %s160
      %s164 = sphi 0, %s163
      %s180 = sphi 0, %s164
      %s186 = sphi 0, %s188
      %s189 = sphi 0, %s186
      %s190 = sphi 0, %s189
      %s206 = sphi 0, %s190
      %s210 = sphi 0, %s210
      %s212 = sphi 0, %s210
      %s213 = sphi 0, %s212
      %s227 = sphi 0, %s213
      %s231 = sphi 0, %s231
      %s233 = sphi 0, %s231
      %s234 = sphi 0, %s233
      %s248 = sphi 0, %s234
      %s252 = sphi 0, %s252
      %s254 = sphi 0, %s252
      %s255 = sphi 0, %s254
      %s269 = sphi 0, %s255
      %s273 = sphi 0, %s273
      %s275 = sphi 0, %s273
      %s276 = sphi 0, %s275
      %s290 = sphi 0, %s276
      %s294 = sphi 0, %s294
      %s296 = sphi 0, %s294
      %s297 = sphi 0, %s296
      %s311 = sphi 0, %s297
      %s317 = sphi 0, %s319
      %s320 = sphi 0, %s317
      %s321 = sphi 0, %s320
      %s337 = sphi 0, %s321
    $region4: #{tpu_custom_call.1} parent=1 // loop_header_branch
      %23 = sbr.rel (%p21) target = $region8
    $region5: #{tpu_custom_call.1} parent=1 // loop_body
      %s25 = ssub.s32 %s20, 1
      %s26 = ssub.s32 %s20, 2
      %s33 = sadd.s32 1, %s28
      %p34 = scmp.ge.s32.totalorder %s33, 6
      %s35 = scalar_select %p34, 0, %s33
      %s36 = sadd.s32 1, %s27
      %s37 = scalar_select %p34, %s36, %s27
      %p38 = scmp.ge.s32.totalorder %s37, 2
      %s39 = scalar_select %p38, 0, %s37
      %s40 = ssub.s32 %s27, %s39
      %p41 = scmp.eq.s32.totalorder %s40, 0
      %s43 = sadd.s32 %s42, 1
      %s44 = scalar_select %p41, %s42, %s43
      %p47 = pneg %p41
      %p48 = scmp.eq.s32.totalorder %s20, 11
      %p49 = por %p47, %p48
      %p50 = scmp.ne.s32.totalorder %s42, %s45
      %p51 = scmp.eq.s32.totalorder %s20, 0
      %p52 = por %p50, %p51
      %p53 = scmp.ne.s32.totalorder %s42, %s45
      %p54 = scmp.eq.s32.totalorder %s25, 11
      %p55 = por %p53, %p54
      %p56 = scmp.ne.s32.totalorder %s45, %s46
      %p57 = scmp.eq.s32.totalorder %s25, 0
      %p58 = por %p56, %p57
      %p59 = scmp.ne.s32.totalorder %s45, %s46
      %p60 = scmp.eq.s32.totalorder %s26, 11
      %p61 = por %p59, %p60
      %p63 = scmp.ne.s32.totalorder %s46, %s62
      %p64 = scmp.eq.s32.totalorder %s26, 0
      %p65 = por %p63, %p64
      %s66 = ssub.s32 %s27, %s39
      %p67 = scmp.eq.s32.totalorder %s66, 0
      %s69 = sadd.s32 %s68, 1
      %s70 = scalar_select %p67, %s68, %s69
      %p73 = pneg %p67
      %p74 = scmp.eq.s32.totalorder %s20, 11
      %p75 = por %p73, %p74
      %p76 = scmp.ne.s32.totalorder %s68, %s71
      %p77 = scmp.eq.s32.totalorder %s20, 0
      %p78 = por %p76, %p77
      %p79 = scmp.ne.s32.totalorder %s68, %s71
      %p80 = scmp.eq.s32.totalorder %s25, 11
      %p81 = por %p79, %p80
      %p82 = scmp.ne.s32.totalorder %s71, %s72
      %p83 = scmp.eq.s32.totalorder %s25, 0
      %p84 = por %p82, %p83
      %p85 = scmp.ne.s32.totalorder %s71, %s72
      %p86 = scmp.eq.s32.totalorder %s26, 11
      %p87 = por %p85, %p86
      %p89 = scmp.ne.s32.totalorder %s72, %s88
      %p90 = scmp.eq.s32.totalorder %s26, 0
      %p91 = por %p89, %p90
      %p92 = scmp.lt.s32.totalorder %s28, 2
      %s93 = scalar_select %p92, %s28, 2
      %p94 = scmp.lt.s32.totalorder %s35, 2
      %s95 = scalar_select %p94, %s35, 2
      %s96 = ssub.s32 %s93, %s95
      %p97 = scmp.eq.s32.totalorder %s96, 0
      %s99 = sadd.s32 %s98, 1
      %s100 = scalar_select %p97, %s98, %s99
      %p103 = pneg %p97
      %p104 = scmp.eq.s32.totalorder %s20, 11
      %p105 = por %p103, %p104
      %p106 = scmp.ne.s32.totalorder %s98, %s101
      %p107 = scmp.eq.s32.totalorder %s20, 0
      %p108 = por %p106, %p107
      %p109 = scmp.ne.s32.totalorder %s98, %s101
      %p110 = scmp.eq.s32.totalorder %s25, 11
      %p111 = por %p109, %p110
      %p112 = scmp.ne.s32.totalorder %s101, %s102
      %p113 = scmp.eq.s32.totalorder %s25, 0
      %p114 = por %p112, %p113
      %p115 = scmp.ne.s32.totalorder %s101, %s102
      %p116 = scmp.eq.s32.totalorder %s26, 11
      %p117 = por %p115, %p116
      %p119 = scmp.ne.s32.totalorder %s102, %s118
      %p120 = scmp.eq.s32.totalorder %s26, 0
      %p121 = por %p119, %p120
      %p122 = scmp.lt.s32.totalorder %s28, 2
      %s123 = scalar_select %p122, %s28, 2
      %p124 = scmp.lt.s32.totalorder %s35, 2
      %s125 = scalar_select %p124, %s35, 2
      %s126 = ssub.s32 %s123, %s125
      %p127 = scmp.eq.s32.totalorder %s126, 0
      %s129 = sadd.s32 %s128, 1
      %s130 = scalar_select %p127, %s128, %s129
      %p133 = pneg %p127
      %p134 = scmp.eq.s32.totalorder %s20, 11
      %p135 = por %p133, %p134
      %p136 = scmp.ne.s32.totalorder %s128, %s131
      %p137 = scmp.eq.s32.totalorder %s20, 0
      %p138 = por %p136, %p137
      %p139 = scmp.ne.s32.totalorder %s128, %s131
      %p140 = scmp.eq.s32.totalorder %s25, 11
      %p141 = por %p139, %p140
      %p142 = scmp.ne.s32.totalorder %s131, %s132
      %p143 = scmp.eq.s32.totalorder %s25, 0
      %p144 = por %p142, %p143
      %p145 = scmp.ne.s32.totalorder %s131, %s132
      %p146 = scmp.eq.s32.totalorder %s26, 11
      %p147 = por %p145, %p146
      %p149 = scmp.ne.s32.totalorder %s132, %s148
      %p150 = scmp.eq.s32.totalorder %s26, 0
      %p151 = por %p149, %p150
      %s152 = ssub.s32 %s28, 3
      %p153 = scmp.gt.s32.totalorder %s152, 0
      %s154 = scalar_select %p153, %s152, 0
      %s155 = ssub.s32 %s35, 3
      %p156 = scmp.gt.s32.totalorder %s155, 0
      %s157 = scalar_select %p156, %s155, 0
      %s158 = ssub.s32 %s154, %s157
      %p159 = scmp.eq.s32.totalorder %s158, 0
      %s161 = sadd.s32 %s160, 1
      %s162 = scalar_select %p159, %s160, %s161
      %p165 = pneg %p159
      %p166 = scmp.eq.s32.totalorder %s20, 11
      %p167 = por %p165, %p166
      %p168 = scmp.ne.s32.totalorder %s160, %s163
      %p169 = scmp.eq.s32.totalorder %s20, 0
      %p170 = por %p168, %p169
      %p171 = scmp.ne.s32.totalorder %s160, %s163
      %p172 = scmp.eq.s32.totalorder %s25, 11
      %p173 = por %p171, %p172
      %p174 = scmp.ne.s32.totalorder %s163, %s164
      %p175 = scmp.eq.s32.totalorder %s25, 0
      %p176 = por %p174, %p175
      %p177 = scmp.ne.s32.totalorder %s163, %s164
      %p178 = scmp.eq.s32.totalorder %s26, 11
      %p179 = por %p177, %p178
      %p181 = scmp.ne.s32.totalorder %s164, %s180
      %p182 = scmp.eq.s32.totalorder %s26, 0
      %p183 = por %p181, %p182
      %s184 = ssub.s32 %s27, %s39
      %p185 = scmp.eq.s32.totalorder %s184, 0
      %s187 = sadd.s32 %s186, 1
      %s188 = scalar_select %p185, %s186, %s187
      %p191 = pneg %p185
      %p192 = scmp.eq.s32.totalorder %s20, 11
      %p193 = por %p191, %p192
      %p194 = scmp.ne.s32.totalorder %s186, %s189
      %p195 = scmp.eq.s32.totalorder %s20, 0
      %p196 = por %p194, %p195
      %p197 = scmp.ne.s32.totalorder %s186, %s189
      %p198 = scmp.eq.s32.totalorder %s25, 11
      %p199 = por %p197, %p198
      %p200 = scmp.ne.s32.totalorder %s189, %s190
      %p201 = scmp.eq.s32.totalorder %s25, 0
      %p202 = por %p200, %p201
      %p203 = scmp.ne.s32.totalorder %s189, %s190
      %p204 = scmp.eq.s32.totalorder %s26, 11
      %p205 = por %p203, %p204
      %p207 = scmp.ne.s32.totalorder %s190, %s206
      %p208 = scmp.eq.s32.totalorder %s26, 0
      %p209 = por %p207, %p208
      %s211 = sadd.s32 %s210, 1
      %p214 = scmp.eq.s32.totalorder %s20, 11
      %p215 = scmp.ne.s32.totalorder %s210, %s212
      %p216 = scmp.eq.s32.totalorder %s20, 0
      %p217 = por %p215, %p216
      %p218 = scmp.ne.s32.totalorder %s210, %s212
      %p219 = scmp.eq.s32.totalorder %s25, 11
      %p220 = por %p218, %p219
      %p221 = scmp.ne.s32.totalorder %s212, %s213
      %p222 = scmp.eq.s32.totalorder %s25, 0
      %p223 = por %p221, %p222
      %p224 = scmp.ne.s32.totalorder %s212, %s213
      %p225 = scmp.eq.s32.totalorder %s26, 11
      %p226 = por %p224, %p225
      %p228 = scmp.ne.s32.totalorder %s213, %s227
      %p229 = scmp.eq.s32.totalorder %s26, 0
      %p230 = por %p228, %p229
      %s232 = sadd.s32 %s231, 1
      %p235 = scmp.eq.s32.totalorder %s20, 11
      %p236 = scmp.ne.s32.totalorder %s231, %s233
      %p237 = scmp.eq.s32.totalorder %s20, 0
      %p238 = por %p236, %p237
      %p239 = scmp.ne.s32.totalorder %s231, %s233
      %p240 = scmp.eq.s32.totalorder %s25, 11
      %p241 = por %p239, %p240
      %p242 = scmp.ne.s32.totalorder %s233, %s234
      %p243 = scmp.eq.s32.totalorder %s25, 0
      %p244 = por %p242, %p243
      %p245 = scmp.ne.s32.totalorder %s233, %s234
      %p246 = scmp.eq.s32.totalorder %s26, 11
      %p247 = por %p245, %p246
      %p249 = scmp.ne.s32.totalorder %s234, %s248
      %p250 = scmp.eq.s32.totalorder %s26, 0
      %p251 = por %p249, %p250
      %s253 = sadd.s32 %s252, 1
      %p256 = scmp.eq.s32.totalorder %s20, 11
      %p257 = scmp.ne.s32.totalorder %s252, %s254
      %p258 = scmp.eq.s32.totalorder %s20, 0
      %p259 = por %p257, %p258
      %p260 = scmp.ne.s32.totalorder %s252, %s254
      %p261 = scmp.eq.s32.totalorder %s25, 11
      %p262 = por %p260, %p261
      %p263 = scmp.ne.s32.totalorder %s254, %s255
      %p264 = scmp.eq.s32.totalorder %s25, 0
      %p265 = por %p263, %p264
      %p266 = scmp.ne.s32.totalorder %s254, %s255
      %p267 = scmp.eq.s32.totalorder %s26, 11
      %p268 = por %p266, %p267
      %p270 = scmp.ne.s32.totalorder %s255, %s269
      %p271 = scmp.eq.s32.totalorder %s26, 0
      %p272 = por %p270, %p271
      %s274 = sadd.s32 %s273, 1
      %p277 = scmp.eq.s32.totalorder %s20, 11
      %p278 = scmp.ne.s32.totalorder %s273, %s275
      %p279 = scmp.eq.s32.totalorder %s20, 0
      %p280 = por %p278, %p279
      %p281 = scmp.ne.s32.totalorder %s273, %s275
      %p282 = scmp.eq.s32.totalorder %s25, 11
      %p283 = por %p281, %p282
      %p284 = scmp.ne.s32.totalorder %s275, %s276
      %p285 = scmp.eq.s32.totalorder %s25, 0
      %p286 = por %p284, %p285
      %p287 = scmp.ne.s32.totalorder %s275, %s276
      %p288 = scmp.eq.s32.totalorder %s26, 11
      %p289 = por %p287, %p288
      %p291 = scmp.ne.s32.totalorder %s276, %s290
      %p292 = scmp.eq.s32.totalorder %s26, 0
      %p293 = por %p291, %p292
      %s295 = sadd.s32 %s294, 1
      %p298 = scmp.eq.s32.totalorder %s20, 11
      %p299 = scmp.ne.s32.totalorder %s294, %s296
      %p300 = scmp.eq.s32.totalorder %s20, 0
      %p301 = por %p299, %p300
      %p302 = scmp.ne.s32.totalorder %s294, %s296
      %p303 = scmp.eq.s32.totalorder %s25, 11
      %p304 = por %p302, %p303
      %p305 = scmp.ne.s32.totalorder %s296, %s297
      %p306 = scmp.eq.s32.totalorder %s25, 0
      %p307 = por %p305, %p306
      %p308 = scmp.ne.s32.totalorder %s296, %s297
      %p309 = scmp.eq.s32.totalorder %s26, 11
      %p310 = por %p308, %p309
      %p312 = scmp.ne.s32.totalorder %s297, %s311
      %p313 = scmp.eq.s32.totalorder %s26, 0
      %p314 = por %p312, %p313
      %s315 = ssub.s32 %s27, %s39
      %p316 = scmp.eq.s32.totalorder %s315, 0
      %s318 = sadd.s32 %s317, 1
      %s319 = scalar_select %p316, %s317, %s318
      %p322 = pneg %p316
      %p323 = scmp.eq.s32.totalorder %s20, 11
      %p324 = por %p322, %p323
      %p325 = scmp.ne.s32.totalorder %s317, %s320
      %p326 = scmp.eq.s32.totalorder %s20, 0
      %p327 = por %p325, %p326
      %p328 = scmp.ne.s32.totalorder %s317, %s320
      %p329 = scmp.eq.s32.totalorder %s25, 11
      %p330 = por %p328, %p329
      %p331 = scmp.ne.s32.totalorder %s320, %s321
      %p332 = scmp.eq.s32.totalorder %s25, 0
      %p333 = por %p331, %p332
      %p334 = scmp.ne.s32.totalorder %s320, %s321
      %p335 = scmp.eq.s32.totalorder %s26, 11
      %p336 = por %p334, %p335
      %p338 = scmp.ne.s32.totalorder %s321, %s337
      %p339 = scmp.eq.s32.totalorder %s26, 0
      %p340 = por %p338, %p339
      %p341 = scmp.le.s32.totalorder 1, %s20
      %p342 = scmp.lt.s32.totalorder %s20, 13
      %p343 = pnand %p341, %p342
      %p344 = pneg %p343
      // Predicated region
      $region9: #{tpu_custom_call.1} parent=5 // pred_check
        _
      $region10: #{tpu_custom_call.1} parent=5 // pred_check_branch
        %346 = sbr.rel (%p343) target = $region12
      $region11: #{tpu_custom_call.1} parent=5 // pred_region
        %s347 = ssub.s32 %s20, 1
        // Predicated region
        $region13: #{tpu_custom_call.1} parent=11 // pred_check
          %p348 = pneg %p223
        $region14: #{tpu_custom_call.1} parent=11 // pred_check_branch
          %350 = sbr.rel (%p348) target = $region16
        $region15: #{tpu_custom_call.1} parent=11 // pred_region
          _
        $region16: #{tpu_custom_call.1} parent=11 // pred_fallthru
          _
        // Predicated region
        $region17: #{tpu_custom_call.1} parent=11 // pred_check
          %p351 = pneg %p244
        $region18: #{tpu_custom_call.1} parent=11 // pred_check_branch
          %353 = sbr.rel (%p351) target = $region20
        $region19: #{tpu_custom_call.1} parent=11 // pred_region
          _
        $region20: #{tpu_custom_call.1} parent=11 // pred_fallthru
          _
        // Predicated region
        $region21: #{tpu_custom_call.1} parent=11 // pred_check
          %p354 = pneg %p265
        $region22: #{tpu_custom_call.1} parent=11 // pred_check_branch
          %356 = sbr.rel (%p354) target = $region24
        $region23: #{tpu_custom_call.1} parent=11 // pred_region
          _
        $region24: #{tpu_custom_call.1} parent=11 // pred_fallthru
          _
        // Predicated region
        $region25: #{tpu_custom_call.1} parent=11 // pred_check
          %p357 = pneg %p286
        $region26: #{tpu_custom_call.1} parent=11 // pred_check_branch
          %359 = sbr.rel (%p357) target = $region28
        $region27: #{tpu_custom_call.1} parent=11 // pred_region
          _
        $region28: #{tpu_custom_call.1} parent=11 // pred_fallthru
          _
        // Predicated region
        $region29: #{tpu_custom_call.1} parent=11 // pred_check
          %p360 = pneg %p307
        $region30: #{tpu_custom_call.1} parent=11 // pred_check_branch
          %362 = sbr.rel (%p360) target = $region32
        $region31: #{tpu_custom_call.1} parent=11 // pred_region
          _
        $region32: #{tpu_custom_call.1} parent=11 // pred_fallthru
          _
      $region12: #{tpu_custom_call.1} parent=5 // pred_fallthru
        _
      %p363 = scmp.lt.s32.totalorder %s20, 12
      // Predicated region
      $region33: #{tpu_custom_call.1} parent=5 // pred_check
        %p364 = pneg %p363
      $region34: #{tpu_custom_call.1} parent=5 // pred_check_branch
        %366 = sbr.rel (%p364) target = $region36
      $region35: #{tpu_custom_call.1} parent=5 // pred_region
        // Predicated region
        $region37: #{tpu_custom_call.1} parent=35 // pred_check
          %p367 = pneg %p52
        $region38: #{tpu_custom_call.1} parent=35 // pred_check_branch
          %369 = sbr.rel (%p367) target = $region40
        $region39: #{tpu_custom_call.1} parent=35 // pred_region
          %s370 = smul.u32 32, %s27
          %p371 = scmp.lt.s32.totalorder %s370, 63
          %s372 = scalar_select %p371, %s370, 63
          %s373 = smul.addr %s372, 8
          %s374 = scalar_lea.vmem %s0, %s373
          %s375 = smul.u32 32, %s27
        $region40: #{tpu_custom_call.1} parent=35 // pred_fallthru
          _
        // Predicated region
        $region41: #{tpu_custom_call.1} parent=35 // pred_check
          %p376 = pneg %p78
        $region42: #{tpu_custom_call.1} parent=35 // pred_check_branch
          %378 = sbr.rel (%p376) target = $region44
        $region43: #{tpu_custom_call.1} parent=35 // pred_region
          %s379 = smul.u32 32, %s27
          %p380 = scmp.lt.s32.totalorder %s379, 63
          %s381 = scalar_select %p380, %s379, 63
          %s382 = smul.addr %s381, 8
          %s383 = scalar_lea.vmem %s1, %s382
          %s384 = smul.u32 32, %s27
        $region44: #{tpu_custom_call.1} parent=35 // pred_fallthru
          _
        // Predicated region
        $region45: #{tpu_custom_call.1} parent=35 // pred_check
          %p385 = pneg %p108
        $region46: #{tpu_custom_call.1} parent=35 // pred_check_branch
          %387 = sbr.rel (%p385) target = $region48
        $region47: #{tpu_custom_call.1} parent=35 // pred_region
          %p388 = scmp.lt.s32.totalorder %s28, 2
          %s389 = scalar_select %p388, %s28, 2
          %p390 = scmp.lt.s32.totalorder %s389, 2
          %s391 = scalar_select %p390, %s389, 2
          %s392 = smul.addr %s391, 8
          %s393 = scalar_lea.vmem %s2, %s392
          %p394 = scmp.lt.s32.totalorder %s28, 2
          %s395 = scalar_select %p394, %s28, 2
        $region48: #{tpu_custom_call.1} parent=35 // pred_fallthru
          _
        // Predicated region
        $region49: #{tpu_custom_call.1} parent=35 // pred_check
          %p396 = pneg %p138
        $region50: #{tpu_custom_call.1} parent=35 // pred_check_branch
          %398 = sbr.rel (%p396) target = $region52
        $region51: #{tpu_custom_call.1} parent=35 // pred_region
          %p399 = scmp.lt.s32.totalorder %s28, 2
          %s400 = scalar_select %p399, %s28, 2
          %p401 = scmp.lt.s32.totalorder %s400, 2
          %s402 = scalar_select %p401, %s400, 2
          %s403 = scalar_lea.vmem %s3, %s402
          %p404 = scmp.lt.s32.totalorder %s28, 2
          %s405 = scalar_select %p404, %s28, 2
        $region52: #{tpu_custom_call.1} parent=35 // pred_fallthru
          _
        // Predicated region
        $region53: #{tpu_custom_call.1} parent=35 // pred_check
          %p406 = pneg %p170
        $region54: #{tpu_custom_call.1} parent=35 // pred_check_branch
          %408 = sbr.rel (%p406) target = $region56
        $region55: #{tpu_custom_call.1} parent=35 // pred_region
          %s409 = ssub.s32 %s28, 3
          %p410 = scmp.gt.s32.totalorder %s409, 0
          %s411 = scalar_select %p410, %s409, 0
          %s412 = smul.u32 16, %s411
          %p413 = scmp.lt.s32.totalorder %s412, 47
          %s414 = scalar_select %p413, %s412, 47
          %s415 = smul.addr %s414, 4
          %s416 = scalar_lea.vmem %s4, %s415
          %s417 = ssub.s32 %s28, 3
          %p418 = scmp.gt.s32.totalorder %s417, 0
          %s419 = scalar_select %p418, %s417, 0
          %s420 = smul.u32 16, %s419
        $region56: #{tpu_custom_call.1} parent=35 // pred_fallthru
          _
        // Predicated region
        $region57: #{tpu_custom_call.1} parent=35 // pred_check
          %p421 = pneg %p196
        $region58: #{tpu_custom_call.1} parent=35 // pred_check_branch
          %423 = sbr.rel (%p421) target = $region60
        $region59: #{tpu_custom_call.1} parent=35 // pred_region
          %s424 = smul.u32 32, %s27
          %p425 = scmp.lt.s32.totalorder %s424, 63
          %s426 = scalar_select %p425, %s424, 63
          %s427 = smul.addr %s426, 4
          %s428 = scalar_lea.vmem %s5, %s427
          %s429 = smul.u32 32, %s27
        $region60: #{tpu_custom_call.1} parent=35 // pred_fallthru
          _
      $region36: #{tpu_custom_call.1} parent=5 // pred_fallthru
        _
      %p430 = scmp.le.s32.totalorder 1, %s20
      %p431 = scmp.lt.s32.totalorder %s20, 13
      %p432 = pnand %p430, %p431
      %p433 = pneg %p432
      // Predicated region
      $region61: #{tpu_custom_call.1} parent=5 // pred_check
        _
      $region62: #{tpu_custom_call.1} parent=5 // pred_check_branch
        %435 = sbr.rel (%p432) target = $region64
      $region63: #{tpu_custom_call.1} parent=5 // pred_region
        %s436 = ssub.s32 %s20, 1
        %s437 = smul.u32 32, %s29
        %p438 = scmp.lt.s32.totalorder %s437, 63
        %s439 = scalar_select %p438, %s437, 63
        %s440 = smul.addr %s439, 8
        %s441 = scalar_lea.vmem %s0, %s440
        %p442 = pneg %p58
        %p443 = pneg %p55
        %s444 = smul.u32 32, %s29
        %p445 = scmp.lt.s32.totalorder %s444, 63
        %s446 = scalar_select %p445, %s444, 63
        %s447 = smul.addr %s446, 8
        %s448 = scalar_lea.vmem %s1, %s447
        %p449 = pneg %p84
        %p450 = pneg %p81
        %p451 = scmp.lt.s32.totalorder %s30, 2
        %s452 = scalar_select %p451, %s30, 2
        %p453 = scmp.lt.s32.totalorder %s452, 2
        %s454 = scalar_select %p453, %s452, 2
        %s455 = smul.addr %s454, 8
        %s456 = scalar_lea.vmem %s2, %s455
        %p457 = pneg %p114
        %p458 = pneg %p111
        %p459 = scmp.lt.s32.totalorder %s30, 2
        %s460 = scalar_select %p459, %s30, 2
        %p461 = scmp.lt.s32.totalorder %s460, 2
        %s462 = scalar_select %p461, %s460, 2
        %s463 = scalar_lea.vmem %s3, %s462
        %p464 = pneg %p144
        %p465 = pneg %p141
        %s466 = ssub.s32 %s30, 3
        %p467 = scmp.gt.s32.totalorder %s466, 0
        %s468 = scalar_select %p467, %s466, 0
        %s469 = smul.u32 16, %s468
        %p470 = scmp.lt.s32.totalorder %s469, 47
        %s471 = scalar_select %p470, %s469, 47
        %s472 = smul.addr %s471, 4
        %s473 = scalar_lea.vmem %s4, %s472
        %p474 = pneg %p176
        %p475 = pneg %p173
        %s476 = smul.u32 32, %s29
        %p477 = scmp.lt.s32.totalorder %s476, 63
        %s478 = scalar_select %p477, %s476, 63
        %s479 = smul.addr %s478, 4
        %s480 = scalar_lea.vmem %s5, %s479
        %p481 = pneg %p202
        %p482 = pneg %p199
        %p483 = pneg %p223
        %p484 = pneg %p220
        %p485 = pneg %p244
        %p486 = pneg %p241
        %p487 = pneg %p265
        %p488 = pneg %p262
        %p489 = pneg %p286
        %p490 = pneg %p283
        %p491 = pneg %p307
        %p492 = pneg %p304
        %p493 = pneg %p333
        %p494 = pneg %p330
        %s495 = sand.u32 %s320, 1
        %s496 = scalar_lea.sflag [#allocation10], %s495
        %s497 = sand.u32 %s320, 1
        %s498 = smul.addr %s497, 128
        %s499 = scalar_lea.vmem [#allocation9], %s498
        %s500 = smul.u32 32, %s29
        %p501 = scmp.lt.s32.totalorder %s500, 63
        %s502 = scalar_select %p501, %s500, 63
        %s503 = smul.addr %s502, 8
        %s504 = scalar_lea.vmem %s0, %s503
        %s505 = smul.u32 32, %s29
        %s506 = smul.u32 32, %s29
        %p507 = scmp.lt.s32.totalorder %s506, 63
        %s508 = scalar_select %p507, %s506, 63
        %s509 = smul.addr %s508, 8
        %s510 = scalar_lea.vmem %s1, %s509
        %s511 = smul.u32 32, %s29
        %p512 = scmp.lt.s32.totalorder %s30, 2
        %s513 = scalar_select %p512, %s30, 2
        %p514 = scmp.lt.s32.totalorder %s513, 2
        %s515 = scalar_select %p514, %s513, 2
        %s516 = smul.addr %s515, 8
        %s517 = scalar_lea.vmem %s2, %s516
        %p518 = scmp.lt.s32.totalorder %s30, 2
        %s519 = scalar_select %p518, %s30, 2
        %p520 = scmp.lt.s32.totalorder %s30, 2
        %s521 = scalar_select %p520, %s30, 2
        %p522 = scmp.lt.s32.totalorder %s521, 2
        %s523 = scalar_select %p522, %s521, 2
        %s524 = scalar_lea.vmem %s3, %s523
        %p525 = scmp.lt.s32.totalorder %s30, 2
        %s526 = scalar_select %p525, %s30, 2
        %s527 = ssub.s32 %s30, 3
        %p528 = scmp.gt.s32.totalorder %s527, 0
        %s529 = scalar_select %p528, %s527, 0
        %s530 = smul.u32 16, %s529
        %p531 = scmp.lt.s32.totalorder %s530, 47
        %s532 = scalar_select %p531, %s530, 47
        %s533 = smul.addr %s532, 4
        %s534 = scalar_lea.vmem %s4, %s533
        %s535 = ssub.s32 %s30, 3
        %p536 = scmp.gt.s32.totalorder %s535, 0
        %s537 = scalar_select %p536, %s535, 0
        %s538 = smul.u32 16, %s537
        %s539 = smul.u32 32, %s29
        %p540 = scmp.lt.s32.totalorder %s539, 63
        %s541 = scalar_select %p540, %s539, 63
        %s542 = smul.addr %s541, 4
        %s543 = scalar_lea.vmem %s5, %s542
        %s544 = smul.u32 32, %s29
        %s545 = smul.u32 32, %s29
        %p547 = scmp.eq.s32.totalorder %s30, 0
        // Predicated region
        $region65: #{tpu_custom_call.1} parent=63 // pred_check
          %p548 = pneg %p547
        $region66: #{tpu_custom_call.1} parent=63 // pred_check_branch
          %550 = sbr.rel (%p548) target = $region68
        $region67: #{tpu_custom_call.1} parent=63 // pred_region
          %vm551 = vcmask 7168
          %552 = vst.msk [vmem:[#allocation2] sm:$0xff] %vm551, inf
          %553 = vst.msk [vmem:[#allocation2 + $0x8] sm:$0xff] %vm551, inf
          %554 = vst.msk [vmem:[#allocation2 + $0x10] sm:$0xff] %vm551, inf
          %555 = vst.msk [vmem:[#allocation2 + $0x18] sm:$0xff] %vm551, inf
          %556 = vst.msk [vmem:[#allocation2 + $0x20] sm:$0xff] %vm551, inf
          %557 = vst.msk [vmem:[#allocation2 + $0x28] sm:$0xff] %vm551, inf
          %558 = vst.msk [vmem:[#allocation2 + $0x30] sm:$0xff] %vm551, inf
          %559 = vst.msk [vmem:[#allocation2 + $0x38] sm:$0xff] %vm551, inf
          %560 = vst.msk [vmem:[#allocation2 + $0x40] sm:$0xff] %vm551, inf
          %561 = vst.msk [vmem:[#allocation2 + $0x48] sm:$0xff] %vm551, inf
          %562 = vst.msk [vmem:[#allocation2 + $0x50] sm:$0xff] %vm551, inf
          %563 = vst.msk [vmem:[#allocation2 + $0x58] sm:$0xff] %vm551, inf
          %564 = vst.msk [vmem:[#allocation2 + $0x60] sm:$0xff] %vm551, inf
          %565 = vst.msk [vmem:[#allocation2 + $0x68] sm:$0xff] %vm551, inf
          %566 = vst.msk [vmem:[#allocation2 + $0x70] sm:$0xff] %vm551, inf
          %567 = vst.msk [vmem:[#allocation2 + $0x78] sm:$0xff] %vm551, inf
          %568 = vst.msk [vmem:[#allocation2 + $0x80] sm:$0xff] %vm551, inf
          %569 = vst.msk [vmem:[#allocation2 + $0x88] sm:$0xff] %vm551, inf
          %570 = vst.msk [vmem:[#allocation2 + $0x90] sm:$0xff] %vm551, inf
          %571 = vst.msk [vmem:[#allocation2 + $0x98] sm:$0xff] %vm551, inf
          %572 = vst.msk [vmem:[#allocation2 + $0xa0] sm:$0xff] %vm551, inf
          %573 = vst.msk [vmem:[#allocation2 + $0xa8] sm:$0xff] %vm551, inf
          %574 = vst.msk [vmem:[#allocation2 + $0xb0] sm:$0xff] %vm551, inf
          %575 = vst.msk [vmem:[#allocation2 + $0xb8] sm:$0xff] %vm551, inf
          %576 = vst.msk [vmem:[#allocation2 + $0xc0] sm:$0xff] %vm551, inf
          %577 = vst.msk [vmem:[#allocation2 + $0xc8] sm:$0xff] %vm551, inf
          %578 = vst.msk [vmem:[#allocation2 + $0xd0] sm:$0xff] %vm551, inf
          %579 = vst.msk [vmem:[#allocation2 + $0xd8] sm:$0xff] %vm551, inf
          %580 = vst.msk [vmem:[#allocation2 + $0xe0] sm:$0xff] %vm551, inf
          %581 = vst.msk [vmem:[#allocation2 + $0xe8] sm:$0xff] %vm551, inf
          %582 = vst.msk [vmem:[#allocation2 + $0xf0] sm:$0xff] %vm551, inf
          %583 = vst.msk [vmem:[#allocation2 + $0xf8] sm:$0xff] %vm551, inf
          %584 = vst.msk [vmem:[#allocation3] sm:$0xff] %vm551, inf
          %585 = vst.msk [vmem:[#allocation3 + $0x8] sm:$0xff] %vm551, inf
          %586 = vst.msk [vmem:[#allocation3 + $0x10] sm:$0xff] %vm551, inf
          %587 = vst.msk [vmem:[#allocation3 + $0x18] sm:$0xff] %vm551, inf
          %588 = vst.msk [vmem:[#allocation3 + $0x20] sm:$0xff] %vm551, inf
          %589 = vst.msk [vmem:[#allocation3 + $0x28] sm:$0xff] %vm551, inf
          %590 = vst.msk [vmem:[#allocation3 + $0x30] sm:$0xff] %vm551, inf
          %591 = vst.msk [vmem:[#allocation3 + $0x38] sm:$0xff] %vm551, inf
          %592 = vst.msk [vmem:[#allocation3 + $0x40] sm:$0xff] %vm551, inf
          %593 = vst.msk [vmem:[#allocation3 + $0x48] sm:$0xff] %vm551, inf
          %594 = vst.msk [vmem:[#allocation3 + $0x50] sm:$0xff] %vm551, inf
          %595 = vst.msk [vmem:[#allocation3 + $0x58] sm:$0xff] %vm551, inf
          %596 = vst.msk [vmem:[#allocation3 + $0x60] sm:$0xff] %vm551, inf
          %597 = vst.msk [vmem:[#allocation3 + $0x68] sm:$0xff] %vm551, inf
          %598 = vst.msk [vmem:[#allocation3 + $0x70] sm:$0xff] %vm551, inf
          %599 = vst.msk [vmem:[#allocation3 + $0x78] sm:$0xff] %vm551, inf
          %600 = vst.msk [vmem:[#allocation3 + $0x80] sm:$0xff] %vm551, inf
          %601 = vst.msk [vmem:[#allocation3 + $0x88] sm:$0xff] %vm551, inf
          %602 = vst.msk [vmem:[#allocation3 + $0x90] sm:$0xff] %vm551, inf
          %603 = vst.msk [vmem:[#allocation3 + $0x98] sm:$0xff] %vm551, inf
          %604 = vst.msk [vmem:[#allocation3 + $0xa0] sm:$0xff] %vm551, inf
          %605 = vst.msk [vmem:[#allocation3 + $0xa8] sm:$0xff] %vm551, inf
          %606 = vst.msk [vmem:[#allocation3 + $0xb0] sm:$0xff] %vm551, inf
          %607 = vst.msk [vmem:[#allocation3 + $0xb8] sm:$0xff] %vm551, inf
          %608 = vst.msk [vmem:[#allocation3 + $0xc0] sm:$0xff] %vm551, inf
          %609 = vst.msk [vmem:[#allocation3 + $0xc8] sm:$0xff] %vm551, inf
          %610 = vst.msk [vmem:[#allocation3 + $0xd0] sm:$0xff] %vm551, inf
          %611 = vst.msk [vmem:[#allocation3 + $0xd8] sm:$0xff] %vm551, inf
          %612 = vst.msk [vmem:[#allocation3 + $0xe0] sm:$0xff] %vm551, inf
          %613 = vst.msk [vmem:[#allocation3 + $0xe8] sm:$0xff] %vm551, inf
          %614 = vst.msk [vmem:[#allocation3 + $0xf0] sm:$0xff] %vm551, inf
          %615 = vst.msk [vmem:[#allocation3 + $0xf8] sm:$0xff] %vm551, inf
          %616 = vst.msk [vmem:[#allocation4] sm:$0xff] %vm551, inf
          %617 = vst.msk [vmem:[#allocation4 + $0x8] sm:$0xff] %vm551, inf
          %618 = vst.msk [vmem:[#allocation4 + $0x10] sm:$0xff] %vm551, inf
          %619 = vst.msk [vmem:[#allocation4 + $0x18] sm:$0xff] %vm551, inf
          %620 = vst.msk [vmem:[#allocation4 + $0x20] sm:$0xff] %vm551, inf
          %621 = vst.msk [vmem:[#allocation4 + $0x28] sm:$0xff] %vm551, inf
          %622 = vst.msk [vmem:[#allocation4 + $0x30] sm:$0xff] %vm551, inf
          %623 = vst.msk [vmem:[#allocation4 + $0x38] sm:$0xff] %vm551, inf
          %624 = vst.msk [vmem:[#allocation4 + $0x40] sm:$0xff] %vm551, inf
          %625 = vst.msk [vmem:[#allocation4 + $0x48] sm:$0xff] %vm551, inf
          %626 = vst.msk [vmem:[#allocation4 + $0x50] sm:$0xff] %vm551, inf
          %627 = vst.msk [vmem:[#allocation4 + $0x58] sm:$0xff] %vm551, inf
          %628 = vst.msk [vmem:[#allocation4 + $0x60] sm:$0xff] %vm551, inf
          %629 = vst.msk [vmem:[#allocation4 + $0x68] sm:$0xff] %vm551, inf
          %630 = vst.msk [vmem:[#allocation4 + $0x70] sm:$0xff] %vm551, inf
          %631 = vst.msk [vmem:[#allocation4 + $0x78] sm:$0xff] %vm551, inf
          %632 = vst.msk [vmem:[#allocation4 + $0x80] sm:$0xff] %vm551, inf
          %633 = vst.msk [vmem:[#allocation4 + $0x88] sm:$0xff] %vm551, inf
          %634 = vst.msk [vmem:[#allocation4 + $0x90] sm:$0xff] %vm551, inf
          %635 = vst.msk [vmem:[#allocation4 + $0x98] sm:$0xff] %vm551, inf
          %636 = vst.msk [vmem:[#allocation4 + $0xa0] sm:$0xff] %vm551, inf
          %637 = vst.msk [vmem:[#allocation4 + $0xa8] sm:$0xff] %vm551, inf
          %638 = vst.msk [vmem:[#allocation4 + $0xb0] sm:$0xff] %vm551, inf
          %639 = vst.msk [vmem:[#allocation4 + $0xb8] sm:$0xff] %vm551, inf
          %640 = vst.msk [vmem:[#allocation4 + $0xc0] sm:$0xff] %vm551, inf
          %641 = vst.msk [vmem:[#allocation4 + $0xc8] sm:$0xff] %vm551, inf
          %642 = vst.msk [vmem:[#allocation4 + $0xd0] sm:$0xff] %vm551, inf
          %643 = vst.msk [vmem:[#allocation4 + $0xd8] sm:$0xff] %vm551, inf
          %644 = vst.msk [vmem:[#allocation4 + $0xe0] sm:$0xff] %vm551, inf
          %645 = vst.msk [vmem:[#allocation4 + $0xe8] sm:$0xff] %vm551, inf
          %646 = vst.msk [vmem:[#allocation4 + $0xf0] sm:$0xff] %vm551, inf
          %647 = vst.msk [vmem:[#allocation4 + $0xf8] sm:$0xff] %vm551, inf
          %648 = vst.msk [vmem:[#allocation5] sm:$0xff] %vm551, 4294967295
          %649 = vst.msk [vmem:[#allocation5 + $0x8] sm:$0xff] %vm551, 4294967295
          %650 = vst.msk [vmem:[#allocation5 + $0x10] sm:$0xff] %vm551, 4294967295
          %651 = vst.msk [vmem:[#allocation5 + $0x18] sm:$0xff] %vm551, 4294967295
          %652 = vst.msk [vmem:[#allocation5 + $0x20] sm:$0xff] %vm551, 4294967295
          %653 = vst.msk [vmem:[#allocation5 + $0x28] sm:$0xff] %vm551, 4294967295
          %654 = vst.msk [vmem:[#allocation5 + $0x30] sm:$0xff] %vm551, 4294967295
          %655 = vst.msk [vmem:[#allocation5 + $0x38] sm:$0xff] %vm551, 4294967295
          %656 = vst.msk [vmem:[#allocation5 + $0x40] sm:$0xff] %vm551, 4294967295
          %657 = vst.msk [vmem:[#allocation5 + $0x48] sm:$0xff] %vm551, 4294967295
          %658 = vst.msk [vmem:[#allocation5 + $0x50] sm:$0xff] %vm551, 4294967295
          %659 = vst.msk [vmem:[#allocation5 + $0x58] sm:$0xff] %vm551, 4294967295
          %660 = vst.msk [vmem:[#allocation5 + $0x60] sm:$0xff] %vm551, 4294967295
          %661 = vst.msk [vmem:[#allocation5 + $0x68] sm:$0xff] %vm551, 4294967295
          %662 = vst.msk [vmem:[#allocation5 + $0x70] sm:$0xff] %vm551, 4294967295
          %663 = vst.msk [vmem:[#allocation5 + $0x78] sm:$0xff] %vm551, 4294967295
          %664 = vst.msk [vmem:[#allocation5 + $0x80] sm:$0xff] %vm551, 4294967295
          %665 = vst.msk [vmem:[#allocation5 + $0x88] sm:$0xff] %vm551, 4294967295
          %666 = vst.msk [vmem:[#allocation5 + $0x90] sm:$0xff] %vm551, 4294967295
          %667 = vst.msk [vmem:[#allocation5 + $0x98] sm:$0xff] %vm551, 4294967295
          %668 = vst.msk [vmem:[#allocation5 + $0xa0] sm:$0xff] %vm551, 4294967295
          %669 = vst.msk [vmem:[#allocation5 + $0xa8] sm:$0xff] %vm551, 4294967295
          %670 = vst.msk [vmem:[#allocation5 + $0xb0] sm:$0xff] %vm551, 4294967295
          %671 = vst.msk [vmem:[#allocation5 + $0xb8] sm:$0xff] %vm551, 4294967295
          %672 = vst.msk [vmem:[#allocation5 + $0xc0] sm:$0xff] %vm551, 4294967295
          %673 = vst.msk [vmem:[#allocation5 + $0xc8] sm:$0xff] %vm551, 4294967295
          %674 = vst.msk [vmem:[#allocation5 + $0xd0] sm:$0xff] %vm551, 4294967295
          %675 = vst.msk [vmem:[#allocation5 + $0xd8] sm:$0xff] %vm551, 4294967295
          %676 = vst.msk [vmem:[#allocation5 + $0xe0] sm:$0xff] %vm551, 4294967295
          %677 = vst.msk [vmem:[#allocation5 + $0xe8] sm:$0xff] %vm551, 4294967295
          %678 = vst.msk [vmem:[#allocation5 + $0xf0] sm:$0xff] %vm551, 4294967295
          %679 = vst.msk [vmem:[#allocation5 + $0xf8] sm:$0xff] %vm551, 4294967295
          %680 = vst.msk [vmem:[#allocation6] sm:$0xff] %vm551, 4294967295
          %681 = vst.msk [vmem:[#allocation6 + $0x8] sm:$0xff] %vm551, 4294967295
          %682 = vst.msk [vmem:[#allocation6 + $0x10] sm:$0xff] %vm551, 4294967295
          %683 = vst.msk [vmem:[#allocation6 + $0x18] sm:$0xff] %vm551, 4294967295
          %684 = vst.msk [vmem:[#allocation6 + $0x20] sm:$0xff] %vm551, 4294967295
          %685 = vst.msk [vmem:[#allocation6 + $0x28] sm:$0xff] %vm551, 4294967295
          %686 = vst.msk [vmem:[#allocation6 + $0x30] sm:$0xff] %vm551, 4294967295
          %687 = vst.msk [vmem:[#allocation6 + $0x38] sm:$0xff] %vm551, 4294967295
          %688 = vst.msk [vmem:[#allocation6 + $0x40] sm:$0xff] %vm551, 4294967295
          %689 = vst.msk [vmem:[#allocation6 + $0x48] sm:$0xff] %vm551, 4294967295
          %690 = vst.msk [vmem:[#allocation6 + $0x50] sm:$0xff] %vm551, 4294967295
          %691 = vst.msk [vmem:[#allocation6 + $0x58] sm:$0xff] %vm551, 4294967295
          %692 = vst.msk [vmem:[#allocation6 + $0x60] sm:$0xff] %vm551, 4294967295
          %693 = vst.msk [vmem:[#allocation6 + $0x68] sm:$0xff] %vm551, 4294967295
          %694 = vst.msk [vmem:[#allocation6 + $0x70] sm:$0xff] %vm551, 4294967295
          %695 = vst.msk [vmem:[#allocation6 + $0x78] sm:$0xff] %vm551, 4294967295
          %696 = vst.msk [vmem:[#allocation6 + $0x80] sm:$0xff] %vm551, 4294967295
          %697 = vst.msk [vmem:[#allocation6 + $0x88] sm:$0xff] %vm551, 4294967295
          %698 = vst.msk [vmem:[#allocation6 + $0x90] sm:$0xff] %vm551, 4294967295
          %699 = vst.msk [vmem:[#allocation6 + $0x98] sm:$0xff] %vm551, 4294967295
          %700 = vst.msk [vmem:[#allocation6 + $0xa0] sm:$0xff] %vm551, 4294967295
          %701 = vst.msk [vmem:[#allocation6 + $0xa8] sm:$0xff] %vm551, 4294967295
          %702 = vst.msk [vmem:[#allocation6 + $0xb0] sm:$0xff] %vm551, 4294967295
          %703 = vst.msk [vmem:[#allocation6 + $0xb8] sm:$0xff] %vm551, 4294967295
          %704 = vst.msk [vmem:[#allocation6 + $0xc0] sm:$0xff] %vm551, 4294967295
          %705 = vst.msk [vmem:[#allocation6 + $0xc8] sm:$0xff] %vm551, 4294967295
          %706 = vst.msk [vmem:[#allocation6 + $0xd0] sm:$0xff] %vm551, 4294967295
          %707 = vst.msk [vmem:[#allocation6 + $0xd8] sm:$0xff] %vm551, 4294967295
          %708 = vst.msk [vmem:[#allocation6 + $0xe0] sm:$0xff] %vm551, 4294967295
          %709 = vst.msk [vmem:[#allocation6 + $0xe8] sm:$0xff] %vm551, 4294967295
          %710 = vst.msk [vmem:[#allocation6 + $0xf0] sm:$0xff] %vm551, 4294967295
          %711 = vst.msk [vmem:[#allocation6 + $0xf8] sm:$0xff] %vm551, 4294967295
          %712 = vst.msk [vmem:[#allocation7] sm:$0xff] %vm551, 4294967295
          %713 = vst.msk [vmem:[#allocation7 + $0x8] sm:$0xff] %vm551, 4294967295
          %714 = vst.msk [vmem:[#allocation7 + $0x10] sm:$0xff] %vm551, 4294967295
          %715 = vst.msk [vmem:[#allocation7 + $0x18] sm:$0xff] %vm551, 4294967295
          %716 = vst.msk [vmem:[#allocation7 + $0x20] sm:$0xff] %vm551, 4294967295
          %717 = vst.msk [vmem:[#allocation7 + $0x28] sm:$0xff] %vm551, 4294967295
          %718 = vst.msk [vmem:[#allocation7 + $0x30] sm:$0xff] %vm551, 4294967295
          %719 = vst.msk [vmem:[#allocation7 + $0x38] sm:$0xff] %vm551, 4294967295
          %720 = vst.msk [vmem:[#allocation7 + $0x40] sm:$0xff] %vm551, 4294967295
          %721 = vst.msk [vmem:[#allocation7 + $0x48] sm:$0xff] %vm551, 4294967295
          %722 = vst.msk [vmem:[#allocation7 + $0x50] sm:$0xff] %vm551, 4294967295
          %723 = vst.msk [vmem:[#allocation7 + $0x58] sm:$0xff] %vm551, 4294967295
          %724 = vst.msk [vmem:[#allocation7 + $0x60] sm:$0xff] %vm551, 4294967295
          %725 = vst.msk [vmem:[#allocation7 + $0x68] sm:$0xff] %vm551, 4294967295
          %726 = vst.msk [vmem:[#allocation7 + $0x70] sm:$0xff] %vm551, 4294967295
          %727 = vst.msk [vmem:[#allocation7 + $0x78] sm:$0xff] %vm551, 4294967295
          %728 = vst.msk [vmem:[#allocation7 + $0x80] sm:$0xff] %vm551, 4294967295
          %729 = vst.msk [vmem:[#allocation7 + $0x88] sm:$0xff] %vm551, 4294967295
          %730 = vst.msk [vmem:[#allocation7 + $0x90] sm:$0xff] %vm551, 4294967295
          %731 = vst.msk [vmem:[#allocation7 + $0x98] sm:$0xff] %vm551, 4294967295
          %732 = vst.msk [vmem:[#allocation7 + $0xa0] sm:$0xff] %vm551, 4294967295
          %733 = vst.msk [vmem:[#allocation7 + $0xa8] sm:$0xff] %vm551, 4294967295
          %734 = vst.msk [vmem:[#allocation7 + $0xb0] sm:$0xff] %vm551, 4294967295
          %735 = vst.msk [vmem:[#allocation7 + $0xb8] sm:$0xff] %vm551, 4294967295
          %736 = vst.msk [vmem:[#allocation7 + $0xc0] sm:$0xff] %vm551, 4294967295
          %737 = vst.msk [vmem:[#allocation7 + $0xc8] sm:$0xff] %vm551, 4294967295
          %738 = vst.msk [vmem:[#allocation7 + $0xd0] sm:$0xff] %vm551, 4294967295
          %739 = vst.msk [vmem:[#allocation7 + $0xd8] sm:$0xff] %vm551, 4294967295
          %740 = vst.msk [vmem:[#allocation7 + $0xe0] sm:$0xff] %vm551, 4294967295
          %741 = vst.msk [vmem:[#allocation7 + $0xe8] sm:$0xff] %vm551, 4294967295
          %742 = vst.msk [vmem:[#allocation7 + $0xf0] sm:$0xff] %vm551, 4294967295
          %743 = vst.msk [vmem:[#allocation7 + $0xf8] sm:$0xff] %vm551, 4294967295
        $region68: #{tpu_custom_call.1} parent=63 // pred_fallthru
          _
        %p744 = scmp.lt.s32.totalorder %s30, 3
        // Predicated region
        $region69: #{tpu_custom_call.1} parent=63 // pred_check
          %p745 = pneg %p744
        $region70: #{tpu_custom_call.1} parent=63 // pred_check_branch
          %747 = sbr.rel (%p745) target = $region72
        $region71: #{tpu_custom_call.1} parent=63 // pred_region
          %v748 = vld [vmem:[%s504] sm:$0xff]
          %v749 = vld [vmem:[%s504 + $0x8] sm:$0xff]
          %v750 = vld [vmem:[%s504 + $0x10] sm:$0xff]
          %v751 = vld [vmem:[%s504 + $0x18] sm:$0xff]
          %v752 = vld [vmem:[%s504 + $0x20] sm:$0xff]
          %v753 = vld [vmem:[%s504 + $0x28] sm:$0xff]
          %v754 = vld [vmem:[%s504 + $0x30] sm:$0xff]
          %v755 = vld [vmem:[%s504 + $0x38] sm:$0xff]
          %v756 = vld [vmem:[%s504 + $0x40] sm:$0xff]
          %v757 = vld [vmem:[%s504 + $0x48] sm:$0xff]
          %v758 = vld [vmem:[%s504 + $0x50] sm:$0xff]
          %v759 = vld [vmem:[%s504 + $0x58] sm:$0xff]
          %v760 = vld [vmem:[%s504 + $0x60] sm:$0xff]
          %v761 = vld [vmem:[%s504 + $0x68] sm:$0xff]
          %v762 = vld [vmem:[%s504 + $0x70] sm:$0xff]
          %v763 = vld [vmem:[%s504 + $0x78] sm:$0xff]
          %v764 = vld [vmem:[%s504 + $0x80] sm:$0xff]
          %v765 = vld [vmem:[%s504 + $0x88] sm:$0xff]
          %v766 = vld [vmem:[%s504 + $0x90] sm:$0xff]
          %v767 = vld [vmem:[%s504 + $0x98] sm:$0xff]
          %v768 = vld [vmem:[%s504 + $0xa0] sm:$0xff]
          %v769 = vld [vmem:[%s504 + $0xa8] sm:$0xff]
          %v770 = vld [vmem:[%s504 + $0xb0] sm:$0xff]
          %v771 = vld [vmem:[%s504 + $0xb8] sm:$0xff]
          %v772 = vld [vmem:[%s504 + $0xc0] sm:$0xff]
          %v773 = vld [vmem:[%s504 + $0xc8] sm:$0xff]
          %v774 = vld [vmem:[%s504 + $0xd0] sm:$0xff]
          %v775 = vld [vmem:[%s504 + $0xd8] sm:$0xff]
          %v776 = vld [vmem:[%s504 + $0xe0] sm:$0xff]
          %v777 = vld [vmem:[%s504 + $0xe8] sm:$0xff]
          %v778 = vld [vmem:[%s504 + $0xf0] sm:$0xff]
          %v779 = vld [vmem:[%s504 + $0xf8] sm:$0xff]
          %v780 = vld [vmem:[%s510] sm:$0xff]
          %v781 = vld [vmem:[%s510 + $0x8] sm:$0xff]
          %v782 = vld [vmem:[%s510 + $0x10] sm:$0xff]
          %v783 = vld [vmem:[%s510 + $0x18] sm:$0xff]
          %v784 = vld [vmem:[%s510 + $0x20] sm:$0xff]
          %v785 = vld [vmem:[%s510 + $0x28] sm:$0xff]
          %v786 = vld [vmem:[%s510 + $0x30] sm:$0xff]
          %v787 = vld [vmem:[%s510 + $0x38] sm:$0xff]
          %v788 = vld [vmem:[%s510 + $0x40] sm:$0xff]
          %v789 = vld [vmem:[%s510 + $0x48] sm:$0xff]
          %v790 = vld [vmem:[%s510 + $0x50] sm:$0xff]
          %v791 = vld [vmem:[%s510 + $0x58] sm:$0xff]
          %v792 = vld [vmem:[%s510 + $0x60] sm:$0xff]
          %v793 = vld [vmem:[%s510 + $0x68] sm:$0xff]
          %v794 = vld [vmem:[%s510 + $0x70] sm:$0xff]
          %v795 = vld [vmem:[%s510 + $0x78] sm:$0xff]
          %v796 = vld [vmem:[%s510 + $0x80] sm:$0xff]
          %v797 = vld [vmem:[%s510 + $0x88] sm:$0xff]
          %v798 = vld [vmem:[%s510 + $0x90] sm:$0xff]
          %v799 = vld [vmem:[%s510 + $0x98] sm:$0xff]
          %v800 = vld [vmem:[%s510 + $0xa0] sm:$0xff]
          %v801 = vld [vmem:[%s510 + $0xa8] sm:$0xff]
          %v802 = vld [vmem:[%s510 + $0xb0] sm:$0xff]
          %v803 = vld [vmem:[%s510 + $0xb8] sm:$0xff]
          %v804 = vld [vmem:[%s510 + $0xc0] sm:$0xff]
          %v805 = vld [vmem:[%s510 + $0xc8] sm:$0xff]
          %v806 = vld [vmem:[%s510 + $0xd0] sm:$0xff]
          %v807 = vld [vmem:[%s510 + $0xd8] sm:$0xff]
          %v808 = vld [vmem:[%s510 + $0xe0] sm:$0xff]
          %v809 = vld [vmem:[%s510 + $0xe8] sm:$0xff]
          %v810 = vld [vmem:[%s510 + $0xf0] sm:$0xff]
          %v811 = vld [vmem:[%s510 + $0xf8] sm:$0xff]
          %v812 = vld [vmem:[%s517] sm:$0xff]
          %v813 = vld [vmem:[%s524] sm:$0x1]
          %v814 = vmul.f32 %v748, %v748
          %v815 = vmul.f32 %v749, %v749
          %v816 = vmul.f32 %v750, %v750
          %v817 = vmul.f32 %v751, %v751
          %v818 = vmul.f32 %v752, %v752
          %v819 = vmul.f32 %v753, %v753
          %v820 = vmul.f32 %v754, %v754
          %v821 = vmul.f32 %v755, %v755
          %v822 = vmul.f32 %v756, %v756
          %v823 = vmul.f32 %v757, %v757
          %v824 = vmul.f32 %v758, %v758
          %v825 = vmul.f32 %v759, %v759
          %v826 = vmul.f32 %v760, %v760
          %v827 = vmul.f32 %v761, %v761
          %v828 = vmul.f32 %v762, %v762
          %v829 = vmul.f32 %v763, %v763
          %v830 = vmul.f32 %v764, %v764
          %v831 = vmul.f32 %v765, %v765
          %v832 = vmul.f32 %v766, %v766
          %v833 = vmul.f32 %v767, %v767
          %v834 = vmul.f32 %v768, %v768
          %v835 = vmul.f32 %v769, %v769
          %v836 = vmul.f32 %v770, %v770
          %v837 = vmul.f32 %v771, %v771
          %v838 = vmul.f32 %v772, %v772
          %v839 = vmul.f32 %v773, %v773
          %v840 = vmul.f32 %v774, %v774
          %v841 = vmul.f32 %v775, %v775
          %v842 = vmul.f32 %v776, %v776
          %v843 = vmul.f32 %v777, %v777
          %v844 = vmul.f32 %v778, %v778
          %v845 = vmul.f32 %v779, %v779
          %vm846 = vcmask 64512
          %v847 = vsel %vm846, %v814, 0.0
          %848 = vadd.xlane.f32.xlu0 %v847
          %v849 = vpop.xlane.xlu0 %848
          %v850 = vsel %vm846, %v815, 0.0
          %851 = vadd.xlane.f32.xlu0 %v850
          %v852 = vpop.xlane.xlu0 %851
          %v853 = vsel %vm846, %v816, 0.0
          %854 = vadd.xlane.f32.xlu0 %v853
          %v855 = vpop.xlane.xlu0 %854
          %v856 = vsel %vm846, %v817, 0.0
          %857 = vadd.xlane.f32.xlu0 %v856
          %v858 = vpop.xlane.xlu0 %857
          %v859 = vsel %vm846, %v818, 0.0
          %860 = vadd.xlane.f32.xlu0 %v859
          %v861 = vpop.xlane.xlu0 %860
          %v862 = vsel %vm846, %v819, 0.0
          %863 = vadd.xlane.f32.xlu0 %v862
          %v864 = vpop.xlane.xlu0 %863
          %v865 = vsel %vm846, %v820, 0.0
          %866 = vadd.xlane.f32.xlu0 %v865
          %v867 = vpop.xlane.xlu0 %866
          %v868 = vsel %vm846, %v821, 0.0
          %869 = vadd.xlane.f32.xlu0 %v868
          %v870 = vpop.xlane.xlu0 %869
          %v871 = vsel %vm846, %v822, 0.0
          %872 = vadd.xlane.f32.xlu0 %v871
          %v873 = vpop.xlane.xlu0 %872
          %v874 = vsel %vm846, %v823, 0.0
          %875 = vadd.xlane.f32.xlu0 %v874
          %v876 = vpop.xlane.xlu0 %875
          %v877 = vsel %vm846, %v824, 0.0
          %878 = vadd.xlane.f32.xlu0 %v877
          %v879 = vpop.xlane.xlu0 %878
          %v880 = vsel %vm846, %v825, 0.0
          %881 = vadd.xlane.f32.xlu0 %v880
          %v882 = vpop.xlane.xlu0 %881
          %v883 = vsel %vm846, %v826, 0.0
          %884 = vadd.xlane.f32.xlu0 %v883
          %v885 = vpop.xlane.xlu0 %884
          %v886 = vsel %vm846, %v827, 0.0
          %887 = vadd.xlane.f32.xlu0 %v886
          %v888 = vpop.xlane.xlu0 %887
          %v889 = vsel %vm846, %v828, 0.0
          %890 = vadd.xlane.f32.xlu0 %v889
          %v891 = vpop.xlane.xlu0 %890
          %v892 = vsel %vm846, %v829, 0.0
          %893 = vadd.xlane.f32.xlu0 %v892
          %v894 = vpop.xlane.xlu0 %893
          %v895 = vsel %vm846, %v830, 0.0
          %896 = vadd.xlane.f32.xlu0 %v895
          %v897 = vpop.xlane.xlu0 %896
          %v898 = vsel %vm846, %v831, 0.0
          %899 = vadd.xlane.f32.xlu0 %v898
          %v900 = vpop.xlane.xlu0 %899
          %v901 = vsel %vm846, %v832, 0.0
          %902 = vadd.xlane.f32.xlu0 %v901
          %v903 = vpop.xlane.xlu0 %902
          %v904 = vsel %vm846, %v833, 0.0
          %905 = vadd.xlane.f32.xlu0 %v904
          %v906 = vpop.xlane.xlu0 %905
          %v907 = vsel %vm846, %v834, 0.0
          %908 = vadd.xlane.f32.xlu0 %v907
          %v909 = vpop.xlane.xlu0 %908
          %v910 = vsel %vm846, %v835, 0.0
          %911 = vadd.xlane.f32.xlu0 %v910
          %v912 = vpop.xlane.xlu0 %911
          %v913 = vsel %vm846, %v836, 0.0
          %914 = vadd.xlane.f32.xlu0 %v913
          %v915 = vpop.xlane.xlu0 %914
          %v916 = vsel %vm846, %v837, 0.0
          %917 = vadd.xlane.f32.xlu0 %v916
          %v918 = vpop.xlane.xlu0 %917
          %v919 = vsel %vm846, %v838, 0.0
          %920 = vadd.xlane.f32.xlu0 %v919
          %v921 = vpop.xlane.xlu0 %920
          %v922 = vsel %vm846, %v839, 0.0
          %923 = vadd.xlane.f32.xlu0 %v922
          %v924 = vpop.xlane.xlu0 %923
          %v925 = vsel %vm846, %v840, 0.0
          %926 = vadd.xlane.f32.xlu0 %v925
          %v927 = vpop.xlane.xlu0 %926
          %v928 = vsel %vm846, %v841, 0.0
          %929 = vadd.xlane.f32.xlu0 %v928
          %v930 = vpop.xlane.xlu0 %929
          %v931 = vsel %vm846, %v842, 0.0
          %932 = vadd.xlane.f32.xlu0 %v931
          %v933 = vpop.xlane.xlu0 %932
          %v934 = vsel %vm846, %v843, 0.0
          %935 = vadd.xlane.f32.xlu0 %v934
          %v936 = vpop.xlane.xlu0 %935
          %v937 = vsel %vm846, %v844, 0.0
          %938 = vadd.xlane.f32.xlu0 %v937
          %v939 = vpop.xlane.xlu0 %938
          %v940 = vsel %vm846, %v845, 0.0
          %941 = vadd.xlane.f32.xlu0 %v940
          %v942 = vpop.xlane.xlu0 %941
          %v943 = vmul.f32 %v812, %v812
          %v944 = vrot.slane %v943, 4
          %v945 = vadd.f32 %v943, %v944
          %v946 = vrot.slane %v945, 2
          %v947 = vadd.f32 %v945, %v946
          %v948 = vrot.slane %v947, 1
          %v949 = vadd.f32 %v947, %v948
          %v951 = vsel %vm846, %v748, 0
          %v954 = vsel %vm846, %v749, 0
          %v957 = vsel %vm846, %v750, 0
          %v960 = vsel %vm846, %v751, 0
          %v963 = vsel %vm846, %v752, 0
          %v966 = vsel %vm846, %v753, 0
          %v969 = vsel %vm846, %v754, 0
          %v972 = vsel %vm846, %v755, 0
          %v975 = vsel %vm846, %v756, 0
          %v978 = vsel %vm846, %v757, 0
          %v981 = vsel %vm846, %v758, 0
          %v984 = vsel %vm846, %v759, 0
          %v987 = vsel %vm846, %v760, 0
          %v990 = vsel %vm846, %v761, 0
          %v993 = vsel %vm846, %v762, 0
          %v996 = vsel %vm846, %v763, 0
          %v999 = vsel %vm846, %v764, 0
          %v1002 = vsel %vm846, %v765, 0
          %v1005 = vsel %vm846, %v766, 0
          %v1008 = vsel %vm846, %v767, 0
          %v1011 = vsel %vm846, %v768, 0
          %v1014 = vsel %vm846, %v769, 0
          %v1017 = vsel %vm846, %v770, 0
          %v1020 = vsel %vm846, %v771, 0
          %v1023 = vsel %vm846, %v772, 0
          %v1026 = vsel %vm846, %v773, 0
          %v1029 = vsel %vm846, %v774, 0
          %v1032 = vsel %vm846, %v775, 0
          %v1035 = vsel %vm846, %v776, 0
          %v1038 = vsel %vm846, %v777, 0
          %v1041 = vsel %vm846, %v778, 0
          %v1044 = vsel %vm846, %v779, 0
          %1046 = vmatpush.msra.mxu0 0.0
          %1047 = vmatpush.msra.mxu0 0.0
          %1048 = vmatpush.msra.mxu0 0.0
          %1049 = vmatpush.msra.mxu0 0.0
          %1050 = vmatpush.msra.mxu0 0.0
          %1051 = vmatpush.msra.mxu0 0.0
          %1052 = vmatpush.msra.mxu0 0.0
          %1053 = vmatpush.msra.mxu0 0.0
          %1054 = vmatpush.msra.mxu0 0.0
          %1055 = vmatpush.msra.mxu0 0.0
          %1056 = vmatpush.msra.mxu0 0.0
          %1057 = vmatpush.msra.mxu0 0.0
          %1058 = vmatpush.msra.mxu0 0.0
          %1059 = vmatpush.msra.mxu0 0.0
          %1060 = vmatpush.msra.mxu0 0.0
          %1061 = vmatpush.msra.mxu0 %v812
          %1062 = vmatmul.f32.gmra.mxu0 %v951
          %v1063 = vpop.f32.mrf.mxu0
          %v1064 = vadd.f32 0.0, %v1063
          %1065 = vmatmul.f32.gmra.mxu0 %v954
          %v1066 = vpop.f32.mrf.mxu0
          %v1067 = vadd.f32 0.0, %v1066
          %1068 = vmatmul.f32.gmra.mxu0 %v957
          %v1069 = vpop.f32.mrf.mxu0
          %v1070 = vadd.f32 0.0, %v1069
          %1071 = vmatmul.f32.gmra.mxu0 %v960
          %v1072 = vpop.f32.mrf.mxu0
          %v1073 = vadd.f32 0.0, %v1072
          %1074 = vmatmul.f32.gmra.mxu0 %v963
          %v1075 = vpop.f32.mrf.mxu0
          %v1076 = vadd.f32 0.0, %v1075
          %1077 = vmatmul.f32.gmra.mxu0 %v966
          %v1078 = vpop.f32.mrf.mxu0
          %v1079 = vadd.f32 0.0, %v1078
          %1080 = vmatmul.f32.gmra.mxu0 %v969
          %v1081 = vpop.f32.mrf.mxu0
          %v1082 = vadd.f32 0.0, %v1081
          %1083 = vmatmul.f32.gmra.mxu0 %v972
          %v1084 = vpop.f32.mrf.mxu0
          %v1085 = vadd.f32 0.0, %v1084
          %1086 = vmatmul.f32.gmra.mxu0 %v975
          %v1087 = vpop.f32.mrf.mxu0
          %v1088 = vadd.f32 0.0, %v1087
          %1089 = vmatmul.f32.gmra.mxu0 %v978
          %v1090 = vpop.f32.mrf.mxu0
          %v1091 = vadd.f32 0.0, %v1090
          %1092 = vmatmul.f32.gmra.mxu0 %v981
          %v1093 = vpop.f32.mrf.mxu0
          %v1094 = vadd.f32 0.0, %v1093
          %1095 = vmatmul.f32.gmra.mxu0 %v984
          %v1096 = vpop.f32.mrf.mxu0
          %v1097 = vadd.f32 0.0, %v1096
          %1098 = vmatmul.f32.gmra.mxu0 %v987
          %v1099 = vpop.f32.mrf.mxu0
          %v1100 = vadd.f32 0.0, %v1099
          %1101 = vmatmul.f32.gmra.mxu0 %v990
          %v1102 = vpop.f32.mrf.mxu0
          %v1103 = vadd.f32 0.0, %v1102
          %1104 = vmatmul.f32.gmra.mxu0 %v993
          %v1105 = vpop.f32.mrf.mxu0
          %v1106 = vadd.f32 0.0, %v1105
          %1107 = vmatmul.f32.gmra.mxu0 %v996
          %v1108 = vpop.f32.mrf.mxu0
          %v1109 = vadd.f32 0.0, %v1108
          %1110 = vmatmul.f32.gmra.mxu0 %v999
          %v1111 = vpop.f32.mrf.mxu0
          %v1112 = vadd.f32 0.0, %v1111
          %1113 = vmatmul.f32.gmra.mxu0 %v1002
          %v1114 = vpop.f32.mrf.mxu0
          %v1115 = vadd.f32 0.0, %v1114
          %1116 = vmatmul.f32.gmra.mxu0 %v1005
          %v1117 = vpop.f32.mrf.mxu0
          %v1118 = vadd.f32 0.0, %v1117
          %1119 = vmatmul.f32.gmra.mxu0 %v1008
          %v1120 = vpop.f32.mrf.mxu0
          %v1121 = vadd.f32 0.0, %v1120
          %1122 = vmatmul.f32.gmra.mxu0 %v1011
          %v1123 = vpop.f32.mrf.mxu0
          %v1124 = vadd.f32 0.0, %v1123
          %1125 = vmatmul.f32.gmra.mxu0 %v1014
          %v1126 = vpop.f32.mrf.mxu0
          %v1127 = vadd.f32 0.0, %v1126
          %1128 = vmatmul.f32.gmra.mxu0 %v1017
          %v1129 = vpop.f32.mrf.mxu0
          %v1130 = vadd.f32 0.0, %v1129
          %1131 = vmatmul.f32.gmra.mxu0 %v1020
          %v1132 = vpop.f32.mrf.mxu0
          %v1133 = vadd.f32 0.0, %v1132
          %1134 = vmatmul.f32.gmra.mxu0 %v1023
          %v1135 = vpop.f32.mrf.mxu0
          %v1136 = vadd.f32 0.0, %v1135
          %1137 = vmatmul.f32.gmra.mxu0 %v1026
          %v1138 = vpop.f32.mrf.mxu0
          %v1139 = vadd.f32 0.0, %v1138
          %1140 = vmatmul.f32.gmra.mxu0 %v1029
          %v1141 = vpop.f32.mrf.mxu0
          %v1142 = vadd.f32 0.0, %v1141
          %1143 = vmatmul.f32.gmra.mxu0 %v1032
          %v1144 = vpop.f32.mrf.mxu0
          %v1145 = vadd.f32 0.0, %v1144
          %1146 = vmatmul.f32.gmra.mxu0 %v1035
          %v1147 = vpop.f32.mrf.mxu0
          %v1148 = vadd.f32 0.0, %v1147
          %1149 = vmatmul.f32.gmra.mxu0 %v1038
          %v1150 = vpop.f32.mrf.mxu0
          %v1151 = vadd.f32 0.0, %v1150
          %1152 = vmatmul.f32.gmra.mxu0 %v1041
          %v1153 = vpop.f32.mrf.mxu0
          %v1154 = vadd.f32 0.0, %v1153
          %1155 = vmatmul.f32.gmra.mxu0 %v1044
          %v1156 = vpop.f32.mrf.mxu0
          %v1157 = vadd.f32 0.0, %v1156
          %1158 = vdwg.mxu0
          %v1159 = vadd.f32 %v849, %v949
          %v1160 = vadd.f32 %v852, %v949
          %v1161 = vadd.f32 %v855, %v949
          %v1162 = vadd.f32 %v858, %v949
          %v1163 = vadd.f32 %v861, %v949
          %v1164 = vadd.f32 %v864, %v949
          %v1165 = vadd.f32 %v867, %v949
          %v1166 = vadd.f32 %v870, %v949
          %v1167 = vadd.f32 %v873, %v949
          %v1168 = vadd.f32 %v876, %v949
          %v1169 = vadd.f32 %v879, %v949
          %v1170 = vadd.f32 %v882, %v949
          %v1171 = vadd.f32 %v885, %v949
          %v1172 = vadd.f32 %v888, %v949
          %v1173 = vadd.f32 %v891, %v949
          %v1174 = vadd.f32 %v894, %v949
          %v1175 = vadd.f32 %v897, %v949
          %v1176 = vadd.f32 %v900, %v949
          %v1177 = vadd.f32 %v903, %v949
          %v1178 = vadd.f32 %v906, %v949
          %v1179 = vadd.f32 %v909, %v949
          %v1180 = vadd.f32 %v912, %v949
          %v1181 = vadd.f32 %v915, %v949
          %v1182 = vadd.f32 %v918, %v949
          %v1183 = vadd.f32 %v921, %v949
          %v1184 = vadd.f32 %v924, %v949
          %v1185 = vadd.f32 %v927, %v949
          %v1186 = vadd.f32 %v930, %v949
          %v1187 = vadd.f32 %v933, %v949
          %v1188 = vadd.f32 %v936, %v949
          %v1189 = vadd.f32 %v939, %v949
          %v1190 = vadd.f32 %v942, %v949
          %v1191 = vmul.f32 %v1064, 2.0
          %v1192 = vmul.f32 %v1067, 2.0
          %v1193 = vmul.f32 %v1070, 2.0
          %v1194 = vmul.f32 %v1073, 2.0
          %v1195 = vmul.f32 %v1076, 2.0
          %v1196 = vmul.f32 %v1079, 2.0
          %v1197 = vmul.f32 %v1082, 2.0
          %v1198 = vmul.f32 %v1085, 2.0
          %v1199 = vmul.f32 %v1088, 2.0
          %v1200 = vmul.f32 %v1091, 2.0
          %v1201 = vmul.f32 %v1094, 2.0
          %v1202 = vmul.f32 %v1097, 2.0
          %v1203 = vmul.f32 %v1100, 2.0
          %v1204 = vmul.f32 %v1103, 2.0
          %v1205 = vmul.f32 %v1106, 2.0
          %v1206 = vmul.f32 %v1109, 2.0
          %v1207 = vmul.f32 %v1112, 2.0
          %v1208 = vmul.f32 %v1115, 2.0
          %v1209 = vmul.f32 %v1118, 2.0
          %v1210 = vmul.f32 %v1121, 2.0
          %v1211 = vmul.f32 %v1124, 2.0
          %v1212 = vmul.f32 %v1127, 2.0
          %v1213 = vmul.f32 %v1130, 2.0
          %v1214 = vmul.f32 %v1133, 2.0
          %v1215 = vmul.f32 %v1136, 2.0
          %v1216 = vmul.f32 %v1139, 2.0
          %v1217 = vmul.f32 %v1142, 2.0
          %v1218 = vmul.f32 %v1145, 2.0
          %v1219 = vmul.f32 %v1148, 2.0
          %v1220 = vmul.f32 %v1151, 2.0
          %v1221 = vmul.f32 %v1154, 2.0
          %v1222 = vmul.f32 %v1157, 2.0
          %v1223 = vsub.f32 %v1159, %v1191
          %v1224 = vsub.f32 %v1160, %v1192
          %v1225 = vsub.f32 %v1161, %v1193
          %v1226 = vsub.f32 %v1162, %v1194
          %v1227 = vsub.f32 %v1163, %v1195
          %v1228 = vsub.f32 %v1164, %v1196
          %v1229 = vsub.f32 %v1165, %v1197
          %v1230 = vsub.f32 %v1166, %v1198
          %v1231 = vsub.f32 %v1167, %v1199
          %v1232 = vsub.f32 %v1168, %v1200
          %v1233 = vsub.f32 %v1169, %v1201
          %v1234 = vsub.f32 %v1170, %v1202
          %v1235 = vsub.f32 %v1171, %v1203
          %v1236 = vsub.f32 %v1172, %v1204
          %v1237 = vsub.f32 %v1173, %v1205
          %v1238 = vsub.f32 %v1174, %v1206
          %v1239 = vsub.f32 %v1175, %v1207
          %v1240 = vsub.f32 %v1176, %v1208
          %v1241 = vsub.f32 %v1177, %v1209
          %v1242 = vsub.f32 %v1178, %v1210
          %v1243 = vsub.f32 %v1179, %v1211
          %v1244 = vsub.f32 %v1180, %v1212
          %v1245 = vsub.f32 %v1181, %v1213
          %v1246 = vsub.f32 %v1182, %v1214
          %v1247 = vsub.f32 %v1183, %v1215
          %v1248 = vsub.f32 %v1184, %v1216
          %v1249 = vsub.f32 %v1185, %v1217
          %v1250 = vsub.f32 %v1186, %v1218
          %v1251 = vsub.f32 %v1187, %v1219
          %v1252 = vsub.f32 %v1188, %v1220
          %v1253 = vsub.f32 %v1189, %v1221
          %v1254 = vsub.f32 %v1190, %v1222
          %v1255 = vmax.f32 %v1223, 0.0
          %v1256 = vmax.f32 %v1224, 0.0
          %v1257 = vmax.f32 %v1225, 0.0
          %v1258 = vmax.f32 %v1226, 0.0
          %v1259 = vmax.f32 %v1227, 0.0
          %v1260 = vmax.f32 %v1228, 0.0
          %v1261 = vmax.f32 %v1229, 0.0
          %v1262 = vmax.f32 %v1230, 0.0
          %v1263 = vmax.f32 %v1231, 0.0
          %v1264 = vmax.f32 %v1232, 0.0
          %v1265 = vmax.f32 %v1233, 0.0
          %v1266 = vmax.f32 %v1234, 0.0
          %v1267 = vmax.f32 %v1235, 0.0
          %v1268 = vmax.f32 %v1236, 0.0
          %v1269 = vmax.f32 %v1237, 0.0
          %v1270 = vmax.f32 %v1238, 0.0
          %v1271 = vmax.f32 %v1239, 0.0
          %v1272 = vmax.f32 %v1240, 0.0
          %v1273 = vmax.f32 %v1241, 0.0
          %v1274 = vmax.f32 %v1242, 0.0
          %v1275 = vmax.f32 %v1243, 0.0
          %v1276 = vmax.f32 %v1244, 0.0
          %v1277 = vmax.f32 %v1245, 0.0
          %v1278 = vmax.f32 %v1246, 0.0
          %v1279 = vmax.f32 %v1247, 0.0
          %v1280 = vmax.f32 %v1248, 0.0
          %v1281 = vmax.f32 %v1249, 0.0
          %v1282 = vmax.f32 %v1250, 0.0
          %v1283 = vmax.f32 %v1251, 0.0
          %v1284 = vmax.f32 %v1252, 0.0
          %v1285 = vmax.f32 %v1253, 0.0
          %v1286 = vmax.f32 %v1254, 0.0
          %1287 = vset.pattern.permute.xlu0 0
          %1288 = vperm.xlu0 %1287, %v780
          %v1289 = vpop.permute.xlu0 %1288
          %1290 = vset.pattern.permute.xlu0 0
          %1291 = vperm.xlu0 %1290, %v781
          %v1292 = vpop.permute.xlu0 %1291
          %1293 = vset.pattern.permute.xlu0 0
          %1294 = vperm.xlu0 %1293, %v782
          %v1295 = vpop.permute.xlu0 %1294
          %1296 = vset.pattern.permute.xlu0 0
          %1297 = vperm.xlu0 %1296, %v783
          %v1298 = vpop.permute.xlu0 %1297
          %1299 = vset.pattern.permute.xlu0 0
          %1300 = vperm.xlu0 %1299, %v784
          %v1301 = vpop.permute.xlu0 %1300
          %1302 = vset.pattern.permute.xlu0 0
          %1303 = vperm.xlu0 %1302, %v785
          %v1304 = vpop.permute.xlu0 %1303
          %1305 = vset.pattern.permute.xlu0 0
          %1306 = vperm.xlu0 %1305, %v786
          %v1307 = vpop.permute.xlu0 %1306
          %1308 = vset.pattern.permute.xlu0 0
          %1309 = vperm.xlu0 %1308, %v787
          %v1310 = vpop.permute.xlu0 %1309
          %1311 = vset.pattern.permute.xlu0 0
          %1312 = vperm.xlu0 %1311, %v788
          %v1313 = vpop.permute.xlu0 %1312
          %1314 = vset.pattern.permute.xlu0 0
          %1315 = vperm.xlu0 %1314, %v789
          %v1316 = vpop.permute.xlu0 %1315
          %1317 = vset.pattern.permute.xlu0 0
          %1318 = vperm.xlu0 %1317, %v790
          %v1319 = vpop.permute.xlu0 %1318
          %1320 = vset.pattern.permute.xlu0 0
          %1321 = vperm.xlu0 %1320, %v791
          %v1322 = vpop.permute.xlu0 %1321
          %1323 = vset.pattern.permute.xlu0 0
          %1324 = vperm.xlu0 %1323, %v792
          %v1325 = vpop.permute.xlu0 %1324
          %1326 = vset.pattern.permute.xlu0 0
          %1327 = vperm.xlu0 %1326, %v793
          %v1328 = vpop.permute.xlu0 %1327
          %1329 = vset.pattern.permute.xlu0 0
          %1330 = vperm.xlu0 %1329, %v794
          %v1331 = vpop.permute.xlu0 %1330
          %1332 = vset.pattern.permute.xlu0 0
          %1333 = vperm.xlu0 %1332, %v795
          %v1334 = vpop.permute.xlu0 %1333
          %1335 = vset.pattern.permute.xlu0 0
          %1336 = vperm.xlu0 %1335, %v796
          %v1337 = vpop.permute.xlu0 %1336
          %1338 = vset.pattern.permute.xlu0 0
          %1339 = vperm.xlu0 %1338, %v797
          %v1340 = vpop.permute.xlu0 %1339
          %1341 = vset.pattern.permute.xlu0 0
          %1342 = vperm.xlu0 %1341, %v798
          %v1343 = vpop.permute.xlu0 %1342
          %1344 = vset.pattern.permute.xlu0 0
          %1345 = vperm.xlu0 %1344, %v799
          %v1346 = vpop.permute.xlu0 %1345
          %1347 = vset.pattern.permute.xlu0 0
          %1348 = vperm.xlu0 %1347, %v800
          %v1349 = vpop.permute.xlu0 %1348
          %1350 = vset.pattern.permute.xlu0 0
          %1351 = vperm.xlu0 %1350, %v801
          %v1352 = vpop.permute.xlu0 %1351
          %1353 = vset.pattern.permute.xlu0 0
          %1354 = vperm.xlu0 %1353, %v802
          %v1355 = vpop.permute.xlu0 %1354
          %1356 = vset.pattern.permute.xlu0 0
          %1357 = vperm.xlu0 %1356, %v803
          %v1358 = vpop.permute.xlu0 %1357
          %1359 = vset.pattern.permute.xlu0 0
          %1360 = vperm.xlu0 %1359, %v804
          %v1361 = vpop.permute.xlu0 %1360
          %1362 = vset.pattern.permute.xlu0 0
          %1363 = vperm.xlu0 %1362, %v805
          %v1364 = vpop.permute.xlu0 %1363
          %1365 = vset.pattern.permute.xlu0 0
          %1366 = vperm.xlu0 %1365, %v806
          %v1367 = vpop.permute.xlu0 %1366
          %1368 = vset.pattern.permute.xlu0 0
          %1369 = vperm.xlu0 %1368, %v807
          %v1370 = vpop.permute.xlu0 %1369
          %1371 = vset.pattern.permute.xlu0 0
          %1372 = vperm.xlu0 %1371, %v808
          %v1373 = vpop.permute.xlu0 %1372
          %1374 = vset.pattern.permute.xlu0 0
          %1375 = vperm.xlu0 %1374, %v809
          %v1376 = vpop.permute.xlu0 %1375
          %1377 = vset.pattern.permute.xlu0 0
          %1378 = vperm.xlu0 %1377, %v810
          %v1379 = vpop.permute.xlu0 %1378
          %1380 = vset.pattern.permute.xlu0 0
          %1381 = vperm.xlu0 %1380, %v811
          %v1382 = vpop.permute.xlu0 %1381
          %v1383 = vperm.slane %v813, 0
          %vm1384 = vcmp.eq.s32.totalorder %v1289, %v1383
          %vm1385 = vcmp.eq.s32.totalorder %v1292, %v1383
          %vm1386 = vcmp.eq.s32.totalorder %v1295, %v1383
          %vm1387 = vcmp.eq.s32.totalorder %v1298, %v1383
          %vm1388 = vcmp.eq.s32.totalorder %v1301, %v1383
          %vm1389 = vcmp.eq.s32.totalorder %v1304, %v1383
          %vm1390 = vcmp.eq.s32.totalorder %v1307, %v1383
          %vm1391 = vcmp.eq.s32.totalorder %v1310, %v1383
          %vm1392 = vcmp.eq.s32.totalorder %v1313, %v1383
          %vm1393 = vcmp.eq.s32.totalorder %v1316, %v1383
          %vm1394 = vcmp.eq.s32.totalorder %v1319, %v1383
          %vm1395 = vcmp.eq.s32.totalorder %v1322, %v1383
          %vm1396 = vcmp.eq.s32.totalorder %v1325, %v1383
          %vm1397 = vcmp.eq.s32.totalorder %v1328, %v1383
          %vm1398 = vcmp.eq.s32.totalorder %v1331, %v1383
          %vm1399 = vcmp.eq.s32.totalorder %v1334, %v1383
          %vm1400 = vcmp.eq.s32.totalorder %v1337, %v1383
          %vm1401 = vcmp.eq.s32.totalorder %v1340, %v1383
          %vm1402 = vcmp.eq.s32.totalorder %v1343, %v1383
          %vm1403 = vcmp.eq.s32.totalorder %v1346, %v1383
          %vm1404 = vcmp.eq.s32.totalorder %v1349, %v1383
          %vm1405 = vcmp.eq.s32.totalorder %v1352, %v1383
          %vm1406 = vcmp.eq.s32.totalorder %v1355, %v1383
          %vm1407 = vcmp.eq.s32.totalorder %v1358, %v1383
          %vm1408 = vcmp.eq.s32.totalorder %v1361, %v1383
          %vm1409 = vcmp.eq.s32.totalorder %v1364, %v1383
          %vm1410 = vcmp.eq.s32.totalorder %v1367, %v1383
          %vm1411 = vcmp.eq.s32.totalorder %v1370, %v1383
          %vm1412 = vcmp.eq.s32.totalorder %v1373, %v1383
          %vm1413 = vcmp.eq.s32.totalorder %v1376, %v1383
          %vm1414 = vcmp.eq.s32.totalorder %v1379, %v1383
          %vm1415 = vcmp.eq.s32.totalorder %v1382, %v1383
          %v1416 = vsel %vm1384, %v1255, 1e+30
          %v1417 = vsel %vm1385, %v1256, 1e+30
          %v1418 = vsel %vm1386, %v1257, 1e+30
          %v1419 = vsel %vm1387, %v1258, 1e+30
          %v1420 = vsel %vm1388, %v1259, 1e+30
          %v1421 = vsel %vm1389, %v1260, 1e+30
          %v1422 = vsel %vm1390, %v1261, 1e+30
          %v1423 = vsel %vm1391, %v1262, 1e+30
          %v1424 = vsel %vm1392, %v1263, 1e+30
          %v1425 = vsel %vm1393, %v1264, 1e+30
          %v1426 = vsel %vm1394, %v1265, 1e+30
          %v1427 = vsel %vm1395, %v1266, 1e+30
          %v1428 = vsel %vm1396, %v1267, 1e+30
          %v1429 = vsel %vm1397, %v1268, 1e+30
          %v1430 = vsel %vm1398, %v1269, 1e+30
          %v1431 = vsel %vm1399, %v1270, 1e+30
          %v1432 = vsel %vm1400, %v1271, 1e+30
          %v1433 = vsel %vm1401, %v1272, 1e+30
          %v1434 = vsel %vm1402, %v1273, 1e+30
          %v1435 = vsel %vm1403, %v1274, 1e+30
          %v1436 = vsel %vm1404, %v1275, 1e+30
          %v1437 = vsel %vm1405, %v1276, 1e+30
          %v1438 = vsel %vm1406, %v1277, 1e+30
          %v1439 = vsel %vm1407, %v1278, 1e+30
          %v1440 = vsel %vm1408, %v1279, 1e+30
          %v1441 = vsel %vm1409, %v1280, 1e+30
          %v1442 = vsel %vm1410, %v1281, 1e+30
          %v1443 = vsel %vm1411, %v1282, 1e+30
          %v1444 = vsel %vm1412, %v1283, 1e+30
          %v1445 = vsel %vm1413, %v1284, 1e+30
          %v1446 = vsel %vm1414, %v1285, 1e+30
          %v1447 = vsel %vm1415, %v1286, 1e+30
          %v1448 = vlaneseq
          %v1449 = vand.u32 %v1448, 127
          %s1450 = smul.u32 %s30, 128
          %v1451 = vld [vmem:[#allocation2] sm:$0xff]
          %v1452 = vld [vmem:[#allocation2 + $0x8] sm:$0xff]
          %v1453 = vld [vmem:[#allocation2 + $0x10] sm:$0xff]
          %v1454 = vld [vmem:[#allocation2 + $0x18] sm:$0xff]
          %v1455 = vld [vmem:[#allocation2 + $0x20] sm:$0xff]
          %v1456 = vld [vmem:[#allocation2 + $0x28] sm:$0xff]
          %v1457 = vld [vmem:[#allocation2 + $0x30] sm:$0xff]
          %v1458 = vld [vmem:[#allocation2 + $0x38] sm:$0xff]
          %v1459 = vld [vmem:[#allocation2 + $0x40] sm:$0xff]
          %v1460 = vld [vmem:[#allocation2 + $0x48] sm:$0xff]
          %v1461 = vld [vmem:[#allocation2 + $0x50] sm:$0xff]
          %v1462 = vld [vmem:[#allocation2 + $0x58] sm:$0xff]
          %v1463 = vld [vmem:[#allocation2 + $0x60] sm:$0xff]
          %v1464 = vld [vmem:[#allocation2 + $0x68] sm:$0xff]
          %v1465 = vld [vmem:[#allocation2 + $0x70] sm:$0xff]
          %v1466 = vld [vmem:[#allocation2 + $0x78] sm:$0xff]
          %v1467 = vld [vmem:[#allocation2 + $0x80] sm:$0xff]
          %v1468 = vld [vmem:[#allocation2 + $0x88] sm:$0xff]
          %v1469 = vld [vmem:[#allocation2 + $0x90] sm:$0xff]
          %v1470 = vld [vmem:[#allocation2 + $0x98] sm:$0xff]
          %v1471 = vld [vmem:[#allocation2 + $0xa0] sm:$0xff]
          %v1472 = vld [vmem:[#allocation2 + $0xa8] sm:$0xff]
          %v1473 = vld [vmem:[#allocation2 + $0xb0] sm:$0xff]
          %v1474 = vld [vmem:[#allocation2 + $0xb8] sm:$0xff]
          %v1475 = vld [vmem:[#allocation2 + $0xc0] sm:$0xff]
          %v1476 = vld [vmem:[#allocation2 + $0xc8] sm:$0xff]
          %v1477 = vld [vmem:[#allocation2 + $0xd0] sm:$0xff]
          %v1478 = vld [vmem:[#allocation2 + $0xd8] sm:$0xff]
          %v1479 = vld [vmem:[#allocation2 + $0xe0] sm:$0xff]
          %v1480 = vld [vmem:[#allocation2 + $0xe8] sm:$0xff]
          %v1481 = vld [vmem:[#allocation2 + $0xf0] sm:$0xff]
          %v1482 = vld [vmem:[#allocation2 + $0xf8] sm:$0xff]
          %v1483 = vld [vmem:[#allocation3] sm:$0xff]
          %v1484 = vld [vmem:[#allocation3 + $0x8] sm:$0xff]
          %v1485 = vld [vmem:[#allocation3 + $0x10] sm:$0xff]
          %v1486 = vld [vmem:[#allocation3 + $0x18] sm:$0xff]
          %v1487 = vld [vmem:[#allocation3 + $0x20] sm:$0xff]
          %v1488 = vld [vmem:[#allocation3 + $0x28] sm:$0xff]
          %v1489 = vld [vmem:[#allocation3 + $0x30] sm:$0xff]
          %v1490 = vld [vmem:[#allocation3 + $0x38] sm:$0xff]
          %v1491 = vld [vmem:[#allocation3 + $0x40] sm:$0xff]
          %v1492 = vld [vmem:[#allocation3 + $0x48] sm:$0xff]
          %v1493 = vld [vmem:[#allocation3 + $0x50] sm:$0xff]
          %v1494 = vld [vmem:[#allocation3 + $0x58] sm:$0xff]
          %v1495 = vld [vmem:[#allocation3 + $0x60] sm:$0xff]
          %v1496 = vld [vmem:[#allocation3 + $0x68] sm:$0xff]
          %v1497 = vld [vmem:[#allocation3 + $0x70] sm:$0xff]
          %v1498 = vld [vmem:[#allocation3 + $0x78] sm:$0xff]
          %v1499 = vld [vmem:[#allocation3 + $0x80] sm:$0xff]
          %v1500 = vld [vmem:[#allocation3 + $0x88] sm:$0xff]
          %v1501 = vld [vmem:[#allocation3 + $0x90] sm:$0xff]
          %v1502 = vld [vmem:[#allocation3 + $0x98] sm:$0xff]
          %v1503 = vld [vmem:[#allocation3 + $0xa0] sm:$0xff]
          %v1504 = vld [vmem:[#allocation3 + $0xa8] sm:$0xff]
          %v1505 = vld [vmem:[#allocation3 + $0xb0] sm:$0xff]
          %v1506 = vld [vmem:[#allocation3 + $0xb8] sm:$0xff]
          %v1507 = vld [vmem:[#allocation3 + $0xc0] sm:$0xff]
          %v1508 = vld [vmem:[#allocation3 + $0xc8] sm:$0xff]
          %v1509 = vld [vmem:[#allocation3 + $0xd0] sm:$0xff]
          %v1510 = vld [vmem:[#allocation3 + $0xd8] sm:$0xff]
          %v1511 = vld [vmem:[#allocation3 + $0xe0] sm:$0xff]
          %v1512 = vld [vmem:[#allocation3 + $0xe8] sm:$0xff]
          %v1513 = vld [vmem:[#allocation3 + $0xf0] sm:$0xff]
          %v1514 = vld [vmem:[#allocation3 + $0xf8] sm:$0xff]
          %v1515 = vld [vmem:[#allocation4] sm:$0xff]
          %v1516 = vld [vmem:[#allocation4 + $0x8] sm:$0xff]
          %v1517 = vld [vmem:[#allocation4 + $0x10] sm:$0xff]
          %v1518 = vld [vmem:[#allocation4 + $0x18] sm:$0xff]
          %v1519 = vld [vmem:[#allocation4 + $0x20] sm:$0xff]
          %v1520 = vld [vmem:[#allocation4 + $0x28] sm:$0xff]
          %v1521 = vld [vmem:[#allocation4 + $0x30] sm:$0xff]
          %v1522 = vld [vmem:[#allocation4 + $0x38] sm:$0xff]
          %v1523 = vld [vmem:[#allocation4 + $0x40] sm:$0xff]
          %v1524 = vld [vmem:[#allocation4 + $0x48] sm:$0xff]
          %v1525 = vld [vmem:[#allocation4 + $0x50] sm:$0xff]
          %v1526 = vld [vmem:[#allocation4 + $0x58] sm:$0xff]
          %v1527 = vld [vmem:[#allocation4 + $0x60] sm:$0xff]
          %v1528 = vld [vmem:[#allocation4 + $0x68] sm:$0xff]
          %v1529 = vld [vmem:[#allocation4 + $0x70] sm:$0xff]
          %v1530 = vld [vmem:[#allocation4 + $0x78] sm:$0xff]
          %v1531 = vld [vmem:[#allocation4 + $0x80] sm:$0xff]
          %v1532 = vld [vmem:[#allocation4 + $0x88] sm:$0xff]
          %v1533 = vld [vmem:[#allocation4 + $0x90] sm:$0xff]
          %v1534 = vld [vmem:[#allocation4 + $0x98] sm:$0xff]
          %v1535 = vld [vmem:[#allocation4 + $0xa0] sm:$0xff]
          %v1536 = vld [vmem:[#allocation4 + $0xa8] sm:$0xff]
          %v1537 = vld [vmem:[#allocation4 + $0xb0] sm:$0xff]
          %v1538 = vld [vmem:[#allocation4 + $0xb8] sm:$0xff]
          %v1539 = vld [vmem:[#allocation4 + $0xc0] sm:$0xff]
          %v1540 = vld [vmem:[#allocation4 + $0xc8] sm:$0xff]
          %v1541 = vld [vmem:[#allocation4 + $0xd0] sm:$0xff]
          %v1542 = vld [vmem:[#allocation4 + $0xd8] sm:$0xff]
          %v1543 = vld [vmem:[#allocation4 + $0xe0] sm:$0xff]
          %v1544 = vld [vmem:[#allocation4 + $0xe8] sm:$0xff]
          %v1545 = vld [vmem:[#allocation4 + $0xf0] sm:$0xff]
          %v1546 = vld [vmem:[#allocation4 + $0xf8] sm:$0xff]
          %v1547 = vld [vmem:[#allocation5] sm:$0xff]
          %v1548 = vld [vmem:[#allocation5 + $0x8] sm:$0xff]
          %v1549 = vld [vmem:[#allocation5 + $0x10] sm:$0xff]
          %v1550 = vld [vmem:[#allocation5 + $0x18] sm:$0xff]
          %v1551 = vld [vmem:[#allocation5 + $0x20] sm:$0xff]
          %v1552 = vld [vmem:[#allocation5 + $0x28] sm:$0xff]
          %v1553 = vld [vmem:[#allocation5 + $0x30] sm:$0xff]
          %v1554 = vld [vmem:[#allocation5 + $0x38] sm:$0xff]
          %v1555 = vld [vmem:[#allocation5 + $0x40] sm:$0xff]
          %v1556 = vld [vmem:[#allocation5 + $0x48] sm:$0xff]
          %v1557 = vld [vmem:[#allocation5 + $0x50] sm:$0xff]
          %v1558 = vld [vmem:[#allocation5 + $0x58] sm:$0xff]
          %v1559 = vld [vmem:[#allocation5 + $0x60] sm:$0xff]
          %v1560 = vld [vmem:[#allocation5 + $0x68] sm:$0xff]
          %v1561 = vld [vmem:[#allocation5 + $0x70] sm:$0xff]
          %v1562 = vld [vmem:[#allocation5 + $0x78] sm:$0xff]
          %v1563 = vld [vmem:[#allocation5 + $0x80] sm:$0xff]
          %v1564 = vld [vmem:[#allocation5 + $0x88] sm:$0xff]
          %v1565 = vld [vmem:[#allocation5 + $0x90] sm:$0xff]
          %v1566 = vld [vmem:[#allocation5 + $0x98] sm:$0xff]
          %v1567 = vld [vmem:[#allocation5 + $0xa0] sm:$0xff]
          %v1568 = vld [vmem:[#allocation5 + $0xa8] sm:$0xff]
          %v1569 = vld [vmem:[#allocation5 + $0xb0] sm:$0xff]
          %v1570 = vld [vmem:[#allocation5 + $0xb8] sm:$0xff]
          %v1571 = vld [vmem:[#allocation5 + $0xc0] sm:$0xff]
          %v1572 = vld [vmem:[#allocation5 + $0xc8] sm:$0xff]
          %v1573 = vld [vmem:[#allocation5 + $0xd0] sm:$0xff]
          %v1574 = vld [vmem:[#allocation5 + $0xd8] sm:$0xff]
          %v1575 = vld [vmem:[#allocation5 + $0xe0] sm:$0xff]
          %v1576 = vld [vmem:[#allocation5 + $0xe8] sm:$0xff]
          %v1577 = vld [vmem:[#allocation5 + $0xf0] sm:$0xff]
          %v1578 = vld [vmem:[#allocation5 + $0xf8] sm:$0xff]
          %v1579 = vld [vmem:[#allocation6] sm:$0xff]
          %v1580 = vld [vmem:[#allocation6 + $0x8] sm:$0xff]
          %v1581 = vld [vmem:[#allocation6 + $0x10] sm:$0xff]
          %v1582 = vld [vmem:[#allocation6 + $0x18] sm:$0xff]
          %v1583 = vld [vmem:[#allocation6 + $0x20] sm:$0xff]
          %v1584 = vld [vmem:[#allocation6 + $0x28] sm:$0xff]
          %v1585 = vld [vmem:[#allocation6 + $0x30] sm:$0xff]
          %v1586 = vld [vmem:[#allocation6 + $0x38] sm:$0xff]
          %v1587 = vld [vmem:[#allocation6 + $0x40] sm:$0xff]
          %v1588 = vld [vmem:[#allocation6 + $0x48] sm:$0xff]
          %v1589 = vld [vmem:[#allocation6 + $0x50] sm:$0xff]
          %v1590 = vld [vmem:[#allocation6 + $0x58] sm:$0xff]
          %v1591 = vld [vmem:[#allocation6 + $0x60] sm:$0xff]
          %v1592 = vld [vmem:[#allocation6 + $0x68] sm:$0xff]
          %v1593 = vld [vmem:[#allocation6 + $0x70] sm:$0xff]
          %v1594 = vld [vmem:[#allocation6 + $0x78] sm:$0xff]
          %v1595 = vld [vmem:[#allocation6 + $0x80] sm:$0xff]
          %v1596 = vld [vmem:[#allocation6 + $0x88] sm:$0xff]
          %v1597 = vld [vmem:[#allocation6 + $0x90] sm:$0xff]
          %v1598 = vld [vmem:[#allocation6 + $0x98] sm:$0xff]
          %v1599 = vld [vmem:[#allocation6 + $0xa0] sm:$0xff]
          %v1600 = vld [vmem:[#allocation6 + $0xa8] sm:$0xff]
          %v1601 = vld [vmem:[#allocation6 + $0xb0] sm:$0xff]
          %v1602 = vld [vmem:[#allocation6 + $0xb8] sm:$0xff]
          %v1603 = vld [vmem:[#allocation6 + $0xc0] sm:$0xff]
          %v1604 = vld [vmem:[#allocation6 + $0xc8] sm:$0xff]
          %v1605 = vld [vmem:[#allocation6 + $0xd0] sm:$0xff]
          %v1606 = vld [vmem:[#allocation6 + $0xd8] sm:$0xff]
          %v1607 = vld [vmem:[#allocation6 + $0xe0] sm:$0xff]
          %v1608 = vld [vmem:[#allocation6 + $0xe8] sm:$0xff]
          %v1609 = vld [vmem:[#allocation6 + $0xf0] sm:$0xff]
          %v1610 = vld [vmem:[#allocation6 + $0xf8] sm:$0xff]
          %v1611 = vld [vmem:[#allocation7] sm:$0xff]
          %v1612 = vld [vmem:[#allocation7 + $0x8] sm:$0xff]
          %v1613 = vld [vmem:[#allocation7 + $0x10] sm:$0xff]
          %v1614 = vld [vmem:[#allocation7 + $0x18] sm:$0xff]
          %v1615 = vld [vmem:[#allocation7 + $0x20] sm:$0xff]
          %v1616 = vld [vmem:[#allocation7 + $0x28] sm:$0xff]
          %v1617 = vld [vmem:[#allocation7 + $0x30] sm:$0xff]
          %v1618 = vld [vmem:[#allocation7 + $0x38] sm:$0xff]
          %v1619 = vld [vmem:[#allocation7 + $0x40] sm:$0xff]
          %v1620 = vld [vmem:[#allocation7 + $0x48] sm:$0xff]
          %v1621 = vld [vmem:[#allocation7 + $0x50] sm:$0xff]
          %v1622 = vld [vmem:[#allocation7 + $0x58] sm:$0xff]
          %v1623 = vld [vmem:[#allocation7 + $0x60] sm:$0xff]
          %v1624 = vld [vmem:[#allocation7 + $0x68] sm:$0xff]
          %v1625 = vld [vmem:[#allocation7 + $0x70] sm:$0xff]
          %v1626 = vld [vmem:[#allocation7 + $0x78] sm:$0xff]
          %v1627 = vld [vmem:[#allocation7 + $0x80] sm:$0xff]
          %v1628 = vld [vmem:[#allocation7 + $0x88] sm:$0xff]
          %v1629 = vld [vmem:[#allocation7 + $0x90] sm:$0xff]
          %v1630 = vld [vmem:[#allocation7 + $0x98] sm:$0xff]
          %v1631 = vld [vmem:[#allocation7 + $0xa0] sm:$0xff]
          %v1632 = vld [vmem:[#allocation7 + $0xa8] sm:$0xff]
          %v1633 = vld [vmem:[#allocation7 + $0xb0] sm:$0xff]
          %v1634 = vld [vmem:[#allocation7 + $0xb8] sm:$0xff]
          %v1635 = vld [vmem:[#allocation7 + $0xc0] sm:$0xff]
          %v1636 = vld [vmem:[#allocation7 + $0xc8] sm:$0xff]
          %v1637 = vld [vmem:[#allocation7 + $0xd0] sm:$0xff]
          %v1638 = vld [vmem:[#allocation7 + $0xd8] sm:$0xff]
          %v1639 = vld [vmem:[#allocation7 + $0xe0] sm:$0xff]
          %v1640 = vld [vmem:[#allocation7 + $0xe8] sm:$0xff]
          %v1641 = vld [vmem:[#allocation7 + $0xf0] sm:$0xff]
          %v1642 = vld [vmem:[#allocation7 + $0xf8] sm:$0xff]
          %1643 = vmin.xlane.f32.xlu0 %v1416
          %v1644 = vpop.xlane.xlu0 %1643
          %1645 = vmin.xlane.f32.xlu0 %v1417
          %v1646 = vpop.xlane.xlu0 %1645
          %1647 = vmin.xlane.f32.xlu0 %v1418
          %v1648 = vpop.xlane.xlu0 %1647
          %1649 = vmin.xlane.f32.xlu0 %v1419
          %v1650 = vpop.xlane.xlu0 %1649
          %1651 = vmin.xlane.f32.xlu0 %v1420
          %v1652 = vpop.xlane.xlu0 %1651
          %1653 = vmin.xlane.f32.xlu0 %v1421
          %v1654 = vpop.xlane.xlu0 %1653
          %1655 = vmin.xlane.f32.xlu0 %v1422
          %v1656 = vpop.xlane.xlu0 %1655
          %1657 = vmin.xlane.f32.xlu0 %v1423
          %v1658 = vpop.xlane.xlu0 %1657
          %1659 = vmin.xlane.f32.xlu0 %v1424
          %v1660 = vpop.xlane.xlu0 %1659
          %1661 = vmin.xlane.f32.xlu0 %v1425
          %v1662 = vpop.xlane.xlu0 %1661
          %1663 = vmin.xlane.f32.xlu0 %v1426
          %v1664 = vpop.xlane.xlu0 %1663
          %1665 = vmin.xlane.f32.xlu0 %v1427
          %v1666 = vpop.xlane.xlu0 %1665
          %1667 = vmin.xlane.f32.xlu0 %v1428
          %v1668 = vpop.xlane.xlu0 %1667
          %1669 = vmin.xlane.f32.xlu0 %v1429
          %v1670 = vpop.xlane.xlu0 %1669
          %1671 = vmin.xlane.f32.xlu0 %v1430
          %v1672 = vpop.xlane.xlu0 %1671
          %1673 = vmin.xlane.f32.xlu0 %v1431
          %v1674 = vpop.xlane.xlu0 %1673
          %1675 = vmin.xlane.f32.xlu0 %v1432
          %v1676 = vpop.xlane.xlu0 %1675
          %1677 = vmin.xlane.f32.xlu0 %v1433
          %v1678 = vpop.xlane.xlu0 %1677
          %1679 = vmin.xlane.f32.xlu0 %v1434
          %v1680 = vpop.xlane.xlu0 %1679
          %1681 = vmin.xlane.f32.xlu0 %v1435
          %v1682 = vpop.xlane.xlu0 %1681
          %1683 = vmin.xlane.f32.xlu0 %v1436
          %v1684 = vpop.xlane.xlu0 %1683
          %1685 = vmin.xlane.f32.xlu0 %v1437
          %v1686 = vpop.xlane.xlu0 %1685
          %1687 = vmin.xlane.f32.xlu0 %v1438
          %v1688 = vpop.xlane.xlu0 %1687
          %1689 = vmin.xlane.f32.xlu0 %v1439
          %v1690 = vpop.xlane.xlu0 %1689
          %1691 = vmin.xlane.f32.xlu0 %v1440
          %v1692 = vpop.xlane.xlu0 %1691
          %1693 = vmin.xlane.f32.xlu0 %v1441
          %v1694 = vpop.xlane.xlu0 %1693
          %1695 = vmin.xlane.f32.xlu0 %v1442
          %v1696 = vpop.xlane.xlu0 %1695
          %1697 = vmin.xlane.f32.xlu0 %v1443
          %v1698 = vpop.xlane.xlu0 %1697
          %1699 = vmin.xlane.f32.xlu0 %v1444
          %v1700 = vpop.xlane.xlu0 %1699
          %1701 = vmin.xlane.f32.xlu0 %v1445
          %v1702 = vpop.xlane.xlu0 %1701
          %1703 = vmin.xlane.f32.xlu0 %v1446
          %v1704 = vpop.xlane.xlu0 %1703
          %1705 = vmin.xlane.f32.xlu0 %v1447
          %v1706 = vpop.xlane.xlu0 %1705
          %vm1707 = vcmp.eq.f32.partialorder %v1416, %v1644
          %vm1708 = vcmp.eq.f32.partialorder %v1417, %v1646
          %vm1709 = vcmp.eq.f32.partialorder %v1418, %v1648
          %vm1710 = vcmp.eq.f32.partialorder %v1419, %v1650
          %vm1711 = vcmp.eq.f32.partialorder %v1420, %v1652
          %vm1712 = vcmp.eq.f32.partialorder %v1421, %v1654
          %vm1713 = vcmp.eq.f32.partialorder %v1422, %v1656
          %vm1714 = vcmp.eq.f32.partialorder %v1423, %v1658
          %vm1715 = vcmp.eq.f32.partialorder %v1424, %v1660
          %vm1716 = vcmp.eq.f32.partialorder %v1425, %v1662
          %vm1717 = vcmp.eq.f32.partialorder %v1426, %v1664
          %vm1718 = vcmp.eq.f32.partialorder %v1427, %v1666
          %vm1719 = vcmp.eq.f32.partialorder %v1428, %v1668
          %vm1720 = vcmp.eq.f32.partialorder %v1429, %v1670
          %vm1721 = vcmp.eq.f32.partialorder %v1430, %v1672
          %vm1722 = vcmp.eq.f32.partialorder %v1431, %v1674
          %vm1723 = vcmp.eq.f32.partialorder %v1432, %v1676
          %vm1724 = vcmp.eq.f32.partialorder %v1433, %v1678
          %vm1725 = vcmp.eq.f32.partialorder %v1434, %v1680
          %vm1726 = vcmp.eq.f32.partialorder %v1435, %v1682
          %vm1727 = vcmp.eq.f32.partialorder %v1436, %v1684
          %vm1728 = vcmp.eq.f32.partialorder %v1437, %v1686
          %vm1729 = vcmp.eq.f32.partialorder %v1438, %v1688
          %vm1730 = vcmp.eq.f32.partialorder %v1439, %v1690
          %vm1731 = vcmp.eq.f32.partialorder %v1440, %v1692
          %vm1732 = vcmp.eq.f32.partialorder %v1441, %v1694
          %vm1733 = vcmp.eq.f32.partialorder %v1442, %v1696
          %vm1734 = vcmp.eq.f32.partialorder %v1443, %v1698
          %vm1735 = vcmp.eq.f32.partialorder %v1444, %v1700
          %vm1736 = vcmp.eq.f32.partialorder %v1445, %v1702
          %vm1737 = vcmp.eq.f32.partialorder %v1446, %v1704
          %vm1738 = vcmp.eq.f32.partialorder %v1447, %v1706
          %v1739 = vsel %vm1707, %v1449, 128
          %v1740 = vsel %vm1708, %v1449, 128
          %v1741 = vsel %vm1709, %v1449, 128
          %v1742 = vsel %vm1710, %v1449, 128
          %v1743 = vsel %vm1711, %v1449, 128
          %v1744 = vsel %vm1712, %v1449, 128
          %v1745 = vsel %vm1713, %v1449, 128
          %v1746 = vsel %vm1714, %v1449, 128
          %v1747 = vsel %vm1715, %v1449, 128
          %v1748 = vsel %vm1716, %v1449, 128
          %v1749 = vsel %vm1717, %v1449, 128
          %v1750 = vsel %vm1718, %v1449, 128
          %v1751 = vsel %vm1719, %v1449, 128
          %v1752 = vsel %vm1720, %v1449, 128
          %v1753 = vsel %vm1721, %v1449, 128
          %v1754 = vsel %vm1722, %v1449, 128
          %v1755 = vsel %vm1723, %v1449, 128
          %v1756 = vsel %vm1724, %v1449, 128
          %v1757 = vsel %vm1725, %v1449, 128
          %v1758 = vsel %vm1726, %v1449, 128
          %v1759 = vsel %vm1727, %v1449, 128
          %v1760 = vsel %vm1728, %v1449, 128
          %v1761 = vsel %vm1729, %v1449, 128
          %v1762 = vsel %vm1730, %v1449, 128
          %v1763 = vsel %vm1731, %v1449, 128
          %v1764 = vsel %vm1732, %v1449, 128
          %v1765 = vsel %vm1733, %v1449, 128
          %v1766 = vsel %vm1734, %v1449, 128
          %v1767 = vsel %vm1735, %v1449, 128
          %v1768 = vsel %vm1736, %v1449, 128
          %v1769 = vsel %vm1737, %v1449, 128
          %v1770 = vsel %vm1738, %v1449, 128
          %v1771 = vand.u32 %v1739, 65535
          %v1772 = vshra.s32 %v1739, 16
          %v1773 = vcvt.s32.f32 %v1771
          %v1774 = vcvt.s32.f32 %v1772
          %1775 = vmin.xlane.f32.xlu0 %v1774
          %v1776 = vpop.xlane.xlu0 %1775
          %vm1777 = vcmp.eq.f32.partialorder %v1774, %v1776
          %v1778 = vsel %vm1777, %v1773, inf
          %1779 = vmin.xlane.f32.xlu0 %v1778
          %v1780 = vpop.xlane.xlu0 %1779
          %v1781 = vcvt.f32.s32 %v1780
          %v1782 = vcvt.f32.s32 %v1776
          %v1783 = vshll.u32 %v1782, 16
          %v1784 = vadd.s32 %v1783, %v1781
          %v1785 = vand.u32 %v1740, 65535
          %v1786 = vshra.s32 %v1740, 16
          %v1787 = vcvt.s32.f32 %v1785
          %v1788 = vcvt.s32.f32 %v1786
          %1789 = vmin.xlane.f32.xlu0 %v1788
          %v1790 = vpop.xlane.xlu0 %1789
          %vm1791 = vcmp.eq.f32.partialorder %v1788, %v1790
          %v1792 = vsel %vm1791, %v1787, inf
          %1793 = vmin.xlane.f32.xlu0 %v1792
          %v1794 = vpop.xlane.xlu0 %1793
          %v1795 = vcvt.f32.s32 %v1794
          %v1796 = vcvt.f32.s32 %v1790
          %v1797 = vshll.u32 %v1796, 16
          %v1798 = vadd.s32 %v1797, %v1795
          %v1799 = vand.u32 %v1741, 65535
          %v1800 = vshra.s32 %v1741, 16
          %v1801 = vcvt.s32.f32 %v1799
          %v1802 = vcvt.s32.f32 %v1800
          %1803 = vmin.xlane.f32.xlu0 %v1802
          %v1804 = vpop.xlane.xlu0 %1803
          %vm1805 = vcmp.eq.f32.partialorder %v1802, %v1804
          %v1806 = vsel %vm1805, %v1801, inf
          %1807 = vmin.xlane.f32.xlu0 %v1806
          %v1808 = vpop.xlane.xlu0 %1807
          %v1809 = vcvt.f32.s32 %v1808
          %v1810 = vcvt.f32.s32 %v1804
          %v1811 = vshll.u32 %v1810, 16
          %v1812 = vadd.s32 %v1811, %v1809
          %v1813 = vand.u32 %v1742, 65535
          %v1814 = vshra.s32 %v1742, 16
          %v1815 = vcvt.s32.f32 %v1813
          %v1816 = vcvt.s32.f32 %v1814
          %1817 = vmin.xlane.f32.xlu0 %v1816
          %v1818 = vpop.xlane.xlu0 %1817
          %vm1819 = vcmp.eq.f32.partialorder %v1816, %v1818
          %v1820 = vsel %vm1819, %v1815, inf
          %1821 = vmin.xlane.f32.xlu0 %v1820
          %v1822 = vpop.xlane.xlu0 %1821
          %v1823 = vcvt.f32.s32 %v1822
          %v1824 = vcvt.f32.s32 %v1818
          %v1825 = vshll.u32 %v1824, 16
          %v1826 = vadd.s32 %v1825, %v1823
          %v1827 = vand.u32 %v1743, 65535
          %v1828 = vshra.s32 %v1743, 16
          %v1829 = vcvt.s32.f32 %v1827
          %v1830 = vcvt.s32.f32 %v1828
          %1831 = vmin.xlane.f32.xlu0 %v1830
          %v1832 = vpop.xlane.xlu0 %1831
          %vm1833 = vcmp.eq.f32.partialorder %v1830, %v1832
          %v1834 = vsel %vm1833, %v1829, inf
          %1835 = vmin.xlane.f32.xlu0 %v1834
          %v1836 = vpop.xlane.xlu0 %1835
          %v1837 = vcvt.f32.s32 %v1836
          %v1838 = vcvt.f32.s32 %v1832
          %v1839 = vshll.u32 %v1838, 16
          %v1840 = vadd.s32 %v1839, %v1837
          %v1841 = vand.u32 %v1744, 65535
          %v1842 = vshra.s32 %v1744, 16
          %v1843 = vcvt.s32.f32 %v1841
          %v1844 = vcvt.s32.f32 %v1842
          %1845 = vmin.xlane.f32.xlu0 %v1844
          %v1846 = vpop.xlane.xlu0 %1845
          %vm1847 = vcmp.eq.f32.partialorder %v1844, %v1846
          %v1848 = vsel %vm1847, %v1843, inf
          %1849 = vmin.xlane.f32.xlu0 %v1848
          %v1850 = vpop.xlane.xlu0 %1849
          %v1851 = vcvt.f32.s32 %v1850
          %v1852 = vcvt.f32.s32 %v1846
          %v1853 = vshll.u32 %v1852, 16
          %v1854 = vadd.s32 %v1853, %v1851
          %v1855 = vand.u32 %v1745, 65535
          %v1856 = vshra.s32 %v1745, 16
          %v1857 = vcvt.s32.f32 %v1855
          %v1858 = vcvt.s32.f32 %v1856
          %1859 = vmin.xlane.f32.xlu0 %v1858
          %v1860 = vpop.xlane.xlu0 %1859
          %vm1861 = vcmp.eq.f32.partialorder %v1858, %v1860
          %v1862 = vsel %vm1861, %v1857, inf
          %1863 = vmin.xlane.f32.xlu0 %v1862
          %v1864 = vpop.xlane.xlu0 %1863
          %v1865 = vcvt.f32.s32 %v1864
          %v1866 = vcvt.f32.s32 %v1860
          %v1867 = vshll.u32 %v1866, 16
          %v1868 = vadd.s32 %v1867, %v1865
          %v1869 = vand.u32 %v1746, 65535
          %v1870 = vshra.s32 %v1746, 16
          %v1871 = vcvt.s32.f32 %v1869
          %v1872 = vcvt.s32.f32 %v1870
          %1873 = vmin.xlane.f32.xlu0 %v1872
          %v1874 = vpop.xlane.xlu0 %1873
          %vm1875 = vcmp.eq.f32.partialorder %v1872, %v1874
          %v1876 = vsel %vm1875, %v1871, inf
          %1877 = vmin.xlane.f32.xlu0 %v1876
          %v1878 = vpop.xlane.xlu0 %1877
          %v1879 = vcvt.f32.s32 %v1878
          %v1880 = vcvt.f32.s32 %v1874
          %v1881 = vshll.u32 %v1880, 16
          %v1882 = vadd.s32 %v1881, %v1879
          %v1883 = vand.u32 %v1747, 65535
          %v1884 = vshra.s32 %v1747, 16
          %v1885 = vcvt.s32.f32 %v1883
          %v1886 = vcvt.s32.f32 %v1884
          %1887 = vmin.xlane.f32.xlu0 %v1886
          %v1888 = vpop.xlane.xlu0 %1887
          %vm1889 = vcmp.eq.f32.partialorder %v1886, %v1888
          %v1890 = vsel %vm1889, %v1885, inf
          %1891 = vmin.xlane.f32.xlu0 %v1890
          %v1892 = vpop.xlane.xlu0 %1891
          %v1893 = vcvt.f32.s32 %v1892
          %v1894 = vcvt.f32.s32 %v1888
          %v1895 = vshll.u32 %v1894, 16
          %v1896 = vadd.s32 %v1895, %v1893
          %v1897 = vand.u32 %v1748, 65535
          %v1898 = vshra.s32 %v1748, 16
          %v1899 = vcvt.s32.f32 %v1897
          %v1900 = vcvt.s32.f32 %v1898
          %1901 = vmin.xlane.f32.xlu0 %v1900
          %v1902 = vpop.xlane.xlu0 %1901
          %vm1903 = vcmp.eq.f32.partialorder %v1900, %v1902
          %v1904 = vsel %vm1903, %v1899, inf
          %1905 = vmin.xlane.f32.xlu0 %v1904
          %v1906 = vpop.xlane.xlu0 %1905
          %v1907 = vcvt.f32.s32 %v1906
          %v1908 = vcvt.f32.s32 %v1902
          %v1909 = vshll.u32 %v1908, 16
          %v1910 = vadd.s32 %v1909, %v1907
          %v1911 = vand.u32 %v1749, 65535
          %v1912 = vshra.s32 %v1749, 16
          %v1913 = vcvt.s32.f32 %v1911
          %v1914 = vcvt.s32.f32 %v1912
          %1915 = vmin.xlane.f32.xlu0 %v1914
          %v1916 = vpop.xlane.xlu0 %1915
          %vm1917 = vcmp.eq.f32.partialorder %v1914, %v1916
          %v1918 = vsel %vm1917, %v1913, inf
          %1919 = vmin.xlane.f32.xlu0 %v1918
          %v1920 = vpop.xlane.xlu0 %1919
          %v1921 = vcvt.f32.s32 %v1920
          %v1922 = vcvt.f32.s32 %v1916
          %v1923 = vshll.u32 %v1922, 16
          %v1924 = vadd.s32 %v1923, %v1921
          %v1925 = vand.u32 %v1750, 65535
          %v1926 = vshra.s32 %v1750, 16
          %v1927 = vcvt.s32.f32 %v1925
          %v1928 = vcvt.s32.f32 %v1926
          %1929 = vmin.xlane.f32.xlu0 %v1928
          %v1930 = vpop.xlane.xlu0 %1929
          %vm1931 = vcmp.eq.f32.partialorder %v1928, %v1930
          %v1932 = vsel %vm1931, %v1927, inf
          %1933 = vmin.xlane.f32.xlu0 %v1932
          %v1934 = vpop.xlane.xlu0 %1933
          %v1935 = vcvt.f32.s32 %v1934
          %v1936 = vcvt.f32.s32 %v1930
          %v1937 = vshll.u32 %v1936, 16
          %v1938 = vadd.s32 %v1937, %v1935
          %v1939 = vand.u32 %v1751, 65535
          %v1940 = vshra.s32 %v1751, 16
          %v1941 = vcvt.s32.f32 %v1939
          %v1942 = vcvt.s32.f32 %v1940
          %1943 = vmin.xlane.f32.xlu0 %v1942
          %v1944 = vpop.xlane.xlu0 %1943
          %vm1945 = vcmp.eq.f32.partialorder %v1942, %v1944
          %v1946 = vsel %vm1945, %v1941, inf
          %1947 = vmin.xlane.f32.xlu0 %v1946
          %v1948 = vpop.xlane.xlu0 %1947
          %v1949 = vcvt.f32.s32 %v1948
          %v1950 = vcvt.f32.s32 %v1944
          %v1951 = vshll.u32 %v1950, 16
          %v1952 = vadd.s32 %v1951, %v1949
          %v1953 = vand.u32 %v1752, 65535
          %v1954 = vshra.s32 %v1752, 16
          %v1955 = vcvt.s32.f32 %v1953
          %v1956 = vcvt.s32.f32 %v1954
          %1957 = vmin.xlane.f32.xlu0 %v1956
          %v1958 = vpop.xlane.xlu0 %1957
          %vm1959 = vcmp.eq.f32.partialorder %v1956, %v1958
          %v1960 = vsel %vm1959, %v1955, inf
          %1961 = vmin.xlane.f32.xlu0 %v1960
          %v1962 = vpop.xlane.xlu0 %1961
          %v1963 = vcvt.f32.s32 %v1962
          %v1964 = vcvt.f32.s32 %v1958
          %v1965 = vshll.u32 %v1964, 16
          %v1966 = vadd.s32 %v1965, %v1963
          %v1967 = vand.u32 %v1753, 65535
          %v1968 = vshra.s32 %v1753, 16
          %v1969 = vcvt.s32.f32 %v1967
          %v1970 = vcvt.s32.f32 %v1968
          %1971 = vmin.xlane.f32.xlu0 %v1970
          %v1972 = vpop.xlane.xlu0 %1971
          %vm1973 = vcmp.eq.f32.partialorder %v1970, %v1972
          %v1974 = vsel %vm1973, %v1969, inf
          %1975 = vmin.xlane.f32.xlu0 %v1974
          %v1976 = vpop.xlane.xlu0 %1975
          %v1977 = vcvt.f32.s32 %v1976
          %v1978 = vcvt.f32.s32 %v1972
          %v1979 = vshll.u32 %v1978, 16
          %v1980 = vadd.s32 %v1979, %v1977
          %v1981 = vand.u32 %v1754, 65535
          %v1982 = vshra.s32 %v1754, 16
          %v1983 = vcvt.s32.f32 %v1981
          %v1984 = vcvt.s32.f32 %v1982
          %1985 = vmin.xlane.f32.xlu0 %v1984
          %v1986 = vpop.xlane.xlu0 %1985
          %vm1987 = vcmp.eq.f32.partialorder %v1984, %v1986
          %v1988 = vsel %vm1987, %v1983, inf
          %1989 = vmin.xlane.f32.xlu0 %v1988
          %v1990 = vpop.xlane.xlu0 %1989
          %v1991 = vcvt.f32.s32 %v1990
          %v1992 = vcvt.f32.s32 %v1986
          %v1993 = vshll.u32 %v1992, 16
          %v1994 = vadd.s32 %v1993, %v1991
          %v1995 = vand.u32 %v1755, 65535
          %v1996 = vshra.s32 %v1755, 16
          %v1997 = vcvt.s32.f32 %v1995
          %v1998 = vcvt.s32.f32 %v1996
          %1999 = vmin.xlane.f32.xlu0 %v1998
          %v2000 = vpop.xlane.xlu0 %1999
          %vm2001 = vcmp.eq.f32.partialorder %v1998, %v2000
          %v2002 = vsel %vm2001, %v1997, inf
          %2003 = vmin.xlane.f32.xlu0 %v2002
          %v2004 = vpop.xlane.xlu0 %2003
          %v2005 = vcvt.f32.s32 %v2004
          %v2006 = vcvt.f32.s32 %v2000
          %v2007 = vshll.u32 %v2006, 16
          %v2008 = vadd.s32 %v2007, %v2005
          %v2009 = vand.u32 %v1756, 65535
          %v2010 = vshra.s32 %v1756, 16
          %v2011 = vcvt.s32.f32 %v2009
          %v2012 = vcvt.s32.f32 %v2010
          %2013 = vmin.xlane.f32.xlu0 %v2012
          %v2014 = vpop.xlane.xlu0 %2013
          %vm2015 = vcmp.eq.f32.partialorder %v2012, %v2014
          %v2016 = vsel %vm2015, %v2011, inf
          %2017 = vmin.xlane.f32.xlu0 %v2016
          %v2018 = vpop.xlane.xlu0 %2017
          %v2019 = vcvt.f32.s32 %v2018
          %v2020 = vcvt.f32.s32 %v2014
          %v2021 = vshll.u32 %v2020, 16
          %v2022 = vadd.s32 %v2021, %v2019
          %v2023 = vand.u32 %v1757, 65535
          %v2024 = vshra.s32 %v1757, 16
          %v2025 = vcvt.s32.f32 %v2023
          %v2026 = vcvt.s32.f32 %v2024
          %2027 = vmin.xlane.f32.xlu0 %v2026
          %v2028 = vpop.xlane.xlu0 %2027
          %vm2029 = vcmp.eq.f32.partialorder %v2026, %v2028
          %v2030 = vsel %vm2029, %v2025, inf
          %2031 = vmin.xlane.f32.xlu0 %v2030
          %v2032 = vpop.xlane.xlu0 %2031
          %v2033 = vcvt.f32.s32 %v2032
          %v2034 = vcvt.f32.s32 %v2028
          %v2035 = vshll.u32 %v2034, 16
          %v2036 = vadd.s32 %v2035, %v2033
          %v2037 = vand.u32 %v1758, 65535
          %v2038 = vshra.s32 %v1758, 16
          %v2039 = vcvt.s32.f32 %v2037
          %v2040 = vcvt.s32.f32 %v2038
          %2041 = vmin.xlane.f32.xlu0 %v2040
          %v2042 = vpop.xlane.xlu0 %2041
          %vm2043 = vcmp.eq.f32.partialorder %v2040, %v2042
          %v2044 = vsel %vm2043, %v2039, inf
          %2045 = vmin.xlane.f32.xlu0 %v2044
          %v2046 = vpop.xlane.xlu0 %2045
          %v2047 = vcvt.f32.s32 %v2046
          %v2048 = vcvt.f32.s32 %v2042
          %v2049 = vshll.u32 %v2048, 16
          %v2050 = vadd.s32 %v2049, %v2047
          %v2051 = vand.u32 %v1759, 65535
          %v2052 = vshra.s32 %v1759, 16
          %v2053 = vcvt.s32.f32 %v2051
          %v2054 = vcvt.s32.f32 %v2052
          %2055 = vmin.xlane.f32.xlu0 %v2054
          %v2056 = vpop.xlane.xlu0 %2055
          %vm2057 = vcmp.eq.f32.partialorder %v2054, %v2056
          %v2058 = vsel %vm2057, %v2053, inf
          %2059 = vmin.xlane.f32.xlu0 %v2058
          %v2060 = vpop.xlane.xlu0 %2059
          %v2061 = vcvt.f32.s32 %v2060
          %v2062 = vcvt.f32.s32 %v2056
          %v2063 = vshll.u32 %v2062, 16
          %v2064 = vadd.s32 %v2063, %v2061
          %v2065 = vand.u32 %v1760, 65535
          %v2066 = vshra.s32 %v1760, 16
          %v2067 = vcvt.s32.f32 %v2065
          %v2068 = vcvt.s32.f32 %v2066
          %2069 = vmin.xlane.f32.xlu0 %v2068
          %v2070 = vpop.xlane.xlu0 %2069
          %vm2071 = vcmp.eq.f32.partialorder %v2068, %v2070
          %v2072 = vsel %vm2071, %v2067, inf
          %2073 = vmin.xlane.f32.xlu0 %v2072
          %v2074 = vpop.xlane.xlu0 %2073
          %v2075 = vcvt.f32.s32 %v2074
          %v2076 = vcvt.f32.s32 %v2070
          %v2077 = vshll.u32 %v2076, 16
          %v2078 = vadd.s32 %v2077, %v2075
          %v2079 = vand.u32 %v1761, 65535
          %v2080 = vshra.s32 %v1761, 16
          %v2081 = vcvt.s32.f32 %v2079
          %v2082 = vcvt.s32.f32 %v2080
          %2083 = vmin.xlane.f32.xlu0 %v2082
          %v2084 = vpop.xlane.xlu0 %2083
          %vm2085 = vcmp.eq.f32.partialorder %v2082, %v2084
          %v2086 = vsel %vm2085, %v2081, inf
          %2087 = vmin.xlane.f32.xlu0 %v2086
          %v2088 = vpop.xlane.xlu0 %2087
          %v2089 = vcvt.f32.s32 %v2088
          %v2090 = vcvt.f32.s32 %v2084
          %v2091 = vshll.u32 %v2090, 16
          %v2092 = vadd.s32 %v2091, %v2089
          %v2093 = vand.u32 %v1762, 65535
          %v2094 = vshra.s32 %v1762, 16
          %v2095 = vcvt.s32.f32 %v2093
          %v2096 = vcvt.s32.f32 %v2094
          %2097 = vmin.xlane.f32.xlu0 %v2096
          %v2098 = vpop.xlane.xlu0 %2097
          %vm2099 = vcmp.eq.f32.partialorder %v2096, %v2098
          %v2100 = vsel %vm2099, %v2095, inf
          %2101 = vmin.xlane.f32.xlu0 %v2100
          %v2102 = vpop.xlane.xlu0 %2101
          %v2103 = vcvt.f32.s32 %v2102
          %v2104 = vcvt.f32.s32 %v2098
          %v2105 = vshll.u32 %v2104, 16
          %v2106 = vadd.s32 %v2105, %v2103
          %v2107 = vand.u32 %v1763, 65535
          %v2108 = vshra.s32 %v1763, 16
          %v2109 = vcvt.s32.f32 %v2107
          %v2110 = vcvt.s32.f32 %v2108
          %2111 = vmin.xlane.f32.xlu0 %v2110
          %v2112 = vpop.xlane.xlu0 %2111
          %vm2113 = vcmp.eq.f32.partialorder %v2110, %v2112
          %v2114 = vsel %vm2113, %v2109, inf
          %2115 = vmin.xlane.f32.xlu0 %v2114
          %v2116 = vpop.xlane.xlu0 %2115
          %v2117 = vcvt.f32.s32 %v2116
          %v2118 = vcvt.f32.s32 %v2112
          %v2119 = vshll.u32 %v2118, 16
          %v2120 = vadd.s32 %v2119, %v2117
          %v2121 = vand.u32 %v1764, 65535
          %v2122 = vshra.s32 %v1764, 16
          %v2123 = vcvt.s32.f32 %v2121
          %v2124 = vcvt.s32.f32 %v2122
          %2125 = vmin.xlane.f32.xlu0 %v2124
          %v2126 = vpop.xlane.xlu0 %2125
          %vm2127 = vcmp.eq.f32.partialorder %v2124, %v2126
          %v2128 = vsel %vm2127, %v2123, inf
          %2129 = vmin.xlane.f32.xlu0 %v2128
          %v2130 = vpop.xlane.xlu0 %2129
          %v2131 = vcvt.f32.s32 %v2130
          %v2132 = vcvt.f32.s32 %v2126
          %v2133 = vshll.u32 %v2132, 16
          %v2134 = vadd.s32 %v2133, %v2131
          %v2135 = vand.u32 %v1765, 65535
          %v2136 = vshra.s32 %v1765, 16
          %v2137 = vcvt.s32.f32 %v2135
          %v2138 = vcvt.s32.f32 %v2136
          %2139 = vmin.xlane.f32.xlu0 %v2138
          %v2140 = vpop.xlane.xlu0 %2139
          %vm2141 = vcmp.eq.f32.partialorder %v2138, %v2140
          %v2142 = vsel %vm2141, %v2137, inf
          %2143 = vmin.xlane.f32.xlu0 %v2142
          %v2144 = vpop.xlane.xlu0 %2143
          %v2145 = vcvt.f32.s32 %v2144
          %v2146 = vcvt.f32.s32 %v2140
          %v2147 = vshll.u32 %v2146, 16
          %v2148 = vadd.s32 %v2147, %v2145
          %v2149 = vand.u32 %v1766, 65535
          %v2150 = vshra.s32 %v1766, 16
          %v2151 = vcvt.s32.f32 %v2149
          %v2152 = vcvt.s32.f32 %v2150
          %2153 = vmin.xlane.f32.xlu0 %v2152
          %v2154 = vpop.xlane.xlu0 %2153
          %vm2155 = vcmp.eq.f32.partialorder %v2152, %v2154
          %v2156 = vsel %vm2155, %v2151, inf
          %2157 = vmin.xlane.f32.xlu0 %v2156
          %v2158 = vpop.xlane.xlu0 %2157
          %v2159 = vcvt.f32.s32 %v2158
          %v2160 = vcvt.f32.s32 %v2154
          %v2161 = vshll.u32 %v2160, 16
          %v2162 = vadd.s32 %v2161, %v2159
          %v2163 = vand.u32 %v1767, 65535
          %v2164 = vshra.s32 %v1767, 16
          %v2165 = vcvt.s32.f32 %v2163
          %v2166 = vcvt.s32.f32 %v2164
          %2167 = vmin.xlane.f32.xlu0 %v2166
          %v2168 = vpop.xlane.xlu0 %2167
          %vm2169 = vcmp.eq.f32.partialorder %v2166, %v2168
          %v2170 = vsel %vm2169, %v2165, inf
          %2171 = vmin.xlane.f32.xlu0 %v2170
          %v2172 = vpop.xlane.xlu0 %2171
          %v2173 = vcvt.f32.s32 %v2172
          %v2174 = vcvt.f32.s32 %v2168
          %v2175 = vshll.u32 %v2174, 16
          %v2176 = vadd.s32 %v2175, %v2173
          %v2177 = vand.u32 %v1768, 65535
          %v2178 = vshra.s32 %v1768, 16
          %v2179 = vcvt.s32.f32 %v2177
          %v2180 = vcvt.s32.f32 %v2178
          %2181 = vmin.xlane.f32.xlu0 %v2180
          %v2182 = vpop.xlane.xlu0 %2181
          %vm2183 = vcmp.eq.f32.partialorder %v2180, %v2182
          %v2184 = vsel %vm2183, %v2179, inf
          %2185 = vmin.xlane.f32.xlu0 %v2184
          %v2186 = vpop.xlane.xlu0 %2185
          %v2187 = vcvt.f32.s32 %v2186
          %v2188 = vcvt.f32.s32 %v2182
          %v2189 = vshll.u32 %v2188, 16
          %v2190 = vadd.s32 %v2189, %v2187
          %v2191 = vand.u32 %v1769, 65535
          %v2192 = vshra.s32 %v1769, 16
          %v2193 = vcvt.s32.f32 %v2191
          %v2194 = vcvt.s32.f32 %v2192
          %2195 = vmin.xlane.f32.xlu0 %v2194
          %v2196 = vpop.xlane.xlu0 %2195
          %vm2197 = vcmp.eq.f32.partialorder %v2194, %v2196
          %v2198 = vsel %vm2197, %v2193, inf
          %2199 = vmin.xlane.f32.xlu0 %v2198
          %v2200 = vpop.xlane.xlu0 %2199
          %v2201 = vcvt.f32.s32 %v2200
          %v2202 = vcvt.f32.s32 %v2196
          %v2203 = vshll.u32 %v2202, 16
          %v2204 = vadd.s32 %v2203, %v2201
          %v2205 = vand.u32 %v1770, 65535
          %v2206 = vshra.s32 %v1770, 16
          %v2207 = vcvt.s32.f32 %v2205
          %v2208 = vcvt.s32.f32 %v2206
          %2209 = vmin.xlane.f32.xlu0 %v2208
          %v2210 = vpop.xlane.xlu0 %2209
          %vm2211 = vcmp.eq.f32.partialorder %v2208, %v2210
          %v2212 = vsel %vm2211, %v2207, inf
          %2213 = vmin.xlane.f32.xlu0 %v2212
          %v2214 = vpop.xlane.xlu0 %2213
          %v2215 = vcvt.f32.s32 %v2214
          %v2216 = vcvt.f32.s32 %v2210
          %v2217 = vshll.u32 %v2216, 16
          %v2218 = vadd.s32 %v2217, %v2215
          %vm2219 = vcmp.eq.s32.totalorder %v1449, %v1784
          %vm2220 = vcmp.eq.s32.totalorder %v1449, %v1798
          %vm2221 = vcmp.eq.s32.totalorder %v1449, %v1812
          %vm2222 = vcmp.eq.s32.totalorder %v1449, %v1826
          %vm2223 = vcmp.eq.s32.totalorder %v1449, %v1840
          %vm2224 = vcmp.eq.s32.totalorder %v1449, %v1854
          %vm2225 = vcmp.eq.s32.totalorder %v1449, %v1868
          %vm2226 = vcmp.eq.s32.totalorder %v1449, %v1882
          %vm2227 = vcmp.eq.s32.totalorder %v1449, %v1896
          %vm2228 = vcmp.eq.s32.totalorder %v1449, %v1910
          %vm2229 = vcmp.eq.s32.totalorder %v1449, %v1924
          %vm2230 = vcmp.eq.s32.totalorder %v1449, %v1938
          %vm2231 = vcmp.eq.s32.totalorder %v1449, %v1952
          %vm2232 = vcmp.eq.s32.totalorder %v1449, %v1966
          %vm2233 = vcmp.eq.s32.totalorder %v1449, %v1980
          %vm2234 = vcmp.eq.s32.totalorder %v1449, %v1994
          %vm2235 = vcmp.eq.s32.totalorder %v1449, %v2008
          %vm2236 = vcmp.eq.s32.totalorder %v1449, %v2022
          %vm2237 = vcmp.eq.s32.totalorder %v1449, %v2036
          %vm2238 = vcmp.eq.s32.totalorder %v1449, %v2050
          %vm2239 = vcmp.eq.s32.totalorder %v1449, %v2064
          %vm2240 = vcmp.eq.s32.totalorder %v1449, %v2078
          %vm2241 = vcmp.eq.s32.totalorder %v1449, %v2092
          %vm2242 = vcmp.eq.s32.totalorder %v1449, %v2106
          %vm2243 = vcmp.eq.s32.totalorder %v1449, %v2120
          %vm2244 = vcmp.eq.s32.totalorder %v1449, %v2134
          %vm2245 = vcmp.eq.s32.totalorder %v1449, %v2148
          %vm2246 = vcmp.eq.s32.totalorder %v1449, %v2162
          %vm2247 = vcmp.eq.s32.totalorder %v1449, %v2176
          %vm2248 = vcmp.eq.s32.totalorder %v1449, %v2190
          %vm2249 = vcmp.eq.s32.totalorder %v1449, %v2204
          %vm2250 = vcmp.eq.s32.totalorder %v1449, %v2218
          %v2251 = vsel %vm2219, 1e+30, %v1416
          %v2252 = vsel %vm2220, 1e+30, %v1417
          %v2253 = vsel %vm2221, 1e+30, %v1418
          %v2254 = vsel %vm2222, 1e+30, %v1419
          %v2255 = vsel %vm2223, 1e+30, %v1420
          %v2256 = vsel %vm2224, 1e+30, %v1421
          %v2257 = vsel %vm2225, 1e+30, %v1422
          %v2258 = vsel %vm2226, 1e+30, %v1423
          %v2259 = vsel %vm2227, 1e+30, %v1424
          %v2260 = vsel %vm2228, 1e+30, %v1425
          %v2261 = vsel %vm2229, 1e+30, %v1426
          %v2262 = vsel %vm2230, 1e+30, %v1427
          %v2263 = vsel %vm2231, 1e+30, %v1428
          %v2264 = vsel %vm2232, 1e+30, %v1429
          %v2265 = vsel %vm2233, 1e+30, %v1430
          %v2266 = vsel %vm2234, 1e+30, %v1431
          %v2267 = vsel %vm2235, 1e+30, %v1432
          %v2268 = vsel %vm2236, 1e+30, %v1433
          %v2269 = vsel %vm2237, 1e+30, %v1434
          %v2270 = vsel %vm2238, 1e+30, %v1435
          %v2271 = vsel %vm2239, 1e+30, %v1436
          %v2272 = vsel %vm2240, 1e+30, %v1437
          %v2273 = vsel %vm2241, 1e+30, %v1438
          %v2274 = vsel %vm2242, 1e+30, %v1439
          %v2275 = vsel %vm2243, 1e+30, %v1440
          %v2276 = vsel %vm2244, 1e+30, %v1441
          %v2277 = vsel %vm2245, 1e+30, %v1442
          %v2278 = vsel %vm2246, 1e+30, %v1443
          %v2279 = vsel %vm2247, 1e+30, %v1444
          %v2280 = vsel %vm2248, 1e+30, %v1445
          %v2281 = vsel %vm2249, 1e+30, %v1446
          %v2282 = vsel %vm2250, 1e+30, %v1447
          %v2283 = vstv %s1450
          %v2284 = vadd.s32 %v1784, %v2283
          %v2285 = vadd.s32 %v1798, %v2283
          %v2286 = vadd.s32 %v1812, %v2283
          %v2287 = vadd.s32 %v1826, %v2283
          %v2288 = vadd.s32 %v1840, %v2283
          %v2289 = vadd.s32 %v1854, %v2283
          %v2290 = vadd.s32 %v1868, %v2283
          %v2291 = vadd.s32 %v1882, %v2283
          %v2292 = vadd.s32 %v1896, %v2283
          %v2293 = vadd.s32 %v1910, %v2283
          %v2294 = vadd.s32 %v1924, %v2283
          %v2295 = vadd.s32 %v1938, %v2283
          %v2296 = vadd.s32 %v1952, %v2283
          %v2297 = vadd.s32 %v1966, %v2283
          %v2298 = vadd.s32 %v1980, %v2283
          %v2299 = vadd.s32 %v1994, %v2283
          %v2300 = vadd.s32 %v2008, %v2283
          %v2301 = vadd.s32 %v2022, %v2283
          %v2302 = vadd.s32 %v2036, %v2283
          %v2303 = vadd.s32 %v2050, %v2283
          %v2304 = vadd.s32 %v2064, %v2283
          %v2305 = vadd.s32 %v2078, %v2283
          %v2306 = vadd.s32 %v2092, %v2283
          %v2307 = vadd.s32 %v2106, %v2283
          %v2308 = vadd.s32 %v2120, %v2283
          %v2309 = vadd.s32 %v2134, %v2283
          %v2310 = vadd.s32 %v2148, %v2283
          %v2311 = vadd.s32 %v2162, %v2283
          %v2312 = vadd.s32 %v2176, %v2283
          %v2313 = vadd.s32 %v2190, %v2283
          %v2314 = vadd.s32 %v2204, %v2283
          %v2315 = vadd.s32 %v2218, %v2283
          %vm2316 = vcmp.lt.f32.partialorder %v1644, %v1451
          %vm2317 = vcmp.lt.f32.partialorder %v1646, %v1452
          %vm2318 = vcmp.lt.f32.partialorder %v1648, %v1453
          %vm2319 = vcmp.lt.f32.partialorder %v1650, %v1454
          %vm2320 = vcmp.lt.f32.partialorder %v1652, %v1455
          %vm2321 = vcmp.lt.f32.partialorder %v1654, %v1456
          %vm2322 = vcmp.lt.f32.partialorder %v1656, %v1457
          %vm2323 = vcmp.lt.f32.partialorder %v1658, %v1458
          %vm2324 = vcmp.lt.f32.partialorder %v1660, %v1459
          %vm2325 = vcmp.lt.f32.partialorder %v1662, %v1460
          %vm2326 = vcmp.lt.f32.partialorder %v1664, %v1461
          %vm2327 = vcmp.lt.f32.partialorder %v1666, %v1462
          %vm2328 = vcmp.lt.f32.partialorder %v1668, %v1463
          %vm2329 = vcmp.lt.f32.partialorder %v1670, %v1464
          %vm2330 = vcmp.lt.f32.partialorder %v1672, %v1465
          %vm2331 = vcmp.lt.f32.partialorder %v1674, %v1466
          %vm2332 = vcmp.lt.f32.partialorder %v1676, %v1467
          %vm2333 = vcmp.lt.f32.partialorder %v1678, %v1468
          %vm2334 = vcmp.lt.f32.partialorder %v1680, %v1469
          %vm2335 = vcmp.lt.f32.partialorder %v1682, %v1470
          %vm2336 = vcmp.lt.f32.partialorder %v1684, %v1471
          %vm2337 = vcmp.lt.f32.partialorder %v1686, %v1472
          %vm2338 = vcmp.lt.f32.partialorder %v1688, %v1473
          %vm2339 = vcmp.lt.f32.partialorder %v1690, %v1474
          %vm2340 = vcmp.lt.f32.partialorder %v1692, %v1475
          %vm2341 = vcmp.lt.f32.partialorder %v1694, %v1476
          %vm2342 = vcmp.lt.f32.partialorder %v1696, %v1477
          %vm2343 = vcmp.lt.f32.partialorder %v1698, %v1478
          %vm2344 = vcmp.lt.f32.partialorder %v1700, %v1479
          %vm2345 = vcmp.lt.f32.partialorder %v1702, %v1480
          %vm2346 = vcmp.lt.f32.partialorder %v1704, %v1481
          %vm2347 = vcmp.lt.f32.partialorder %v1706, %v1482
          %vm2348 = vcmp.lt.f32.partialorder %v1644, %v1483
          %vm2349 = vcmp.lt.f32.partialorder %v1646, %v1484
          %vm2350 = vcmp.lt.f32.partialorder %v1648, %v1485
          %vm2351 = vcmp.lt.f32.partialorder %v1650, %v1486
          %vm2352 = vcmp.lt.f32.partialorder %v1652, %v1487
          %vm2353 = vcmp.lt.f32.partialorder %v1654, %v1488
          %vm2354 = vcmp.lt.f32.partialorder %v1656, %v1489
          %vm2355 = vcmp.lt.f32.partialorder %v1658, %v1490
          %vm2356 = vcmp.lt.f32.partialorder %v1660, %v1491
          %vm2357 = vcmp.lt.f32.partialorder %v1662, %v1492
          %vm2358 = vcmp.lt.f32.partialorder %v1664, %v1493
          %vm2359 = vcmp.lt.f32.partialorder %v1666, %v1494
          %vm2360 = vcmp.lt.f32.partialorder %v1668, %v1495
          %vm2361 = vcmp.lt.f32.partialorder %v1670, %v1496
          %vm2362 = vcmp.lt.f32.partialorder %v1672, %v1497
          %vm2363 = vcmp.lt.f32.partialorder %v1674, %v1498
          %vm2364 = vcmp.lt.f32.partialorder %v1676, %v1499
          %vm2365 = vcmp.lt.f32.partialorder %v1678, %v1500
          %vm2366 = vcmp.lt.f32.partialorder %v1680, %v1501
          %vm2367 = vcmp.lt.f32.partialorder %v1682, %v1502
          %vm2368 = vcmp.lt.f32.partialorder %v1684, %v1503
          %vm2369 = vcmp.lt.f32.partialorder %v1686, %v1504
          %vm2370 = vcmp.lt.f32.partialorder %v1688, %v1505
          %vm2371 = vcmp.lt.f32.partialorder %v1690, %v1506
          %vm2372 = vcmp.lt.f32.partialorder %v1692, %v1507
          %vm2373 = vcmp.lt.f32.partialorder %v1694, %v1508
          %vm2374 = vcmp.lt.f32.partialorder %v1696, %v1509
          %vm2375 = vcmp.lt.f32.partialorder %v1698, %v1510
          %vm2376 = vcmp.lt.f32.partialorder %v1700, %v1511
          %vm2377 = vcmp.lt.f32.partialorder %v1702, %v1512
          %vm2378 = vcmp.lt.f32.partialorder %v1704, %v1513
          %vm2379 = vcmp.lt.f32.partialorder %v1706, %v1514
          %vm2380 = vcmp.lt.f32.partialorder %v1644, %v1515
          %vm2381 = vcmp.lt.f32.partialorder %v1646, %v1516
          %vm2382 = vcmp.lt.f32.partialorder %v1648, %v1517
          %vm2383 = vcmp.lt.f32.partialorder %v1650, %v1518
          %vm2384 = vcmp.lt.f32.partialorder %v1652, %v1519
          %vm2385 = vcmp.lt.f32.partialorder %v1654, %v1520
          %vm2386 = vcmp.lt.f32.partialorder %v1656, %v1521
          %vm2387 = vcmp.lt.f32.partialorder %v1658, %v1522
          %vm2388 = vcmp.lt.f32.partialorder %v1660, %v1523
          %vm2389 = vcmp.lt.f32.partialorder %v1662, %v1524
          %vm2390 = vcmp.lt.f32.partialorder %v1664, %v1525
          %vm2391 = vcmp.lt.f32.partialorder %v1666, %v1526
          %vm2392 = vcmp.lt.f32.partialorder %v1668, %v1527
          %vm2393 = vcmp.lt.f32.partialorder %v1670, %v1528
          %vm2394 = vcmp.lt.f32.partialorder %v1672, %v1529
          %vm2395 = vcmp.lt.f32.partialorder %v1674, %v1530
          %vm2396 = vcmp.lt.f32.partialorder %v1676, %v1531
          %vm2397 = vcmp.lt.f32.partialorder %v1678, %v1532
          %vm2398 = vcmp.lt.f32.partialorder %v1680, %v1533
          %vm2399 = vcmp.lt.f32.partialorder %v1682, %v1534
          %vm2400 = vcmp.lt.f32.partialorder %v1684, %v1535
          %vm2401 = vcmp.lt.f32.partialorder %v1686, %v1536
          %vm2402 = vcmp.lt.f32.partialorder %v1688, %v1537
          %vm2403 = vcmp.lt.f32.partialorder %v1690, %v1538
          %vm2404 = vcmp.lt.f32.partialorder %v1692, %v1539
          %vm2405 = vcmp.lt.f32.partialorder %v1694, %v1540
          %vm2406 = vcmp.lt.f32.partialorder %v1696, %v1541
          %vm2407 = vcmp.lt.f32.partialorder %v1698, %v1542
          %vm2408 = vcmp.lt.f32.partialorder %v1700, %v1543
          %vm2409 = vcmp.lt.f32.partialorder %v1702, %v1544
          %vm2410 = vcmp.lt.f32.partialorder %v1704, %v1545
          %vm2411 = vcmp.lt.f32.partialorder %v1706, %v1546
          %v2412 = vsel %vm2380, %v1644, %v1515
          %v2413 = vsel %vm2381, %v1646, %v1516
          %v2414 = vsel %vm2382, %v1648, %v1517
          %v2415 = vsel %vm2383, %v1650, %v1518
          %v2416 = vsel %vm2384, %v1652, %v1519
          %v2417 = vsel %vm2385, %v1654, %v1520
          %v2418 = vsel %vm2386, %v1656, %v1521
          %v2419 = vsel %vm2387, %v1658, %v1522
          %v2420 = vsel %vm2388, %v1660, %v1523
          %v2421 = vsel %vm2389, %v1662, %v1524
          %v2422 = vsel %vm2390, %v1664, %v1525
          %v2423 = vsel %vm2391, %v1666, %v1526
          %v2424 = vsel %vm2392, %v1668, %v1527
          %v2425 = vsel %vm2393, %v1670, %v1528
          %v2426 = vsel %vm2394, %v1672, %v1529
          %v2427 = vsel %vm2395, %v1674, %v1530
          %v2428 = vsel %vm2396, %v1676, %v1531
          %v2429 = vsel %vm2397, %v1678, %v1532
          %v2430 = vsel %vm2398, %v1680, %v1533
          %v2431 = vsel %vm2399, %v1682, %v1534
          %v2432 = vsel %vm2400, %v1684, %v1535
          %v2433 = vsel %vm2401, %v1686, %v1536
          %v2434 = vsel %vm2402, %v1688, %v1537
          %v2435 = vsel %vm2403, %v1690, %v1538
          %v2436 = vsel %vm2404, %v1692, %v1539
          %v2437 = vsel %vm2405, %v1694, %v1540
          %v2438 = vsel %vm2406, %v1696, %v1541
          %v2439 = vsel %vm2407, %v1698, %v1542
          %v2440 = vsel %vm2408, %v1700, %v1543
          %v2441 = vsel %vm2409, %v1702, %v1544
          %v2442 = vsel %vm2410, %v1704, %v1545
          %v2443 = vsel %vm2411, %v1706, %v1546
          %v2444 = vsel %vm2348, %v1483, %v2412
          %v2445 = vsel %vm2349, %v1484, %v2413
          %v2446 = vsel %vm2350, %v1485, %v2414
          %v2447 = vsel %vm2351, %v1486, %v2415
          %v2448 = vsel %vm2352, %v1487, %v2416
          %v2449 = vsel %vm2353, %v1488, %v2417
          %v2450 = vsel %vm2354, %v1489, %v2418
          %v2451 = vsel %vm2355, %v1490, %v2419
          %v2452 = vsel %vm2356, %v1491, %v2420
          %v2453 = vsel %vm2357, %v1492, %v2421
          %v2454 = vsel %vm2358, %v1493, %v2422
          %v2455 = vsel %vm2359, %v1494, %v2423
          %v2456 = vsel %vm2360, %v1495, %v2424
          %v2457 = vsel %vm2361, %v1496, %v2425
          %v2458 = vsel %vm2362, %v1497, %v2426
          %v2459 = vsel %vm2363, %v1498, %v2427
          %v2460 = vsel %vm2364, %v1499, %v2428
          %v2461 = vsel %vm2365, %v1500, %v2429
          %v2462 = vsel %vm2366, %v1501, %v2430
          %v2463 = vsel %vm2367, %v1502, %v2431
          %v2464 = vsel %vm2368, %v1503, %v2432
          %v2465 = vsel %vm2369, %v1504, %v2433
          %v2466 = vsel %vm2370, %v1505, %v2434
          %v2467 = vsel %vm2371, %v1506, %v2435
          %v2468 = vsel %vm2372, %v1507, %v2436
          %v2469 = vsel %vm2373, %v1508, %v2437
          %v2470 = vsel %vm2374, %v1509, %v2438
          %v2471 = vsel %vm2375, %v1510, %v2439
          %v2472 = vsel %vm2376, %v1511, %v2440
          %v2473 = vsel %vm2377, %v1512, %v2441
          %v2474 = vsel %vm2378, %v1513, %v2442
          %v2475 = vsel %vm2379, %v1514, %v2443
          %v2476 = vsel %vm2380, %v2284, %v1611
          %v2477 = vsel %vm2381, %v2285, %v1612
          %v2478 = vsel %vm2382, %v2286, %v1613
          %v2479 = vsel %vm2383, %v2287, %v1614
          %v2480 = vsel %vm2384, %v2288, %v1615
          %v2481 = vsel %vm2385, %v2289, %v1616
          %v2482 = vsel %vm2386, %v2290, %v1617
          %v2483 = vsel %vm2387, %v2291, %v1618
          %v2484 = vsel %vm2388, %v2292, %v1619
          %v2485 = vsel %vm2389, %v2293, %v1620
          %v2486 = vsel %vm2390, %v2294, %v1621
          %v2487 = vsel %vm2391, %v2295, %v1622
          %v2488 = vsel %vm2392, %v2296, %v1623
          %v2489 = vsel %vm2393, %v2297, %v1624
          %v2490 = vsel %vm2394, %v2298, %v1625
          %v2491 = vsel %vm2395, %v2299, %v1626
          %v2492 = vsel %vm2396, %v2300, %v1627
          %v2493 = vsel %vm2397, %v2301, %v1628
          %v2494 = vsel %vm2398, %v2302, %v1629
          %v2495 = vsel %vm2399, %v2303, %v1630
          %v2496 = vsel %vm2400, %v2304, %v1631
          %v2497 = vsel %vm2401, %v2305, %v1632
          %v2498 = vsel %vm2402, %v2306, %v1633
          %v2499 = vsel %vm2403, %v2307, %v1634
          %v2500 = vsel %vm2404, %v2308, %v1635
          %v2501 = vsel %vm2405, %v2309, %v1636
          %v2502 = vsel %vm2406, %v2310, %v1637
          %v2503 = vsel %vm2407, %v2311, %v1638
          %v2504 = vsel %vm2408, %v2312, %v1639
          %v2505 = vsel %vm2409, %v2313, %v1640
          %v2506 = vsel %vm2410, %v2314, %v1641
          %v2507 = vsel %vm2411, %v2315, %v1642
          %v2508 = vsel %vm2348, %v1579, %v2476
          %v2509 = vsel %vm2349, %v1580, %v2477
          %v2510 = vsel %vm2350, %v1581, %v2478
          %v2511 = vsel %vm2351, %v1582, %v2479
          %v2512 = vsel %vm2352, %v1583, %v2480
          %v2513 = vsel %vm2353, %v1584, %v2481
          %v2514 = vsel %vm2354, %v1585, %v2482
          %v2515 = vsel %vm2355, %v1586, %v2483
          %v2516 = vsel %vm2356, %v1587, %v2484
          %v2517 = vsel %vm2357, %v1588, %v2485
          %v2518 = vsel %vm2358, %v1589, %v2486
          %v2519 = vsel %vm2359, %v1590, %v2487
          %v2520 = vsel %vm2360, %v1591, %v2488
          %v2521 = vsel %vm2361, %v1592, %v2489
          %v2522 = vsel %vm2362, %v1593, %v2490
          %v2523 = vsel %vm2363, %v1594, %v2491
          %v2524 = vsel %vm2364, %v1595, %v2492
          %v2525 = vsel %vm2365, %v1596, %v2493
          %v2526 = vsel %vm2366, %v1597, %v2494
          %v2527 = vsel %vm2367, %v1598, %v2495
          %v2528 = vsel %vm2368, %v1599, %v2496
          %v2529 = vsel %vm2369, %v1600, %v2497
          %v2530 = vsel %vm2370, %v1601, %v2498
          %v2531 = vsel %vm2371, %v1602, %v2499
          %v2532 = vsel %vm2372, %v1603, %v2500
          %v2533 = vsel %vm2373, %v1604, %v2501
          %v2534 = vsel %vm2374, %v1605, %v2502
          %v2535 = vsel %vm2375, %v1606, %v2503
          %v2536 = vsel %vm2376, %v1607, %v2504
          %v2537 = vsel %vm2377, %v1608, %v2505
          %v2538 = vsel %vm2378, %v1609, %v2506
          %v2539 = vsel %vm2379, %v1610, %v2507
          %v2540 = vsel %vm2348, %v1644, %v1483
          %v2541 = vsel %vm2349, %v1646, %v1484
          %v2542 = vsel %vm2350, %v1648, %v1485
          %v2543 = vsel %vm2351, %v1650, %v1486
          %v2544 = vsel %vm2352, %v1652, %v1487
          %v2545 = vsel %vm2353, %v1654, %v1488
          %v2546 = vsel %vm2354, %v1656, %v1489
          %v2547 = vsel %vm2355, %v1658, %v1490
          %v2548 = vsel %vm2356, %v1660, %v1491
          %v2549 = vsel %vm2357, %v1662, %v1492
          %v2550 = vsel %vm2358, %v1664, %v1493
          %v2551 = vsel %vm2359, %v1666, %v1494
          %v2552 = vsel %vm2360, %v1668, %v1495
          %v2553 = vsel %vm2361, %v1670, %v1496
          %v2554 = vsel %vm2362, %v1672, %v1497
          %v2555 = vsel %vm2363, %v1674, %v1498
          %v2556 = vsel %vm2364, %v1676, %v1499
          %v2557 = vsel %vm2365, %v1678, %v1500
          %v2558 = vsel %vm2366, %v1680, %v1501
          %v2559 = vsel %vm2367, %v1682, %v1502
          %v2560 = vsel %vm2368, %v1684, %v1503
          %v2561 = vsel %vm2369, %v1686, %v1504
          %v2562 = vsel %vm2370, %v1688, %v1505
          %v2563 = vsel %vm2371, %v1690, %v1506
          %v2564 = vsel %vm2372, %v1692, %v1507
          %v2565 = vsel %vm2373, %v1694, %v1508
          %v2566 = vsel %vm2374, %v1696, %v1509
          %v2567 = vsel %vm2375, %v1698, %v1510
          %v2568 = vsel %vm2376, %v1700, %v1511
          %v2569 = vsel %vm2377, %v1702, %v1512
          %v2570 = vsel %vm2378, %v1704, %v1513
          %v2571 = vsel %vm2379, %v1706, %v1514
          %v2572 = vsel %vm2316, %v1451, %v2540
          %v2573 = vsel %vm2317, %v1452, %v2541
          %v2574 = vsel %vm2318, %v1453, %v2542
          %v2575 = vsel %vm2319, %v1454, %v2543
          %v2576 = vsel %vm2320, %v1455, %v2544
          %v2577 = vsel %vm2321, %v1456, %v2545
          %v2578 = vsel %vm2322, %v1457, %v2546
          %v2579 = vsel %vm2323, %v1458, %v2547
          %v2580 = vsel %vm2324, %v1459, %v2548
          %v2581 = vsel %vm2325, %v1460, %v2549
          %v2582 = vsel %vm2326, %v1461, %v2550
          %v2583 = vsel %vm2327, %v1462, %v2551
          %v2584 = vsel %vm2328, %v1463, %v2552
          %v2585 = vsel %vm2329, %v1464, %v2553
          %v2586 = vsel %vm2330, %v1465, %v2554
          %v2587 = vsel %vm2331, %v1466, %v2555
          %v2588 = vsel %vm2332, %v1467, %v2556
          %v2589 = vsel %vm2333, %v1468, %v2557
          %v2590 = vsel %vm2334, %v1469, %v2558
          %v2591 = vsel %vm2335, %v1470, %v2559
          %v2592 = vsel %vm2336, %v1471, %v2560
          %v2593 = vsel %vm2337, %v1472, %v2561
          %v2594 = vsel %vm2338, %v1473, %v2562
          %v2595 = vsel %vm2339, %v1474, %v2563
          %v2596 = vsel %vm2340, %v1475, %v2564
          %v2597 = vsel %vm2341, %v1476, %v2565
          %v2598 = vsel %vm2342, %v1477, %v2566
          %v2599 = vsel %vm2343, %v1478, %v2567
          %v2600 = vsel %vm2344, %v1479, %v2568
          %v2601 = vsel %vm2345, %v1480, %v2569
          %v2602 = vsel %vm2346, %v1481, %v2570
          %v2603 = vsel %vm2347, %v1482, %v2571
          %v2604 = vsel %vm2348, %v2284, %v1579
          %v2605 = vsel %vm2349, %v2285, %v1580
          %v2606 = vsel %vm2350, %v2286, %v1581
          %v2607 = vsel %vm2351, %v2287, %v1582
          %v2608 = vsel %vm2352, %v2288, %v1583
          %v2609 = vsel %vm2353, %v2289, %v1584
          %v2610 = vsel %vm2354, %v2290, %v1585
          %v2611 = vsel %vm2355, %v2291, %v1586
          %v2612 = vsel %vm2356, %v2292, %v1587
          %v2613 = vsel %vm2357, %v2293, %v1588
          %v2614 = vsel %vm2358, %v2294, %v1589
          %v2615 = vsel %vm2359, %v2295, %v1590
          %v2616 = vsel %vm2360, %v2296, %v1591
          %v2617 = vsel %vm2361, %v2297, %v1592
          %v2618 = vsel %vm2362, %v2298, %v1593
          %v2619 = vsel %vm2363, %v2299, %v1594
          %v2620 = vsel %vm2364, %v2300, %v1595
          %v2621 = vsel %vm2365, %v2301, %v1596
          %v2622 = vsel %vm2366, %v2302, %v1597
          %v2623 = vsel %vm2367, %v2303, %v1598
          %v2624 = vsel %vm2368, %v2304, %v1599
          %v2625 = vsel %vm2369, %v2305, %v1600
          %v2626 = vsel %vm2370, %v2306, %v1601
          %v2627 = vsel %vm2371, %v2307, %v1602
          %v2628 = vsel %vm2372, %v2308, %v1603
          %v2629 = vsel %vm2373, %v2309, %v1604
          %v2630 = vsel %vm2374, %v2310, %v1605
          %v2631 = vsel %vm2375, %v2311, %v1606
          %v2632 = vsel %vm2376, %v2312, %v1607
          %v2633 = vsel %vm2377, %v2313, %v1608
          %v2634 = vsel %vm2378, %v2314, %v1609
          %v2635 = vsel %vm2379, %v2315, %v1610
          %v2636 = vsel %vm2316, %v1547, %v2604
          %v2637 = vsel %vm2317, %v1548, %v2605
          %v2638 = vsel %vm2318, %v1549, %v2606
          %v2639 = vsel %vm2319, %v1550, %v2607
          %v2640 = vsel %vm2320, %v1551, %v2608
          %v2641 = vsel %vm2321, %v1552, %v2609
          %v2642 = vsel %vm2322, %v1553, %v2610
          %v2643 = vsel %vm2323, %v1554, %v2611
          %v2644 = vsel %vm2324, %v1555, %v2612
          %v2645 = vsel %vm2325, %v1556, %v2613
          %v2646 = vsel %vm2326, %v1557, %v2614
          %v2647 = vsel %vm2327, %v1558, %v2615
          %v2648 = vsel %vm2328, %v1559, %v2616
          %v2649 = vsel %vm2329, %v1560, %v2617
          %v2650 = vsel %vm2330, %v1561, %v2618
          %v2651 = vsel %vm2331, %v1562, %v2619
          %v2652 = vsel %vm2332, %v1563, %v2620
          %v2653 = vsel %vm2333, %v1564, %v2621
          %v2654 = vsel %vm2334, %v1565, %v2622
          %v2655 = vsel %vm2335, %v1566, %v2623
          %v2656 = vsel %vm2336, %v1567, %v2624
          %v2657 = vsel %vm2337, %v1568, %v2625
          %v2658 = vsel %vm2338, %v1569, %v2626
          %v2659 = vsel %vm2339, %v1570, %v2627
          %v2660 = vsel %vm2340, %v1571, %v2628
          %v2661 = vsel %vm2341, %v1572, %v2629
          %v2662 = vsel %vm2342, %v1573, %v2630
          %v2663 = vsel %vm2343, %v1574, %v2631
          %v2664 = vsel %vm2344, %v1575, %v2632
          %v2665 = vsel %vm2345, %v1576, %v2633
          %v2666 = vsel %vm2346, %v1577, %v2634
          %v2667 = vsel %vm2347, %v1578, %v2635
          %v2668 = vsel %vm2316, %v1644, %v1451
          %v2669 = vsel %vm2317, %v1646, %v1452
          %v2670 = vsel %vm2318, %v1648, %v1453
          %v2671 = vsel %vm2319, %v1650, %v1454
          %v2672 = vsel %vm2320, %v1652, %v1455
          %v2673 = vsel %vm2321, %v1654, %v1456
          %v2674 = vsel %vm2322, %v1656, %v1457
          %v2675 = vsel %vm2323, %v1658, %v1458
          %v2676 = vsel %vm2324, %v1660, %v1459
          %v2677 = vsel %vm2325, %v1662, %v1460
          %v2678 = vsel %vm2326, %v1664, %v1461
          %v2679 = vsel %vm2327, %v1666, %v1462
          %v2680 = vsel %vm2328, %v1668, %v1463
          %v2681 = vsel %vm2329, %v1670, %v1464
          %v2682 = vsel %vm2330, %v1672, %v1465
          %v2683 = vsel %vm2331, %v1674, %v1466
          %v2684 = vsel %vm2332, %v1676, %v1467
          %v2685 = vsel %vm2333, %v1678, %v1468
          %v2686 = vsel %vm2334, %v1680, %v1469
          %v2687 = vsel %vm2335, %v1682, %v1470
          %v2688 = vsel %vm2336, %v1684, %v1471
          %v2689 = vsel %vm2337, %v1686, %v1472
          %v2690 = vsel %vm2338, %v1688, %v1473
          %v2691 = vsel %vm2339, %v1690, %v1474
          %v2692 = vsel %vm2340, %v1692, %v1475
          %v2693 = vsel %vm2341, %v1694, %v1476
          %v2694 = vsel %vm2342, %v1696, %v1477
          %v2695 = vsel %vm2343, %v1698, %v1478
          %v2696 = vsel %vm2344, %v1700, %v1479
          %v2697 = vsel %vm2345, %v1702, %v1480
          %v2698 = vsel %vm2346, %v1704, %v1481
          %v2699 = vsel %vm2347, %v1706, %v1482
          %v2700 = vsel %vm2316, %v2284, %v1547
          %v2701 = vsel %vm2317, %v2285, %v1548
          %v2702 = vsel %vm2318, %v2286, %v1549
          %v2703 = vsel %vm2319, %v2287, %v1550
          %v2704 = vsel %vm2320, %v2288, %v1551
          %v2705 = vsel %vm2321, %v2289, %v1552
          %v2706 = vsel %vm2322, %v2290, %v1553
          %v2707 = vsel %vm2323, %v2291, %v1554
          %v2708 = vsel %vm2324, %v2292, %v1555
          %v2709 = vsel %vm2325, %v2293, %v1556
          %v2710 = vsel %vm2326, %v2294, %v1557
          %v2711 = vsel %vm2327, %v2295, %v1558
          %v2712 = vsel %vm2328, %v2296, %v1559
          %v2713 = vsel %vm2329, %v2297, %v1560
          %v2714 = vsel %vm2330, %v2298, %v1561
          %v2715 = vsel %vm2331, %v2299, %v1562
          %v2716 = vsel %vm2332, %v2300, %v1563
          %v2717 = vsel %vm2333, %v2301, %v1564
          %v2718 = vsel %vm2334, %v2302, %v1565
          %v2719 = vsel %vm2335, %v2303, %v1566
          %v2720 = vsel %vm2336, %v2304, %v1567
          %v2721 = vsel %vm2337, %v2305, %v1568
          %v2722 = vsel %vm2338, %v2306, %v1569
          %v2723 = vsel %vm2339, %v2307, %v1570
          %v2724 = vsel %vm2340, %v2308, %v1571
          %v2725 = vsel %vm2341, %v2309, %v1572
          %v2726 = vsel %vm2342, %v2310, %v1573
          %v2727 = vsel %vm2343, %v2311, %v1574
          %v2728 = vsel %vm2344, %v2312, %v1575
          %v2729 = vsel %vm2345, %v2313, %v1576
          %v2730 = vsel %vm2346, %v2314, %v1577
          %v2731 = vsel %vm2347, %v2315, %v1578
          %2732 = vmin.xlane.f32.xlu0 %v2251
          %v2733 = vpop.xlane.xlu0 %2732
          %2734 = vmin.xlane.f32.xlu0 %v2252
          %v2735 = vpop.xlane.xlu0 %2734
          %2736 = vmin.xlane.f32.xlu0 %v2253
          %v2737 = vpop.xlane.xlu0 %2736
          %2738 = vmin.xlane.f32.xlu0 %v2254
          %v2739 = vpop.xlane.xlu0 %2738
          %2740 = vmin.xlane.f32.xlu0 %v2255
          %v2741 = vpop.xlane.xlu0 %2740
          %2742 = vmin.xlane.f32.xlu0 %v2256
          %v2743 = vpop.xlane.xlu0 %2742
          %2744 = vmin.xlane.f32.xlu0 %v2257
          %v2745 = vpop.xlane.xlu0 %2744
          %2746 = vmin.xlane.f32.xlu0 %v2258
          %v2747 = vpop.xlane.xlu0 %2746
          %2748 = vmin.xlane.f32.xlu0 %v2259
          %v2749 = vpop.xlane.xlu0 %2748
          %2750 = vmin.xlane.f32.xlu0 %v2260
          %v2751 = vpop.xlane.xlu0 %2750
          %2752 = vmin.xlane.f32.xlu0 %v2261
          %v2753 = vpop.xlane.xlu0 %2752
          %2754 = vmin.xlane.f32.xlu0 %v2262
          %v2755 = vpop.xlane.xlu0 %2754
          %2756 = vmin.xlane.f32.xlu0 %v2263
          %v2757 = vpop.xlane.xlu0 %2756
          %2758 = vmin.xlane.f32.xlu0 %v2264
          %v2759 = vpop.xlane.xlu0 %2758
          %2760 = vmin.xlane.f32.xlu0 %v2265
          %v2761 = vpop.xlane.xlu0 %2760
          %2762 = vmin.xlane.f32.xlu0 %v2266
          %v2763 = vpop.xlane.xlu0 %2762
          %2764 = vmin.xlane.f32.xlu0 %v2267
          %v2765 = vpop.xlane.xlu0 %2764
          %2766 = vmin.xlane.f32.xlu0 %v2268
          %v2767 = vpop.xlane.xlu0 %2766
          %2768 = vmin.xlane.f32.xlu0 %v2269
          %v2769 = vpop.xlane.xlu0 %2768
          %2770 = vmin.xlane.f32.xlu0 %v2270
          %v2771 = vpop.xlane.xlu0 %2770
          %2772 = vmin.xlane.f32.xlu0 %v2271
          %v2773 = vpop.xlane.xlu0 %2772
          %2774 = vmin.xlane.f32.xlu0 %v2272
          %v2775 = vpop.xlane.xlu0 %2774
          %2776 = vmin.xlane.f32.xlu0 %v2273
          %v2777 = vpop.xlane.xlu0 %2776
          %2778 = vmin.xlane.f32.xlu0 %v2274
          %v2779 = vpop.xlane.xlu0 %2778
          %2780 = vmin.xlane.f32.xlu0 %v2275
          %v2781 = vpop.xlane.xlu0 %2780
          %2782 = vmin.xlane.f32.xlu0 %v2276
          %v2783 = vpop.xlane.xlu0 %2782
          %2784 = vmin.xlane.f32.xlu0 %v2277
          %v2785 = vpop.xlane.xlu0 %2784
          %2786 = vmin.xlane.f32.xlu0 %v2278
          %v2787 = vpop.xlane.xlu0 %2786
          %2788 = vmin.xlane.f32.xlu0 %v2279
          %v2789 = vpop.xlane.xlu0 %2788
          %2790 = vmin.xlane.f32.xlu0 %v2280
          %v2791 = vpop.xlane.xlu0 %2790
          %2792 = vmin.xlane.f32.xlu0 %v2281
          %v2793 = vpop.xlane.xlu0 %2792
          %2794 = vmin.xlane.f32.xlu0 %v2282
          %v2795 = vpop.xlane.xlu0 %2794
          %vm2796 = vcmp.eq.f32.partialorder %v2251, %v2733
          %vm2797 = vcmp.eq.f32.partialorder %v2252, %v2735
          %vm2798 = vcmp.eq.f32.partialorder %v2253, %v2737
          %vm2799 = vcmp.eq.f32.partialorder %v2254, %v2739
          %vm2800 = vcmp.eq.f32.partialorder %v2255, %v2741
          %vm2801 = vcmp.eq.f32.partialorder %v2256, %v2743
          %vm2802 = vcmp.eq.f32.partialorder %v2257, %v2745
          %vm2803 = vcmp.eq.f32.partialorder %v2258, %v2747
          %vm2804 = vcmp.eq.f32.partialorder %v2259, %v2749
          %vm2805 = vcmp.eq.f32.partialorder %v2260, %v2751
          %vm2806 = vcmp.eq.f32.partialorder %v2261, %v2753
          %vm2807 = vcmp.eq.f32.partialorder %v2262, %v2755
          %vm2808 = vcmp.eq.f32.partialorder %v2263, %v2757
          %vm2809 = vcmp.eq.f32.partialorder %v2264, %v2759
          %vm2810 = vcmp.eq.f32.partialorder %v2265, %v2761
          %vm2811 = vcmp.eq.f32.partialorder %v2266, %v2763
          %vm2812 = vcmp.eq.f32.partialorder %v2267, %v2765
          %vm2813 = vcmp.eq.f32.partialorder %v2268, %v2767
          %vm2814 = vcmp.eq.f32.partialorder %v2269, %v2769
          %vm2815 = vcmp.eq.f32.partialorder %v2270, %v2771
          %vm2816 = vcmp.eq.f32.partialorder %v2271, %v2773
          %vm2817 = vcmp.eq.f32.partialorder %v2272, %v2775
          %vm2818 = vcmp.eq.f32.partialorder %v2273, %v2777
          %vm2819 = vcmp.eq.f32.partialorder %v2274, %v2779
          %vm2820 = vcmp.eq.f32.partialorder %v2275, %v2781
          %vm2821 = vcmp.eq.f32.partialorder %v2276, %v2783
          %vm2822 = vcmp.eq.f32.partialorder %v2277, %v2785
          %vm2823 = vcmp.eq.f32.partialorder %v2278, %v2787
          %vm2824 = vcmp.eq.f32.partialorder %v2279, %v2789
          %vm2825 = vcmp.eq.f32.partialorder %v2280, %v2791
          %vm2826 = vcmp.eq.f32.partialorder %v2281, %v2793
          %vm2827 = vcmp.eq.f32.partialorder %v2282, %v2795
          %v2828 = vsel %vm2796, %v1449, 128
          %v2829 = vsel %vm2797, %v1449, 128
          %v2830 = vsel %vm2798, %v1449, 128
          %v2831 = vsel %vm2799, %v1449, 128
          %v2832 = vsel %vm2800, %v1449, 128
          %v2833 = vsel %vm2801, %v1449, 128
          %v2834 = vsel %vm2802, %v1449, 128
          %v2835 = vsel %vm2803, %v1449, 128
          %v2836 = vsel %vm2804, %v1449, 128
          %v2837 = vsel %vm2805, %v1449, 128
          %v2838 = vsel %vm2806, %v1449, 128
          %v2839 = vsel %vm2807, %v1449, 128
          %v2840 = vsel %vm2808, %v1449, 128
          %v2841 = vsel %vm2809, %v1449, 128
          %v2842 = vsel %vm2810, %v1449, 128
          %v2843 = vsel %vm2811, %v1449, 128
          %v2844 = vsel %vm2812, %v1449, 128
          %v2845 = vsel %vm2813, %v1449, 128
          %v2846 = vsel %vm2814, %v1449, 128
          %v2847 = vsel %vm2815, %v1449, 128
          %v2848 = vsel %vm2816, %v1449, 128
          %v2849 = vsel %vm2817, %v1449, 128
          %v2850 = vsel %vm2818, %v1449, 128
          %v2851 = vsel %vm2819, %v1449, 128
          %v2852 = vsel %vm2820, %v1449, 128
          %v2853 = vsel %vm2821, %v1449, 128
          %v2854 = vsel %vm2822, %v1449, 128
          %v2855 = vsel %vm2823, %v1449, 128
          %v2856 = vsel %vm2824, %v1449, 128
          %v2857 = vsel %vm2825, %v1449, 128
          %v2858 = vsel %vm2826, %v1449, 128
          %v2859 = vsel %vm2827, %v1449, 128
          %v2860 = vand.u32 %v2828, 65535
          %v2861 = vshra.s32 %v2828, 16
          %v2862 = vcvt.s32.f32 %v2860
          %v2863 = vcvt.s32.f32 %v2861
          %2864 = vmin.xlane.f32.xlu0 %v2863
          %v2865 = vpop.xlane.xlu0 %2864
          %vm2866 = vcmp.eq.f32.partialorder %v2863, %v2865
          %v2867 = vsel %vm2866, %v2862, inf
          %2868 = vmin.xlane.f32.xlu0 %v2867
          %v2869 = vpop.xlane.xlu0 %2868
          %v2870 = vcvt.f32.s32 %v2869
          %v2871 = vcvt.f32.s32 %v2865
          %v2872 = vshll.u32 %v2871, 16
          %v2873 = vadd.s32 %v2872, %v2870
          %v2874 = vand.u32 %v2829, 65535
          %v2875 = vshra.s32 %v2829, 16
          %v2876 = vcvt.s32.f32 %v2874
          %v2877 = vcvt.s32.f32 %v2875
          %2878 = vmin.xlane.f32.xlu0 %v2877
          %v2879 = vpop.xlane.xlu0 %2878
          %vm2880 = vcmp.eq.f32.partialorder %v2877, %v2879
          %v2881 = vsel %vm2880, %v2876, inf
          %2882 = vmin.xlane.f32.xlu0 %v2881
          %v2883 = vpop.xlane.xlu0 %2882
          %v2884 = vcvt.f32.s32 %v2883
          %v2885 = vcvt.f32.s32 %v2879
          %v2886 = vshll.u32 %v2885, 16
          %v2887 = vadd.s32 %v2886, %v2884
          %v2888 = vand.u32 %v2830, 65535
          %v2889 = vshra.s32 %v2830, 16
          %v2890 = vcvt.s32.f32 %v2888
          %v2891 = vcvt.s32.f32 %v2889
          %2892 = vmin.xlane.f32.xlu0 %v2891
          %v2893 = vpop.xlane.xlu0 %2892
          %vm2894 = vcmp.eq.f32.partialorder %v2891, %v2893
          %v2895 = vsel %vm2894, %v2890, inf
          %2896 = vmin.xlane.f32.xlu0 %v2895
          %v2897 = vpop.xlane.xlu0 %2896
          %v2898 = vcvt.f32.s32 %v2897
          %v2899 = vcvt.f32.s32 %v2893
          %v2900 = vshll.u32 %v2899, 16
          %v2901 = vadd.s32 %v2900, %v2898
          %v2902 = vand.u32 %v2831, 65535
          %v2903 = vshra.s32 %v2831, 16
          %v2904 = vcvt.s32.f32 %v2902
          %v2905 = vcvt.s32.f32 %v2903
          %2906 = vmin.xlane.f32.xlu0 %v2905
          %v2907 = vpop.xlane.xlu0 %2906
          %vm2908 = vcmp.eq.f32.partialorder %v2905, %v2907
          %v2909 = vsel %vm2908, %v2904, inf
          %2910 = vmin.xlane.f32.xlu0 %v2909
          %v2911 = vpop.xlane.xlu0 %2910
          %v2912 = vcvt.f32.s32 %v2911
          %v2913 = vcvt.f32.s32 %v2907
          %v2914 = vshll.u32 %v2913, 16
          %v2915 = vadd.s32 %v2914, %v2912
          %v2916 = vand.u32 %v2832, 65535
          %v2917 = vshra.s32 %v2832, 16
          %v2918 = vcvt.s32.f32 %v2916
          %v2919 = vcvt.s32.f32 %v2917
          %2920 = vmin.xlane.f32.xlu0 %v2919
          %v2921 = vpop.xlane.xlu0 %2920
          %vm2922 = vcmp.eq.f32.partialorder %v2919, %v2921
          %v2923 = vsel %vm2922, %v2918, inf
          %2924 = vmin.xlane.f32.xlu0 %v2923
          %v2925 = vpop.xlane.xlu0 %2924
          %v2926 = vcvt.f32.s32 %v2925
          %v2927 = vcvt.f32.s32 %v2921
          %v2928 = vshll.u32 %v2927, 16
          %v2929 = vadd.s32 %v2928, %v2926
          %v2930 = vand.u32 %v2833, 65535
          %v2931 = vshra.s32 %v2833, 16
          %v2932 = vcvt.s32.f32 %v2930
          %v2933 = vcvt.s32.f32 %v2931
          %2934 = vmin.xlane.f32.xlu0 %v2933
          %v2935 = vpop.xlane.xlu0 %2934
          %vm2936 = vcmp.eq.f32.partialorder %v2933, %v2935
          %v2937 = vsel %vm2936, %v2932, inf
          %2938 = vmin.xlane.f32.xlu0 %v2937
          %v2939 = vpop.xlane.xlu0 %2938
          %v2940 = vcvt.f32.s32 %v2939
          %v2941 = vcvt.f32.s32 %v2935
          %v2942 = vshll.u32 %v2941, 16
          %v2943 = vadd.s32 %v2942, %v2940
          %v2944 = vand.u32 %v2834, 65535
          %v2945 = vshra.s32 %v2834, 16
          %v2946 = vcvt.s32.f32 %v2944
          %v2947 = vcvt.s32.f32 %v2945
          %2948 = vmin.xlane.f32.xlu0 %v2947
          %v2949 = vpop.xlane.xlu0 %2948
          %vm2950 = vcmp.eq.f32.partialorder %v2947, %v2949
          %v2951 = vsel %vm2950, %v2946, inf
          %2952 = vmin.xlane.f32.xlu0 %v2951
          %v2953 = vpop.xlane.xlu0 %2952
          %v2954 = vcvt.f32.s32 %v2953
          %v2955 = vcvt.f32.s32 %v2949
          %v2956 = vshll.u32 %v2955, 16
          %v2957 = vadd.s32 %v2956, %v2954
          %v2958 = vand.u32 %v2835, 65535
          %v2959 = vshra.s32 %v2835, 16
          %v2960 = vcvt.s32.f32 %v2958
          %v2961 = vcvt.s32.f32 %v2959
          %2962 = vmin.xlane.f32.xlu0 %v2961
          %v2963 = vpop.xlane.xlu0 %2962
          %vm2964 = vcmp.eq.f32.partialorder %v2961, %v2963
          %v2965 = vsel %vm2964, %v2960, inf
          %2966 = vmin.xlane.f32.xlu0 %v2965
          %v2967 = vpop.xlane.xlu0 %2966
          %v2968 = vcvt.f32.s32 %v2967
          %v2969 = vcvt.f32.s32 %v2963
          %v2970 = vshll.u32 %v2969, 16
          %v2971 = vadd.s32 %v2970, %v2968
          %v2972 = vand.u32 %v2836, 65535
          %v2973 = vshra.s32 %v2836, 16
          %v2974 = vcvt.s32.f32 %v2972
          %v2975 = vcvt.s32.f32 %v2973
          %2976 = vmin.xlane.f32.xlu0 %v2975
          %v2977 = vpop.xlane.xlu0 %2976
          %vm2978 = vcmp.eq.f32.partialorder %v2975, %v2977
          %v2979 = vsel %vm2978, %v2974, inf
          %2980 = vmin.xlane.f32.xlu0 %v2979
          %v2981 = vpop.xlane.xlu0 %2980
          %v2982 = vcvt.f32.s32 %v2981
          %v2983 = vcvt.f32.s32 %v2977
          %v2984 = vshll.u32 %v2983, 16
          %v2985 = vadd.s32 %v2984, %v2982
          %v2986 = vand.u32 %v2837, 65535
          %v2987 = vshra.s32 %v2837, 16
          %v2988 = vcvt.s32.f32 %v2986
          %v2989 = vcvt.s32.f32 %v2987
          %2990 = vmin.xlane.f32.xlu0 %v2989
          %v2991 = vpop.xlane.xlu0 %2990
          %vm2992 = vcmp.eq.f32.partialorder %v2989, %v2991
          %v2993 = vsel %vm2992, %v2988, inf
          %2994 = vmin.xlane.f32.xlu0 %v2993
          %v2995 = vpop.xlane.xlu0 %2994
          %v2996 = vcvt.f32.s32 %v2995
          %v2997 = vcvt.f32.s32 %v2991
          %v2998 = vshll.u32 %v2997, 16
          %v2999 = vadd.s32 %v2998, %v2996
          %v3000 = vand.u32 %v2838, 65535
          %v3001 = vshra.s32 %v2838, 16
          %v3002 = vcvt.s32.f32 %v3000
          %v3003 = vcvt.s32.f32 %v3001
          %3004 = vmin.xlane.f32.xlu0 %v3003
          %v3005 = vpop.xlane.xlu0 %3004
          %vm3006 = vcmp.eq.f32.partialorder %v3003, %v3005
          %v3007 = vsel %vm3006, %v3002, inf
          %3008 = vmin.xlane.f32.xlu0 %v3007
          %v3009 = vpop.xlane.xlu0 %3008
          %v3010 = vcvt.f32.s32 %v3009
          %v3011 = vcvt.f32.s32 %v3005
          %v3012 = vshll.u32 %v3011, 16
          %v3013 = vadd.s32 %v3012, %v3010
          %v3014 = vand.u32 %v2839, 65535
          %v3015 = vshra.s32 %v2839, 16
          %v3016 = vcvt.s32.f32 %v3014
          %v3017 = vcvt.s32.f32 %v3015
          %3018 = vmin.xlane.f32.xlu0 %v3017
          %v3019 = vpop.xlane.xlu0 %3018
          %vm3020 = vcmp.eq.f32.partialorder %v3017, %v3019
          %v3021 = vsel %vm3020, %v3016, inf
          %3022 = vmin.xlane.f32.xlu0 %v3021
          %v3023 = vpop.xlane.xlu0 %3022
          %v3024 = vcvt.f32.s32 %v3023
          %v3025 = vcvt.f32.s32 %v3019
          %v3026 = vshll.u32 %v3025, 16
          %v3027 = vadd.s32 %v3026, %v3024
          %v3028 = vand.u32 %v2840, 65535
          %v3029 = vshra.s32 %v2840, 16
          %v3030 = vcvt.s32.f32 %v3028
          %v3031 = vcvt.s32.f32 %v3029
          %3032 = vmin.xlane.f32.xlu0 %v3031
          %v3033 = vpop.xlane.xlu0 %3032
          %vm3034 = vcmp.eq.f32.partialorder %v3031, %v3033
          %v3035 = vsel %vm3034, %v3030, inf
          %3036 = vmin.xlane.f32.xlu0 %v3035
          %v3037 = vpop.xlane.xlu0 %3036
          %v3038 = vcvt.f32.s32 %v3037
          %v3039 = vcvt.f32.s32 %v3033
          %v3040 = vshll.u32 %v3039, 16
          %v3041 = vadd.s32 %v3040, %v3038
          %v3042 = vand.u32 %v2841, 65535
          %v3043 = vshra.s32 %v2841, 16
          %v3044 = vcvt.s32.f32 %v3042
          %v3045 = vcvt.s32.f32 %v3043
          %3046 = vmin.xlane.f32.xlu0 %v3045
          %v3047 = vpop.xlane.xlu0 %3046
          %vm3048 = vcmp.eq.f32.partialorder %v3045, %v3047
          %v3049 = vsel %vm3048, %v3044, inf
          %3050 = vmin.xlane.f32.xlu0 %v3049
          %v3051 = vpop.xlane.xlu0 %3050
          %v3052 = vcvt.f32.s32 %v3051
          %v3053 = vcvt.f32.s32 %v3047
          %v3054 = vshll.u32 %v3053, 16
          %v3055 = vadd.s32 %v3054, %v3052
          %v3056 = vand.u32 %v2842, 65535
          %v3057 = vshra.s32 %v2842, 16
          %v3058 = vcvt.s32.f32 %v3056
          %v3059 = vcvt.s32.f32 %v3057
          %3060 = vmin.xlane.f32.xlu0 %v3059
          %v3061 = vpop.xlane.xlu0 %3060
          %vm3062 = vcmp.eq.f32.partialorder %v3059, %v3061
          %v3063 = vsel %vm3062, %v3058, inf
          %3064 = vmin.xlane.f32.xlu0 %v3063
          %v3065 = vpop.xlane.xlu0 %3064
          %v3066 = vcvt.f32.s32 %v3065
          %v3067 = vcvt.f32.s32 %v3061
          %v3068 = vshll.u32 %v3067, 16
          %v3069 = vadd.s32 %v3068, %v3066
          %v3070 = vand.u32 %v2843, 65535
          %v3071 = vshra.s32 %v2843, 16
          %v3072 = vcvt.s32.f32 %v3070
          %v3073 = vcvt.s32.f32 %v3071
          %3074 = vmin.xlane.f32.xlu0 %v3073
          %v3075 = vpop.xlane.xlu0 %3074
          %vm3076 = vcmp.eq.f32.partialorder %v3073, %v3075
          %v3077 = vsel %vm3076, %v3072, inf
          %3078 = vmin.xlane.f32.xlu0 %v3077
          %v3079 = vpop.xlane.xlu0 %3078
          %v3080 = vcvt.f32.s32 %v3079
          %v3081 = vcvt.f32.s32 %v3075
          %v3082 = vshll.u32 %v3081, 16
          %v3083 = vadd.s32 %v3082, %v3080
          %v3084 = vand.u32 %v2844, 65535
          %v3085 = vshra.s32 %v2844, 16
          %v3086 = vcvt.s32.f32 %v3084
          %v3087 = vcvt.s32.f32 %v3085
          %3088 = vmin.xlane.f32.xlu0 %v3087
          %v3089 = vpop.xlane.xlu0 %3088
          %vm3090 = vcmp.eq.f32.partialorder %v3087, %v3089
          %v3091 = vsel %vm3090, %v3086, inf
          %3092 = vmin.xlane.f32.xlu0 %v3091
          %v3093 = vpop.xlane.xlu0 %3092
          %v3094 = vcvt.f32.s32 %v3093
          %v3095 = vcvt.f32.s32 %v3089
          %v3096 = vshll.u32 %v3095, 16
          %v3097 = vadd.s32 %v3096, %v3094
          %v3098 = vand.u32 %v2845, 65535
          %v3099 = vshra.s32 %v2845, 16
          %v3100 = vcvt.s32.f32 %v3098
          %v3101 = vcvt.s32.f32 %v3099
          %3102 = vmin.xlane.f32.xlu0 %v3101
          %v3103 = vpop.xlane.xlu0 %3102
          %vm3104 = vcmp.eq.f32.partialorder %v3101, %v3103
          %v3105 = vsel %vm3104, %v3100, inf
          %3106 = vmin.xlane.f32.xlu0 %v3105
          %v3107 = vpop.xlane.xlu0 %3106
          %v3108 = vcvt.f32.s32 %v3107
          %v3109 = vcvt.f32.s32 %v3103
          %v3110 = vshll.u32 %v3109, 16
          %v3111 = vadd.s32 %v3110, %v3108
          %v3112 = vand.u32 %v2846, 65535
          %v3113 = vshra.s32 %v2846, 16
          %v3114 = vcvt.s32.f32 %v3112
          %v3115 = vcvt.s32.f32 %v3113
          %3116 = vmin.xlane.f32.xlu0 %v3115
          %v3117 = vpop.xlane.xlu0 %3116
          %vm3118 = vcmp.eq.f32.partialorder %v3115, %v3117
          %v3119 = vsel %vm3118, %v3114, inf
          %3120 = vmin.xlane.f32.xlu0 %v3119
          %v3121 = vpop.xlane.xlu0 %3120
          %v3122 = vcvt.f32.s32 %v3121
          %v3123 = vcvt.f32.s32 %v3117
          %v3124 = vshll.u32 %v3123, 16
          %v3125 = vadd.s32 %v3124, %v3122
          %v3126 = vand.u32 %v2847, 65535
          %v3127 = vshra.s32 %v2847, 16
          %v3128 = vcvt.s32.f32 %v3126
          %v3129 = vcvt.s32.f32 %v3127
          %3130 = vmin.xlane.f32.xlu0 %v3129
          %v3131 = vpop.xlane.xlu0 %3130
          %vm3132 = vcmp.eq.f32.partialorder %v3129, %v3131
          %v3133 = vsel %vm3132, %v3128, inf
          %3134 = vmin.xlane.f32.xlu0 %v3133
          %v3135 = vpop.xlane.xlu0 %3134
          %v3136 = vcvt.f32.s32 %v3135
          %v3137 = vcvt.f32.s32 %v3131
          %v3138 = vshll.u32 %v3137, 16
          %v3139 = vadd.s32 %v3138, %v3136
          %v3140 = vand.u32 %v2848, 65535
          %v3141 = vshra.s32 %v2848, 16
          %v3142 = vcvt.s32.f32 %v3140
          %v3143 = vcvt.s32.f32 %v3141
          %3144 = vmin.xlane.f32.xlu0 %v3143
          %v3145 = vpop.xlane.xlu0 %3144
          %vm3146 = vcmp.eq.f32.partialorder %v3143, %v3145
          %v3147 = vsel %vm3146, %v3142, inf
          %3148 = vmin.xlane.f32.xlu0 %v3147
          %v3149 = vpop.xlane.xlu0 %3148
          %v3150 = vcvt.f32.s32 %v3149
          %v3151 = vcvt.f32.s32 %v3145
          %v3152 = vshll.u32 %v3151, 16
          %v3153 = vadd.s32 %v3152, %v3150
          %v3154 = vand.u32 %v2849, 65535
          %v3155 = vshra.s32 %v2849, 16
          %v3156 = vcvt.s32.f32 %v3154
          %v3157 = vcvt.s32.f32 %v3155
          %3158 = vmin.xlane.f32.xlu0 %v3157
          %v3159 = vpop.xlane.xlu0 %3158
          %vm3160 = vcmp.eq.f32.partialorder %v3157, %v3159
          %v3161 = vsel %vm3160, %v3156, inf
          %3162 = vmin.xlane.f32.xlu0 %v3161
          %v3163 = vpop.xlane.xlu0 %3162
          %v3164 = vcvt.f32.s32 %v3163
          %v3165 = vcvt.f32.s32 %v3159
          %v3166 = vshll.u32 %v3165, 16
          %v3167 = vadd.s32 %v3166, %v3164
          %v3168 = vand.u32 %v2850, 65535
          %v3169 = vshra.s32 %v2850, 16
          %v3170 = vcvt.s32.f32 %v3168
          %v3171 = vcvt.s32.f32 %v3169
          %3172 = vmin.xlane.f32.xlu0 %v3171
          %v3173 = vpop.xlane.xlu0 %3172
          %vm3174 = vcmp.eq.f32.partialorder %v3171, %v3173
          %v3175 = vsel %vm3174, %v3170, inf
          %3176 = vmin.xlane.f32.xlu0 %v3175
          %v3177 = vpop.xlane.xlu0 %3176
          %v3178 = vcvt.f32.s32 %v3177
          %v3179 = vcvt.f32.s32 %v3173
          %v3180 = vshll.u32 %v3179, 16
          %v3181 = vadd.s32 %v3180, %v3178
          %v3182 = vand.u32 %v2851, 65535
          %v3183 = vshra.s32 %v2851, 16
          %v3184 = vcvt.s32.f32 %v3182
          %v3185 = vcvt.s32.f32 %v3183
          %3186 = vmin.xlane.f32.xlu0 %v3185
          %v3187 = vpop.xlane.xlu0 %3186
          %vm3188 = vcmp.eq.f32.partialorder %v3185, %v3187
          %v3189 = vsel %vm3188, %v3184, inf
          %3190 = vmin.xlane.f32.xlu0 %v3189
          %v3191 = vpop.xlane.xlu0 %3190
          %v3192 = vcvt.f32.s32 %v3191
          %v3193 = vcvt.f32.s32 %v3187
          %v3194 = vshll.u32 %v3193, 16
          %v3195 = vadd.s32 %v3194, %v3192
          %v3196 = vand.u32 %v2852, 65535
          %v3197 = vshra.s32 %v2852, 16
          %v3198 = vcvt.s32.f32 %v3196
          %v3199 = vcvt.s32.f32 %v3197
          %3200 = vmin.xlane.f32.xlu0 %v3199
          %v3201 = vpop.xlane.xlu0 %3200
          %vm3202 = vcmp.eq.f32.partialorder %v3199, %v3201
          %v3203 = vsel %vm3202, %v3198, inf
          %3204 = vmin.xlane.f32.xlu0 %v3203
          %v3205 = vpop.xlane.xlu0 %3204
          %v3206 = vcvt.f32.s32 %v3205
          %v3207 = vcvt.f32.s32 %v3201
          %v3208 = vshll.u32 %v3207, 16
          %v3209 = vadd.s32 %v3208, %v3206
          %v3210 = vand.u32 %v2853, 65535
          %v3211 = vshra.s32 %v2853, 16
          %v3212 = vcvt.s32.f32 %v3210
          %v3213 = vcvt.s32.f32 %v3211
          %3214 = vmin.xlane.f32.xlu0 %v3213
          %v3215 = vpop.xlane.xlu0 %3214
          %vm3216 = vcmp.eq.f32.partialorder %v3213, %v3215
          %v3217 = vsel %vm3216, %v3212, inf
          %3218 = vmin.xlane.f32.xlu0 %v3217
          %v3219 = vpop.xlane.xlu0 %3218
          %v3220 = vcvt.f32.s32 %v3219
          %v3221 = vcvt.f32.s32 %v3215
          %v3222 = vshll.u32 %v3221, 16
          %v3223 = vadd.s32 %v3222, %v3220
          %v3224 = vand.u32 %v2854, 65535
          %v3225 = vshra.s32 %v2854, 16
          %v3226 = vcvt.s32.f32 %v3224
          %v3227 = vcvt.s32.f32 %v3225
          %3228 = vmin.xlane.f32.xlu0 %v3227
          %v3229 = vpop.xlane.xlu0 %3228
          %vm3230 = vcmp.eq.f32.partialorder %v3227, %v3229
          %v3231 = vsel %vm3230, %v3226, inf
          %3232 = vmin.xlane.f32.xlu0 %v3231
          %v3233 = vpop.xlane.xlu0 %3232
          %v3234 = vcvt.f32.s32 %v3233
          %v3235 = vcvt.f32.s32 %v3229
          %v3236 = vshll.u32 %v3235, 16
          %v3237 = vadd.s32 %v3236, %v3234
          %v3238 = vand.u32 %v2855, 65535
          %v3239 = vshra.s32 %v2855, 16
          %v3240 = vcvt.s32.f32 %v3238
          %v3241 = vcvt.s32.f32 %v3239
          %3242 = vmin.xlane.f32.xlu0 %v3241
          %v3243 = vpop.xlane.xlu0 %3242
          %vm3244 = vcmp.eq.f32.partialorder %v3241, %v3243
          %v3245 = vsel %vm3244, %v3240, inf
          %3246 = vmin.xlane.f32.xlu0 %v3245
          %v3247 = vpop.xlane.xlu0 %3246
          %v3248 = vcvt.f32.s32 %v3247
          %v3249 = vcvt.f32.s32 %v3243
          %v3250 = vshll.u32 %v3249, 16
          %v3251 = vadd.s32 %v3250, %v3248
          %v3252 = vand.u32 %v2856, 65535
          %v3253 = vshra.s32 %v2856, 16
          %v3254 = vcvt.s32.f32 %v3252
          %v3255 = vcvt.s32.f32 %v3253
          %3256 = vmin.xlane.f32.xlu0 %v3255
          %v3257 = vpop.xlane.xlu0 %3256
          %vm3258 = vcmp.eq.f32.partialorder %v3255, %v3257
          %v3259 = vsel %vm3258, %v3254, inf
          %3260 = vmin.xlane.f32.xlu0 %v3259
          %v3261 = vpop.xlane.xlu0 %3260
          %v3262 = vcvt.f32.s32 %v3261
          %v3263 = vcvt.f32.s32 %v3257
          %v3264 = vshll.u32 %v3263, 16
          %v3265 = vadd.s32 %v3264, %v3262
          %v3266 = vand.u32 %v2857, 65535
          %v3267 = vshra.s32 %v2857, 16
          %v3268 = vcvt.s32.f32 %v3266
          %v3269 = vcvt.s32.f32 %v3267
          %3270 = vmin.xlane.f32.xlu0 %v3269
          %v3271 = vpop.xlane.xlu0 %3270
          %vm3272 = vcmp.eq.f32.partialorder %v3269, %v3271
          %v3273 = vsel %vm3272, %v3268, inf
          %3274 = vmin.xlane.f32.xlu0 %v3273
          %v3275 = vpop.xlane.xlu0 %3274
          %v3276 = vcvt.f32.s32 %v3275
          %v3277 = vcvt.f32.s32 %v3271
          %v3278 = vshll.u32 %v3277, 16
          %v3279 = vadd.s32 %v3278, %v3276
          %v3280 = vand.u32 %v2858, 65535
          %v3281 = vshra.s32 %v2858, 16
          %v3282 = vcvt.s32.f32 %v3280
          %v3283 = vcvt.s32.f32 %v3281
          %3284 = vmin.xlane.f32.xlu0 %v3283
          %v3285 = vpop.xlane.xlu0 %3284
          %vm3286 = vcmp.eq.f32.partialorder %v3283, %v3285
          %v3287 = vsel %vm3286, %v3282, inf
          %3288 = vmin.xlane.f32.xlu0 %v3287
          %v3289 = vpop.xlane.xlu0 %3288
          %v3290 = vcvt.f32.s32 %v3289
          %v3291 = vcvt.f32.s32 %v3285
          %v3292 = vshll.u32 %v3291, 16
          %v3293 = vadd.s32 %v3292, %v3290
          %v3294 = vand.u32 %v2859, 65535
          %v3295 = vshra.s32 %v2859, 16
          %v3296 = vcvt.s32.f32 %v3294
          %v3297 = vcvt.s32.f32 %v3295
          %3298 = vmin.xlane.f32.xlu0 %v3297
          %v3299 = vpop.xlane.xlu0 %3298
          %vm3300 = vcmp.eq.f32.partialorder %v3297, %v3299
          %v3301 = vsel %vm3300, %v3296, inf
          %3302 = vmin.xlane.f32.xlu0 %v3301
          %v3303 = vpop.xlane.xlu0 %3302
          %v3304 = vcvt.f32.s32 %v3303
          %v3305 = vcvt.f32.s32 %v3299
          %v3306 = vshll.u32 %v3305, 16
          %v3307 = vadd.s32 %v3306, %v3304
          %vm3308 = vcmp.eq.s32.totalorder %v1449, %v2873
          %vm3309 = vcmp.eq.s32.totalorder %v1449, %v2887
          %vm3310 = vcmp.eq.s32.totalorder %v1449, %v2901
          %vm3311 = vcmp.eq.s32.totalorder %v1449, %v2915
          %vm3312 = vcmp.eq.s32.totalorder %v1449, %v2929
          %vm3313 = vcmp.eq.s32.totalorder %v1449, %v2943
          %vm3314 = vcmp.eq.s32.totalorder %v1449, %v2957
          %vm3315 = vcmp.eq.s32.totalorder %v1449, %v2971
          %vm3316 = vcmp.eq.s32.totalorder %v1449, %v2985
          %vm3317 = vcmp.eq.s32.totalorder %v1449, %v2999
          %vm3318 = vcmp.eq.s32.totalorder %v1449, %v3013
          %vm3319 = vcmp.eq.s32.totalorder %v1449, %v3027
          %vm3320 = vcmp.eq.s32.totalorder %v1449, %v3041
          %vm3321 = vcmp.eq.s32.totalorder %v1449, %v3055
          %vm3322 = vcmp.eq.s32.totalorder %v1449, %v3069
          %vm3323 = vcmp.eq.s32.totalorder %v1449, %v3083
          %vm3324 = vcmp.eq.s32.totalorder %v1449, %v3097
          %vm3325 = vcmp.eq.s32.totalorder %v1449, %v3111
          %vm3326 = vcmp.eq.s32.totalorder %v1449, %v3125
          %vm3327 = vcmp.eq.s32.totalorder %v1449, %v3139
          %vm3328 = vcmp.eq.s32.totalorder %v1449, %v3153
          %vm3329 = vcmp.eq.s32.totalorder %v1449, %v3167
          %vm3330 = vcmp.eq.s32.totalorder %v1449, %v3181
          %vm3331 = vcmp.eq.s32.totalorder %v1449, %v3195
          %vm3332 = vcmp.eq.s32.totalorder %v1449, %v3209
          %vm3333 = vcmp.eq.s32.totalorder %v1449, %v3223
          %vm3334 = vcmp.eq.s32.totalorder %v1449, %v3237
          %vm3335 = vcmp.eq.s32.totalorder %v1449, %v3251
          %vm3336 = vcmp.eq.s32.totalorder %v1449, %v3265
          %vm3337 = vcmp.eq.s32.totalorder %v1449, %v3279
          %vm3338 = vcmp.eq.s32.totalorder %v1449, %v3293
          %vm3339 = vcmp.eq.s32.totalorder %v1449, %v3307
          %v3340 = vsel %vm3308, 1e+30, %v2251
          %v3341 = vsel %vm3309, 1e+30, %v2252
          %v3342 = vsel %vm3310, 1e+30, %v2253
          %v3343 = vsel %vm3311, 1e+30, %v2254
          %v3344 = vsel %vm3312, 1e+30, %v2255
          %v3345 = vsel %vm3313, 1e+30, %v2256
          %v3346 = vsel %vm3314, 1e+30, %v2257
          %v3347 = vsel %vm3315, 1e+30, %v2258
          %v3348 = vsel %vm3316, 1e+30, %v2259
          %v3349 = vsel %vm3317, 1e+30, %v2260
          %v3350 = vsel %vm3318, 1e+30, %v2261
          %v3351 = vsel %vm3319, 1e+30, %v2262
          %v3352 = vsel %vm3320, 1e+30, %v2263
          %v3353 = vsel %vm3321, 1e+30, %v2264
          %v3354 = vsel %vm3322, 1e+30, %v2265
          %v3355 = vsel %vm3323, 1e+30, %v2266
          %v3356 = vsel %vm3324, 1e+30, %v2267
          %v3357 = vsel %vm3325, 1e+30, %v2268
          %v3358 = vsel %vm3326, 1e+30, %v2269
          %v3359 = vsel %vm3327, 1e+30, %v2270
          %v3360 = vsel %vm3328, 1e+30, %v2271
          %v3361 = vsel %vm3329, 1e+30, %v2272
          %v3362 = vsel %vm3330, 1e+30, %v2273
          %v3363 = vsel %vm3331, 1e+30, %v2274
          %v3364 = vsel %vm3332, 1e+30, %v2275
          %v3365 = vsel %vm3333, 1e+30, %v2276
          %v3366 = vsel %vm3334, 1e+30, %v2277
          %v3367 = vsel %vm3335, 1e+30, %v2278
          %v3368 = vsel %vm3336, 1e+30, %v2279
          %v3369 = vsel %vm3337, 1e+30, %v2280
          %v3370 = vsel %vm3338, 1e+30, %v2281
          %v3371 = vsel %vm3339, 1e+30, %v2282
          %v3372 = vadd.s32 %v2873, %v2283
          %v3373 = vadd.s32 %v2887, %v2283
          %v3374 = vadd.s32 %v2901, %v2283
          %v3375 = vadd.s32 %v2915, %v2283
          %v3376 = vadd.s32 %v2929, %v2283
          %v3377 = vadd.s32 %v2943, %v2283
          %v3378 = vadd.s32 %v2957, %v2283
          %v3379 = vadd.s32 %v2971, %v2283
          %v3380 = vadd.s32 %v2985, %v2283
          %v3381 = vadd.s32 %v2999, %v2283
          %v3382 = vadd.s32 %v3013, %v2283
          %v3383 = vadd.s32 %v3027, %v2283
          %v3384 = vadd.s32 %v3041, %v2283
          %v3385 = vadd.s32 %v3055, %v2283
          %v3386 = vadd.s32 %v3069, %v2283
          %v3387 = vadd.s32 %v3083, %v2283
          %v3388 = vadd.s32 %v3097, %v2283
          %v3389 = vadd.s32 %v3111, %v2283
          %v3390 = vadd.s32 %v3125, %v2283
          %v3391 = vadd.s32 %v3139, %v2283
          %v3392 = vadd.s32 %v3153, %v2283
          %v3393 = vadd.s32 %v3167, %v2283
          %v3394 = vadd.s32 %v3181, %v2283
          %v3395 = vadd.s32 %v3195, %v2283
          %v3396 = vadd.s32 %v3209, %v2283
          %v3397 = vadd.s32 %v3223, %v2283
          %v3398 = vadd.s32 %v3237, %v2283
          %v3399 = vadd.s32 %v3251, %v2283
          %v3400 = vadd.s32 %v3265, %v2283
          %v3401 = vadd.s32 %v3279, %v2283
          %v3402 = vadd.s32 %v3293, %v2283
          %v3403 = vadd.s32 %v3307, %v2283
          %vm3404 = vcmp.lt.f32.partialorder %v2733, %v2668
          %vm3405 = vcmp.lt.f32.partialorder %v2735, %v2669
          %vm3406 = vcmp.lt.f32.partialorder %v2737, %v2670
          %vm3407 = vcmp.lt.f32.partialorder %v2739, %v2671
          %vm3408 = vcmp.lt.f32.partialorder %v2741, %v2672
          %vm3409 = vcmp.lt.f32.partialorder %v2743, %v2673
          %vm3410 = vcmp.lt.f32.partialorder %v2745, %v2674
          %vm3411 = vcmp.lt.f32.partialorder %v2747, %v2675
          %vm3412 = vcmp.lt.f32.partialorder %v2749, %v2676
          %vm3413 = vcmp.lt.f32.partialorder %v2751, %v2677
          %vm3414 = vcmp.lt.f32.partialorder %v2753, %v2678
          %vm3415 = vcmp.lt.f32.partialorder %v2755, %v2679
          %vm3416 = vcmp.lt.f32.partialorder %v2757, %v2680
          %vm3417 = vcmp.lt.f32.partialorder %v2759, %v2681
          %vm3418 = vcmp.lt.f32.partialorder %v2761, %v2682
          %vm3419 = vcmp.lt.f32.partialorder %v2763, %v2683
          %vm3420 = vcmp.lt.f32.partialorder %v2765, %v2684
          %vm3421 = vcmp.lt.f32.partialorder %v2767, %v2685
          %vm3422 = vcmp.lt.f32.partialorder %v2769, %v2686
          %vm3423 = vcmp.lt.f32.partialorder %v2771, %v2687
          %vm3424 = vcmp.lt.f32.partialorder %v2773, %v2688
          %vm3425 = vcmp.lt.f32.partialorder %v2775, %v2689
          %vm3426 = vcmp.lt.f32.partialorder %v2777, %v2690
          %vm3427 = vcmp.lt.f32.partialorder %v2779, %v2691
          %vm3428 = vcmp.lt.f32.partialorder %v2781, %v2692
          %vm3429 = vcmp.lt.f32.partialorder %v2783, %v2693
          %vm3430 = vcmp.lt.f32.partialorder %v2785, %v2694
          %vm3431 = vcmp.lt.f32.partialorder %v2787, %v2695
          %vm3432 = vcmp.lt.f32.partialorder %v2789, %v2696
          %vm3433 = vcmp.lt.f32.partialorder %v2791, %v2697
          %vm3434 = vcmp.lt.f32.partialorder %v2793, %v2698
          %vm3435 = vcmp.lt.f32.partialorder %v2795, %v2699
          %vm3436 = vcmp.lt.f32.partialorder %v2733, %v2572
          %vm3437 = vcmp.lt.f32.partialorder %v2735, %v2573
          %vm3438 = vcmp.lt.f32.partialorder %v2737, %v2574
          %vm3439 = vcmp.lt.f32.partialorder %v2739, %v2575
          %vm3440 = vcmp.lt.f32.partialorder %v2741, %v2576
          %vm3441 = vcmp.lt.f32.partialorder %v2743, %v2577
          %vm3442 = vcmp.lt.f32.partialorder %v2745, %v2578
          %vm3443 = vcmp.lt.f32.partialorder %v2747, %v2579
          %vm3444 = vcmp.lt.f32.partialorder %v2749, %v2580
          %vm3445 = vcmp.lt.f32.partialorder %v2751, %v2581
          %vm3446 = vcmp.lt.f32.partialorder %v2753, %v2582
          %vm3447 = vcmp.lt.f32.partialorder %v2755, %v2583
          %vm3448 = vcmp.lt.f32.partialorder %v2757, %v2584
          %vm3449 = vcmp.lt.f32.partialorder %v2759, %v2585
          %vm3450 = vcmp.lt.f32.partialorder %v2761, %v2586
          %vm3451 = vcmp.lt.f32.partialorder %v2763, %v2587
          %vm3452 = vcmp.lt.f32.partialorder %v2765, %v2588
          %vm3453 = vcmp.lt.f32.partialorder %v2767, %v2589
          %vm3454 = vcmp.lt.f32.partialorder %v2769, %v2590
          %vm3455 = vcmp.lt.f32.partialorder %v2771, %v2591
          %vm3456 = vcmp.lt.f32.partialorder %v2773, %v2592
          %vm3457 = vcmp.lt.f32.partialorder %v2775, %v2593
          %vm3458 = vcmp.lt.f32.partialorder %v2777, %v2594
          %vm3459 = vcmp.lt.f32.partialorder %v2779, %v2595
          %vm3460 = vcmp.lt.f32.partialorder %v2781, %v2596
          %vm3461 = vcmp.lt.f32.partialorder %v2783, %v2597
          %vm3462 = vcmp.lt.f32.partialorder %v2785, %v2598
          %vm3463 = vcmp.lt.f32.partialorder %v2787, %v2599
          %vm3464 = vcmp.lt.f32.partialorder %v2789, %v2600
          %vm3465 = vcmp.lt.f32.partialorder %v2791, %v2601
          %vm3466 = vcmp.lt.f32.partialorder %v2793, %v2602
          %vm3467 = vcmp.lt.f32.partialorder %v2795, %v2603
          %vm3468 = vcmp.lt.f32.partialorder %v2733, %v2444
          %vm3469 = vcmp.lt.f32.partialorder %v2735, %v2445
          %vm3470 = vcmp.lt.f32.partialorder %v2737, %v2446
          %vm3471 = vcmp.lt.f32.partialorder %v2739, %v2447
          %vm3472 = vcmp.lt.f32.partialorder %v2741, %v2448
          %vm3473 = vcmp.lt.f32.partialorder %v2743, %v2449
          %vm3474 = vcmp.lt.f32.partialorder %v2745, %v2450
          %vm3475 = vcmp.lt.f32.partialorder %v2747, %v2451
          %vm3476 = vcmp.lt.f32.partialorder %v2749, %v2452
          %vm3477 = vcmp.lt.f32.partialorder %v2751, %v2453
          %vm3478 = vcmp.lt.f32.partialorder %v2753, %v2454
          %vm3479 = vcmp.lt.f32.partialorder %v2755, %v2455
          %vm3480 = vcmp.lt.f32.partialorder %v2757, %v2456
          %vm3481 = vcmp.lt.f32.partialorder %v2759, %v2457
          %vm3482 = vcmp.lt.f32.partialorder %v2761, %v2458
          %vm3483 = vcmp.lt.f32.partialorder %v2763, %v2459
          %vm3484 = vcmp.lt.f32.partialorder %v2765, %v2460
          %vm3485 = vcmp.lt.f32.partialorder %v2767, %v2461
          %vm3486 = vcmp.lt.f32.partialorder %v2769, %v2462
          %vm3487 = vcmp.lt.f32.partialorder %v2771, %v2463
          %vm3488 = vcmp.lt.f32.partialorder %v2773, %v2464
          %vm3489 = vcmp.lt.f32.partialorder %v2775, %v2465
          %vm3490 = vcmp.lt.f32.partialorder %v2777, %v2466
          %vm3491 = vcmp.lt.f32.partialorder %v2779, %v2467
          %vm3492 = vcmp.lt.f32.partialorder %v2781, %v2468
          %vm3493 = vcmp.lt.f32.partialorder %v2783, %v2469
          %vm3494 = vcmp.lt.f32.partialorder %v2785, %v2470
          %vm3495 = vcmp.lt.f32.partialorder %v2787, %v2471
          %vm3496 = vcmp.lt.f32.partialorder %v2789, %v2472
          %vm3497 = vcmp.lt.f32.partialorder %v2791, %v2473
          %vm3498 = vcmp.lt.f32.partialorder %v2793, %v2474
          %vm3499 = vcmp.lt.f32.partialorder %v2795, %v2475
          %v3500 = vsel %vm3468, %v2733, %v2444
          %v3501 = vsel %vm3469, %v2735, %v2445
          %v3502 = vsel %vm3470, %v2737, %v2446
          %v3503 = vsel %vm3471, %v2739, %v2447
          %v3504 = vsel %vm3472, %v2741, %v2448
          %v3505 = vsel %vm3473, %v2743, %v2449
          %v3506 = vsel %vm3474, %v2745, %v2450
          %v3507 = vsel %vm3475, %v2747, %v2451
          %v3508 = vsel %vm3476, %v2749, %v2452
          %v3509 = vsel %vm3477, %v2751, %v2453
          %v3510 = vsel %vm3478, %v2753, %v2454
          %v3511 = vsel %vm3479, %v2755, %v2455
          %v3512 = vsel %vm3480, %v2757, %v2456
          %v3513 = vsel %vm3481, %v2759, %v2457
          %v3514 = vsel %vm3482, %v2761, %v2458
          %v3515 = vsel %vm3483, %v2763, %v2459
          %v3516 = vsel %vm3484, %v2765, %v2460
          %v3517 = vsel %vm3485, %v2767, %v2461
          %v3518 = vsel %vm3486, %v2769, %v2462
          %v3519 = vsel %vm3487, %v2771, %v2463
          %v3520 = vsel %vm3488, %v2773, %v2464
          %v3521 = vsel %vm3489, %v2775, %v2465
          %v3522 = vsel %vm3490, %v2777, %v2466
          %v3523 = vsel %vm3491, %v2779, %v2467
          %v3524 = vsel %vm3492, %v2781, %v2468
          %v3525 = vsel %vm3493, %v2783, %v2469
          %v3526 = vsel %vm3494, %v2785, %v2470
          %v3527 = vsel %vm3495, %v2787, %v2471
          %v3528 = vsel %vm3496, %v2789, %v2472
          %v3529 = vsel %vm3497, %v2791, %v2473
          %v3530 = vsel %vm3498, %v2793, %v2474
          %v3531 = vsel %vm3499, %v2795, %v2475
          %v3532 = vsel %vm3436, %v2572, %v3500
          %v3533 = vsel %vm3437, %v2573, %v3501
          %v3534 = vsel %vm3438, %v2574, %v3502
          %v3535 = vsel %vm3439, %v2575, %v3503
          %v3536 = vsel %vm3440, %v2576, %v3504
          %v3537 = vsel %vm3441, %v2577, %v3505
          %v3538 = vsel %vm3442, %v2578, %v3506
          %v3539 = vsel %vm3443, %v2579, %v3507
          %v3540 = vsel %vm3444, %v2580, %v3508
          %v3541 = vsel %vm3445, %v2581, %v3509
          %v3542 = vsel %vm3446, %v2582, %v3510
          %v3543 = vsel %vm3447, %v2583, %v3511
          %v3544 = vsel %vm3448, %v2584, %v3512
          %v3545 = vsel %vm3449, %v2585, %v3513
          %v3546 = vsel %vm3450, %v2586, %v3514
          %v3547 = vsel %vm3451, %v2587, %v3515
          %v3548 = vsel %vm3452, %v2588, %v3516
          %v3549 = vsel %vm3453, %v2589, %v3517
          %v3550 = vsel %vm3454, %v2590, %v3518
          %v3551 = vsel %vm3455, %v2591, %v3519
          %v3552 = vsel %vm3456, %v2592, %v3520
          %v3553 = vsel %vm3457, %v2593, %v3521
          %v3554 = vsel %vm3458, %v2594, %v3522
          %v3555 = vsel %vm3459, %v2595, %v3523
          %v3556 = vsel %vm3460, %v2596, %v3524
          %v3557 = vsel %vm3461, %v2597, %v3525
          %v3558 = vsel %vm3462, %v2598, %v3526
          %v3559 = vsel %vm3463, %v2599, %v3527
          %v3560 = vsel %vm3464, %v2600, %v3528
          %v3561 = vsel %vm3465, %v2601, %v3529
          %v3562 = vsel %vm3466, %v2602, %v3530
          %v3563 = vsel %vm3467, %v2603, %v3531
          %v3564 = vsel %vm3468, %v3372, %v2508
          %v3565 = vsel %vm3469, %v3373, %v2509
          %v3566 = vsel %vm3470, %v3374, %v2510
          %v3567 = vsel %vm3471, %v3375, %v2511
          %v3568 = vsel %vm3472, %v3376, %v2512
          %v3569 = vsel %vm3473, %v3377, %v2513
          %v3570 = vsel %vm3474, %v3378, %v2514
          %v3571 = vsel %vm3475, %v3379, %v2515
          %v3572 = vsel %vm3476, %v3380, %v2516
          %v3573 = vsel %vm3477, %v3381, %v2517
          %v3574 = vsel %vm3478, %v3382, %v2518
          %v3575 = vsel %vm3479, %v3383, %v2519
          %v3576 = vsel %vm3480, %v3384, %v2520
          %v3577 = vsel %vm3481, %v3385, %v2521
          %v3578 = vsel %vm3482, %v3386, %v2522
          %v3579 = vsel %vm3483, %v3387, %v2523
          %v3580 = vsel %vm3484, %v3388, %v2524
          %v3581 = vsel %vm3485, %v3389, %v2525
          %v3582 = vsel %vm3486, %v3390, %v2526
          %v3583 = vsel %vm3487, %v3391, %v2527
          %v3584 = vsel %vm3488, %v3392, %v2528
          %v3585 = vsel %vm3489, %v3393, %v2529
          %v3586 = vsel %vm3490, %v3394, %v2530
          %v3587 = vsel %vm3491, %v3395, %v2531
          %v3588 = vsel %vm3492, %v3396, %v2532
          %v3589 = vsel %vm3493, %v3397, %v2533
          %v3590 = vsel %vm3494, %v3398, %v2534
          %v3591 = vsel %vm3495, %v3399, %v2535
          %v3592 = vsel %vm3496, %v3400, %v2536
          %v3593 = vsel %vm3497, %v3401, %v2537
          %v3594 = vsel %vm3498, %v3402, %v2538
          %v3595 = vsel %vm3499, %v3403, %v2539
          %v3596 = vsel %vm3436, %v2636, %v3564
          %v3597 = vsel %vm3437, %v2637, %v3565
          %v3598 = vsel %vm3438, %v2638, %v3566
          %v3599 = vsel %vm3439, %v2639, %v3567
          %v3600 = vsel %vm3440, %v2640, %v3568
          %v3601 = vsel %vm3441, %v2641, %v3569
          %v3602 = vsel %vm3442, %v2642, %v3570
          %v3603 = vsel %vm3443, %v2643, %v3571
          %v3604 = vsel %vm3444, %v2644, %v3572
          %v3605 = vsel %vm3445, %v2645, %v3573
          %v3606 = vsel %vm3446, %v2646, %v3574
          %v3607 = vsel %vm3447, %v2647, %v3575
          %v3608 = vsel %vm3448, %v2648, %v3576
          %v3609 = vsel %vm3449, %v2649, %v3577
          %v3610 = vsel %vm3450, %v2650, %v3578
          %v3611 = vsel %vm3451, %v2651, %v3579
          %v3612 = vsel %vm3452, %v2652, %v3580
          %v3613 = vsel %vm3453, %v2653, %v3581
          %v3614 = vsel %vm3454, %v2654, %v3582
          %v3615 = vsel %vm3455, %v2655, %v3583
          %v3616 = vsel %vm3456, %v2656, %v3584
          %v3617 = vsel %vm3457, %v2657, %v3585
          %v3618 = vsel %vm3458, %v2658, %v3586
          %v3619 = vsel %vm3459, %v2659, %v3587
          %v3620 = vsel %vm3460, %v2660, %v3588
          %v3621 = vsel %vm3461, %v2661, %v3589
          %v3622 = vsel %vm3462, %v2662, %v3590
          %v3623 = vsel %vm3463, %v2663, %v3591
          %v3624 = vsel %vm3464, %v2664, %v3592
          %v3625 = vsel %vm3465, %v2665, %v3593
          %v3626 = vsel %vm3466, %v2666, %v3594
          %v3627 = vsel %vm3467, %v2667, %v3595
          %v3628 = vsel %vm3436, %v2733, %v2572
          %v3629 = vsel %vm3437, %v2735, %v2573
          %v3630 = vsel %vm3438, %v2737, %v2574
          %v3631 = vsel %vm3439, %v2739, %v2575
          %v3632 = vsel %vm3440, %v2741, %v2576
          %v3633 = vsel %vm3441, %v2743, %v2577
          %v3634 = vsel %vm3442, %v2745, %v2578
          %v3635 = vsel %vm3443, %v2747, %v2579
          %v3636 = vsel %vm3444, %v2749, %v2580
          %v3637 = vsel %vm3445, %v2751, %v2581
          %v3638 = vsel %vm3446, %v2753, %v2582
          %v3639 = vsel %vm3447, %v2755, %v2583
          %v3640 = vsel %vm3448, %v2757, %v2584
          %v3641 = vsel %vm3449, %v2759, %v2585
          %v3642 = vsel %vm3450, %v2761, %v2586
          %v3643 = vsel %vm3451, %v2763, %v2587
          %v3644 = vsel %vm3452, %v2765, %v2588
          %v3645 = vsel %vm3453, %v2767, %v2589
          %v3646 = vsel %vm3454, %v2769, %v2590
          %v3647 = vsel %vm3455, %v2771, %v2591
          %v3648 = vsel %vm3456, %v2773, %v2592
          %v3649 = vsel %vm3457, %v2775, %v2593
          %v3650 = vsel %vm3458, %v2777, %v2594
          %v3651 = vsel %vm3459, %v2779, %v2595
          %v3652 = vsel %vm3460, %v2781, %v2596
          %v3653 = vsel %vm3461, %v2783, %v2597
          %v3654 = vsel %vm3462, %v2785, %v2598
          %v3655 = vsel %vm3463, %v2787, %v2599
          %v3656 = vsel %vm3464, %v2789, %v2600
          %v3657 = vsel %vm3465, %v2791, %v2601
          %v3658 = vsel %vm3466, %v2793, %v2602
          %v3659 = vsel %vm3467, %v2795, %v2603
          %v3660 = vsel %vm3404, %v2668, %v3628
          %v3661 = vsel %vm3405, %v2669, %v3629
          %v3662 = vsel %vm3406, %v2670, %v3630
          %v3663 = vsel %vm3407, %v2671, %v3631
          %v3664 = vsel %vm3408, %v2672, %v3632
          %v3665 = vsel %vm3409, %v2673, %v3633
          %v3666 = vsel %vm3410, %v2674, %v3634
          %v3667 = vsel %vm3411, %v2675, %v3635
          %v3668 = vsel %vm3412, %v2676, %v3636
          %v3669 = vsel %vm3413, %v2677, %v3637
          %v3670 = vsel %vm3414, %v2678, %v3638
          %v3671 = vsel %vm3415, %v2679, %v3639
          %v3672 = vsel %vm3416, %v2680, %v3640
          %v3673 = vsel %vm3417, %v2681, %v3641
          %v3674 = vsel %vm3418, %v2682, %v3642
          %v3675 = vsel %vm3419, %v2683, %v3643
          %v3676 = vsel %vm3420, %v2684, %v3644
          %v3677 = vsel %vm3421, %v2685, %v3645
          %v3678 = vsel %vm3422, %v2686, %v3646
          %v3679 = vsel %vm3423, %v2687, %v3647
          %v3680 = vsel %vm3424, %v2688, %v3648
          %v3681 = vsel %vm3425, %v2689, %v3649
          %v3682 = vsel %vm3426, %v2690, %v3650
          %v3683 = vsel %vm3427, %v2691, %v3651
          %v3684 = vsel %vm3428, %v2692, %v3652
          %v3685 = vsel %vm3429, %v2693, %v3653
          %v3686 = vsel %vm3430, %v2694, %v3654
          %v3687 = vsel %vm3431, %v2695, %v3655
          %v3688 = vsel %vm3432, %v2696, %v3656
          %v3689 = vsel %vm3433, %v2697, %v3657
          %v3690 = vsel %vm3434, %v2698, %v3658
          %v3691 = vsel %vm3435, %v2699, %v3659
          %v3692 = vsel %vm3436, %v3372, %v2636
          %v3693 = vsel %vm3437, %v3373, %v2637
          %v3694 = vsel %vm3438, %v3374, %v2638
          %v3695 = vsel %vm3439, %v3375, %v2639
          %v3696 = vsel %vm3440, %v3376, %v2640
          %v3697 = vsel %vm3441, %v3377, %v2641
          %v3698 = vsel %vm3442, %v3378, %v2642
          %v3699 = vsel %vm3443, %v3379, %v2643
          %v3700 = vsel %vm3444, %v3380, %v2644
          %v3701 = vsel %vm3445, %v3381, %v2645
          %v3702 = vsel %vm3446, %v3382, %v2646
          %v3703 = vsel %vm3447, %v3383, %v2647
          %v3704 = vsel %vm3448, %v3384, %v2648
          %v3705 = vsel %vm3449, %v3385, %v2649
          %v3706 = vsel %vm3450, %v3386, %v2650
          %v3707 = vsel %vm3451, %v3387, %v2651
          %v3708 = vsel %vm3452, %v3388, %v2652
          %v3709 = vsel %vm3453, %v3389, %v2653
          %v3710 = vsel %vm3454, %v3390, %v2654
          %v3711 = vsel %vm3455, %v3391, %v2655
          %v3712 = vsel %vm3456, %v3392, %v2656
          %v3713 = vsel %vm3457, %v3393, %v2657
          %v3714 = vsel %vm3458, %v3394, %v2658
          %v3715 = vsel %vm3459, %v3395, %v2659
          %v3716 = vsel %vm3460, %v3396, %v2660
          %v3717 = vsel %vm3461, %v3397, %v2661
          %v3718 = vsel %vm3462, %v3398, %v2662
          %v3719 = vsel %vm3463, %v3399, %v2663
          %v3720 = vsel %vm3464, %v3400, %v2664
          %v3721 = vsel %vm3465, %v3401, %v2665
          %v3722 = vsel %vm3466, %v3402, %v2666
          %v3723 = vsel %vm3467, %v3403, %v2667
          %v3724 = vsel %vm3404, %v2700, %v3692
          %v3725 = vsel %vm3405, %v2701, %v3693
          %v3726 = vsel %vm3406, %v2702, %v3694
          %v3727 = vsel %vm3407, %v2703, %v3695
          %v3728 = vsel %vm3408, %v2704, %v3696
          %v3729 = vsel %vm3409, %v2705, %v3697
          %v3730 = vsel %vm3410, %v2706, %v3698
          %v3731 = vsel %vm3411, %v2707, %v3699
          %v3732 = vsel %vm3412, %v2708, %v3700
          %v3733 = vsel %vm3413, %v2709, %v3701
          %v3734 = vsel %vm3414, %v2710, %v3702
          %v3735 = vsel %vm3415, %v2711, %v3703
          %v3736 = vsel %vm3416, %v2712, %v3704
          %v3737 = vsel %vm3417, %v2713, %v3705
          %v3738 = vsel %vm3418, %v2714, %v3706
          %v3739 = vsel %vm3419, %v2715, %v3707
          %v3740 = vsel %vm3420, %v2716, %v3708
          %v3741 = vsel %vm3421, %v2717, %v3709
          %v3742 = vsel %vm3422, %v2718, %v3710
          %v3743 = vsel %vm3423, %v2719, %v3711
          %v3744 = vsel %vm3424, %v2720, %v3712
          %v3745 = vsel %vm3425, %v2721, %v3713
          %v3746 = vsel %vm3426, %v2722, %v3714
          %v3747 = vsel %vm3427, %v2723, %v3715
          %v3748 = vsel %vm3428, %v2724, %v3716
          %v3749 = vsel %vm3429, %v2725, %v3717
          %v3750 = vsel %vm3430, %v2726, %v3718
          %v3751 = vsel %vm3431, %v2727, %v3719
          %v3752 = vsel %vm3432, %v2728, %v3720
          %v3753 = vsel %vm3433, %v2729, %v3721
          %v3754 = vsel %vm3434, %v2730, %v3722
          %v3755 = vsel %vm3435, %v2731, %v3723
          %v3756 = vsel %vm3404, %v2733, %v2668
          %v3757 = vsel %vm3405, %v2735, %v2669
          %v3758 = vsel %vm3406, %v2737, %v2670
          %v3759 = vsel %vm3407, %v2739, %v2671
          %v3760 = vsel %vm3408, %v2741, %v2672
          %v3761 = vsel %vm3409, %v2743, %v2673
          %v3762 = vsel %vm3410, %v2745, %v2674
          %v3763 = vsel %vm3411, %v2747, %v2675
          %v3764 = vsel %vm3412, %v2749, %v2676
          %v3765 = vsel %vm3413, %v2751, %v2677
          %v3766 = vsel %vm3414, %v2753, %v2678
          %v3767 = vsel %vm3415, %v2755, %v2679
          %v3768 = vsel %vm3416, %v2757, %v2680
          %v3769 = vsel %vm3417, %v2759, %v2681
          %v3770 = vsel %vm3418, %v2761, %v2682
          %v3771 = vsel %vm3419, %v2763, %v2683
          %v3772 = vsel %vm3420, %v2765, %v2684
          %v3773 = vsel %vm3421, %v2767, %v2685
          %v3774 = vsel %vm3422, %v2769, %v2686
          %v3775 = vsel %vm3423, %v2771, %v2687
          %v3776 = vsel %vm3424, %v2773, %v2688
          %v3777 = vsel %vm3425, %v2775, %v2689
          %v3778 = vsel %vm3426, %v2777, %v2690
          %v3779 = vsel %vm3427, %v2779, %v2691
          %v3780 = vsel %vm3428, %v2781, %v2692
          %v3781 = vsel %vm3429, %v2783, %v2693
          %v3782 = vsel %vm3430, %v2785, %v2694
          %v3783 = vsel %vm3431, %v2787, %v2695
          %v3784 = vsel %vm3432, %v2789, %v2696
          %v3785 = vsel %vm3433, %v2791, %v2697
          %v3786 = vsel %vm3434, %v2793, %v2698
          %v3787 = vsel %vm3435, %v2795, %v2699
          %v3788 = vsel %vm3404, %v3372, %v2700
          %v3789 = vsel %vm3405, %v3373, %v2701
          %v3790 = vsel %vm3406, %v3374, %v2702
          %v3791 = vsel %vm3407, %v3375, %v2703
          %v3792 = vsel %vm3408, %v3376, %v2704
          %v3793 = vsel %vm3409, %v3377, %v2705
          %v3794 = vsel %vm3410, %v3378, %v2706
          %v3795 = vsel %vm3411, %v3379, %v2707
          %v3796 = vsel %vm3412, %v3380, %v2708
          %v3797 = vsel %vm3413, %v3381, %v2709
          %v3798 = vsel %vm3414, %v3382, %v2710
          %v3799 = vsel %vm3415, %v3383, %v2711
          %v3800 = vsel %vm3416, %v3384, %v2712
          %v3801 = vsel %vm3417, %v3385, %v2713
          %v3802 = vsel %vm3418, %v3386, %v2714
          %v3803 = vsel %vm3419, %v3387, %v2715
          %v3804 = vsel %vm3420, %v3388, %v2716
          %v3805 = vsel %vm3421, %v3389, %v2717
          %v3806 = vsel %vm3422, %v3390, %v2718
          %v3807 = vsel %vm3423, %v3391, %v2719
          %v3808 = vsel %vm3424, %v3392, %v2720
          %v3809 = vsel %vm3425, %v3393, %v2721
          %v3810 = vsel %vm3426, %v3394, %v2722
          %v3811 = vsel %vm3427, %v3395, %v2723
          %v3812 = vsel %vm3428, %v3396, %v2724
          %v3813 = vsel %vm3429, %v3397, %v2725
          %v3814 = vsel %vm3430, %v3398, %v2726
          %v3815 = vsel %vm3431, %v3399, %v2727
          %v3816 = vsel %vm3432, %v3400, %v2728
          %v3817 = vsel %vm3433, %v3401, %v2729
          %v3818 = vsel %vm3434, %v3402, %v2730
          %v3819 = vsel %vm3435, %v3403, %v2731
          %3820 = vmin.xlane.f32.xlu0 %v3340
          %v3821 = vpop.xlane.xlu0 %3820
          %3822 = vmin.xlane.f32.xlu0 %v3341
          %v3823 = vpop.xlane.xlu0 %3822
          %3824 = vmin.xlane.f32.xlu0 %v3342
          %v3825 = vpop.xlane.xlu0 %3824
          %3826 = vmin.xlane.f32.xlu0 %v3343
          %v3827 = vpop.xlane.xlu0 %3826
          %3828 = vmin.xlane.f32.xlu0 %v3344
          %v3829 = vpop.xlane.xlu0 %3828
          %3830 = vmin.xlane.f32.xlu0 %v3345
          %v3831 = vpop.xlane.xlu0 %3830
          %3832 = vmin.xlane.f32.xlu0 %v3346
          %v3833 = vpop.xlane.xlu0 %3832
          %3834 = vmin.xlane.f32.xlu0 %v3347
          %v3835 = vpop.xlane.xlu0 %3834
          %3836 = vmin.xlane.f32.xlu0 %v3348
          %v3837 = vpop.xlane.xlu0 %3836
          %3838 = vmin.xlane.f32.xlu0 %v3349
          %v3839 = vpop.xlane.xlu0 %3838
          %3840 = vmin.xlane.f32.xlu0 %v3350
          %v3841 = vpop.xlane.xlu0 %3840
          %3842 = vmin.xlane.f32.xlu0 %v3351
          %v3843 = vpop.xlane.xlu0 %3842
          %3844 = vmin.xlane.f32.xlu0 %v3352
          %v3845 = vpop.xlane.xlu0 %3844
          %3846 = vmin.xlane.f32.xlu0 %v3353
          %v3847 = vpop.xlane.xlu0 %3846
          %3848 = vmin.xlane.f32.xlu0 %v3354
          %v3849 = vpop.xlane.xlu0 %3848
          %3850 = vmin.xlane.f32.xlu0 %v3355
          %v3851 = vpop.xlane.xlu0 %3850
          %3852 = vmin.xlane.f32.xlu0 %v3356
          %v3853 = vpop.xlane.xlu0 %3852
          %3854 = vmin.xlane.f32.xlu0 %v3357
          %v3855 = vpop.xlane.xlu0 %3854
          %3856 = vmin.xlane.f32.xlu0 %v3358
          %v3857 = vpop.xlane.xlu0 %3856
          %3858 = vmin.xlane.f32.xlu0 %v3359
          %v3859 = vpop.xlane.xlu0 %3858
          %3860 = vmin.xlane.f32.xlu0 %v3360
          %v3861 = vpop.xlane.xlu0 %3860
          %3862 = vmin.xlane.f32.xlu0 %v3361
          %v3863 = vpop.xlane.xlu0 %3862
          %3864 = vmin.xlane.f32.xlu0 %v3362
          %v3865 = vpop.xlane.xlu0 %3864
          %3866 = vmin.xlane.f32.xlu0 %v3363
          %v3867 = vpop.xlane.xlu0 %3866
          %3868 = vmin.xlane.f32.xlu0 %v3364
          %v3869 = vpop.xlane.xlu0 %3868
          %3870 = vmin.xlane.f32.xlu0 %v3365
          %v3871 = vpop.xlane.xlu0 %3870
          %3872 = vmin.xlane.f32.xlu0 %v3366
          %v3873 = vpop.xlane.xlu0 %3872
          %3874 = vmin.xlane.f32.xlu0 %v3367
          %v3875 = vpop.xlane.xlu0 %3874
          %3876 = vmin.xlane.f32.xlu0 %v3368
          %v3877 = vpop.xlane.xlu0 %3876
          %3878 = vmin.xlane.f32.xlu0 %v3369
          %v3879 = vpop.xlane.xlu0 %3878
          %3880 = vmin.xlane.f32.xlu0 %v3370
          %v3881 = vpop.xlane.xlu0 %3880
          %3882 = vmin.xlane.f32.xlu0 %v3371
          %v3883 = vpop.xlane.xlu0 %3882
          %vm3884 = vcmp.eq.f32.partialorder %v3340, %v3821
          %vm3885 = vcmp.eq.f32.partialorder %v3341, %v3823
          %vm3886 = vcmp.eq.f32.partialorder %v3342, %v3825
          %vm3887 = vcmp.eq.f32.partialorder %v3343, %v3827
          %vm3888 = vcmp.eq.f32.partialorder %v3344, %v3829
          %vm3889 = vcmp.eq.f32.partialorder %v3345, %v3831
          %vm3890 = vcmp.eq.f32.partialorder %v3346, %v3833
          %vm3891 = vcmp.eq.f32.partialorder %v3347, %v3835
          %vm3892 = vcmp.eq.f32.partialorder %v3348, %v3837
          %vm3893 = vcmp.eq.f32.partialorder %v3349, %v3839
          %vm3894 = vcmp.eq.f32.partialorder %v3350, %v3841
          %vm3895 = vcmp.eq.f32.partialorder %v3351, %v3843
          %vm3896 = vcmp.eq.f32.partialorder %v3352, %v3845
          %vm3897 = vcmp.eq.f32.partialorder %v3353, %v3847
          %vm3898 = vcmp.eq.f32.partialorder %v3354, %v3849
          %vm3899 = vcmp.eq.f32.partialorder %v3355, %v3851
          %vm3900 = vcmp.eq.f32.partialorder %v3356, %v3853
          %vm3901 = vcmp.eq.f32.partialorder %v3357, %v3855
          %vm3902 = vcmp.eq.f32.partialorder %v3358, %v3857
          %vm3903 = vcmp.eq.f32.partialorder %v3359, %v3859
          %vm3904 = vcmp.eq.f32.partialorder %v3360, %v3861
          %vm3905 = vcmp.eq.f32.partialorder %v3361, %v3863
          %vm3906 = vcmp.eq.f32.partialorder %v3362, %v3865
          %vm3907 = vcmp.eq.f32.partialorder %v3363, %v3867
          %vm3908 = vcmp.eq.f32.partialorder %v3364, %v3869
          %vm3909 = vcmp.eq.f32.partialorder %v3365, %v3871
          %vm3910 = vcmp.eq.f32.partialorder %v3366, %v3873
          %vm3911 = vcmp.eq.f32.partialorder %v3367, %v3875
          %vm3912 = vcmp.eq.f32.partialorder %v3368, %v3877
          %vm3913 = vcmp.eq.f32.partialorder %v3369, %v3879
          %vm3914 = vcmp.eq.f32.partialorder %v3370, %v3881
          %vm3915 = vcmp.eq.f32.partialorder %v3371, %v3883
          %v3916 = vsel %vm3884, %v1449, 128
          %v3917 = vsel %vm3885, %v1449, 128
          %v3918 = vsel %vm3886, %v1449, 128
          %v3919 = vsel %vm3887, %v1449, 128
          %v3920 = vsel %vm3888, %v1449, 128
          %v3921 = vsel %vm3889, %v1449, 128
          %v3922 = vsel %vm3890, %v1449, 128
          %v3923 = vsel %vm3891, %v1449, 128
          %v3924 = vsel %vm3892, %v1449, 128
          %v3925 = vsel %vm3893, %v1449, 128
          %v3926 = vsel %vm3894, %v1449, 128
          %v3927 = vsel %vm3895, %v1449, 128
          %v3928 = vsel %vm3896, %v1449, 128
          %v3929 = vsel %vm3897, %v1449, 128
          %v3930 = vsel %vm3898, %v1449, 128
          %v3931 = vsel %vm3899, %v1449, 128
          %v3932 = vsel %vm3900, %v1449, 128
          %v3933 = vsel %vm3901, %v1449, 128
          %v3934 = vsel %vm3902, %v1449, 128
          %v3935 = vsel %vm3903, %v1449, 128
          %v3936 = vsel %vm3904, %v1449, 128
          %v3937 = vsel %vm3905, %v1449, 128
          %v3938 = vsel %vm3906, %v1449, 128
          %v3939 = vsel %vm3907, %v1449, 128
          %v3940 = vsel %vm3908, %v1449, 128
          %v3941 = vsel %vm3909, %v1449, 128
          %v3942 = vsel %vm3910, %v1449, 128
          %v3943 = vsel %vm3911, %v1449, 128
          %v3944 = vsel %vm3912, %v1449, 128
          %v3945 = vsel %vm3913, %v1449, 128
          %v3946 = vsel %vm3914, %v1449, 128
          %v3947 = vsel %vm3915, %v1449, 128
          %v3948 = vand.u32 %v3916, 65535
          %v3949 = vshra.s32 %v3916, 16
          %v3950 = vcvt.s32.f32 %v3948
          %v3951 = vcvt.s32.f32 %v3949
          %3952 = vmin.xlane.f32.xlu0 %v3951
          %v3953 = vpop.xlane.xlu0 %3952
          %vm3954 = vcmp.eq.f32.partialorder %v3951, %v3953
          %v3955 = vsel %vm3954, %v3950, inf
          %3956 = vmin.xlane.f32.xlu0 %v3955
          %v3957 = vpop.xlane.xlu0 %3956
          %v3958 = vcvt.f32.s32 %v3957
          %v3959 = vcvt.f32.s32 %v3953
          %v3960 = vshll.u32 %v3959, 16
          %v3961 = vadd.s32 %v3960, %v3958
          %v3962 = vand.u32 %v3917, 65535
          %v3963 = vshra.s32 %v3917, 16
          %v3964 = vcvt.s32.f32 %v3962
          %v3965 = vcvt.s32.f32 %v3963
          %3966 = vmin.xlane.f32.xlu0 %v3965
          %v3967 = vpop.xlane.xlu0 %3966
          %vm3968 = vcmp.eq.f32.partialorder %v3965, %v3967
          %v3969 = vsel %vm3968, %v3964, inf
          %3970 = vmin.xlane.f32.xlu0 %v3969
          %v3971 = vpop.xlane.xlu0 %3970
          %v3972 = vcvt.f32.s32 %v3971
          %v3973 = vcvt.f32.s32 %v3967
          %v3974 = vshll.u32 %v3973, 16
          %v3975 = vadd.s32 %v3974, %v3972
          %v3976 = vand.u32 %v3918, 65535
          %v3977 = vshra.s32 %v3918, 16
          %v3978 = vcvt.s32.f32 %v3976
          %v3979 = vcvt.s32.f32 %v3977
          %3980 = vmin.xlane.f32.xlu0 %v3979
          %v3981 = vpop.xlane.xlu0 %3980
          %vm3982 = vcmp.eq.f32.partialorder %v3979, %v3981
          %v3983 = vsel %vm3982, %v3978, inf
          %3984 = vmin.xlane.f32.xlu0 %v3983
          %v3985 = vpop.xlane.xlu0 %3984
          %v3986 = vcvt.f32.s32 %v3985
          %v3987 = vcvt.f32.s32 %v3981
          %v3988 = vshll.u32 %v3987, 16
          %v3989 = vadd.s32 %v3988, %v3986
          %v3990 = vand.u32 %v3919, 65535
          %v3991 = vshra.s32 %v3919, 16
          %v3992 = vcvt.s32.f32 %v3990
          %v3993 = vcvt.s32.f32 %v3991
          %3994 = vmin.xlane.f32.xlu0 %v3993
          %v3995 = vpop.xlane.xlu0 %3994
          %vm3996 = vcmp.eq.f32.partialorder %v3993, %v3995
          %v3997 = vsel %vm3996, %v3992, inf
          %3998 = vmin.xlane.f32.xlu0 %v3997
          %v3999 = vpop.xlane.xlu0 %3998
          %v4000 = vcvt.f32.s32 %v3999
          %v4001 = vcvt.f32.s32 %v3995
          %v4002 = vshll.u32 %v4001, 16
          %v4003 = vadd.s32 %v4002, %v4000
          %v4004 = vand.u32 %v3920, 65535
          %v4005 = vshra.s32 %v3920, 16
          %v4006 = vcvt.s32.f32 %v4004
          %v4007 = vcvt.s32.f32 %v4005
          %4008 = vmin.xlane.f32.xlu0 %v4007
          %v4009 = vpop.xlane.xlu0 %4008
          %vm4010 = vcmp.eq.f32.partialorder %v4007, %v4009
          %v4011 = vsel %vm4010, %v4006, inf
          %4012 = vmin.xlane.f32.xlu0 %v4011
          %v4013 = vpop.xlane.xlu0 %4012
          %v4014 = vcvt.f32.s32 %v4013
          %v4015 = vcvt.f32.s32 %v4009
          %v4016 = vshll.u32 %v4015, 16
          %v4017 = vadd.s32 %v4016, %v4014
          %v4018 = vand.u32 %v3921, 65535
          %v4019 = vshra.s32 %v3921, 16
          %v4020 = vcvt.s32.f32 %v4018
          %v4021 = vcvt.s32.f32 %v4019
          %4022 = vmin.xlane.f32.xlu0 %v4021
          %v4023 = vpop.xlane.xlu0 %4022
          %vm4024 = vcmp.eq.f32.partialorder %v4021, %v4023
          %v4025 = vsel %vm4024, %v4020, inf
          %4026 = vmin.xlane.f32.xlu0 %v4025
          %v4027 = vpop.xlane.xlu0 %4026
          %v4028 = vcvt.f32.s32 %v4027
          %v4029 = vcvt.f32.s32 %v4023
          %v4030 = vshll.u32 %v4029, 16
          %v4031 = vadd.s32 %v4030, %v4028
          %v4032 = vand.u32 %v3922, 65535
          %v4033 = vshra.s32 %v3922, 16
          %v4034 = vcvt.s32.f32 %v4032
          %v4035 = vcvt.s32.f32 %v4033
          %4036 = vmin.xlane.f32.xlu0 %v4035
          %v4037 = vpop.xlane.xlu0 %4036
          %vm4038 = vcmp.eq.f32.partialorder %v4035, %v4037
          %v4039 = vsel %vm4038, %v4034, inf
          %4040 = vmin.xlane.f32.xlu0 %v4039
          %v4041 = vpop.xlane.xlu0 %4040
          %v4042 = vcvt.f32.s32 %v4041
          %v4043 = vcvt.f32.s32 %v4037
          %v4044 = vshll.u32 %v4043, 16
          %v4045 = vadd.s32 %v4044, %v4042
          %v4046 = vand.u32 %v3923, 65535
          %v4047 = vshra.s32 %v3923, 16
          %v4048 = vcvt.s32.f32 %v4046
          %v4049 = vcvt.s32.f32 %v4047
          %4050 = vmin.xlane.f32.xlu0 %v4049
          %v4051 = vpop.xlane.xlu0 %4050
          %vm4052 = vcmp.eq.f32.partialorder %v4049, %v4051
          %v4053 = vsel %vm4052, %v4048, inf
          %4054 = vmin.xlane.f32.xlu0 %v4053
          %v4055 = vpop.xlane.xlu0 %4054
          %v4056 = vcvt.f32.s32 %v4055
          %v4057 = vcvt.f32.s32 %v4051
          %v4058 = vshll.u32 %v4057, 16
          %v4059 = vadd.s32 %v4058, %v4056
          %v4060 = vand.u32 %v3924, 65535
          %v4061 = vshra.s32 %v3924, 16
          %v4062 = vcvt.s32.f32 %v4060
          %v4063 = vcvt.s32.f32 %v4061
          %4064 = vmin.xlane.f32.xlu0 %v4063
          %v4065 = vpop.xlane.xlu0 %4064
          %vm4066 = vcmp.eq.f32.partialorder %v4063, %v4065
          %v4067 = vsel %vm4066, %v4062, inf
          %4068 = vmin.xlane.f32.xlu0 %v4067
          %v4069 = vpop.xlane.xlu0 %4068
          %v4070 = vcvt.f32.s32 %v4069
          %v4071 = vcvt.f32.s32 %v4065
          %v4072 = vshll.u32 %v4071, 16
          %v4073 = vadd.s32 %v4072, %v4070
          %v4074 = vand.u32 %v3925, 65535
          %v4075 = vshra.s32 %v3925, 16
          %v4076 = vcvt.s32.f32 %v4074
          %v4077 = vcvt.s32.f32 %v4075
          %4078 = vmin.xlane.f32.xlu0 %v4077
          %v4079 = vpop.xlane.xlu0 %4078
          %vm4080 = vcmp.eq.f32.partialorder %v4077, %v4079
          %v4081 = vsel %vm4080, %v4076, inf
          %4082 = vmin.xlane.f32.xlu0 %v4081
          %v4083 = vpop.xlane.xlu0 %4082
          %v4084 = vcvt.f32.s32 %v4083
          %v4085 = vcvt.f32.s32 %v4079
          %v4086 = vshll.u32 %v4085, 16
          %v4087 = vadd.s32 %v4086, %v4084
          %v4088 = vand.u32 %v3926, 65535
          %v4089 = vshra.s32 %v3926, 16
          %v4090 = vcvt.s32.f32 %v4088
          %v4091 = vcvt.s32.f32 %v4089
          %4092 = vmin.xlane.f32.xlu0 %v4091
          %v4093 = vpop.xlane.xlu0 %4092
          %vm4094 = vcmp.eq.f32.partialorder %v4091, %v4093
          %v4095 = vsel %vm4094, %v4090, inf
          %4096 = vmin.xlane.f32.xlu0 %v4095
          %v4097 = vpop.xlane.xlu0 %4096
          %v4098 = vcvt.f32.s32 %v4097
          %v4099 = vcvt.f32.s32 %v4093
          %v4100 = vshll.u32 %v4099, 16
          %v4101 = vadd.s32 %v4100, %v4098
          %v4102 = vand.u32 %v3927, 65535
          %v4103 = vshra.s32 %v3927, 16
          %v4104 = vcvt.s32.f32 %v4102
          %v4105 = vcvt.s32.f32 %v4103
          %4106 = vmin.xlane.f32.xlu0 %v4105
          %v4107 = vpop.xlane.xlu0 %4106
          %vm4108 = vcmp.eq.f32.partialorder %v4105, %v4107
          %v4109 = vsel %vm4108, %v4104, inf
          %4110 = vmin.xlane.f32.xlu0 %v4109
          %v4111 = vpop.xlane.xlu0 %4110
          %v4112 = vcvt.f32.s32 %v4111
          %v4113 = vcvt.f32.s32 %v4107
          %v4114 = vshll.u32 %v4113, 16
          %v4115 = vadd.s32 %v4114, %v4112
          %v4116 = vand.u32 %v3928, 65535
          %v4117 = vshra.s32 %v3928, 16
          %v4118 = vcvt.s32.f32 %v4116
          %v4119 = vcvt.s32.f32 %v4117
          %4120 = vmin.xlane.f32.xlu0 %v4119
          %v4121 = vpop.xlane.xlu0 %4120
          %vm4122 = vcmp.eq.f32.partialorder %v4119, %v4121
          %v4123 = vsel %vm4122, %v4118, inf
          %4124 = vmin.xlane.f32.xlu0 %v4123
          %v4125 = vpop.xlane.xlu0 %4124
          %v4126 = vcvt.f32.s32 %v4125
          %v4127 = vcvt.f32.s32 %v4121
          %v4128 = vshll.u32 %v4127, 16
          %v4129 = vadd.s32 %v4128, %v4126
          %v4130 = vand.u32 %v3929, 65535
          %v4131 = vshra.s32 %v3929, 16
          %v4132 = vcvt.s32.f32 %v4130
          %v4133 = vcvt.s32.f32 %v4131
          %4134 = vmin.xlane.f32.xlu0 %v4133
          %v4135 = vpop.xlane.xlu0 %4134
          %vm4136 = vcmp.eq.f32.partialorder %v4133, %v4135
          %v4137 = vsel %vm4136, %v4132, inf
          %4138 = vmin.xlane.f32.xlu0 %v4137
          %v4139 = vpop.xlane.xlu0 %4138
          %v4140 = vcvt.f32.s32 %v4139
          %v4141 = vcvt.f32.s32 %v4135
          %v4142 = vshll.u32 %v4141, 16
          %v4143 = vadd.s32 %v4142, %v4140
          %v4144 = vand.u32 %v3930, 65535
          %v4145 = vshra.s32 %v3930, 16
          %v4146 = vcvt.s32.f32 %v4144
          %v4147 = vcvt.s32.f32 %v4145
          %4148 = vmin.xlane.f32.xlu0 %v4147
          %v4149 = vpop.xlane.xlu0 %4148
          %vm4150 = vcmp.eq.f32.partialorder %v4147, %v4149
          %v4151 = vsel %vm4150, %v4146, inf
          %4152 = vmin.xlane.f32.xlu0 %v4151
          %v4153 = vpop.xlane.xlu0 %4152
          %v4154 = vcvt.f32.s32 %v4153
          %v4155 = vcvt.f32.s32 %v4149
          %v4156 = vshll.u32 %v4155, 16
          %v4157 = vadd.s32 %v4156, %v4154
          %v4158 = vand.u32 %v3931, 65535
          %v4159 = vshra.s32 %v3931, 16
          %v4160 = vcvt.s32.f32 %v4158
          %v4161 = vcvt.s32.f32 %v4159
          %4162 = vmin.xlane.f32.xlu0 %v4161
          %v4163 = vpop.xlane.xlu0 %4162
          %vm4164 = vcmp.eq.f32.partialorder %v4161, %v4163
          %v4165 = vsel %vm4164, %v4160, inf
          %4166 = vmin.xlane.f32.xlu0 %v4165
          %v4167 = vpop.xlane.xlu0 %4166
          %v4168 = vcvt.f32.s32 %v4167
          %v4169 = vcvt.f32.s32 %v4163
          %v4170 = vshll.u32 %v4169, 16
          %v4171 = vadd.s32 %v4170, %v4168
          %v4172 = vand.u32 %v3932, 65535
          %v4173 = vshra.s32 %v3932, 16
          %v4174 = vcvt.s32.f32 %v4172
          %v4175 = vcvt.s32.f32 %v4173
          %4176 = vmin.xlane.f32.xlu0 %v4175
          %v4177 = vpop.xlane.xlu0 %4176
          %vm4178 = vcmp.eq.f32.partialorder %v4175, %v4177
          %v4179 = vsel %vm4178, %v4174, inf
          %4180 = vmin.xlane.f32.xlu0 %v4179
          %v4181 = vpop.xlane.xlu0 %4180
          %v4182 = vcvt.f32.s32 %v4181
          %v4183 = vcvt.f32.s32 %v4177
          %v4184 = vshll.u32 %v4183, 16
          %v4185 = vadd.s32 %v4184, %v4182
          %v4186 = vand.u32 %v3933, 65535
          %v4187 = vshra.s32 %v3933, 16
          %v4188 = vcvt.s32.f32 %v4186
          %v4189 = vcvt.s32.f32 %v4187
          %4190 = vmin.xlane.f32.xlu0 %v4189
          %v4191 = vpop.xlane.xlu0 %4190
          %vm4192 = vcmp.eq.f32.partialorder %v4189, %v4191
          %v4193 = vsel %vm4192, %v4188, inf
          %4194 = vmin.xlane.f32.xlu0 %v4193
          %v4195 = vpop.xlane.xlu0 %4194
          %v4196 = vcvt.f32.s32 %v4195
          %v4197 = vcvt.f32.s32 %v4191
          %v4198 = vshll.u32 %v4197, 16
          %v4199 = vadd.s32 %v4198, %v4196
          %v4200 = vand.u32 %v3934, 65535
          %v4201 = vshra.s32 %v3934, 16
          %v4202 = vcvt.s32.f32 %v4200
          %v4203 = vcvt.s32.f32 %v4201
          %4204 = vmin.xlane.f32.xlu0 %v4203
          %v4205 = vpop.xlane.xlu0 %4204
          %vm4206 = vcmp.eq.f32.partialorder %v4203, %v4205
          %v4207 = vsel %vm4206, %v4202, inf
          %4208 = vmin.xlane.f32.xlu0 %v4207
          %v4209 = vpop.xlane.xlu0 %4208
          %v4210 = vcvt.f32.s32 %v4209
          %v4211 = vcvt.f32.s32 %v4205
          %v4212 = vshll.u32 %v4211, 16
          %v4213 = vadd.s32 %v4212, %v4210
          %v4214 = vand.u32 %v3935, 65535
          %v4215 = vshra.s32 %v3935, 16
          %v4216 = vcvt.s32.f32 %v4214
          %v4217 = vcvt.s32.f32 %v4215
          %4218 = vmin.xlane.f32.xlu0 %v4217
          %v4219 = vpop.xlane.xlu0 %4218
          %vm4220 = vcmp.eq.f32.partialorder %v4217, %v4219
          %v4221 = vsel %vm4220, %v4216, inf
          %4222 = vmin.xlane.f32.xlu0 %v4221
          %v4223 = vpop.xlane.xlu0 %4222
          %v4224 = vcvt.f32.s32 %v4223
          %v4225 = vcvt.f32.s32 %v4219
          %v4226 = vshll.u32 %v4225, 16
          %v4227 = vadd.s32 %v4226, %v4224
          %v4228 = vand.u32 %v3936, 65535
          %v4229 = vshra.s32 %v3936, 16
          %v4230 = vcvt.s32.f32 %v4228
          %v4231 = vcvt.s32.f32 %v4229
          %4232 = vmin.xlane.f32.xlu0 %v4231
          %v4233 = vpop.xlane.xlu0 %4232
          %vm4234 = vcmp.eq.f32.partialorder %v4231, %v4233
          %v4235 = vsel %vm4234, %v4230, inf
          %4236 = vmin.xlane.f32.xlu0 %v4235
          %v4237 = vpop.xlane.xlu0 %4236
          %v4238 = vcvt.f32.s32 %v4237
          %v4239 = vcvt.f32.s32 %v4233
          %v4240 = vshll.u32 %v4239, 16
          %v4241 = vadd.s32 %v4240, %v4238
          %v4242 = vand.u32 %v3937, 65535
          %v4243 = vshra.s32 %v3937, 16
          %v4244 = vcvt.s32.f32 %v4242
          %v4245 = vcvt.s32.f32 %v4243
          %4246 = vmin.xlane.f32.xlu0 %v4245
          %v4247 = vpop.xlane.xlu0 %4246
          %vm4248 = vcmp.eq.f32.partialorder %v4245, %v4247
          %v4249 = vsel %vm4248, %v4244, inf
          %4250 = vmin.xlane.f32.xlu0 %v4249
          %v4251 = vpop.xlane.xlu0 %4250
          %v4252 = vcvt.f32.s32 %v4251
          %v4253 = vcvt.f32.s32 %v4247
          %v4254 = vshll.u32 %v4253, 16
          %v4255 = vadd.s32 %v4254, %v4252
          %v4256 = vand.u32 %v3938, 65535
          %v4257 = vshra.s32 %v3938, 16
          %v4258 = vcvt.s32.f32 %v4256
          %v4259 = vcvt.s32.f32 %v4257
          %4260 = vmin.xlane.f32.xlu0 %v4259
          %v4261 = vpop.xlane.xlu0 %4260
          %vm4262 = vcmp.eq.f32.partialorder %v4259, %v4261
          %v4263 = vsel %vm4262, %v4258, inf
          %4264 = vmin.xlane.f32.xlu0 %v4263
          %v4265 = vpop.xlane.xlu0 %4264
          %v4266 = vcvt.f32.s32 %v4265
          %v4267 = vcvt.f32.s32 %v4261
          %v4268 = vshll.u32 %v4267, 16
          %v4269 = vadd.s32 %v4268, %v4266
          %v4270 = vand.u32 %v3939, 65535
          %v4271 = vshra.s32 %v3939, 16
          %v4272 = vcvt.s32.f32 %v4270
          %v4273 = vcvt.s32.f32 %v4271
          %4274 = vmin.xlane.f32.xlu0 %v4273
          %v4275 = vpop.xlane.xlu0 %4274
          %vm4276 = vcmp.eq.f32.partialorder %v4273, %v4275
          %v4277 = vsel %vm4276, %v4272, inf
          %4278 = vmin.xlane.f32.xlu0 %v4277
          %v4279 = vpop.xlane.xlu0 %4278
          %v4280 = vcvt.f32.s32 %v4279
          %v4281 = vcvt.f32.s32 %v4275
          %v4282 = vshll.u32 %v4281, 16
          %v4283 = vadd.s32 %v4282, %v4280
          %v4284 = vand.u32 %v3940, 65535
          %v4285 = vshra.s32 %v3940, 16
          %v4286 = vcvt.s32.f32 %v4284
          %v4287 = vcvt.s32.f32 %v4285
          %4288 = vmin.xlane.f32.xlu0 %v4287
          %v4289 = vpop.xlane.xlu0 %4288
          %vm4290 = vcmp.eq.f32.partialorder %v4287, %v4289
          %v4291 = vsel %vm4290, %v4286, inf
          %4292 = vmin.xlane.f32.xlu0 %v4291
          %v4293 = vpop.xlane.xlu0 %4292
          %v4294 = vcvt.f32.s32 %v4293
          %v4295 = vcvt.f32.s32 %v4289
          %v4296 = vshll.u32 %v4295, 16
          %v4297 = vadd.s32 %v4296, %v4294
          %v4298 = vand.u32 %v3941, 65535
          %v4299 = vshra.s32 %v3941, 16
          %v4300 = vcvt.s32.f32 %v4298
          %v4301 = vcvt.s32.f32 %v4299
          %4302 = vmin.xlane.f32.xlu0 %v4301
          %v4303 = vpop.xlane.xlu0 %4302
          %vm4304 = vcmp.eq.f32.partialorder %v4301, %v4303
          %v4305 = vsel %vm4304, %v4300, inf
          %4306 = vmin.xlane.f32.xlu0 %v4305
          %v4307 = vpop.xlane.xlu0 %4306
          %v4308 = vcvt.f32.s32 %v4307
          %v4309 = vcvt.f32.s32 %v4303
          %v4310 = vshll.u32 %v4309, 16
          %v4311 = vadd.s32 %v4310, %v4308
          %v4312 = vand.u32 %v3942, 65535
          %v4313 = vshra.s32 %v3942, 16
          %v4314 = vcvt.s32.f32 %v4312
          %v4315 = vcvt.s32.f32 %v4313
          %4316 = vmin.xlane.f32.xlu0 %v4315
          %v4317 = vpop.xlane.xlu0 %4316
          %vm4318 = vcmp.eq.f32.partialorder %v4315, %v4317
          %v4319 = vsel %vm4318, %v4314, inf
          %4320 = vmin.xlane.f32.xlu0 %v4319
          %v4321 = vpop.xlane.xlu0 %4320
          %v4322 = vcvt.f32.s32 %v4321
          %v4323 = vcvt.f32.s32 %v4317
          %v4324 = vshll.u32 %v4323, 16
          %v4325 = vadd.s32 %v4324, %v4322
          %v4326 = vand.u32 %v3943, 65535
          %v4327 = vshra.s32 %v3943, 16
          %v4328 = vcvt.s32.f32 %v4326
          %v4329 = vcvt.s32.f32 %v4327
          %4330 = vmin.xlane.f32.xlu0 %v4329
          %v4331 = vpop.xlane.xlu0 %4330
          %vm4332 = vcmp.eq.f32.partialorder %v4329, %v4331
          %v4333 = vsel %vm4332, %v4328, inf
          %4334 = vmin.xlane.f32.xlu0 %v4333
          %v4335 = vpop.xlane.xlu0 %4334
          %v4336 = vcvt.f32.s32 %v4335
          %v4337 = vcvt.f32.s32 %v4331
          %v4338 = vshll.u32 %v4337, 16
          %v4339 = vadd.s32 %v4338, %v4336
          %v4340 = vand.u32 %v3944, 65535
          %v4341 = vshra.s32 %v3944, 16
          %v4342 = vcvt.s32.f32 %v4340
          %v4343 = vcvt.s32.f32 %v4341
          %4344 = vmin.xlane.f32.xlu0 %v4343
          %v4345 = vpop.xlane.xlu0 %4344
          %vm4346 = vcmp.eq.f32.partialorder %v4343, %v4345
          %v4347 = vsel %vm4346, %v4342, inf
          %4348 = vmin.xlane.f32.xlu0 %v4347
          %v4349 = vpop.xlane.xlu0 %4348
          %v4350 = vcvt.f32.s32 %v4349
          %v4351 = vcvt.f32.s32 %v4345
          %v4352 = vshll.u32 %v4351, 16
          %v4353 = vadd.s32 %v4352, %v4350
          %v4354 = vand.u32 %v3945, 65535
          %v4355 = vshra.s32 %v3945, 16
          %v4356 = vcvt.s32.f32 %v4354
          %v4357 = vcvt.s32.f32 %v4355
          %4358 = vmin.xlane.f32.xlu0 %v4357
          %v4359 = vpop.xlane.xlu0 %4358
          %vm4360 = vcmp.eq.f32.partialorder %v4357, %v4359
          %v4361 = vsel %vm4360, %v4356, inf
          %4362 = vmin.xlane.f32.xlu0 %v4361
          %v4363 = vpop.xlane.xlu0 %4362
          %v4364 = vcvt.f32.s32 %v4363
          %v4365 = vcvt.f32.s32 %v4359
          %v4366 = vshll.u32 %v4365, 16
          %v4367 = vadd.s32 %v4366, %v4364
          %v4368 = vand.u32 %v3946, 65535
          %v4369 = vshra.s32 %v3946, 16
          %v4370 = vcvt.s32.f32 %v4368
          %v4371 = vcvt.s32.f32 %v4369
          %4372 = vmin.xlane.f32.xlu0 %v4371
          %v4373 = vpop.xlane.xlu0 %4372
          %vm4374 = vcmp.eq.f32.partialorder %v4371, %v4373
          %v4375 = vsel %vm4374, %v4370, inf
          %4376 = vmin.xlane.f32.xlu0 %v4375
          %v4377 = vpop.xlane.xlu0 %4376
          %v4378 = vcvt.f32.s32 %v4377
          %v4379 = vcvt.f32.s32 %v4373
          %v4380 = vshll.u32 %v4379, 16
          %v4381 = vadd.s32 %v4380, %v4378
          %v4382 = vand.u32 %v3947, 65535
          %v4383 = vshra.s32 %v3947, 16
          %v4384 = vcvt.s32.f32 %v4382
          %v4385 = vcvt.s32.f32 %v4383
          %4386 = vmin.xlane.f32.xlu0 %v4385
          %v4387 = vpop.xlane.xlu0 %4386
          %vm4388 = vcmp.eq.f32.partialorder %v4385, %v4387
          %v4389 = vsel %vm4388, %v4384, inf
          %4390 = vmin.xlane.f32.xlu0 %v4389
          %v4391 = vpop.xlane.xlu0 %4390
          %v4392 = vcvt.f32.s32 %v4391
          %v4393 = vcvt.f32.s32 %v4387
          %v4394 = vshll.u32 %v4393, 16
          %v4395 = vadd.s32 %v4394, %v4392
          %v4396 = vadd.s32 %v3961, %v2283
          %v4397 = vadd.s32 %v3975, %v2283
          %v4398 = vadd.s32 %v3989, %v2283
          %v4399 = vadd.s32 %v4003, %v2283
          %v4400 = vadd.s32 %v4017, %v2283
          %v4401 = vadd.s32 %v4031, %v2283
          %v4402 = vadd.s32 %v4045, %v2283
          %v4403 = vadd.s32 %v4059, %v2283
          %v4404 = vadd.s32 %v4073, %v2283
          %v4405 = vadd.s32 %v4087, %v2283
          %v4406 = vadd.s32 %v4101, %v2283
          %v4407 = vadd.s32 %v4115, %v2283
          %v4408 = vadd.s32 %v4129, %v2283
          %v4409 = vadd.s32 %v4143, %v2283
          %v4410 = vadd.s32 %v4157, %v2283
          %v4411 = vadd.s32 %v4171, %v2283
          %v4412 = vadd.s32 %v4185, %v2283
          %v4413 = vadd.s32 %v4199, %v2283
          %v4414 = vadd.s32 %v4213, %v2283
          %v4415 = vadd.s32 %v4227, %v2283
          %v4416 = vadd.s32 %v4241, %v2283
          %v4417 = vadd.s32 %v4255, %v2283
          %v4418 = vadd.s32 %v4269, %v2283
          %v4419 = vadd.s32 %v4283, %v2283
          %v4420 = vadd.s32 %v4297, %v2283
          %v4421 = vadd.s32 %v4311, %v2283
          %v4422 = vadd.s32 %v4325, %v2283
          %v4423 = vadd.s32 %v4339, %v2283
          %v4424 = vadd.s32 %v4353, %v2283
          %v4425 = vadd.s32 %v4367, %v2283
          %v4426 = vadd.s32 %v4381, %v2283
          %v4427 = vadd.s32 %v4395, %v2283
          %vm4428 = vcmp.lt.f32.partialorder %v3821, %v3756
          %vm4429 = vcmp.lt.f32.partialorder %v3823, %v3757
          %vm4430 = vcmp.lt.f32.partialorder %v3825, %v3758
          %vm4431 = vcmp.lt.f32.partialorder %v3827, %v3759
          %vm4432 = vcmp.lt.f32.partialorder %v3829, %v3760
          %vm4433 = vcmp.lt.f32.partialorder %v3831, %v3761
          %vm4434 = vcmp.lt.f32.partialorder %v3833, %v3762
          %vm4435 = vcmp.lt.f32.partialorder %v3835, %v3763
          %vm4436 = vcmp.lt.f32.partialorder %v3837, %v3764
          %vm4437 = vcmp.lt.f32.partialorder %v3839, %v3765
          %vm4438 = vcmp.lt.f32.partialorder %v3841, %v3766
          %vm4439 = vcmp.lt.f32.partialorder %v3843, %v3767
          %vm4440 = vcmp.lt.f32.partialorder %v3845, %v3768
          %vm4441 = vcmp.lt.f32.partialorder %v3847, %v3769
          %vm4442 = vcmp.lt.f32.partialorder %v3849, %v3770
          %vm4443 = vcmp.lt.f32.partialorder %v3851, %v3771
          %vm4444 = vcmp.lt.f32.partialorder %v3853, %v3772
          %vm4445 = vcmp.lt.f32.partialorder %v3855, %v3773
          %vm4446 = vcmp.lt.f32.partialorder %v3857, %v3774
          %vm4447 = vcmp.lt.f32.partialorder %v3859, %v3775
          %vm4448 = vcmp.lt.f32.partialorder %v3861, %v3776
          %vm4449 = vcmp.lt.f32.partialorder %v3863, %v3777
          %vm4450 = vcmp.lt.f32.partialorder %v3865, %v3778
          %vm4451 = vcmp.lt.f32.partialorder %v3867, %v3779
          %vm4452 = vcmp.lt.f32.partialorder %v3869, %v3780
          %vm4453 = vcmp.lt.f32.partialorder %v3871, %v3781
          %vm4454 = vcmp.lt.f32.partialorder %v3873, %v3782
          %vm4455 = vcmp.lt.f32.partialorder %v3875, %v3783
          %vm4456 = vcmp.lt.f32.partialorder %v3877, %v3784
          %vm4457 = vcmp.lt.f32.partialorder %v3879, %v3785
          %vm4458 = vcmp.lt.f32.partialorder %v3881, %v3786
          %vm4459 = vcmp.lt.f32.partialorder %v3883, %v3787
          %vm4460 = vcmp.lt.f32.partialorder %v3821, %v3660
          %vm4461 = vcmp.lt.f32.partialorder %v3823, %v3661
          %vm4462 = vcmp.lt.f32.partialorder %v3825, %v3662
          %vm4463 = vcmp.lt.f32.partialorder %v3827, %v3663
          %vm4464 = vcmp.lt.f32.partialorder %v3829, %v3664
          %vm4465 = vcmp.lt.f32.partialorder %v3831, %v3665
          %vm4466 = vcmp.lt.f32.partialorder %v3833, %v3666
          %vm4467 = vcmp.lt.f32.partialorder %v3835, %v3667
          %vm4468 = vcmp.lt.f32.partialorder %v3837, %v3668
          %vm4469 = vcmp.lt.f32.partialorder %v3839, %v3669
          %vm4470 = vcmp.lt.f32.partialorder %v3841, %v3670
          %vm4471 = vcmp.lt.f32.partialorder %v3843, %v3671
          %vm4472 = vcmp.lt.f32.partialorder %v3845, %v3672
          %vm4473 = vcmp.lt.f32.partialorder %v3847, %v3673
          %vm4474 = vcmp.lt.f32.partialorder %v3849, %v3674
          %vm4475 = vcmp.lt.f32.partialorder %v3851, %v3675
          %vm4476 = vcmp.lt.f32.partialorder %v3853, %v3676
          %vm4477 = vcmp.lt.f32.partialorder %v3855, %v3677
          %vm4478 = vcmp.lt.f32.partialorder %v3857, %v3678
          %vm4479 = vcmp.lt.f32.partialorder %v3859, %v3679
          %vm4480 = vcmp.lt.f32.partialorder %v3861, %v3680
          %vm4481 = vcmp.lt.f32.partialorder %v3863, %v3681
          %vm4482 = vcmp.lt.f32.partialorder %v3865, %v3682
          %vm4483 = vcmp.lt.f32.partialorder %v3867, %v3683
          %vm4484 = vcmp.lt.f32.partialorder %v3869, %v3684
          %vm4485 = vcmp.lt.f32.partialorder %v3871, %v3685
          %vm4486 = vcmp.lt.f32.partialorder %v3873, %v3686
          %vm4487 = vcmp.lt.f32.partialorder %v3875, %v3687
          %vm4488 = vcmp.lt.f32.partialorder %v3877, %v3688
          %vm4489 = vcmp.lt.f32.partialorder %v3879, %v3689
          %vm4490 = vcmp.lt.f32.partialorder %v3881, %v3690
          %vm4491 = vcmp.lt.f32.partialorder %v3883, %v3691
          %vm4492 = vcmp.lt.f32.partialorder %v3821, %v3532
          %vm4493 = vcmp.lt.f32.partialorder %v3823, %v3533
          %vm4494 = vcmp.lt.f32.partialorder %v3825, %v3534
          %vm4495 = vcmp.lt.f32.partialorder %v3827, %v3535
          %vm4496 = vcmp.lt.f32.partialorder %v3829, %v3536
          %vm4497 = vcmp.lt.f32.partialorder %v3831, %v3537
          %vm4498 = vcmp.lt.f32.partialorder %v3833, %v3538
          %vm4499 = vcmp.lt.f32.partialorder %v3835, %v3539
          %vm4500 = vcmp.lt.f32.partialorder %v3837, %v3540
          %vm4501 = vcmp.lt.f32.partialorder %v3839, %v3541
          %vm4502 = vcmp.lt.f32.partialorder %v3841, %v3542
          %vm4503 = vcmp.lt.f32.partialorder %v3843, %v3543
          %vm4504 = vcmp.lt.f32.partialorder %v3845, %v3544
          %vm4505 = vcmp.lt.f32.partialorder %v3847, %v3545
          %vm4506 = vcmp.lt.f32.partialorder %v3849, %v3546
          %vm4507 = vcmp.lt.f32.partialorder %v3851, %v3547
          %vm4508 = vcmp.lt.f32.partialorder %v3853, %v3548
          %vm4509 = vcmp.lt.f32.partialorder %v3855, %v3549
          %vm4510 = vcmp.lt.f32.partialorder %v3857, %v3550
          %vm4511 = vcmp.lt.f32.partialorder %v3859, %v3551
          %vm4512 = vcmp.lt.f32.partialorder %v3861, %v3552
          %vm4513 = vcmp.lt.f32.partialorder %v3863, %v3553
          %vm4514 = vcmp.lt.f32.partialorder %v3865, %v3554
          %vm4515 = vcmp.lt.f32.partialorder %v3867, %v3555
          %vm4516 = vcmp.lt.f32.partialorder %v3869, %v3556
          %vm4517 = vcmp.lt.f32.partialorder %v3871, %v3557
          %vm4518 = vcmp.lt.f32.partialorder %v3873, %v3558
          %vm4519 = vcmp.lt.f32.partialorder %v3875, %v3559
          %vm4520 = vcmp.lt.f32.partialorder %v3877, %v3560
          %vm4521 = vcmp.lt.f32.partialorder %v3879, %v3561
          %vm4522 = vcmp.lt.f32.partialorder %v3881, %v3562
          %vm4523 = vcmp.lt.f32.partialorder %v3883, %v3563
          %v4524 = vsel %vm4492, %v3821, %v3532
          %v4525 = vsel %vm4493, %v3823, %v3533
          %v4526 = vsel %vm4494, %v3825, %v3534
          %v4527 = vsel %vm4495, %v3827, %v3535
          %v4528 = vsel %vm4496, %v3829, %v3536
          %v4529 = vsel %vm4497, %v3831, %v3537
          %v4530 = vsel %vm4498, %v3833, %v3538
          %v4531 = vsel %vm4499, %v3835, %v3539
          %v4532 = vsel %vm4500, %v3837, %v3540
          %v4533 = vsel %vm4501, %v3839, %v3541
          %v4534 = vsel %vm4502, %v3841, %v3542
          %v4535 = vsel %vm4503, %v3843, %v3543
          %v4536 = vsel %vm4504, %v3845, %v3544
          %v4537 = vsel %vm4505, %v3847, %v3545
          %v4538 = vsel %vm4506, %v3849, %v3546
          %v4539 = vsel %vm4507, %v3851, %v3547
          %v4540 = vsel %vm4508, %v3853, %v3548
          %v4541 = vsel %vm4509, %v3855, %v3549
          %v4542 = vsel %vm4510, %v3857, %v3550
          %v4543 = vsel %vm4511, %v3859, %v3551
          %v4544 = vsel %vm4512, %v3861, %v3552
          %v4545 = vsel %vm4513, %v3863, %v3553
          %v4546 = vsel %vm4514, %v3865, %v3554
          %v4547 = vsel %vm4515, %v3867, %v3555
          %v4548 = vsel %vm4516, %v3869, %v3556
          %v4549 = vsel %vm4517, %v3871, %v3557
          %v4550 = vsel %vm4518, %v3873, %v3558
          %v4551 = vsel %vm4519, %v3875, %v3559
          %v4552 = vsel %vm4520, %v3877, %v3560
          %v4553 = vsel %vm4521, %v3879, %v3561
          %v4554 = vsel %vm4522, %v3881, %v3562
          %v4555 = vsel %vm4523, %v3883, %v3563
          %v4556 = vsel %vm4460, %v3660, %v4524
          %v4557 = vsel %vm4461, %v3661, %v4525
          %v4558 = vsel %vm4462, %v3662, %v4526
          %v4559 = vsel %vm4463, %v3663, %v4527
          %v4560 = vsel %vm4464, %v3664, %v4528
          %v4561 = vsel %vm4465, %v3665, %v4529
          %v4562 = vsel %vm4466, %v3666, %v4530
          %v4563 = vsel %vm4467, %v3667, %v4531
          %v4564 = vsel %vm4468, %v3668, %v4532
          %v4565 = vsel %vm4469, %v3669, %v4533
          %v4566 = vsel %vm4470, %v3670, %v4534
          %v4567 = vsel %vm4471, %v3671, %v4535
          %v4568 = vsel %vm4472, %v3672, %v4536
          %v4569 = vsel %vm4473, %v3673, %v4537
          %v4570 = vsel %vm4474, %v3674, %v4538
          %v4571 = vsel %vm4475, %v3675, %v4539
          %v4572 = vsel %vm4476, %v3676, %v4540
          %v4573 = vsel %vm4477, %v3677, %v4541
          %v4574 = vsel %vm4478, %v3678, %v4542
          %v4575 = vsel %vm4479, %v3679, %v4543
          %v4576 = vsel %vm4480, %v3680, %v4544
          %v4577 = vsel %vm4481, %v3681, %v4545
          %v4578 = vsel %vm4482, %v3682, %v4546
          %v4579 = vsel %vm4483, %v3683, %v4547
          %v4580 = vsel %vm4484, %v3684, %v4548
          %v4581 = vsel %vm4485, %v3685, %v4549
          %v4582 = vsel %vm4486, %v3686, %v4550
          %v4583 = vsel %vm4487, %v3687, %v4551
          %v4584 = vsel %vm4488, %v3688, %v4552
          %v4585 = vsel %vm4489, %v3689, %v4553
          %v4586 = vsel %vm4490, %v3690, %v4554
          %v4587 = vsel %vm4491, %v3691, %v4555
          %v4588 = vsel %vm4492, %v4396, %v3596
          %v4589 = vsel %vm4493, %v4397, %v3597
          %v4590 = vsel %vm4494, %v4398, %v3598
          %v4591 = vsel %vm4495, %v4399, %v3599
          %v4592 = vsel %vm4496, %v4400, %v3600
          %v4593 = vsel %vm4497, %v4401, %v3601
          %v4594 = vsel %vm4498, %v4402, %v3602
          %v4595 = vsel %vm4499, %v4403, %v3603
          %v4596 = vsel %vm4500, %v4404, %v3604
          %v4597 = vsel %vm4501, %v4405, %v3605
          %v4598 = vsel %vm4502, %v4406, %v3606
          %v4599 = vsel %vm4503, %v4407, %v3607
          %v4600 = vsel %vm4504, %v4408, %v3608
          %v4601 = vsel %vm4505, %v4409, %v3609
          %v4602 = vsel %vm4506, %v4410, %v3610
          %v4603 = vsel %vm4507, %v4411, %v3611
          %v4604 = vsel %vm4508, %v4412, %v3612
          %v4605 = vsel %vm4509, %v4413, %v3613
          %v4606 = vsel %vm4510, %v4414, %v3614
          %v4607 = vsel %vm4511, %v4415, %v3615
          %v4608 = vsel %vm4512, %v4416, %v3616
          %v4609 = vsel %vm4513, %v4417, %v3617
          %v4610 = vsel %vm4514, %v4418, %v3618
          %v4611 = vsel %vm4515, %v4419, %v3619
          %v4612 = vsel %vm4516, %v4420, %v3620
          %v4613 = vsel %vm4517, %v4421, %v3621
          %v4614 = vsel %vm4518, %v4422, %v3622
          %v4615 = vsel %vm4519, %v4423, %v3623
          %v4616 = vsel %vm4520, %v4424, %v3624
          %v4617 = vsel %vm4521, %v4425, %v3625
          %v4618 = vsel %vm4522, %v4426, %v3626
          %v4619 = vsel %vm4523, %v4427, %v3627
          %v4620 = vsel %vm4460, %v3724, %v4588
          %v4621 = vsel %vm4461, %v3725, %v4589
          %v4622 = vsel %vm4462, %v3726, %v4590
          %v4623 = vsel %vm4463, %v3727, %v4591
          %v4624 = vsel %vm4464, %v3728, %v4592
          %v4625 = vsel %vm4465, %v3729, %v4593
          %v4626 = vsel %vm4466, %v3730, %v4594
          %v4627 = vsel %vm4467, %v3731, %v4595
          %v4628 = vsel %vm4468, %v3732, %v4596
          %v4629 = vsel %vm4469, %v3733, %v4597
          %v4630 = vsel %vm4470, %v3734, %v4598
          %v4631 = vsel %vm4471, %v3735, %v4599
          %v4632 = vsel %vm4472, %v3736, %v4600
          %v4633 = vsel %vm4473, %v3737, %v4601
          %v4634 = vsel %vm4474, %v3738, %v4602
          %v4635 = vsel %vm4475, %v3739, %v4603
          %v4636 = vsel %vm4476, %v3740, %v4604
          %v4637 = vsel %vm4477, %v3741, %v4605
          %v4638 = vsel %vm4478, %v3742, %v4606
          %v4639 = vsel %vm4479, %v3743, %v4607
          %v4640 = vsel %vm4480, %v3744, %v4608
          %v4641 = vsel %vm4481, %v3745, %v4609
          %v4642 = vsel %vm4482, %v3746, %v4610
          %v4643 = vsel %vm4483, %v3747, %v4611
          %v4644 = vsel %vm4484, %v3748, %v4612
          %v4645 = vsel %vm4485, %v3749, %v4613
          %v4646 = vsel %vm4486, %v3750, %v4614
          %v4647 = vsel %vm4487, %v3751, %v4615
          %v4648 = vsel %vm4488, %v3752, %v4616
          %v4649 = vsel %vm4489, %v3753, %v4617
          %v4650 = vsel %vm4490, %v3754, %v4618
          %v4651 = vsel %vm4491, %v3755, %v4619
          %v4652 = vsel %vm4460, %v3821, %v3660
          %v4653 = vsel %vm4461, %v3823, %v3661
          %v4654 = vsel %vm4462, %v3825, %v3662
          %v4655 = vsel %vm4463, %v3827, %v3663
          %v4656 = vsel %vm4464, %v3829, %v3664
          %v4657 = vsel %vm4465, %v3831, %v3665
          %v4658 = vsel %vm4466, %v3833, %v3666
          %v4659 = vsel %vm4467, %v3835, %v3667
          %v4660 = vsel %vm4468, %v3837, %v3668
          %v4661 = vsel %vm4469, %v3839, %v3669
          %v4662 = vsel %vm4470, %v3841, %v3670
          %v4663 = vsel %vm4471, %v3843, %v3671
          %v4664 = vsel %vm4472, %v3845, %v3672
          %v4665 = vsel %vm4473, %v3847, %v3673
          %v4666 = vsel %vm4474, %v3849, %v3674
          %v4667 = vsel %vm4475, %v3851, %v3675
          %v4668 = vsel %vm4476, %v3853, %v3676
          %v4669 = vsel %vm4477, %v3855, %v3677
          %v4670 = vsel %vm4478, %v3857, %v3678
          %v4671 = vsel %vm4479, %v3859, %v3679
          %v4672 = vsel %vm4480, %v3861, %v3680
          %v4673 = vsel %vm4481, %v3863, %v3681
          %v4674 = vsel %vm4482, %v3865, %v3682
          %v4675 = vsel %vm4483, %v3867, %v3683
          %v4676 = vsel %vm4484, %v3869, %v3684
          %v4677 = vsel %vm4485, %v3871, %v3685
          %v4678 = vsel %vm4486, %v3873, %v3686
          %v4679 = vsel %vm4487, %v3875, %v3687
          %v4680 = vsel %vm4488, %v3877, %v3688
          %v4681 = vsel %vm4489, %v3879, %v3689
          %v4682 = vsel %vm4490, %v3881, %v3690
          %v4683 = vsel %vm4491, %v3883, %v3691
          %v4684 = vsel %vm4428, %v3756, %v4652
          %v4685 = vsel %vm4429, %v3757, %v4653
          %v4686 = vsel %vm4430, %v3758, %v4654
          %v4687 = vsel %vm4431, %v3759, %v4655
          %v4688 = vsel %vm4432, %v3760, %v4656
          %v4689 = vsel %vm4433, %v3761, %v4657
          %v4690 = vsel %vm4434, %v3762, %v4658
          %v4691 = vsel %vm4435, %v3763, %v4659
          %v4692 = vsel %vm4436, %v3764, %v4660
          %v4693 = vsel %vm4437, %v3765, %v4661
          %v4694 = vsel %vm4438, %v3766, %v4662
          %v4695 = vsel %vm4439, %v3767, %v4663
          %v4696 = vsel %vm4440, %v3768, %v4664
          %v4697 = vsel %vm4441, %v3769, %v4665
          %v4698 = vsel %vm4442, %v3770, %v4666
          %v4699 = vsel %vm4443, %v3771, %v4667
          %v4700 = vsel %vm4444, %v3772, %v4668
          %v4701 = vsel %vm4445, %v3773, %v4669
          %v4702 = vsel %vm4446, %v3774, %v4670
          %v4703 = vsel %vm4447, %v3775, %v4671
          %v4704 = vsel %vm4448, %v3776, %v4672
          %v4705 = vsel %vm4449, %v3777, %v4673
          %v4706 = vsel %vm4450, %v3778, %v4674
          %v4707 = vsel %vm4451, %v3779, %v4675
          %v4708 = vsel %vm4452, %v3780, %v4676
          %v4709 = vsel %vm4453, %v3781, %v4677
          %v4710 = vsel %vm4454, %v3782, %v4678
          %v4711 = vsel %vm4455, %v3783, %v4679
          %v4712 = vsel %vm4456, %v3784, %v4680
          %v4713 = vsel %vm4457, %v3785, %v4681
          %v4714 = vsel %vm4458, %v3786, %v4682
          %v4715 = vsel %vm4459, %v3787, %v4683
          %v4716 = vsel %vm4460, %v4396, %v3724
          %v4717 = vsel %vm4461, %v4397, %v3725
          %v4718 = vsel %vm4462, %v4398, %v3726
          %v4719 = vsel %vm4463, %v4399, %v3727
          %v4720 = vsel %vm4464, %v4400, %v3728
          %v4721 = vsel %vm4465, %v4401, %v3729
          %v4722 = vsel %vm4466, %v4402, %v3730
          %v4723 = vsel %vm4467, %v4403, %v3731
          %v4724 = vsel %vm4468, %v4404, %v3732
          %v4725 = vsel %vm4469, %v4405, %v3733
          %v4726 = vsel %vm4470, %v4406, %v3734
          %v4727 = vsel %vm4471, %v4407, %v3735
          %v4728 = vsel %vm4472, %v4408, %v3736
          %v4729 = vsel %vm4473, %v4409, %v3737
          %v4730 = vsel %vm4474, %v4410, %v3738
          %v4731 = vsel %vm4475, %v4411, %v3739
          %v4732 = vsel %vm4476, %v4412, %v3740
          %v4733 = vsel %vm4477, %v4413, %v3741
          %v4734 = vsel %vm4478, %v4414, %v3742
          %v4735 = vsel %vm4479, %v4415, %v3743
          %v4736 = vsel %vm4480, %v4416, %v3744
          %v4737 = vsel %vm4481, %v4417, %v3745
          %v4738 = vsel %vm4482, %v4418, %v3746
          %v4739 = vsel %vm4483, %v4419, %v3747
          %v4740 = vsel %vm4484, %v4420, %v3748
          %v4741 = vsel %vm4485, %v4421, %v3749
          %v4742 = vsel %vm4486, %v4422, %v3750
          %v4743 = vsel %vm4487, %v4423, %v3751
          %v4744 = vsel %vm4488, %v4424, %v3752
          %v4745 = vsel %vm4489, %v4425, %v3753
          %v4746 = vsel %vm4490, %v4426, %v3754
          %v4747 = vsel %vm4491, %v4427, %v3755
          %v4748 = vsel %vm4428, %v3788, %v4716
          %v4749 = vsel %vm4429, %v3789, %v4717
          %v4750 = vsel %vm4430, %v3790, %v4718
          %v4751 = vsel %vm4431, %v3791, %v4719
          %v4752 = vsel %vm4432, %v3792, %v4720
          %v4753 = vsel %vm4433, %v3793, %v4721
          %v4754 = vsel %vm4434, %v3794, %v4722
          %v4755 = vsel %vm4435, %v3795, %v4723
          %v4756 = vsel %vm4436, %v3796, %v4724
          %v4757 = vsel %vm4437, %v3797, %v4725
          %v4758 = vsel %vm4438, %v3798, %v4726
          %v4759 = vsel %vm4439, %v3799, %v4727
          %v4760 = vsel %vm4440, %v3800, %v4728
          %v4761 = vsel %vm4441, %v3801, %v4729
          %v4762 = vsel %vm4442, %v3802, %v4730
          %v4763 = vsel %vm4443, %v3803, %v4731
          %v4764 = vsel %vm4444, %v3804, %v4732
          %v4765 = vsel %vm4445, %v3805, %v4733
          %v4766 = vsel %vm4446, %v3806, %v4734
          %v4767 = vsel %vm4447, %v3807, %v4735
          %v4768 = vsel %vm4448, %v3808, %v4736
          %v4769 = vsel %vm4449, %v3809, %v4737
          %v4770 = vsel %vm4450, %v3810, %v4738
          %v4771 = vsel %vm4451, %v3811, %v4739
          %v4772 = vsel %vm4452, %v3812, %v4740
          %v4773 = vsel %vm4453, %v3813, %v4741
          %v4774 = vsel %vm4454, %v3814, %v4742
          %v4775 = vsel %vm4455, %v3815, %v4743
          %v4776 = vsel %vm4456, %v3816, %v4744
          %v4777 = vsel %vm4457, %v3817, %v4745
          %v4778 = vsel %vm4458, %v3818, %v4746
          %v4779 = vsel %vm4459, %v3819, %v4747
          %v4780 = vsel %vm4428, %v3821, %v3756
          %v4781 = vsel %vm4429, %v3823, %v3757
          %v4782 = vsel %vm4430, %v3825, %v3758
          %v4783 = vsel %vm4431, %v3827, %v3759
          %v4784 = vsel %vm4432, %v3829, %v3760
          %v4785 = vsel %vm4433, %v3831, %v3761
          %v4786 = vsel %vm4434, %v3833, %v3762
          %v4787 = vsel %vm4435, %v3835, %v3763
          %v4788 = vsel %vm4436, %v3837, %v3764
          %v4789 = vsel %vm4437, %v3839, %v3765
          %v4790 = vsel %vm4438, %v3841, %v3766
          %v4791 = vsel %vm4439, %v3843, %v3767
          %v4792 = vsel %vm4440, %v3845, %v3768
          %v4793 = vsel %vm4441, %v3847, %v3769
          %v4794 = vsel %vm4442, %v3849, %v3770
          %v4795 = vsel %vm4443, %v3851, %v3771
          %v4796 = vsel %vm4444, %v3853, %v3772
          %v4797 = vsel %vm4445, %v3855, %v3773
          %v4798 = vsel %vm4446, %v3857, %v3774
          %v4799 = vsel %vm4447, %v3859, %v3775
          %v4800 = vsel %vm4448, %v3861, %v3776
          %v4801 = vsel %vm4449, %v3863, %v3777
          %v4802 = vsel %vm4450, %v3865, %v3778
          %v4803 = vsel %vm4451, %v3867, %v3779
          %v4804 = vsel %vm4452, %v3869, %v3780
          %v4805 = vsel %vm4453, %v3871, %v3781
          %v4806 = vsel %vm4454, %v3873, %v3782
          %v4807 = vsel %vm4455, %v3875, %v3783
          %v4808 = vsel %vm4456, %v3877, %v3784
          %v4809 = vsel %vm4457, %v3879, %v3785
          %v4810 = vsel %vm4458, %v3881, %v3786
          %v4811 = vsel %vm4459, %v3883, %v3787
          %v4812 = vsel %vm4428, %v4396, %v3788
          %v4813 = vsel %vm4429, %v4397, %v3789
          %v4814 = vsel %vm4430, %v4398, %v3790
          %v4815 = vsel %vm4431, %v4399, %v3791
          %v4816 = vsel %vm4432, %v4400, %v3792
          %v4817 = vsel %vm4433, %v4401, %v3793
          %v4818 = vsel %vm4434, %v4402, %v3794
          %v4819 = vsel %vm4435, %v4403, %v3795
          %v4820 = vsel %vm4436, %v4404, %v3796
          %v4821 = vsel %vm4437, %v4405, %v3797
          %v4822 = vsel %vm4438, %v4406, %v3798
          %v4823 = vsel %vm4439, %v4407, %v3799
          %v4824 = vsel %vm4440, %v4408, %v3800
          %v4825 = vsel %vm4441, %v4409, %v3801
          %v4826 = vsel %vm4442, %v4410, %v3802
          %v4827 = vsel %vm4443, %v4411, %v3803
          %v4828 = vsel %vm4444, %v4412, %v3804
          %v4829 = vsel %vm4445, %v4413, %v3805
          %v4830 = vsel %vm4446, %v4414, %v3806
          %v4831 = vsel %vm4447, %v4415, %v3807
          %v4832 = vsel %vm4448, %v4416, %v3808
          %v4833 = vsel %vm4449, %v4417, %v3809
          %v4834 = vsel %vm4450, %v4418, %v3810
          %v4835 = vsel %vm4451, %v4419, %v3811
          %v4836 = vsel %vm4452, %v4420, %v3812
          %v4837 = vsel %vm4453, %v4421, %v3813
          %v4838 = vsel %vm4454, %v4422, %v3814
          %v4839 = vsel %vm4455, %v4423, %v3815
          %v4840 = vsel %vm4456, %v4424, %v3816
          %v4841 = vsel %vm4457, %v4425, %v3817
          %v4842 = vsel %vm4458, %v4426, %v3818
          %v4843 = vsel %vm4459, %v4427, %v3819
          %vm4844 = vcmask 7168
          %4845 = vst.msk [vmem:[#allocation2] sm:$0xff] %vm4844, %v4780
          %4846 = vst.msk [vmem:[#allocation2 + $0x8] sm:$0xff] %vm4844, %v4781
          %4847 = vst.msk [vmem:[#allocation2 + $0x10] sm:$0xff] %vm4844, %v4782
          %4848 = vst.msk [vmem:[#allocation2 + $0x18] sm:$0xff] %vm4844, %v4783
          %4849 = vst.msk [vmem:[#allocation2 + $0x20] sm:$0xff] %vm4844, %v4784
          %4850 = vst.msk [vmem:[#allocation2 + $0x28] sm:$0xff] %vm4844, %v4785
          %4851 = vst.msk [vmem:[#allocation2 + $0x30] sm:$0xff] %vm4844, %v4786
          %4852 = vst.msk [vmem:[#allocation2 + $0x38] sm:$0xff] %vm4844, %v4787
          %4853 = vst.msk [vmem:[#allocation2 + $0x40] sm:$0xff] %vm4844, %v4788
          %4854 = vst.msk [vmem:[#allocation2 + $0x48] sm:$0xff] %vm4844, %v4789
          %4855 = vst.msk [vmem:[#allocation2 + $0x50] sm:$0xff] %vm4844, %v4790
          %4856 = vst.msk [vmem:[#allocation2 + $0x58] sm:$0xff] %vm4844, %v4791
          %4857 = vst.msk [vmem:[#allocation2 + $0x60] sm:$0xff] %vm4844, %v4792
          %4858 = vst.msk [vmem:[#allocation2 + $0x68] sm:$0xff] %vm4844, %v4793
          %4859 = vst.msk [vmem:[#allocation2 + $0x70] sm:$0xff] %vm4844, %v4794
          %4860 = vst.msk [vmem:[#allocation2 + $0x78] sm:$0xff] %vm4844, %v4795
          %4861 = vst.msk [vmem:[#allocation2 + $0x80] sm:$0xff] %vm4844, %v4796
          %4862 = vst.msk [vmem:[#allocation2 + $0x88] sm:$0xff] %vm4844, %v4797
          %4863 = vst.msk [vmem:[#allocation2 + $0x90] sm:$0xff] %vm4844, %v4798
          %4864 = vst.msk [vmem:[#allocation2 + $0x98] sm:$0xff] %vm4844, %v4799
          %4865 = vst.msk [vmem:[#allocation2 + $0xa0] sm:$0xff] %vm4844, %v4800
          %4866 = vst.msk [vmem:[#allocation2 + $0xa8] sm:$0xff] %vm4844, %v4801
          %4867 = vst.msk [vmem:[#allocation2 + $0xb0] sm:$0xff] %vm4844, %v4802
          %4868 = vst.msk [vmem:[#allocation2 + $0xb8] sm:$0xff] %vm4844, %v4803
          %4869 = vst.msk [vmem:[#allocation2 + $0xc0] sm:$0xff] %vm4844, %v4804
          %4870 = vst.msk [vmem:[#allocation2 + $0xc8] sm:$0xff] %vm4844, %v4805
          %4871 = vst.msk [vmem:[#allocation2 + $0xd0] sm:$0xff] %vm4844, %v4806
          %4872 = vst.msk [vmem:[#allocation2 + $0xd8] sm:$0xff] %vm4844, %v4807
          %4873 = vst.msk [vmem:[#allocation2 + $0xe0] sm:$0xff] %vm4844, %v4808
          %4874 = vst.msk [vmem:[#allocation2 + $0xe8] sm:$0xff] %vm4844, %v4809
          %4875 = vst.msk [vmem:[#allocation2 + $0xf0] sm:$0xff] %vm4844, %v4810
          %4876 = vst.msk [vmem:[#allocation2 + $0xf8] sm:$0xff] %vm4844, %v4811
          %4877 = vst.msk [vmem:[#allocation3] sm:$0xff] %vm4844, %v4684
          %4878 = vst.msk [vmem:[#allocation3 + $0x8] sm:$0xff] %vm4844, %v4685
          %4879 = vst.msk [vmem:[#allocation3 + $0x10] sm:$0xff] %vm4844, %v4686
          %4880 = vst.msk [vmem:[#allocation3 + $0x18] sm:$0xff] %vm4844, %v4687
          %4881 = vst.msk [vmem:[#allocation3 + $0x20] sm:$0xff] %vm4844, %v4688
          %4882 = vst.msk [vmem:[#allocation3 + $0x28] sm:$0xff] %vm4844, %v4689
          %4883 = vst.msk [vmem:[#allocation3 + $0x30] sm:$0xff] %vm4844, %v4690
          %4884 = vst.msk [vmem:[#allocation3 + $0x38] sm:$0xff] %vm4844, %v4691
          %4885 = vst.msk [vmem:[#allocation3 + $0x40] sm:$0xff] %vm4844, %v4692
          %4886 = vst.msk [vmem:[#allocation3 + $0x48] sm:$0xff] %vm4844, %v4693
          %4887 = vst.msk [vmem:[#allocation3 + $0x50] sm:$0xff] %vm4844, %v4694
          %4888 = vst.msk [vmem:[#allocation3 + $0x58] sm:$0xff] %vm4844, %v4695
          %4889 = vst.msk [vmem:[#allocation3 + $0x60] sm:$0xff] %vm4844, %v4696
          %4890 = vst.msk [vmem:[#allocation3 + $0x68] sm:$0xff] %vm4844, %v4697
          %4891 = vst.msk [vmem:[#allocation3 + $0x70] sm:$0xff] %vm4844, %v4698
          %4892 = vst.msk [vmem:[#allocation3 + $0x78] sm:$0xff] %vm4844, %v4699
          %4893 = vst.msk [vmem:[#allocation3 + $0x80] sm:$0xff] %vm4844, %v4700
          %4894 = vst.msk [vmem:[#allocation3 + $0x88] sm:$0xff] %vm4844, %v4701
          %4895 = vst.msk [vmem:[#allocation3 + $0x90] sm:$0xff] %vm4844, %v4702
          %4896 = vst.msk [vmem:[#allocation3 + $0x98] sm:$0xff] %vm4844, %v4703
          %4897 = vst.msk [vmem:[#allocation3 + $0xa0] sm:$0xff] %vm4844, %v4704
          %4898 = vst.msk [vmem:[#allocation3 + $0xa8] sm:$0xff] %vm4844, %v4705
          %4899 = vst.msk [vmem:[#allocation3 + $0xb0] sm:$0xff] %vm4844, %v4706
          %4900 = vst.msk [vmem:[#allocation3 + $0xb8] sm:$0xff] %vm4844, %v4707
          %4901 = vst.msk [vmem:[#allocation3 + $0xc0] sm:$0xff] %vm4844, %v4708
          %4902 = vst.msk [vmem:[#allocation3 + $0xc8] sm:$0xff] %vm4844, %v4709
          %4903 = vst.msk [vmem:[#allocation3 + $0xd0] sm:$0xff] %vm4844, %v4710
          %4904 = vst.msk [vmem:[#allocation3 + $0xd8] sm:$0xff] %vm4844, %v4711
          %4905 = vst.msk [vmem:[#allocation3 + $0xe0] sm:$0xff] %vm4844, %v4712
          %4906 = vst.msk [vmem:[#allocation3 + $0xe8] sm:$0xff] %vm4844, %v4713
          %4907 = vst.msk [vmem:[#allocation3 + $0xf0] sm:$0xff] %vm4844, %v4714
          %4908 = vst.msk [vmem:[#allocation3 + $0xf8] sm:$0xff] %vm4844, %v4715
          %4909 = vst.msk [vmem:[#allocation4] sm:$0xff] %vm4844, %v4556
          %4910 = vst.msk [vmem:[#allocation4 + $0x8] sm:$0xff] %vm4844, %v4557
          %4911 = vst.msk [vmem:[#allocation4 + $0x10] sm:$0xff] %vm4844, %v4558
          %4912 = vst.msk [vmem:[#allocation4 + $0x18] sm:$0xff] %vm4844, %v4559
          %4913 = vst.msk [vmem:[#allocation4 + $0x20] sm:$0xff] %vm4844, %v4560
          %4914 = vst.msk [vmem:[#allocation4 + $0x28] sm:$0xff] %vm4844, %v4561
          %4915 = vst.msk [vmem:[#allocation4 + $0x30] sm:$0xff] %vm4844, %v4562
          %4916 = vst.msk [vmem:[#allocation4 + $0x38] sm:$0xff] %vm4844, %v4563
          %4917 = vst.msk [vmem:[#allocation4 + $0x40] sm:$0xff] %vm4844, %v4564
          %4918 = vst.msk [vmem:[#allocation4 + $0x48] sm:$0xff] %vm4844, %v4565
          %4919 = vst.msk [vmem:[#allocation4 + $0x50] sm:$0xff] %vm4844, %v4566
          %4920 = vst.msk [vmem:[#allocation4 + $0x58] sm:$0xff] %vm4844, %v4567
          %4921 = vst.msk [vmem:[#allocation4 + $0x60] sm:$0xff] %vm4844, %v4568
          %4922 = vst.msk [vmem:[#allocation4 + $0x68] sm:$0xff] %vm4844, %v4569
          %4923 = vst.msk [vmem:[#allocation4 + $0x70] sm:$0xff] %vm4844, %v4570
          %4924 = vst.msk [vmem:[#allocation4 + $0x78] sm:$0xff] %vm4844, %v4571
          %4925 = vst.msk [vmem:[#allocation4 + $0x80] sm:$0xff] %vm4844, %v4572
          %4926 = vst.msk [vmem:[#allocation4 + $0x88] sm:$0xff] %vm4844, %v4573
          %4927 = vst.msk [vmem:[#allocation4 + $0x90] sm:$0xff] %vm4844, %v4574
          %4928 = vst.msk [vmem:[#allocation4 + $0x98] sm:$0xff] %vm4844, %v4575
          %4929 = vst.msk [vmem:[#allocation4 + $0xa0] sm:$0xff] %vm4844, %v4576
          %4930 = vst.msk [vmem:[#allocation4 + $0xa8] sm:$0xff] %vm4844, %v4577
          %4931 = vst.msk [vmem:[#allocation4 + $0xb0] sm:$0xff] %vm4844, %v4578
          %4932 = vst.msk [vmem:[#allocation4 + $0xb8] sm:$0xff] %vm4844, %v4579
          %4933 = vst.msk [vmem:[#allocation4 + $0xc0] sm:$0xff] %vm4844, %v4580
          %4934 = vst.msk [vmem:[#allocation4 + $0xc8] sm:$0xff] %vm4844, %v4581
          %4935 = vst.msk [vmem:[#allocation4 + $0xd0] sm:$0xff] %vm4844, %v4582
          %4936 = vst.msk [vmem:[#allocation4 + $0xd8] sm:$0xff] %vm4844, %v4583
          %4937 = vst.msk [vmem:[#allocation4 + $0xe0] sm:$0xff] %vm4844, %v4584
          %4938 = vst.msk [vmem:[#allocation4 + $0xe8] sm:$0xff] %vm4844, %v4585
          %4939 = vst.msk [vmem:[#allocation4 + $0xf0] sm:$0xff] %vm4844, %v4586
          %4940 = vst.msk [vmem:[#allocation4 + $0xf8] sm:$0xff] %vm4844, %v4587
          %4941 = vst.msk [vmem:[#allocation5] sm:$0xff] %vm4844, %v4812
          %4942 = vst.msk [vmem:[#allocation5 + $0x8] sm:$0xff] %vm4844, %v4813
          %4943 = vst.msk [vmem:[#allocation5 + $0x10] sm:$0xff] %vm4844, %v4814
          %4944 = vst.msk [vmem:[#allocation5 + $0x18] sm:$0xff] %vm4844, %v4815
          %4945 = vst.msk [vmem:[#allocation5 + $0x20] sm:$0xff] %vm4844, %v4816
          %4946 = vst.msk [vmem:[#allocation5 + $0x28] sm:$0xff] %vm4844, %v4817
          %4947 = vst.msk [vmem:[#allocation5 + $0x30] sm:$0xff] %vm4844, %v4818
          %4948 = vst.msk [vmem:[#allocation5 + $0x38] sm:$0xff] %vm4844, %v4819
          %4949 = vst.msk [vmem:[#allocation5 + $0x40] sm:$0xff] %vm4844, %v4820
          %4950 = vst.msk [vmem:[#allocation5 + $0x48] sm:$0xff] %vm4844, %v4821
          %4951 = vst.msk [vmem:[#allocation5 + $0x50] sm:$0xff] %vm4844, %v4822
          %4952 = vst.msk [vmem:[#allocation5 + $0x58] sm:$0xff] %vm4844, %v4823
          %4953 = vst.msk [vmem:[#allocation5 + $0x60] sm:$0xff] %vm4844, %v4824
          %4954 = vst.msk [vmem:[#allocation5 + $0x68] sm:$0xff] %vm4844, %v4825
          %4955 = vst.msk [vmem:[#allocation5 + $0x70] sm:$0xff] %vm4844, %v4826
          %4956 = vst.msk [vmem:[#allocation5 + $0x78] sm:$0xff] %vm4844, %v4827
          %4957 = vst.msk [vmem:[#allocation5 + $0x80] sm:$0xff] %vm4844, %v4828
          %4958 = vst.msk [vmem:[#allocation5 + $0x88] sm:$0xff] %vm4844, %v4829
          %4959 = vst.msk [vmem:[#allocation5 + $0x90] sm:$0xff] %vm4844, %v4830
          %4960 = vst.msk [vmem:[#allocation5 + $0x98] sm:$0xff] %vm4844, %v4831
          %4961 = vst.msk [vmem:[#allocation5 + $0xa0] sm:$0xff] %vm4844, %v4832
          %4962 = vst.msk [vmem:[#allocation5 + $0xa8] sm:$0xff] %vm4844, %v4833
          %4963 = vst.msk [vmem:[#allocation5 + $0xb0] sm:$0xff] %vm4844, %v4834
          %4964 = vst.msk [vmem:[#allocation5 + $0xb8] sm:$0xff] %vm4844, %v4835
          %4965 = vst.msk [vmem:[#allocation5 + $0xc0] sm:$0xff] %vm4844, %v4836
          %4966 = vst.msk [vmem:[#allocation5 + $0xc8] sm:$0xff] %vm4844, %v4837
          %4967 = vst.msk [vmem:[#allocation5 + $0xd0] sm:$0xff] %vm4844, %v4838
          %4968 = vst.msk [vmem:[#allocation5 + $0xd8] sm:$0xff] %vm4844, %v4839
          %4969 = vst.msk [vmem:[#allocation5 + $0xe0] sm:$0xff] %vm4844, %v4840
          %4970 = vst.msk [vmem:[#allocation5 + $0xe8] sm:$0xff] %vm4844, %v4841
          %4971 = vst.msk [vmem:[#allocation5 + $0xf0] sm:$0xff] %vm4844, %v4842
          %4972 = vst.msk [vmem:[#allocation5 + $0xf8] sm:$0xff] %vm4844, %v4843
          %4973 = vst.msk [vmem:[#allocation6] sm:$0xff] %vm4844, %v4748
          %4974 = vst.msk [vmem:[#allocation6 + $0x8] sm:$0xff] %vm4844, %v4749
          %4975 = vst.msk [vmem:[#allocation6 + $0x10] sm:$0xff] %vm4844, %v4750
          %4976 = vst.msk [vmem:[#allocation6 + $0x18] sm:$0xff] %vm4844, %v4751
          %4977 = vst.msk [vmem:[#allocation6 + $0x20] sm:$0xff] %vm4844, %v4752
          %4978 = vst.msk [vmem:[#allocation6 + $0x28] sm:$0xff] %vm4844, %v4753
          %4979 = vst.msk [vmem:[#allocation6 + $0x30] sm:$0xff] %vm4844, %v4754
          %4980 = vst.msk [vmem:[#allocation6 + $0x38] sm:$0xff] %vm4844, %v4755
          %4981 = vst.msk [vmem:[#allocation6 + $0x40] sm:$0xff] %vm4844, %v4756
          %4982 = vst.msk [vmem:[#allocation6 + $0x48] sm:$0xff] %vm4844, %v4757
          %4983 = vst.msk [vmem:[#allocation6 + $0x50] sm:$0xff] %vm4844, %v4758
          %4984 = vst.msk [vmem:[#allocation6 + $0x58] sm:$0xff] %vm4844, %v4759
          %4985 = vst.msk [vmem:[#allocation6 + $0x60] sm:$0xff] %vm4844, %v4760
          %4986 = vst.msk [vmem:[#allocation6 + $0x68] sm:$0xff] %vm4844, %v4761
          %4987 = vst.msk [vmem:[#allocation6 + $0x70] sm:$0xff] %vm4844, %v4762
          %4988 = vst.msk [vmem:[#allocation6 + $0x78] sm:$0xff] %vm4844, %v4763
          %4989 = vst.msk [vmem:[#allocation6 + $0x80] sm:$0xff] %vm4844, %v4764
          %4990 = vst.msk [vmem:[#allocation6 + $0x88] sm:$0xff] %vm4844, %v4765
          %4991 = vst.msk [vmem:[#allocation6 + $0x90] sm:$0xff] %vm4844, %v4766
          %4992 = vst.msk [vmem:[#allocation6 + $0x98] sm:$0xff] %vm4844, %v4767
          %4993 = vst.msk [vmem:[#allocation6 + $0xa0] sm:$0xff] %vm4844, %v4768
          %4994 = vst.msk [vmem:[#allocation6 + $0xa8] sm:$0xff] %vm4844, %v4769
          %4995 = vst.msk [vmem:[#allocation6 + $0xb0] sm:$0xff] %vm4844, %v4770
          %4996 = vst.msk [vmem:[#allocation6 + $0xb8] sm:$0xff] %vm4844, %v4771
          %4997 = vst.msk [vmem:[#allocation6 + $0xc0] sm:$0xff] %vm4844, %v4772
          %4998 = vst.msk [vmem:[#allocation6 + $0xc8] sm:$0xff] %vm4844, %v4773
          %4999 = vst.msk [vmem:[#allocation6 + $0xd0] sm:$0xff] %vm4844, %v4774
          %5000 = vst.msk [vmem:[#allocation6 + $0xd8] sm:$0xff] %vm4844, %v4775
          %5001 = vst.msk [vmem:[#allocation6 + $0xe0] sm:$0xff] %vm4844, %v4776
          %5002 = vst.msk [vmem:[#allocation6 + $0xe8] sm:$0xff] %vm4844, %v4777
          %5003 = vst.msk [vmem:[#allocation6 + $0xf0] sm:$0xff] %vm4844, %v4778
          %5004 = vst.msk [vmem:[#allocation6 + $0xf8] sm:$0xff] %vm4844, %v4779
          %5005 = vst.msk [vmem:[#allocation7] sm:$0xff] %vm4844, %v4620
          %5006 = vst.msk [vmem:[#allocation7 + $0x8] sm:$0xff] %vm4844, %v4621
          %5007 = vst.msk [vmem:[#allocation7 + $0x10] sm:$0xff] %vm4844, %v4622
          %5008 = vst.msk [vmem:[#allocation7 + $0x18] sm:$0xff] %vm4844, %v4623
          %5009 = vst.msk [vmem:[#allocation7 + $0x20] sm:$0xff] %vm4844, %v4624
          %5010 = vst.msk [vmem:[#allocation7 + $0x28] sm:$0xff] %vm4844, %v4625
          %5011 = vst.msk [vmem:[#allocation7 + $0x30] sm:$0xff] %vm4844, %v4626
          %5012 = vst.msk [vmem:[#allocation7 + $0x38] sm:$0xff] %vm4844, %v4627
          %5013 = vst.msk [vmem:[#allocation7 + $0x40] sm:$0xff] %vm4844, %v4628
          %5014 = vst.msk [vmem:[#allocation7 + $0x48] sm:$0xff] %vm4844, %v4629
          %5015 = vst.msk [vmem:[#allocation7 + $0x50] sm:$0xff] %vm4844, %v4630
          %5016 = vst.msk [vmem:[#allocation7 + $0x58] sm:$0xff] %vm4844, %v4631
          %5017 = vst.msk [vmem:[#allocation7 + $0x60] sm:$0xff] %vm4844, %v4632
          %5018 = vst.msk [vmem:[#allocation7 + $0x68] sm:$0xff] %vm4844, %v4633
          %5019 = vst.msk [vmem:[#allocation7 + $0x70] sm:$0xff] %vm4844, %v4634
          %5020 = vst.msk [vmem:[#allocation7 + $0x78] sm:$0xff] %vm4844, %v4635
          %5021 = vst.msk [vmem:[#allocation7 + $0x80] sm:$0xff] %vm4844, %v4636
          %5022 = vst.msk [vmem:[#allocation7 + $0x88] sm:$0xff] %vm4844, %v4637
          %5023 = vst.msk [vmem:[#allocation7 + $0x90] sm:$0xff] %vm4844, %v4638
          %5024 = vst.msk [vmem:[#allocation7 + $0x98] sm:$0xff] %vm4844, %v4639
          %5025 = vst.msk [vmem:[#allocation7 + $0xa0] sm:$0xff] %vm4844, %v4640
          %5026 = vst.msk [vmem:[#allocation7 + $0xa8] sm:$0xff] %vm4844, %v4641
          %5027 = vst.msk [vmem:[#allocation7 + $0xb0] sm:$0xff] %vm4844, %v4642
          %5028 = vst.msk [vmem:[#allocation7 + $0xb8] sm:$0xff] %vm4844, %v4643
          %5029 = vst.msk [vmem:[#allocation7 + $0xc0] sm:$0xff] %vm4844, %v4644
          %5030 = vst.msk [vmem:[#allocation7 + $0xc8] sm:$0xff] %vm4844, %v4645
          %5031 = vst.msk [vmem:[#allocation7 + $0xd0] sm:$0xff] %vm4844, %v4646
          %5032 = vst.msk [vmem:[#allocation7 + $0xd8] sm:$0xff] %vm4844, %v4647
          %5033 = vst.msk [vmem:[#allocation7 + $0xe0] sm:$0xff] %vm4844, %v4648
          %5034 = vst.msk [vmem:[#allocation7 + $0xe8] sm:$0xff] %vm4844, %v4649
          %5035 = vst.msk [vmem:[#allocation7 + $0xf0] sm:$0xff] %vm4844, %v4650
          %5036 = vst.msk [vmem:[#allocation7 + $0xf8] sm:$0xff] %vm4844, %v4651
        $region72: #{tpu_custom_call.1} parent=63 // pred_fallthru
          _
        %p5037 = scmp.eq.s32.totalorder %s30, 3
        // Predicated region
        $region73: #{tpu_custom_call.1} parent=63 // pred_check
          %p5038 = pneg %p5037
        $region74: #{tpu_custom_call.1} parent=63 // pred_check_branch
          %5040 = sbr.rel (%p5038) target = $region76
        $region75: #{tpu_custom_call.1} parent=63 // pred_region
          %v5041 = vld [vmem:[#allocation2] sm:$0xff]
          %v5042 = vld [vmem:[#allocation2 + $0x8] sm:$0xff]
          %v5043 = vld [vmem:[#allocation2 + $0x10] sm:$0xff]
          %v5044 = vld [vmem:[#allocation2 + $0x18] sm:$0xff]
          %v5045 = vld [vmem:[#allocation2 + $0x20] sm:$0xff]
          %v5046 = vld [vmem:[#allocation2 + $0x28] sm:$0xff]
          %v5047 = vld [vmem:[#allocation2 + $0x30] sm:$0xff]
          %v5048 = vld [vmem:[#allocation2 + $0x38] sm:$0xff]
          %v5049 = vld [vmem:[#allocation2 + $0x40] sm:$0xff]
          %v5050 = vld [vmem:[#allocation2 + $0x48] sm:$0xff]
          %v5051 = vld [vmem:[#allocation2 + $0x50] sm:$0xff]
          %v5052 = vld [vmem:[#allocation2 + $0x58] sm:$0xff]
          %v5053 = vld [vmem:[#allocation2 + $0x60] sm:$0xff]
          %v5054 = vld [vmem:[#allocation2 + $0x68] sm:$0xff]
          %v5055 = vld [vmem:[#allocation2 + $0x70] sm:$0xff]
          %v5056 = vld [vmem:[#allocation2 + $0x78] sm:$0xff]
          %v5057 = vld [vmem:[#allocation2 + $0x80] sm:$0xff]
          %v5058 = vld [vmem:[#allocation2 + $0x88] sm:$0xff]
          %v5059 = vld [vmem:[#allocation2 + $0x90] sm:$0xff]
          %v5060 = vld [vmem:[#allocation2 + $0x98] sm:$0xff]
          %v5061 = vld [vmem:[#allocation2 + $0xa0] sm:$0xff]
          %v5062 = vld [vmem:[#allocation2 + $0xa8] sm:$0xff]
          %v5063 = vld [vmem:[#allocation2 + $0xb0] sm:$0xff]
          %v5064 = vld [vmem:[#allocation2 + $0xb8] sm:$0xff]
          %v5065 = vld [vmem:[#allocation2 + $0xc0] sm:$0xff]
          %v5066 = vld [vmem:[#allocation2 + $0xc8] sm:$0xff]
          %v5067 = vld [vmem:[#allocation2 + $0xd0] sm:$0xff]
          %v5068 = vld [vmem:[#allocation2 + $0xd8] sm:$0xff]
          %v5069 = vld [vmem:[#allocation2 + $0xe0] sm:$0xff]
          %v5070 = vld [vmem:[#allocation2 + $0xe8] sm:$0xff]
          %v5071 = vld [vmem:[#allocation2 + $0xf0] sm:$0xff]
          %v5072 = vld [vmem:[#allocation2 + $0xf8] sm:$0xff]
          %v5073 = vrsqrt.pop %v5041
          %v5074 = vmul.f32 %v5073, %v5041
          %v5075 = vmul.f32 %v5074, %v5073
          %v5076 = vmul.f32 0.5, %v5075
          %v5077 = vsub.f32 1.5, %v5076
          %v5078 = vmul.f32 %v5073, %v5077
          %v5079 = vmul.f32 %v5041, %v5078
          %vm5080 = vcmp.eq.f32.partialorder %v5041, inf
          %v5081 = vsel %vm5080, %v5041, %v5079
          %vm5082 = vcmp.eq.f32.partialorder %v5041, 0.0
          %v5083 = vand.u32 %v5041, 2147483648
          %v5084 = vsel %vm5082, %v5083, %v5081
          %v5085 = vrsqrt.pop %v5042
          %v5086 = vmul.f32 %v5085, %v5042
          %v5087 = vmul.f32 %v5086, %v5085
          %v5088 = vmul.f32 0.5, %v5087
          %v5089 = vsub.f32 1.5, %v5088
          %v5090 = vmul.f32 %v5085, %v5089
          %v5091 = vmul.f32 %v5042, %v5090
          %vm5092 = vcmp.eq.f32.partialorder %v5042, inf
          %v5093 = vsel %vm5092, %v5042, %v5091
          %vm5094 = vcmp.eq.f32.partialorder %v5042, 0.0
          %v5095 = vand.u32 %v5042, 2147483648
          %v5096 = vsel %vm5094, %v5095, %v5093
          %v5097 = vrsqrt.pop %v5043
          %v5098 = vmul.f32 %v5097, %v5043
          %v5099 = vmul.f32 %v5098, %v5097
          %v5100 = vmul.f32 0.5, %v5099
          %v5101 = vsub.f32 1.5, %v5100
          %v5102 = vmul.f32 %v5097, %v5101
          %v5103 = vmul.f32 %v5043, %v5102
          %vm5104 = vcmp.eq.f32.partialorder %v5043, inf
          %v5105 = vsel %vm5104, %v5043, %v5103
          %vm5106 = vcmp.eq.f32.partialorder %v5043, 0.0
          %v5107 = vand.u32 %v5043, 2147483648
          %v5108 = vsel %vm5106, %v5107, %v5105
          %v5109 = vrsqrt.pop %v5044
          %v5110 = vmul.f32 %v5109, %v5044
          %v5111 = vmul.f32 %v5110, %v5109
          %v5112 = vmul.f32 0.5, %v5111
          %v5113 = vsub.f32 1.5, %v5112
          %v5114 = vmul.f32 %v5109, %v5113
          %v5115 = vmul.f32 %v5044, %v5114
          %vm5116 = vcmp.eq.f32.partialorder %v5044, inf
          %v5117 = vsel %vm5116, %v5044, %v5115
          %vm5118 = vcmp.eq.f32.partialorder %v5044, 0.0
          %v5119 = vand.u32 %v5044, 2147483648
          %v5120 = vsel %vm5118, %v5119, %v5117
          %v5121 = vrsqrt.pop %v5045
          %v5122 = vmul.f32 %v5121, %v5045
          %v5123 = vmul.f32 %v5122, %v5121
          %v5124 = vmul.f32 0.5, %v5123
          %v5125 = vsub.f32 1.5, %v5124
          %v5126 = vmul.f32 %v5121, %v5125
          %v5127 = vmul.f32 %v5045, %v5126
          %vm5128 = vcmp.eq.f32.partialorder %v5045, inf
          %v5129 = vsel %vm5128, %v5045, %v5127
          %vm5130 = vcmp.eq.f32.partialorder %v5045, 0.0
          %v5131 = vand.u32 %v5045, 2147483648
          %v5132 = vsel %vm5130, %v5131, %v5129
          %v5133 = vrsqrt.pop %v5046
          %v5134 = vmul.f32 %v5133, %v5046
          %v5135 = vmul.f32 %v5134, %v5133
          %v5136 = vmul.f32 0.5, %v5135
          %v5137 = vsub.f32 1.5, %v5136
          %v5138 = vmul.f32 %v5133, %v5137
          %v5139 = vmul.f32 %v5046, %v5138
          %vm5140 = vcmp.eq.f32.partialorder %v5046, inf
          %v5141 = vsel %vm5140, %v5046, %v5139
          %vm5142 = vcmp.eq.f32.partialorder %v5046, 0.0
          %v5143 = vand.u32 %v5046, 2147483648
          %v5144 = vsel %vm5142, %v5143, %v5141
          %v5145 = vrsqrt.pop %v5047
          %v5146 = vmul.f32 %v5145, %v5047
          %v5147 = vmul.f32 %v5146, %v5145
          %v5148 = vmul.f32 0.5, %v5147
          %v5149 = vsub.f32 1.5, %v5148
          %v5150 = vmul.f32 %v5145, %v5149
          %v5151 = vmul.f32 %v5047, %v5150
          %vm5152 = vcmp.eq.f32.partialorder %v5047, inf
          %v5153 = vsel %vm5152, %v5047, %v5151
          %vm5154 = vcmp.eq.f32.partialorder %v5047, 0.0
          %v5155 = vand.u32 %v5047, 2147483648
          %v5156 = vsel %vm5154, %v5155, %v5153
          %v5157 = vrsqrt.pop %v5048
          %v5158 = vmul.f32 %v5157, %v5048
          %v5159 = vmul.f32 %v5158, %v5157
          %v5160 = vmul.f32 0.5, %v5159
          %v5161 = vsub.f32 1.5, %v5160
          %v5162 = vmul.f32 %v5157, %v5161
          %v5163 = vmul.f32 %v5048, %v5162
          %vm5164 = vcmp.eq.f32.partialorder %v5048, inf
          %v5165 = vsel %vm5164, %v5048, %v5163
          %vm5166 = vcmp.eq.f32.partialorder %v5048, 0.0
          %v5167 = vand.u32 %v5048, 2147483648
          %v5168 = vsel %vm5166, %v5167, %v5165
          %v5169 = vrsqrt.pop %v5049
          %v5170 = vmul.f32 %v5169, %v5049
          %v5171 = vmul.f32 %v5170, %v5169
          %v5172 = vmul.f32 0.5, %v5171
          %v5173 = vsub.f32 1.5, %v5172
          %v5174 = vmul.f32 %v5169, %v5173
          %v5175 = vmul.f32 %v5049, %v5174
          %vm5176 = vcmp.eq.f32.partialorder %v5049, inf
          %v5177 = vsel %vm5176, %v5049, %v5175
          %vm5178 = vcmp.eq.f32.partialorder %v5049, 0.0
          %v5179 = vand.u32 %v5049, 2147483648
          %v5180 = vsel %vm5178, %v5179, %v5177
          %v5181 = vrsqrt.pop %v5050
          %v5182 = vmul.f32 %v5181, %v5050
          %v5183 = vmul.f32 %v5182, %v5181
          %v5184 = vmul.f32 0.5, %v5183
          %v5185 = vsub.f32 1.5, %v5184
          %v5186 = vmul.f32 %v5181, %v5185
          %v5187 = vmul.f32 %v5050, %v5186
          %vm5188 = vcmp.eq.f32.partialorder %v5050, inf
          %v5189 = vsel %vm5188, %v5050, %v5187
          %vm5190 = vcmp.eq.f32.partialorder %v5050, 0.0
          %v5191 = vand.u32 %v5050, 2147483648
          %v5192 = vsel %vm5190, %v5191, %v5189
          %v5193 = vrsqrt.pop %v5051
          %v5194 = vmul.f32 %v5193, %v5051
          %v5195 = vmul.f32 %v5194, %v5193
          %v5196 = vmul.f32 0.5, %v5195
          %v5197 = vsub.f32 1.5, %v5196
          %v5198 = vmul.f32 %v5193, %v5197
          %v5199 = vmul.f32 %v5051, %v5198
          %vm5200 = vcmp.eq.f32.partialorder %v5051, inf
          %v5201 = vsel %vm5200, %v5051, %v5199
          %vm5202 = vcmp.eq.f32.partialorder %v5051, 0.0
          %v5203 = vand.u32 %v5051, 2147483648
          %v5204 = vsel %vm5202, %v5203, %v5201
          %v5205 = vrsqrt.pop %v5052
          %v5206 = vmul.f32 %v5205, %v5052
          %v5207 = vmul.f32 %v5206, %v5205
          %v5208 = vmul.f32 0.5, %v5207
          %v5209 = vsub.f32 1.5, %v5208
          %v5210 = vmul.f32 %v5205, %v5209
          %v5211 = vmul.f32 %v5052, %v5210
          %vm5212 = vcmp.eq.f32.partialorder %v5052, inf
          %v5213 = vsel %vm5212, %v5052, %v5211
          %vm5214 = vcmp.eq.f32.partialorder %v5052, 0.0
          %v5215 = vand.u32 %v5052, 2147483648
          %v5216 = vsel %vm5214, %v5215, %v5213
          %v5217 = vrsqrt.pop %v5053
          %v5218 = vmul.f32 %v5217, %v5053
          %v5219 = vmul.f32 %v5218, %v5217
          %v5220 = vmul.f32 0.5, %v5219
          %v5221 = vsub.f32 1.5, %v5220
          %v5222 = vmul.f32 %v5217, %v5221
          %v5223 = vmul.f32 %v5053, %v5222
          %vm5224 = vcmp.eq.f32.partialorder %v5053, inf
          %v5225 = vsel %vm5224, %v5053, %v5223
          %vm5226 = vcmp.eq.f32.partialorder %v5053, 0.0
          %v5227 = vand.u32 %v5053, 2147483648
          %v5228 = vsel %vm5226, %v5227, %v5225
          %v5229 = vrsqrt.pop %v5054
          %v5230 = vmul.f32 %v5229, %v5054
          %v5231 = vmul.f32 %v5230, %v5229
          %v5232 = vmul.f32 0.5, %v5231
          %v5233 = vsub.f32 1.5, %v5232
          %v5234 = vmul.f32 %v5229, %v5233
          %v5235 = vmul.f32 %v5054, %v5234
          %vm5236 = vcmp.eq.f32.partialorder %v5054, inf
          %v5237 = vsel %vm5236, %v5054, %v5235
          %vm5238 = vcmp.eq.f32.partialorder %v5054, 0.0
          %v5239 = vand.u32 %v5054, 2147483648
          %v5240 = vsel %vm5238, %v5239, %v5237
          %v5241 = vrsqrt.pop %v5055
          %v5242 = vmul.f32 %v5241, %v5055
          %v5243 = vmul.f32 %v5242, %v5241
          %v5244 = vmul.f32 0.5, %v5243
          %v5245 = vsub.f32 1.5, %v5244
          %v5246 = vmul.f32 %v5241, %v5245
          %v5247 = vmul.f32 %v5055, %v5246
          %vm5248 = vcmp.eq.f32.partialorder %v5055, inf
          %v5249 = vsel %vm5248, %v5055, %v5247
          %vm5250 = vcmp.eq.f32.partialorder %v5055, 0.0
          %v5251 = vand.u32 %v5055, 2147483648
          %v5252 = vsel %vm5250, %v5251, %v5249
          %v5253 = vrsqrt.pop %v5056
          %v5254 = vmul.f32 %v5253, %v5056
          %v5255 = vmul.f32 %v5254, %v5253
          %v5256 = vmul.f32 0.5, %v5255
          %v5257 = vsub.f32 1.5, %v5256
          %v5258 = vmul.f32 %v5253, %v5257
          %v5259 = vmul.f32 %v5056, %v5258
          %vm5260 = vcmp.eq.f32.partialorder %v5056, inf
          %v5261 = vsel %vm5260, %v5056, %v5259
          %vm5262 = vcmp.eq.f32.partialorder %v5056, 0.0
          %v5263 = vand.u32 %v5056, 2147483648
          %v5264 = vsel %vm5262, %v5263, %v5261
          %v5265 = vrsqrt.pop %v5057
          %v5266 = vmul.f32 %v5265, %v5057
          %v5267 = vmul.f32 %v5266, %v5265
          %v5268 = vmul.f32 0.5, %v5267
          %v5269 = vsub.f32 1.5, %v5268
          %v5270 = vmul.f32 %v5265, %v5269
          %v5271 = vmul.f32 %v5057, %v5270
          %vm5272 = vcmp.eq.f32.partialorder %v5057, inf
          %v5273 = vsel %vm5272, %v5057, %v5271
          %vm5274 = vcmp.eq.f32.partialorder %v5057, 0.0
          %v5275 = vand.u32 %v5057, 2147483648
          %v5276 = vsel %vm5274, %v5275, %v5273
          %v5277 = vrsqrt.pop %v5058
          %v5278 = vmul.f32 %v5277, %v5058
          %v5279 = vmul.f32 %v5278, %v5277
          %v5280 = vmul.f32 0.5, %v5279
          %v5281 = vsub.f32 1.5, %v5280
          %v5282 = vmul.f32 %v5277, %v5281
          %v5283 = vmul.f32 %v5058, %v5282
          %vm5284 = vcmp.eq.f32.partialorder %v5058, inf
          %v5285 = vsel %vm5284, %v5058, %v5283
          %vm5286 = vcmp.eq.f32.partialorder %v5058, 0.0
          %v5287 = vand.u32 %v5058, 2147483648
          %v5288 = vsel %vm5286, %v5287, %v5285
          %v5289 = vrsqrt.pop %v5059
          %v5290 = vmul.f32 %v5289, %v5059
          %v5291 = vmul.f32 %v5290, %v5289
          %v5292 = vmul.f32 0.5, %v5291
          %v5293 = vsub.f32 1.5, %v5292
          %v5294 = vmul.f32 %v5289, %v5293
          %v5295 = vmul.f32 %v5059, %v5294
          %vm5296 = vcmp.eq.f32.partialorder %v5059, inf
          %v5297 = vsel %vm5296, %v5059, %v5295
          %vm5298 = vcmp.eq.f32.partialorder %v5059, 0.0
          %v5299 = vand.u32 %v5059, 2147483648
          %v5300 = vsel %vm5298, %v5299, %v5297
          %v5301 = vrsqrt.pop %v5060
          %v5302 = vmul.f32 %v5301, %v5060
          %v5303 = vmul.f32 %v5302, %v5301
          %v5304 = vmul.f32 0.5, %v5303
          %v5305 = vsub.f32 1.5, %v5304
          %v5306 = vmul.f32 %v5301, %v5305
          %v5307 = vmul.f32 %v5060, %v5306
          %vm5308 = vcmp.eq.f32.partialorder %v5060, inf
          %v5309 = vsel %vm5308, %v5060, %v5307
          %vm5310 = vcmp.eq.f32.partialorder %v5060, 0.0
          %v5311 = vand.u32 %v5060, 2147483648
          %v5312 = vsel %vm5310, %v5311, %v5309
          %v5313 = vrsqrt.pop %v5061
          %v5314 = vmul.f32 %v5313, %v5061
          %v5315 = vmul.f32 %v5314, %v5313
          %v5316 = vmul.f32 0.5, %v5315
          %v5317 = vsub.f32 1.5, %v5316
          %v5318 = vmul.f32 %v5313, %v5317
          %v5319 = vmul.f32 %v5061, %v5318
          %vm5320 = vcmp.eq.f32.partialorder %v5061, inf
          %v5321 = vsel %vm5320, %v5061, %v5319
          %vm5322 = vcmp.eq.f32.partialorder %v5061, 0.0
          %v5323 = vand.u32 %v5061, 2147483648
          %v5324 = vsel %vm5322, %v5323, %v5321
          %v5325 = vrsqrt.pop %v5062
          %v5326 = vmul.f32 %v5325, %v5062
          %v5327 = vmul.f32 %v5326, %v5325
          %v5328 = vmul.f32 0.5, %v5327
          %v5329 = vsub.f32 1.5, %v5328
          %v5330 = vmul.f32 %v5325, %v5329
          %v5331 = vmul.f32 %v5062, %v5330
          %vm5332 = vcmp.eq.f32.partialorder %v5062, inf
          %v5333 = vsel %vm5332, %v5062, %v5331
          %vm5334 = vcmp.eq.f32.partialorder %v5062, 0.0
          %v5335 = vand.u32 %v5062, 2147483648
          %v5336 = vsel %vm5334, %v5335, %v5333
          %v5337 = vrsqrt.pop %v5063
          %v5338 = vmul.f32 %v5337, %v5063
          %v5339 = vmul.f32 %v5338, %v5337
          %v5340 = vmul.f32 0.5, %v5339
          %v5341 = vsub.f32 1.5, %v5340
          %v5342 = vmul.f32 %v5337, %v5341
          %v5343 = vmul.f32 %v5063, %v5342
          %vm5344 = vcmp.eq.f32.partialorder %v5063, inf
          %v5345 = vsel %vm5344, %v5063, %v5343
          %vm5346 = vcmp.eq.f32.partialorder %v5063, 0.0
          %v5347 = vand.u32 %v5063, 2147483648
          %v5348 = vsel %vm5346, %v5347, %v5345
          %v5349 = vrsqrt.pop %v5064
          %v5350 = vmul.f32 %v5349, %v5064
          %v5351 = vmul.f32 %v5350, %v5349
          %v5352 = vmul.f32 0.5, %v5351
          %v5353 = vsub.f32 1.5, %v5352
          %v5354 = vmul.f32 %v5349, %v5353
          %v5355 = vmul.f32 %v5064, %v5354
          %vm5356 = vcmp.eq.f32.partialorder %v5064, inf
          %v5357 = vsel %vm5356, %v5064, %v5355
          %vm5358 = vcmp.eq.f32.partialorder %v5064, 0.0
          %v5359 = vand.u32 %v5064, 2147483648
          %v5360 = vsel %vm5358, %v5359, %v5357
          %v5361 = vrsqrt.pop %v5065
          %v5362 = vmul.f32 %v5361, %v5065
          %v5363 = vmul.f32 %v5362, %v5361
          %v5364 = vmul.f32 0.5, %v5363
          %v5365 = vsub.f32 1.5, %v5364
          %v5366 = vmul.f32 %v5361, %v5365
          %v5367 = vmul.f32 %v5065, %v5366
          %vm5368 = vcmp.eq.f32.partialorder %v5065, inf
          %v5369 = vsel %vm5368, %v5065, %v5367
          %vm5370 = vcmp.eq.f32.partialorder %v5065, 0.0
          %v5371 = vand.u32 %v5065, 2147483648
          %v5372 = vsel %vm5370, %v5371, %v5369
          %v5373 = vrsqrt.pop %v5066
          %v5374 = vmul.f32 %v5373, %v5066
          %v5375 = vmul.f32 %v5374, %v5373
          %v5376 = vmul.f32 0.5, %v5375
          %v5377 = vsub.f32 1.5, %v5376
          %v5378 = vmul.f32 %v5373, %v5377
          %v5379 = vmul.f32 %v5066, %v5378
          %vm5380 = vcmp.eq.f32.partialorder %v5066, inf
          %v5381 = vsel %vm5380, %v5066, %v5379
          %vm5382 = vcmp.eq.f32.partialorder %v5066, 0.0
          %v5383 = vand.u32 %v5066, 2147483648
          %v5384 = vsel %vm5382, %v5383, %v5381
          %v5385 = vrsqrt.pop %v5067
          %v5386 = vmul.f32 %v5385, %v5067
          %v5387 = vmul.f32 %v5386, %v5385
          %v5388 = vmul.f32 0.5, %v5387
          %v5389 = vsub.f32 1.5, %v5388
          %v5390 = vmul.f32 %v5385, %v5389
          %v5391 = vmul.f32 %v5067, %v5390
          %vm5392 = vcmp.eq.f32.partialorder %v5067, inf
          %v5393 = vsel %vm5392, %v5067, %v5391
          %vm5394 = vcmp.eq.f32.partialorder %v5067, 0.0
          %v5395 = vand.u32 %v5067, 2147483648
          %v5396 = vsel %vm5394, %v5395, %v5393
          %v5397 = vrsqrt.pop %v5068
          %v5398 = vmul.f32 %v5397, %v5068
          %v5399 = vmul.f32 %v5398, %v5397
          %v5400 = vmul.f32 0.5, %v5399
          %v5401 = vsub.f32 1.5, %v5400
          %v5402 = vmul.f32 %v5397, %v5401
          %v5403 = vmul.f32 %v5068, %v5402
          %vm5404 = vcmp.eq.f32.partialorder %v5068, inf
          %v5405 = vsel %vm5404, %v5068, %v5403
          %vm5406 = vcmp.eq.f32.partialorder %v5068, 0.0
          %v5407 = vand.u32 %v5068, 2147483648
          %v5408 = vsel %vm5406, %v5407, %v5405
          %v5409 = vrsqrt.pop %v5069
          %v5410 = vmul.f32 %v5409, %v5069
          %v5411 = vmul.f32 %v5410, %v5409
          %v5412 = vmul.f32 0.5, %v5411
          %v5413 = vsub.f32 1.5, %v5412
          %v5414 = vmul.f32 %v5409, %v5413
          %v5415 = vmul.f32 %v5069, %v5414
          %vm5416 = vcmp.eq.f32.partialorder %v5069, inf
          %v5417 = vsel %vm5416, %v5069, %v5415
          %vm5418 = vcmp.eq.f32.partialorder %v5069, 0.0
          %v5419 = vand.u32 %v5069, 2147483648
          %v5420 = vsel %vm5418, %v5419, %v5417
          %v5421 = vrsqrt.pop %v5070
          %v5422 = vmul.f32 %v5421, %v5070
          %v5423 = vmul.f32 %v5422, %v5421
          %v5424 = vmul.f32 0.5, %v5423
          %v5425 = vsub.f32 1.5, %v5424
          %v5426 = vmul.f32 %v5421, %v5425
          %v5427 = vmul.f32 %v5070, %v5426
          %vm5428 = vcmp.eq.f32.partialorder %v5070, inf
          %v5429 = vsel %vm5428, %v5070, %v5427
          %vm5430 = vcmp.eq.f32.partialorder %v5070, 0.0
          %v5431 = vand.u32 %v5070, 2147483648
          %v5432 = vsel %vm5430, %v5431, %v5429
          %v5433 = vrsqrt.pop %v5071
          %v5434 = vmul.f32 %v5433, %v5071
          %v5435 = vmul.f32 %v5434, %v5433
          %v5436 = vmul.f32 0.5, %v5435
          %v5437 = vsub.f32 1.5, %v5436
          %v5438 = vmul.f32 %v5433, %v5437
          %v5439 = vmul.f32 %v5071, %v5438
          %vm5440 = vcmp.eq.f32.partialorder %v5071, inf
          %v5441 = vsel %vm5440, %v5071, %v5439
          %vm5442 = vcmp.eq.f32.partialorder %v5071, 0.0
          %v5443 = vand.u32 %v5071, 2147483648
          %v5444 = vsel %vm5442, %v5443, %v5441
          %v5445 = vrsqrt.pop %v5072
          %v5446 = vmul.f32 %v5445, %v5072
          %v5447 = vmul.f32 %v5446, %v5445
          %v5448 = vmul.f32 0.5, %v5447
          %v5449 = vsub.f32 1.5, %v5448
          %v5450 = vmul.f32 %v5445, %v5449
          %v5451 = vmul.f32 %v5072, %v5450
          %vm5452 = vcmp.eq.f32.partialorder %v5072, inf
          %v5453 = vsel %vm5452, %v5072, %v5451
          %vm5454 = vcmp.eq.f32.partialorder %v5072, 0.0
          %v5455 = vand.u32 %v5072, 2147483648
          %v5456 = vsel %vm5454, %v5455, %v5453
          %v5457 = vadd.f32 %v5084, 1e-08
          %v5458 = vadd.f32 %v5096, 1e-08
          %v5459 = vadd.f32 %v5108, 1e-08
          %v5460 = vadd.f32 %v5120, 1e-08
          %v5461 = vadd.f32 %v5132, 1e-08
          %v5462 = vadd.f32 %v5144, 1e-08
          %v5463 = vadd.f32 %v5156, 1e-08
          %v5464 = vadd.f32 %v5168, 1e-08
          %v5465 = vadd.f32 %v5180, 1e-08
          %v5466 = vadd.f32 %v5192, 1e-08
          %v5467 = vadd.f32 %v5204, 1e-08
          %v5468 = vadd.f32 %v5216, 1e-08
          %v5469 = vadd.f32 %v5228, 1e-08
          %v5470 = vadd.f32 %v5240, 1e-08
          %v5471 = vadd.f32 %v5252, 1e-08
          %v5472 = vadd.f32 %v5264, 1e-08
          %v5473 = vadd.f32 %v5276, 1e-08
          %v5474 = vadd.f32 %v5288, 1e-08
          %v5475 = vadd.f32 %v5300, 1e-08
          %v5476 = vadd.f32 %v5312, 1e-08
          %v5477 = vadd.f32 %v5324, 1e-08
          %v5478 = vadd.f32 %v5336, 1e-08
          %v5479 = vadd.f32 %v5348, 1e-08
          %v5480 = vadd.f32 %v5360, 1e-08
          %v5481 = vadd.f32 %v5372, 1e-08
          %v5482 = vadd.f32 %v5384, 1e-08
          %v5483 = vadd.f32 %v5396, 1e-08
          %v5484 = vadd.f32 %v5408, 1e-08
          %v5485 = vadd.f32 %v5420, 1e-08
          %v5486 = vadd.f32 %v5432, 1e-08
          %v5487 = vadd.f32 %v5444, 1e-08
          %v5488 = vadd.f32 %v5456, 1e-08
          %v5489 = vrcp.pop %v5457
          %v5490 = vrcp.pop %v5458
          %v5491 = vrcp.pop %v5459
          %v5492 = vrcp.pop %v5460
          %v5493 = vrcp.pop %v5461
          %v5494 = vrcp.pop %v5462
          %v5495 = vrcp.pop %v5463
          %v5496 = vrcp.pop %v5464
          %v5497 = vrcp.pop %v5465
          %v5498 = vrcp.pop %v5466
          %v5499 = vrcp.pop %v5467
          %v5500 = vrcp.pop %v5468
          %v5501 = vrcp.pop %v5469
          %v5502 = vrcp.pop %v5470
          %v5503 = vrcp.pop %v5471
          %v5504 = vrcp.pop %v5472
          %v5505 = vrcp.pop %v5473
          %v5506 = vrcp.pop %v5474
          %v5507 = vrcp.pop %v5475
          %v5508 = vrcp.pop %v5476
          %v5509 = vrcp.pop %v5477
          %v5510 = vrcp.pop %v5478
          %v5511 = vrcp.pop %v5479
          %v5512 = vrcp.pop %v5480
          %v5513 = vrcp.pop %v5481
          %v5514 = vrcp.pop %v5482
          %v5515 = vrcp.pop %v5483
          %v5516 = vrcp.pop %v5484
          %v5517 = vrcp.pop %v5485
          %v5518 = vrcp.pop %v5486
          %v5519 = vrcp.pop %v5487
          %v5520 = vrcp.pop %v5488
          %v5521 = vld [vmem:[#allocation3] sm:$0xff]
          %v5522 = vld [vmem:[#allocation3 + $0x8] sm:$0xff]
          %v5523 = vld [vmem:[#allocation3 + $0x10] sm:$0xff]
          %v5524 = vld [vmem:[#allocation3 + $0x18] sm:$0xff]
          %v5525 = vld [vmem:[#allocation3 + $0x20] sm:$0xff]
          %v5526 = vld [vmem:[#allocation3 + $0x28] sm:$0xff]
          %v5527 = vld [vmem:[#allocation3 + $0x30] sm:$0xff]
          %v5528 = vld [vmem:[#allocation3 + $0x38] sm:$0xff]
          %v5529 = vld [vmem:[#allocation3 + $0x40] sm:$0xff]
          %v5530 = vld [vmem:[#allocation3 + $0x48] sm:$0xff]
          %v5531 = vld [vmem:[#allocation3 + $0x50] sm:$0xff]
          %v5532 = vld [vmem:[#allocation3 + $0x58] sm:$0xff]
          %v5533 = vld [vmem:[#allocation3 + $0x60] sm:$0xff]
          %v5534 = vld [vmem:[#allocation3 + $0x68] sm:$0xff]
          %v5535 = vld [vmem:[#allocation3 + $0x70] sm:$0xff]
          %v5536 = vld [vmem:[#allocation3 + $0x78] sm:$0xff]
          %v5537 = vld [vmem:[#allocation3 + $0x80] sm:$0xff]
          %v5538 = vld [vmem:[#allocation3 + $0x88] sm:$0xff]
          %v5539 = vld [vmem:[#allocation3 + $0x90] sm:$0xff]
          %v5540 = vld [vmem:[#allocation3 + $0x98] sm:$0xff]
          %v5541 = vld [vmem:[#allocation3 + $0xa0] sm:$0xff]
          %v5542 = vld [vmem:[#allocation3 + $0xa8] sm:$0xff]
          %v5543 = vld [vmem:[#allocation3 + $0xb0] sm:$0xff]
          %v5544 = vld [vmem:[#allocation3 + $0xb8] sm:$0xff]
          %v5545 = vld [vmem:[#allocation3 + $0xc0] sm:$0xff]
          %v5546 = vld [vmem:[#allocation3 + $0xc8] sm:$0xff]
          %v5547 = vld [vmem:[#allocation3 + $0xd0] sm:$0xff]
          %v5548 = vld [vmem:[#allocation3 + $0xd8] sm:$0xff]
          %v5549 = vld [vmem:[#allocation3 + $0xe0] sm:$0xff]
          %v5550 = vld [vmem:[#allocation3 + $0xe8] sm:$0xff]
          %v5551 = vld [vmem:[#allocation3 + $0xf0] sm:$0xff]
          %v5552 = vld [vmem:[#allocation3 + $0xf8] sm:$0xff]
          %v5553 = vrsqrt.pop %v5521
          %v5554 = vmul.f32 %v5553, %v5521
          %v5555 = vmul.f32 %v5554, %v5553
          %v5556 = vmul.f32 0.5, %v5555
          %v5557 = vsub.f32 1.5, %v5556
          %v5558 = vmul.f32 %v5553, %v5557
          %v5559 = vmul.f32 %v5521, %v5558
          %vm5560 = vcmp.eq.f32.partialorder %v5521, inf
          %v5561 = vsel %vm5560, %v5521, %v5559
          %vm5562 = vcmp.eq.f32.partialorder %v5521, 0.0
          %v5563 = vand.u32 %v5521, 2147483648
          %v5564 = vsel %vm5562, %v5563, %v5561
          %v5565 = vrsqrt.pop %v5522
          %v5566 = vmul.f32 %v5565, %v5522
          %v5567 = vmul.f32 %v5566, %v5565
          %v5568 = vmul.f32 0.5, %v5567
          %v5569 = vsub.f32 1.5, %v5568
          %v5570 = vmul.f32 %v5565, %v5569
          %v5571 = vmul.f32 %v5522, %v5570
          %vm5572 = vcmp.eq.f32.partialorder %v5522, inf
          %v5573 = vsel %vm5572, %v5522, %v5571
          %vm5574 = vcmp.eq.f32.partialorder %v5522, 0.0
          %v5575 = vand.u32 %v5522, 2147483648
          %v5576 = vsel %vm5574, %v5575, %v5573
          %v5577 = vrsqrt.pop %v5523
          %v5578 = vmul.f32 %v5577, %v5523
          %v5579 = vmul.f32 %v5578, %v5577
          %v5580 = vmul.f32 0.5, %v5579
          %v5581 = vsub.f32 1.5, %v5580
          %v5582 = vmul.f32 %v5577, %v5581
          %v5583 = vmul.f32 %v5523, %v5582
          %vm5584 = vcmp.eq.f32.partialorder %v5523, inf
          %v5585 = vsel %vm5584, %v5523, %v5583
          %vm5586 = vcmp.eq.f32.partialorder %v5523, 0.0
          %v5587 = vand.u32 %v5523, 2147483648
          %v5588 = vsel %vm5586, %v5587, %v5585
          %v5589 = vrsqrt.pop %v5524
          %v5590 = vmul.f32 %v5589, %v5524
          %v5591 = vmul.f32 %v5590, %v5589
          %v5592 = vmul.f32 0.5, %v5591
          %v5593 = vsub.f32 1.5, %v5592
          %v5594 = vmul.f32 %v5589, %v5593
          %v5595 = vmul.f32 %v5524, %v5594
          %vm5596 = vcmp.eq.f32.partialorder %v5524, inf
          %v5597 = vsel %vm5596, %v5524, %v5595
          %vm5598 = vcmp.eq.f32.partialorder %v5524, 0.0
          %v5599 = vand.u32 %v5524, 2147483648
          %v5600 = vsel %vm5598, %v5599, %v5597
          %v5601 = vrsqrt.pop %v5525
          %v5602 = vmul.f32 %v5601, %v5525
          %v5603 = vmul.f32 %v5602, %v5601
          %v5604 = vmul.f32 0.5, %v5603
          %v5605 = vsub.f32 1.5, %v5604
          %v5606 = vmul.f32 %v5601, %v5605
          %v5607 = vmul.f32 %v5525, %v5606
          %vm5608 = vcmp.eq.f32.partialorder %v5525, inf
          %v5609 = vsel %vm5608, %v5525, %v5607
          %vm5610 = vcmp.eq.f32.partialorder %v5525, 0.0
          %v5611 = vand.u32 %v5525, 2147483648
          %v5612 = vsel %vm5610, %v5611, %v5609
          %v5613 = vrsqrt.pop %v5526
          %v5614 = vmul.f32 %v5613, %v5526
          %v5615 = vmul.f32 %v5614, %v5613
          %v5616 = vmul.f32 0.5, %v5615
          %v5617 = vsub.f32 1.5, %v5616
          %v5618 = vmul.f32 %v5613, %v5617
          %v5619 = vmul.f32 %v5526, %v5618
          %vm5620 = vcmp.eq.f32.partialorder %v5526, inf
          %v5621 = vsel %vm5620, %v5526, %v5619
          %vm5622 = vcmp.eq.f32.partialorder %v5526, 0.0
          %v5623 = vand.u32 %v5526, 2147483648
          %v5624 = vsel %vm5622, %v5623, %v5621
          %v5625 = vrsqrt.pop %v5527
          %v5626 = vmul.f32 %v5625, %v5527
          %v5627 = vmul.f32 %v5626, %v5625
          %v5628 = vmul.f32 0.5, %v5627
          %v5629 = vsub.f32 1.5, %v5628
          %v5630 = vmul.f32 %v5625, %v5629
          %v5631 = vmul.f32 %v5527, %v5630
          %vm5632 = vcmp.eq.f32.partialorder %v5527, inf
          %v5633 = vsel %vm5632, %v5527, %v5631
          %vm5634 = vcmp.eq.f32.partialorder %v5527, 0.0
          %v5635 = vand.u32 %v5527, 2147483648
          %v5636 = vsel %vm5634, %v5635, %v5633
          %v5637 = vrsqrt.pop %v5528
          %v5638 = vmul.f32 %v5637, %v5528
          %v5639 = vmul.f32 %v5638, %v5637
          %v5640 = vmul.f32 0.5, %v5639
          %v5641 = vsub.f32 1.5, %v5640
          %v5642 = vmul.f32 %v5637, %v5641
          %v5643 = vmul.f32 %v5528, %v5642
          %vm5644 = vcmp.eq.f32.partialorder %v5528, inf
          %v5645 = vsel %vm5644, %v5528, %v5643
          %vm5646 = vcmp.eq.f32.partialorder %v5528, 0.0
          %v5647 = vand.u32 %v5528, 2147483648
          %v5648 = vsel %vm5646, %v5647, %v5645
          %v5649 = vrsqrt.pop %v5529
          %v5650 = vmul.f32 %v5649, %v5529
          %v5651 = vmul.f32 %v5650, %v5649
          %v5652 = vmul.f32 0.5, %v5651
          %v5653 = vsub.f32 1.5, %v5652
          %v5654 = vmul.f32 %v5649, %v5653
          %v5655 = vmul.f32 %v5529, %v5654
          %vm5656 = vcmp.eq.f32.partialorder %v5529, inf
          %v5657 = vsel %vm5656, %v5529, %v5655
          %vm5658 = vcmp.eq.f32.partialorder %v5529, 0.0
          %v5659 = vand.u32 %v5529, 2147483648
          %v5660 = vsel %vm5658, %v5659, %v5657
          %v5661 = vrsqrt.pop %v5530
          %v5662 = vmul.f32 %v5661, %v5530
          %v5663 = vmul.f32 %v5662, %v5661
          %v5664 = vmul.f32 0.5, %v5663
          %v5665 = vsub.f32 1.5, %v5664
          %v5666 = vmul.f32 %v5661, %v5665
          %v5667 = vmul.f32 %v5530, %v5666
          %vm5668 = vcmp.eq.f32.partialorder %v5530, inf
          %v5669 = vsel %vm5668, %v5530, %v5667
          %vm5670 = vcmp.eq.f32.partialorder %v5530, 0.0
          %v5671 = vand.u32 %v5530, 2147483648
          %v5672 = vsel %vm5670, %v5671, %v5669
          %v5673 = vrsqrt.pop %v5531
          %v5674 = vmul.f32 %v5673, %v5531
          %v5675 = vmul.f32 %v5674, %v5673
          %v5676 = vmul.f32 0.5, %v5675
          %v5677 = vsub.f32 1.5, %v5676
          %v5678 = vmul.f32 %v5673, %v5677
          %v5679 = vmul.f32 %v5531, %v5678
          %vm5680 = vcmp.eq.f32.partialorder %v5531, inf
          %v5681 = vsel %vm5680, %v5531, %v5679
          %vm5682 = vcmp.eq.f32.partialorder %v5531, 0.0
          %v5683 = vand.u32 %v5531, 2147483648
          %v5684 = vsel %vm5682, %v5683, %v5681
          %v5685 = vrsqrt.pop %v5532
          %v5686 = vmul.f32 %v5685, %v5532
          %v5687 = vmul.f32 %v5686, %v5685
          %v5688 = vmul.f32 0.5, %v5687
          %v5689 = vsub.f32 1.5, %v5688
          %v5690 = vmul.f32 %v5685, %v5689
          %v5691 = vmul.f32 %v5532, %v5690
          %vm5692 = vcmp.eq.f32.partialorder %v5532, inf
          %v5693 = vsel %vm5692, %v5532, %v5691
          %vm5694 = vcmp.eq.f32.partialorder %v5532, 0.0
          %v5695 = vand.u32 %v5532, 2147483648
          %v5696 = vsel %vm5694, %v5695, %v5693
          %v5697 = vrsqrt.pop %v5533
          %v5698 = vmul.f32 %v5697, %v5533
          %v5699 = vmul.f32 %v5698, %v5697
          %v5700 = vmul.f32 0.5, %v5699
          %v5701 = vsub.f32 1.5, %v5700
          %v5702 = vmul.f32 %v5697, %v5701
          %v5703 = vmul.f32 %v5533, %v5702
          %vm5704 = vcmp.eq.f32.partialorder %v5533, inf
          %v5705 = vsel %vm5704, %v5533, %v5703
          %vm5706 = vcmp.eq.f32.partialorder %v5533, 0.0
          %v5707 = vand.u32 %v5533, 2147483648
          %v5708 = vsel %vm5706, %v5707, %v5705
          %v5709 = vrsqrt.pop %v5534
          %v5710 = vmul.f32 %v5709, %v5534
          %v5711 = vmul.f32 %v5710, %v5709
          %v5712 = vmul.f32 0.5, %v5711
          %v5713 = vsub.f32 1.5, %v5712
          %v5714 = vmul.f32 %v5709, %v5713
          %v5715 = vmul.f32 %v5534, %v5714
          %vm5716 = vcmp.eq.f32.partialorder %v5534, inf
          %v5717 = vsel %vm5716, %v5534, %v5715
          %vm5718 = vcmp.eq.f32.partialorder %v5534, 0.0
          %v5719 = vand.u32 %v5534, 2147483648
          %v5720 = vsel %vm5718, %v5719, %v5717
          %v5721 = vrsqrt.pop %v5535
          %v5722 = vmul.f32 %v5721, %v5535
          %v5723 = vmul.f32 %v5722, %v5721
          %v5724 = vmul.f32 0.5, %v5723
          %v5725 = vsub.f32 1.5, %v5724
          %v5726 = vmul.f32 %v5721, %v5725
          %v5727 = vmul.f32 %v5535, %v5726
          %vm5728 = vcmp.eq.f32.partialorder %v5535, inf
          %v5729 = vsel %vm5728, %v5535, %v5727
          %vm5730 = vcmp.eq.f32.partialorder %v5535, 0.0
          %v5731 = vand.u32 %v5535, 2147483648
          %v5732 = vsel %vm5730, %v5731, %v5729
          %v5733 = vrsqrt.pop %v5536
          %v5734 = vmul.f32 %v5733, %v5536
          %v5735 = vmul.f32 %v5734, %v5733
          %v5736 = vmul.f32 0.5, %v5735
          %v5737 = vsub.f32 1.5, %v5736
          %v5738 = vmul.f32 %v5733, %v5737
          %v5739 = vmul.f32 %v5536, %v5738
          %vm5740 = vcmp.eq.f32.partialorder %v5536, inf
          %v5741 = vsel %vm5740, %v5536, %v5739
          %vm5742 = vcmp.eq.f32.partialorder %v5536, 0.0
          %v5743 = vand.u32 %v5536, 2147483648
          %v5744 = vsel %vm5742, %v5743, %v5741
          %v5745 = vrsqrt.pop %v5537
          %v5746 = vmul.f32 %v5745, %v5537
          %v5747 = vmul.f32 %v5746, %v5745
          %v5748 = vmul.f32 0.5, %v5747
          %v5749 = vsub.f32 1.5, %v5748
          %v5750 = vmul.f32 %v5745, %v5749
          %v5751 = vmul.f32 %v5537, %v5750
          %vm5752 = vcmp.eq.f32.partialorder %v5537, inf
          %v5753 = vsel %vm5752, %v5537, %v5751
          %vm5754 = vcmp.eq.f32.partialorder %v5537, 0.0
          %v5755 = vand.u32 %v5537, 2147483648
          %v5756 = vsel %vm5754, %v5755, %v5753
          %v5757 = vrsqrt.pop %v5538
          %v5758 = vmul.f32 %v5757, %v5538
          %v5759 = vmul.f32 %v5758, %v5757
          %v5760 = vmul.f32 0.5, %v5759
          %v5761 = vsub.f32 1.5, %v5760
          %v5762 = vmul.f32 %v5757, %v5761
          %v5763 = vmul.f32 %v5538, %v5762
          %vm5764 = vcmp.eq.f32.partialorder %v5538, inf
          %v5765 = vsel %vm5764, %v5538, %v5763
          %vm5766 = vcmp.eq.f32.partialorder %v5538, 0.0
          %v5767 = vand.u32 %v5538, 2147483648
          %v5768 = vsel %vm5766, %v5767, %v5765
          %v5769 = vrsqrt.pop %v5539
          %v5770 = vmul.f32 %v5769, %v5539
          %v5771 = vmul.f32 %v5770, %v5769
          %v5772 = vmul.f32 0.5, %v5771
          %v5773 = vsub.f32 1.5, %v5772
          %v5774 = vmul.f32 %v5769, %v5773
          %v5775 = vmul.f32 %v5539, %v5774
          %vm5776 = vcmp.eq.f32.partialorder %v5539, inf
          %v5777 = vsel %vm5776, %v5539, %v5775
          %vm5778 = vcmp.eq.f32.partialorder %v5539, 0.0
          %v5779 = vand.u32 %v5539, 2147483648
          %v5780 = vsel %vm5778, %v5779, %v5777
          %v5781 = vrsqrt.pop %v5540
          %v5782 = vmul.f32 %v5781, %v5540
          %v5783 = vmul.f32 %v5782, %v5781
          %v5784 = vmul.f32 0.5, %v5783
          %v5785 = vsub.f32 1.5, %v5784
          %v5786 = vmul.f32 %v5781, %v5785
          %v5787 = vmul.f32 %v5540, %v5786
          %vm5788 = vcmp.eq.f32.partialorder %v5540, inf
          %v5789 = vsel %vm5788, %v5540, %v5787
          %vm5790 = vcmp.eq.f32.partialorder %v5540, 0.0
          %v5791 = vand.u32 %v5540, 2147483648
          %v5792 = vsel %vm5790, %v5791, %v5789
          %v5793 = vrsqrt.pop %v5541
          %v5794 = vmul.f32 %v5793, %v5541
          %v5795 = vmul.f32 %v5794, %v5793
          %v5796 = vmul.f32 0.5, %v5795
          %v5797 = vsub.f32 1.5, %v5796
          %v5798 = vmul.f32 %v5793, %v5797
          %v5799 = vmul.f32 %v5541, %v5798
          %vm5800 = vcmp.eq.f32.partialorder %v5541, inf
          %v5801 = vsel %vm5800, %v5541, %v5799
          %vm5802 = vcmp.eq.f32.partialorder %v5541, 0.0
          %v5803 = vand.u32 %v5541, 2147483648
          %v5804 = vsel %vm5802, %v5803, %v5801
          %v5805 = vrsqrt.pop %v5542
          %v5806 = vmul.f32 %v5805, %v5542
          %v5807 = vmul.f32 %v5806, %v5805
          %v5808 = vmul.f32 0.5, %v5807
          %v5809 = vsub.f32 1.5, %v5808
          %v5810 = vmul.f32 %v5805, %v5809
          %v5811 = vmul.f32 %v5542, %v5810
          %vm5812 = vcmp.eq.f32.partialorder %v5542, inf
          %v5813 = vsel %vm5812, %v5542, %v5811
          %vm5814 = vcmp.eq.f32.partialorder %v5542, 0.0
          %v5815 = vand.u32 %v5542, 2147483648
          %v5816 = vsel %vm5814, %v5815, %v5813
          %v5817 = vrsqrt.pop %v5543
          %v5818 = vmul.f32 %v5817, %v5543
          %v5819 = vmul.f32 %v5818, %v5817
          %v5820 = vmul.f32 0.5, %v5819
          %v5821 = vsub.f32 1.5, %v5820
          %v5822 = vmul.f32 %v5817, %v5821
          %v5823 = vmul.f32 %v5543, %v5822
          %vm5824 = vcmp.eq.f32.partialorder %v5543, inf
          %v5825 = vsel %vm5824, %v5543, %v5823
          %vm5826 = vcmp.eq.f32.partialorder %v5543, 0.0
          %v5827 = vand.u32 %v5543, 2147483648
          %v5828 = vsel %vm5826, %v5827, %v5825
          %v5829 = vrsqrt.pop %v5544
          %v5830 = vmul.f32 %v5829, %v5544
          %v5831 = vmul.f32 %v5830, %v5829
          %v5832 = vmul.f32 0.5, %v5831
          %v5833 = vsub.f32 1.5, %v5832
          %v5834 = vmul.f32 %v5829, %v5833
          %v5835 = vmul.f32 %v5544, %v5834
          %vm5836 = vcmp.eq.f32.partialorder %v5544, inf
          %v5837 = vsel %vm5836, %v5544, %v5835
          %vm5838 = vcmp.eq.f32.partialorder %v5544, 0.0
          %v5839 = vand.u32 %v5544, 2147483648
          %v5840 = vsel %vm5838, %v5839, %v5837
          %v5841 = vrsqrt.pop %v5545
          %v5842 = vmul.f32 %v5841, %v5545
          %v5843 = vmul.f32 %v5842, %v5841
          %v5844 = vmul.f32 0.5, %v5843
          %v5845 = vsub.f32 1.5, %v5844
          %v5846 = vmul.f32 %v5841, %v5845
          %v5847 = vmul.f32 %v5545, %v5846
          %vm5848 = vcmp.eq.f32.partialorder %v5545, inf
          %v5849 = vsel %vm5848, %v5545, %v5847
          %vm5850 = vcmp.eq.f32.partialorder %v5545, 0.0
          %v5851 = vand.u32 %v5545, 2147483648
          %v5852 = vsel %vm5850, %v5851, %v5849
          %v5853 = vrsqrt.pop %v5546
          %v5854 = vmul.f32 %v5853, %v5546
          %v5855 = vmul.f32 %v5854, %v5853
          %v5856 = vmul.f32 0.5, %v5855
          %v5857 = vsub.f32 1.5, %v5856
          %v5858 = vmul.f32 %v5853, %v5857
          %v5859 = vmul.f32 %v5546, %v5858
          %vm5860 = vcmp.eq.f32.partialorder %v5546, inf
          %v5861 = vsel %vm5860, %v5546, %v5859
          %vm5862 = vcmp.eq.f32.partialorder %v5546, 0.0
          %v5863 = vand.u32 %v5546, 2147483648
          %v5864 = vsel %vm5862, %v5863, %v5861
          %v5865 = vrsqrt.pop %v5547
          %v5866 = vmul.f32 %v5865, %v5547
          %v5867 = vmul.f32 %v5866, %v5865
          %v5868 = vmul.f32 0.5, %v5867
          %v5869 = vsub.f32 1.5, %v5868
          %v5870 = vmul.f32 %v5865, %v5869
          %v5871 = vmul.f32 %v5547, %v5870
          %vm5872 = vcmp.eq.f32.partialorder %v5547, inf
          %v5873 = vsel %vm5872, %v5547, %v5871
          %vm5874 = vcmp.eq.f32.partialorder %v5547, 0.0
          %v5875 = vand.u32 %v5547, 2147483648
          %v5876 = vsel %vm5874, %v5875, %v5873
          %v5877 = vrsqrt.pop %v5548
          %v5878 = vmul.f32 %v5877, %v5548
          %v5879 = vmul.f32 %v5878, %v5877
          %v5880 = vmul.f32 0.5, %v5879
          %v5881 = vsub.f32 1.5, %v5880
          %v5882 = vmul.f32 %v5877, %v5881
          %v5883 = vmul.f32 %v5548, %v5882
          %vm5884 = vcmp.eq.f32.partialorder %v5548, inf
          %v5885 = vsel %vm5884, %v5548, %v5883
          %vm5886 = vcmp.eq.f32.partialorder %v5548, 0.0
          %v5887 = vand.u32 %v5548, 2147483648
          %v5888 = vsel %vm5886, %v5887, %v5885
          %v5889 = vrsqrt.pop %v5549
          %v5890 = vmul.f32 %v5889, %v5549
          %v5891 = vmul.f32 %v5890, %v5889
          %v5892 = vmul.f32 0.5, %v5891
          %v5893 = vsub.f32 1.5, %v5892
          %v5894 = vmul.f32 %v5889, %v5893
          %v5895 = vmul.f32 %v5549, %v5894
          %vm5896 = vcmp.eq.f32.partialorder %v5549, inf
          %v5897 = vsel %vm5896, %v5549, %v5895
          %vm5898 = vcmp.eq.f32.partialorder %v5549, 0.0
          %v5899 = vand.u32 %v5549, 2147483648
          %v5900 = vsel %vm5898, %v5899, %v5897
          %v5901 = vrsqrt.pop %v5550
          %v5902 = vmul.f32 %v5901, %v5550
          %v5903 = vmul.f32 %v5902, %v5901
          %v5904 = vmul.f32 0.5, %v5903
          %v5905 = vsub.f32 1.5, %v5904
          %v5906 = vmul.f32 %v5901, %v5905
          %v5907 = vmul.f32 %v5550, %v5906
          %vm5908 = vcmp.eq.f32.partialorder %v5550, inf
          %v5909 = vsel %vm5908, %v5550, %v5907
          %vm5910 = vcmp.eq.f32.partialorder %v5550, 0.0
          %v5911 = vand.u32 %v5550, 2147483648
          %v5912 = vsel %vm5910, %v5911, %v5909
          %v5913 = vrsqrt.pop %v5551
          %v5914 = vmul.f32 %v5913, %v5551
          %v5915 = vmul.f32 %v5914, %v5913
          %v5916 = vmul.f32 0.5, %v5915
          %v5917 = vsub.f32 1.5, %v5916
          %v5918 = vmul.f32 %v5913, %v5917
          %v5919 = vmul.f32 %v5551, %v5918
          %vm5920 = vcmp.eq.f32.partialorder %v5551, inf
          %v5921 = vsel %vm5920, %v5551, %v5919
          %vm5922 = vcmp.eq.f32.partialorder %v5551, 0.0
          %v5923 = vand.u32 %v5551, 2147483648
          %v5924 = vsel %vm5922, %v5923, %v5921
          %v5925 = vrsqrt.pop %v5552
          %v5926 = vmul.f32 %v5925, %v5552
          %v5927 = vmul.f32 %v5926, %v5925
          %v5928 = vmul.f32 0.5, %v5927
          %v5929 = vsub.f32 1.5, %v5928
          %v5930 = vmul.f32 %v5925, %v5929
          %v5931 = vmul.f32 %v5552, %v5930
          %vm5932 = vcmp.eq.f32.partialorder %v5552, inf
          %v5933 = vsel %vm5932, %v5552, %v5931
          %vm5934 = vcmp.eq.f32.partialorder %v5552, 0.0
          %v5935 = vand.u32 %v5552, 2147483648
          %v5936 = vsel %vm5934, %v5935, %v5933
          %v5937 = vadd.f32 %v5564, 1e-08
          %v5938 = vadd.f32 %v5576, 1e-08
          %v5939 = vadd.f32 %v5588, 1e-08
          %v5940 = vadd.f32 %v5600, 1e-08
          %v5941 = vadd.f32 %v5612, 1e-08
          %v5942 = vadd.f32 %v5624, 1e-08
          %v5943 = vadd.f32 %v5636, 1e-08
          %v5944 = vadd.f32 %v5648, 1e-08
          %v5945 = vadd.f32 %v5660, 1e-08
          %v5946 = vadd.f32 %v5672, 1e-08
          %v5947 = vadd.f32 %v5684, 1e-08
          %v5948 = vadd.f32 %v5696, 1e-08
          %v5949 = vadd.f32 %v5708, 1e-08
          %v5950 = vadd.f32 %v5720, 1e-08
          %v5951 = vadd.f32 %v5732, 1e-08
          %v5952 = vadd.f32 %v5744, 1e-08
          %v5953 = vadd.f32 %v5756, 1e-08
          %v5954 = vadd.f32 %v5768, 1e-08
          %v5955 = vadd.f32 %v5780, 1e-08
          %v5956 = vadd.f32 %v5792, 1e-08
          %v5957 = vadd.f32 %v5804, 1e-08
          %v5958 = vadd.f32 %v5816, 1e-08
          %v5959 = vadd.f32 %v5828, 1e-08
          %v5960 = vadd.f32 %v5840, 1e-08
          %v5961 = vadd.f32 %v5852, 1e-08
          %v5962 = vadd.f32 %v5864, 1e-08
          %v5963 = vadd.f32 %v5876, 1e-08
          %v5964 = vadd.f32 %v5888, 1e-08
          %v5965 = vadd.f32 %v5900, 1e-08
          %v5966 = vadd.f32 %v5912, 1e-08
          %v5967 = vadd.f32 %v5924, 1e-08
          %v5968 = vadd.f32 %v5936, 1e-08
          %v5969 = vrcp.pop %v5937
          %v5970 = vrcp.pop %v5938
          %v5971 = vrcp.pop %v5939
          %v5972 = vrcp.pop %v5940
          %v5973 = vrcp.pop %v5941
          %v5974 = vrcp.pop %v5942
          %v5975 = vrcp.pop %v5943
          %v5976 = vrcp.pop %v5944
          %v5977 = vrcp.pop %v5945
          %v5978 = vrcp.pop %v5946
          %v5979 = vrcp.pop %v5947
          %v5980 = vrcp.pop %v5948
          %v5981 = vrcp.pop %v5949
          %v5982 = vrcp.pop %v5950
          %v5983 = vrcp.pop %v5951
          %v5984 = vrcp.pop %v5952
          %v5985 = vrcp.pop %v5953
          %v5986 = vrcp.pop %v5954
          %v5987 = vrcp.pop %v5955
          %v5988 = vrcp.pop %v5956
          %v5989 = vrcp.pop %v5957
          %v5990 = vrcp.pop %v5958
          %v5991 = vrcp.pop %v5959
          %v5992 = vrcp.pop %v5960
          %v5993 = vrcp.pop %v5961
          %v5994 = vrcp.pop %v5962
          %v5995 = vrcp.pop %v5963
          %v5996 = vrcp.pop %v5964
          %v5997 = vrcp.pop %v5965
          %v5998 = vrcp.pop %v5966
          %v5999 = vrcp.pop %v5967
          %v6000 = vrcp.pop %v5968
          %v6001 = vld [vmem:[#allocation4] sm:$0xff]
          %v6002 = vld [vmem:[#allocation4 + $0x8] sm:$0xff]
          %v6003 = vld [vmem:[#allocation4 + $0x10] sm:$0xff]
          %v6004 = vld [vmem:[#allocation4 + $0x18] sm:$0xff]
          %v6005 = vld [vmem:[#allocation4 + $0x20] sm:$0xff]
          %v6006 = vld [vmem:[#allocation4 + $0x28] sm:$0xff]
          %v6007 = vld [vmem:[#allocation4 + $0x30] sm:$0xff]
          %v6008 = vld [vmem:[#allocation4 + $0x38] sm:$0xff]
          %v6009 = vld [vmem:[#allocation4 + $0x40] sm:$0xff]
          %v6010 = vld [vmem:[#allocation4 + $0x48] sm:$0xff]
          %v6011 = vld [vmem:[#allocation4 + $0x50] sm:$0xff]
          %v6012 = vld [vmem:[#allocation4 + $0x58] sm:$0xff]
          %v6013 = vld [vmem:[#allocation4 + $0x60] sm:$0xff]
          %v6014 = vld [vmem:[#allocation4 + $0x68] sm:$0xff]
          %v6015 = vld [vmem:[#allocation4 + $0x70] sm:$0xff]
          %v6016 = vld [vmem:[#allocation4 + $0x78] sm:$0xff]
          %v6017 = vld [vmem:[#allocation4 + $0x80] sm:$0xff]
          %v6018 = vld [vmem:[#allocation4 + $0x88] sm:$0xff]
          %v6019 = vld [vmem:[#allocation4 + $0x90] sm:$0xff]
          %v6020 = vld [vmem:[#allocation4 + $0x98] sm:$0xff]
          %v6021 = vld [vmem:[#allocation4 + $0xa0] sm:$0xff]
          %v6022 = vld [vmem:[#allocation4 + $0xa8] sm:$0xff]
          %v6023 = vld [vmem:[#allocation4 + $0xb0] sm:$0xff]
          %v6024 = vld [vmem:[#allocation4 + $0xb8] sm:$0xff]
          %v6025 = vld [vmem:[#allocation4 + $0xc0] sm:$0xff]
          %v6026 = vld [vmem:[#allocation4 + $0xc8] sm:$0xff]
          %v6027 = vld [vmem:[#allocation4 + $0xd0] sm:$0xff]
          %v6028 = vld [vmem:[#allocation4 + $0xd8] sm:$0xff]
          %v6029 = vld [vmem:[#allocation4 + $0xe0] sm:$0xff]
          %v6030 = vld [vmem:[#allocation4 + $0xe8] sm:$0xff]
          %v6031 = vld [vmem:[#allocation4 + $0xf0] sm:$0xff]
          %v6032 = vld [vmem:[#allocation4 + $0xf8] sm:$0xff]
          %v6033 = vrsqrt.pop %v6001
          %v6034 = vmul.f32 %v6033, %v6001
          %v6035 = vmul.f32 %v6034, %v6033
          %v6036 = vmul.f32 0.5, %v6035
          %v6037 = vsub.f32 1.5, %v6036
          %v6038 = vmul.f32 %v6033, %v6037
          %v6039 = vmul.f32 %v6001, %v6038
          %vm6040 = vcmp.eq.f32.partialorder %v6001, inf
          %v6041 = vsel %vm6040, %v6001, %v6039
          %vm6042 = vcmp.eq.f32.partialorder %v6001, 0.0
          %v6043 = vand.u32 %v6001, 2147483648
          %v6044 = vsel %vm6042, %v6043, %v6041
          %v6045 = vrsqrt.pop %v6002
          %v6046 = vmul.f32 %v6045, %v6002
          %v6047 = vmul.f32 %v6046, %v6045
          %v6048 = vmul.f32 0.5, %v6047
          %v6049 = vsub.f32 1.5, %v6048
          %v6050 = vmul.f32 %v6045, %v6049
          %v6051 = vmul.f32 %v6002, %v6050
          %vm6052 = vcmp.eq.f32.partialorder %v6002, inf
          %v6053 = vsel %vm6052, %v6002, %v6051
          %vm6054 = vcmp.eq.f32.partialorder %v6002, 0.0
          %v6055 = vand.u32 %v6002, 2147483648
          %v6056 = vsel %vm6054, %v6055, %v6053
          %v6057 = vrsqrt.pop %v6003
          %v6058 = vmul.f32 %v6057, %v6003
          %v6059 = vmul.f32 %v6058, %v6057
          %v6060 = vmul.f32 0.5, %v6059
          %v6061 = vsub.f32 1.5, %v6060
          %v6062 = vmul.f32 %v6057, %v6061
          %v6063 = vmul.f32 %v6003, %v6062
          %vm6064 = vcmp.eq.f32.partialorder %v6003, inf
          %v6065 = vsel %vm6064, %v6003, %v6063
          %vm6066 = vcmp.eq.f32.partialorder %v6003, 0.0
          %v6067 = vand.u32 %v6003, 2147483648
          %v6068 = vsel %vm6066, %v6067, %v6065
          %v6069 = vrsqrt.pop %v6004
          %v6070 = vmul.f32 %v6069, %v6004
          %v6071 = vmul.f32 %v6070, %v6069
          %v6072 = vmul.f32 0.5, %v6071
          %v6073 = vsub.f32 1.5, %v6072
          %v6074 = vmul.f32 %v6069, %v6073
          %v6075 = vmul.f32 %v6004, %v6074
          %vm6076 = vcmp.eq.f32.partialorder %v6004, inf
          %v6077 = vsel %vm6076, %v6004, %v6075
          %vm6078 = vcmp.eq.f32.partialorder %v6004, 0.0
          %v6079 = vand.u32 %v6004, 2147483648
          %v6080 = vsel %vm6078, %v6079, %v6077
          %v6081 = vrsqrt.pop %v6005
          %v6082 = vmul.f32 %v6081, %v6005
          %v6083 = vmul.f32 %v6082, %v6081
          %v6084 = vmul.f32 0.5, %v6083
          %v6085 = vsub.f32 1.5, %v6084
          %v6086 = vmul.f32 %v6081, %v6085
          %v6087 = vmul.f32 %v6005, %v6086
          %vm6088 = vcmp.eq.f32.partialorder %v6005, inf
          %v6089 = vsel %vm6088, %v6005, %v6087
          %vm6090 = vcmp.eq.f32.partialorder %v6005, 0.0
          %v6091 = vand.u32 %v6005, 2147483648
          %v6092 = vsel %vm6090, %v6091, %v6089
          %v6093 = vrsqrt.pop %v6006
          %v6094 = vmul.f32 %v6093, %v6006
          %v6095 = vmul.f32 %v6094, %v6093
          %v6096 = vmul.f32 0.5, %v6095
          %v6097 = vsub.f32 1.5, %v6096
          %v6098 = vmul.f32 %v6093, %v6097
          %v6099 = vmul.f32 %v6006, %v6098
          %vm6100 = vcmp.eq.f32.partialorder %v6006, inf
          %v6101 = vsel %vm6100, %v6006, %v6099
          %vm6102 = vcmp.eq.f32.partialorder %v6006, 0.0
          %v6103 = vand.u32 %v6006, 2147483648
          %v6104 = vsel %vm6102, %v6103, %v6101
          %v6105 = vrsqrt.pop %v6007
          %v6106 = vmul.f32 %v6105, %v6007
          %v6107 = vmul.f32 %v6106, %v6105
          %v6108 = vmul.f32 0.5, %v6107
          %v6109 = vsub.f32 1.5, %v6108
          %v6110 = vmul.f32 %v6105, %v6109
          %v6111 = vmul.f32 %v6007, %v6110
          %vm6112 = vcmp.eq.f32.partialorder %v6007, inf
          %v6113 = vsel %vm6112, %v6007, %v6111
          %vm6114 = vcmp.eq.f32.partialorder %v6007, 0.0
          %v6115 = vand.u32 %v6007, 2147483648
          %v6116 = vsel %vm6114, %v6115, %v6113
          %v6117 = vrsqrt.pop %v6008
          %v6118 = vmul.f32 %v6117, %v6008
          %v6119 = vmul.f32 %v6118, %v6117
          %v6120 = vmul.f32 0.5, %v6119
          %v6121 = vsub.f32 1.5, %v6120
          %v6122 = vmul.f32 %v6117, %v6121
          %v6123 = vmul.f32 %v6008, %v6122
          %vm6124 = vcmp.eq.f32.partialorder %v6008, inf
          %v6125 = vsel %vm6124, %v6008, %v6123
          %vm6126 = vcmp.eq.f32.partialorder %v6008, 0.0
          %v6127 = vand.u32 %v6008, 2147483648
          %v6128 = vsel %vm6126, %v6127, %v6125
          %v6129 = vrsqrt.pop %v6009
          %v6130 = vmul.f32 %v6129, %v6009
          %v6131 = vmul.f32 %v6130, %v6129
          %v6132 = vmul.f32 0.5, %v6131
          %v6133 = vsub.f32 1.5, %v6132
          %v6134 = vmul.f32 %v6129, %v6133
          %v6135 = vmul.f32 %v6009, %v6134
          %vm6136 = vcmp.eq.f32.partialorder %v6009, inf
          %v6137 = vsel %vm6136, %v6009, %v6135
          %vm6138 = vcmp.eq.f32.partialorder %v6009, 0.0
          %v6139 = vand.u32 %v6009, 2147483648
          %v6140 = vsel %vm6138, %v6139, %v6137
          %v6141 = vrsqrt.pop %v6010
          %v6142 = vmul.f32 %v6141, %v6010
          %v6143 = vmul.f32 %v6142, %v6141
          %v6144 = vmul.f32 0.5, %v6143
          %v6145 = vsub.f32 1.5, %v6144
          %v6146 = vmul.f32 %v6141, %v6145
          %v6147 = vmul.f32 %v6010, %v6146
          %vm6148 = vcmp.eq.f32.partialorder %v6010, inf
          %v6149 = vsel %vm6148, %v6010, %v6147
          %vm6150 = vcmp.eq.f32.partialorder %v6010, 0.0
          %v6151 = vand.u32 %v6010, 2147483648
          %v6152 = vsel %vm6150, %v6151, %v6149
          %v6153 = vrsqrt.pop %v6011
          %v6154 = vmul.f32 %v6153, %v6011
          %v6155 = vmul.f32 %v6154, %v6153
          %v6156 = vmul.f32 0.5, %v6155
          %v6157 = vsub.f32 1.5, %v6156
          %v6158 = vmul.f32 %v6153, %v6157
          %v6159 = vmul.f32 %v6011, %v6158
          %vm6160 = vcmp.eq.f32.partialorder %v6011, inf
          %v6161 = vsel %vm6160, %v6011, %v6159
          %vm6162 = vcmp.eq.f32.partialorder %v6011, 0.0
          %v6163 = vand.u32 %v6011, 2147483648
          %v6164 = vsel %vm6162, %v6163, %v6161
          %v6165 = vrsqrt.pop %v6012
          %v6166 = vmul.f32 %v6165, %v6012
          %v6167 = vmul.f32 %v6166, %v6165
          %v6168 = vmul.f32 0.5, %v6167
          %v6169 = vsub.f32 1.5, %v6168
          %v6170 = vmul.f32 %v6165, %v6169
          %v6171 = vmul.f32 %v6012, %v6170
          %vm6172 = vcmp.eq.f32.partialorder %v6012, inf
          %v6173 = vsel %vm6172, %v6012, %v6171
          %vm6174 = vcmp.eq.f32.partialorder %v6012, 0.0
          %v6175 = vand.u32 %v6012, 2147483648
          %v6176 = vsel %vm6174, %v6175, %v6173
          %v6177 = vrsqrt.pop %v6013
          %v6178 = vmul.f32 %v6177, %v6013
          %v6179 = vmul.f32 %v6178, %v6177
          %v6180 = vmul.f32 0.5, %v6179
          %v6181 = vsub.f32 1.5, %v6180
          %v6182 = vmul.f32 %v6177, %v6181
          %v6183 = vmul.f32 %v6013, %v6182
          %vm6184 = vcmp.eq.f32.partialorder %v6013, inf
          %v6185 = vsel %vm6184, %v6013, %v6183
          %vm6186 = vcmp.eq.f32.partialorder %v6013, 0.0
          %v6187 = vand.u32 %v6013, 2147483648
          %v6188 = vsel %vm6186, %v6187, %v6185
          %v6189 = vrsqrt.pop %v6014
          %v6190 = vmul.f32 %v6189, %v6014
          %v6191 = vmul.f32 %v6190, %v6189
          %v6192 = vmul.f32 0.5, %v6191
          %v6193 = vsub.f32 1.5, %v6192
          %v6194 = vmul.f32 %v6189, %v6193
          %v6195 = vmul.f32 %v6014, %v6194
          %vm6196 = vcmp.eq.f32.partialorder %v6014, inf
          %v6197 = vsel %vm6196, %v6014, %v6195
          %vm6198 = vcmp.eq.f32.partialorder %v6014, 0.0
          %v6199 = vand.u32 %v6014, 2147483648
          %v6200 = vsel %vm6198, %v6199, %v6197
          %v6201 = vrsqrt.pop %v6015
          %v6202 = vmul.f32 %v6201, %v6015
          %v6203 = vmul.f32 %v6202, %v6201
          %v6204 = vmul.f32 0.5, %v6203
          %v6205 = vsub.f32 1.5, %v6204
          %v6206 = vmul.f32 %v6201, %v6205
          %v6207 = vmul.f32 %v6015, %v6206
          %vm6208 = vcmp.eq.f32.partialorder %v6015, inf
          %v6209 = vsel %vm6208, %v6015, %v6207
          %vm6210 = vcmp.eq.f32.partialorder %v6015, 0.0
          %v6211 = vand.u32 %v6015, 2147483648
          %v6212 = vsel %vm6210, %v6211, %v6209
          %v6213 = vrsqrt.pop %v6016
          %v6214 = vmul.f32 %v6213, %v6016
          %v6215 = vmul.f32 %v6214, %v6213
          %v6216 = vmul.f32 0.5, %v6215
          %v6217 = vsub.f32 1.5, %v6216
          %v6218 = vmul.f32 %v6213, %v6217
          %v6219 = vmul.f32 %v6016, %v6218
          %vm6220 = vcmp.eq.f32.partialorder %v6016, inf
          %v6221 = vsel %vm6220, %v6016, %v6219
          %vm6222 = vcmp.eq.f32.partialorder %v6016, 0.0
          %v6223 = vand.u32 %v6016, 2147483648
          %v6224 = vsel %vm6222, %v6223, %v6221
          %v6225 = vrsqrt.pop %v6017
          %v6226 = vmul.f32 %v6225, %v6017
          %v6227 = vmul.f32 %v6226, %v6225
          %v6228 = vmul.f32 0.5, %v6227
          %v6229 = vsub.f32 1.5, %v6228
          %v6230 = vmul.f32 %v6225, %v6229
          %v6231 = vmul.f32 %v6017, %v6230
          %vm6232 = vcmp.eq.f32.partialorder %v6017, inf
          %v6233 = vsel %vm6232, %v6017, %v6231
          %vm6234 = vcmp.eq.f32.partialorder %v6017, 0.0
          %v6235 = vand.u32 %v6017, 2147483648
          %v6236 = vsel %vm6234, %v6235, %v6233
          %v6237 = vrsqrt.pop %v6018
          %v6238 = vmul.f32 %v6237, %v6018
          %v6239 = vmul.f32 %v6238, %v6237
          %v6240 = vmul.f32 0.5, %v6239
          %v6241 = vsub.f32 1.5, %v6240
          %v6242 = vmul.f32 %v6237, %v6241
          %v6243 = vmul.f32 %v6018, %v6242
          %vm6244 = vcmp.eq.f32.partialorder %v6018, inf
          %v6245 = vsel %vm6244, %v6018, %v6243
          %vm6246 = vcmp.eq.f32.partialorder %v6018, 0.0
          %v6247 = vand.u32 %v6018, 2147483648
          %v6248 = vsel %vm6246, %v6247, %v6245
          %v6249 = vrsqrt.pop %v6019
          %v6250 = vmul.f32 %v6249, %v6019
          %v6251 = vmul.f32 %v6250, %v6249
          %v6252 = vmul.f32 0.5, %v6251
          %v6253 = vsub.f32 1.5, %v6252
          %v6254 = vmul.f32 %v6249, %v6253
          %v6255 = vmul.f32 %v6019, %v6254
          %vm6256 = vcmp.eq.f32.partialorder %v6019, inf
          %v6257 = vsel %vm6256, %v6019, %v6255
          %vm6258 = vcmp.eq.f32.partialorder %v6019, 0.0
          %v6259 = vand.u32 %v6019, 2147483648
          %v6260 = vsel %vm6258, %v6259, %v6257
          %v6261 = vrsqrt.pop %v6020
          %v6262 = vmul.f32 %v6261, %v6020
          %v6263 = vmul.f32 %v6262, %v6261
          %v6264 = vmul.f32 0.5, %v6263
          %v6265 = vsub.f32 1.5, %v6264
          %v6266 = vmul.f32 %v6261, %v6265
          %v6267 = vmul.f32 %v6020, %v6266
          %vm6268 = vcmp.eq.f32.partialorder %v6020, inf
          %v6269 = vsel %vm6268, %v6020, %v6267
          %vm6270 = vcmp.eq.f32.partialorder %v6020, 0.0
          %v6271 = vand.u32 %v6020, 2147483648
          %v6272 = vsel %vm6270, %v6271, %v6269
          %v6273 = vrsqrt.pop %v6021
          %v6274 = vmul.f32 %v6273, %v6021
          %v6275 = vmul.f32 %v6274, %v6273
          %v6276 = vmul.f32 0.5, %v6275
          %v6277 = vsub.f32 1.5, %v6276
          %v6278 = vmul.f32 %v6273, %v6277
          %v6279 = vmul.f32 %v6021, %v6278
          %vm6280 = vcmp.eq.f32.partialorder %v6021, inf
          %v6281 = vsel %vm6280, %v6021, %v6279
          %vm6282 = vcmp.eq.f32.partialorder %v6021, 0.0
          %v6283 = vand.u32 %v6021, 2147483648
          %v6284 = vsel %vm6282, %v6283, %v6281
          %v6285 = vrsqrt.pop %v6022
          %v6286 = vmul.f32 %v6285, %v6022
          %v6287 = vmul.f32 %v6286, %v6285
          %v6288 = vmul.f32 0.5, %v6287
          %v6289 = vsub.f32 1.5, %v6288
          %v6290 = vmul.f32 %v6285, %v6289
          %v6291 = vmul.f32 %v6022, %v6290
          %vm6292 = vcmp.eq.f32.partialorder %v6022, inf
          %v6293 = vsel %vm6292, %v6022, %v6291
          %vm6294 = vcmp.eq.f32.partialorder %v6022, 0.0
          %v6295 = vand.u32 %v6022, 2147483648
          %v6296 = vsel %vm6294, %v6295, %v6293
          %v6297 = vrsqrt.pop %v6023
          %v6298 = vmul.f32 %v6297, %v6023
          %v6299 = vmul.f32 %v6298, %v6297
          %v6300 = vmul.f32 0.5, %v6299
          %v6301 = vsub.f32 1.5, %v6300
          %v6302 = vmul.f32 %v6297, %v6301
          %v6303 = vmul.f32 %v6023, %v6302
          %vm6304 = vcmp.eq.f32.partialorder %v6023, inf
          %v6305 = vsel %vm6304, %v6023, %v6303
          %vm6306 = vcmp.eq.f32.partialorder %v6023, 0.0
          %v6307 = vand.u32 %v6023, 2147483648
          %v6308 = vsel %vm6306, %v6307, %v6305
          %v6309 = vrsqrt.pop %v6024
          %v6310 = vmul.f32 %v6309, %v6024
          %v6311 = vmul.f32 %v6310, %v6309
          %v6312 = vmul.f32 0.5, %v6311
          %v6313 = vsub.f32 1.5, %v6312
          %v6314 = vmul.f32 %v6309, %v6313
          %v6315 = vmul.f32 %v6024, %v6314
          %vm6316 = vcmp.eq.f32.partialorder %v6024, inf
          %v6317 = vsel %vm6316, %v6024, %v6315
          %vm6318 = vcmp.eq.f32.partialorder %v6024, 0.0
          %v6319 = vand.u32 %v6024, 2147483648
          %v6320 = vsel %vm6318, %v6319, %v6317
          %v6321 = vrsqrt.pop %v6025
          %v6322 = vmul.f32 %v6321, %v6025
          %v6323 = vmul.f32 %v6322, %v6321
          %v6324 = vmul.f32 0.5, %v6323
          %v6325 = vsub.f32 1.5, %v6324
          %v6326 = vmul.f32 %v6321, %v6325
          %v6327 = vmul.f32 %v6025, %v6326
          %vm6328 = vcmp.eq.f32.partialorder %v6025, inf
          %v6329 = vsel %vm6328, %v6025, %v6327
          %vm6330 = vcmp.eq.f32.partialorder %v6025, 0.0
          %v6331 = vand.u32 %v6025, 2147483648
          %v6332 = vsel %vm6330, %v6331, %v6329
          %v6333 = vrsqrt.pop %v6026
          %v6334 = vmul.f32 %v6333, %v6026
          %v6335 = vmul.f32 %v6334, %v6333
          %v6336 = vmul.f32 0.5, %v6335
          %v6337 = vsub.f32 1.5, %v6336
          %v6338 = vmul.f32 %v6333, %v6337
          %v6339 = vmul.f32 %v6026, %v6338
          %vm6340 = vcmp.eq.f32.partialorder %v6026, inf
          %v6341 = vsel %vm6340, %v6026, %v6339
          %vm6342 = vcmp.eq.f32.partialorder %v6026, 0.0
          %v6343 = vand.u32 %v6026, 2147483648
          %v6344 = vsel %vm6342, %v6343, %v6341
          %v6345 = vrsqrt.pop %v6027
          %v6346 = vmul.f32 %v6345, %v6027
          %v6347 = vmul.f32 %v6346, %v6345
          %v6348 = vmul.f32 0.5, %v6347
          %v6349 = vsub.f32 1.5, %v6348
          %v6350 = vmul.f32 %v6345, %v6349
          %v6351 = vmul.f32 %v6027, %v6350
          %vm6352 = vcmp.eq.f32.partialorder %v6027, inf
          %v6353 = vsel %vm6352, %v6027, %v6351
          %vm6354 = vcmp.eq.f32.partialorder %v6027, 0.0
          %v6355 = vand.u32 %v6027, 2147483648
          %v6356 = vsel %vm6354, %v6355, %v6353
          %v6357 = vrsqrt.pop %v6028
          %v6358 = vmul.f32 %v6357, %v6028
          %v6359 = vmul.f32 %v6358, %v6357
          %v6360 = vmul.f32 0.5, %v6359
          %v6361 = vsub.f32 1.5, %v6360
          %v6362 = vmul.f32 %v6357, %v6361
          %v6363 = vmul.f32 %v6028, %v6362
          %vm6364 = vcmp.eq.f32.partialorder %v6028, inf
          %v6365 = vsel %vm6364, %v6028, %v6363
          %vm6366 = vcmp.eq.f32.partialorder %v6028, 0.0
          %v6367 = vand.u32 %v6028, 2147483648
          %v6368 = vsel %vm6366, %v6367, %v6365
          %v6369 = vrsqrt.pop %v6029
          %v6370 = vmul.f32 %v6369, %v6029
          %v6371 = vmul.f32 %v6370, %v6369
          %v6372 = vmul.f32 0.5, %v6371
          %v6373 = vsub.f32 1.5, %v6372
          %v6374 = vmul.f32 %v6369, %v6373
          %v6375 = vmul.f32 %v6029, %v6374
          %vm6376 = vcmp.eq.f32.partialorder %v6029, inf
          %v6377 = vsel %vm6376, %v6029, %v6375
          %vm6378 = vcmp.eq.f32.partialorder %v6029, 0.0
          %v6379 = vand.u32 %v6029, 2147483648
          %v6380 = vsel %vm6378, %v6379, %v6377
          %v6381 = vrsqrt.pop %v6030
          %v6382 = vmul.f32 %v6381, %v6030
          %v6383 = vmul.f32 %v6382, %v6381
          %v6384 = vmul.f32 0.5, %v6383
          %v6385 = vsub.f32 1.5, %v6384
          %v6386 = vmul.f32 %v6381, %v6385
          %v6387 = vmul.f32 %v6030, %v6386
          %vm6388 = vcmp.eq.f32.partialorder %v6030, inf
          %v6389 = vsel %vm6388, %v6030, %v6387
          %vm6390 = vcmp.eq.f32.partialorder %v6030, 0.0
          %v6391 = vand.u32 %v6030, 2147483648
          %v6392 = vsel %vm6390, %v6391, %v6389
          %v6393 = vrsqrt.pop %v6031
          %v6394 = vmul.f32 %v6393, %v6031
          %v6395 = vmul.f32 %v6394, %v6393
          %v6396 = vmul.f32 0.5, %v6395
          %v6397 = vsub.f32 1.5, %v6396
          %v6398 = vmul.f32 %v6393, %v6397
          %v6399 = vmul.f32 %v6031, %v6398
          %vm6400 = vcmp.eq.f32.partialorder %v6031, inf
          %v6401 = vsel %vm6400, %v6031, %v6399
          %vm6402 = vcmp.eq.f32.partialorder %v6031, 0.0
          %v6403 = vand.u32 %v6031, 2147483648
          %v6404 = vsel %vm6402, %v6403, %v6401
          %v6405 = vrsqrt.pop %v6032
          %v6406 = vmul.f32 %v6405, %v6032
          %v6407 = vmul.f32 %v6406, %v6405
          %v6408 = vmul.f32 0.5, %v6407
          %v6409 = vsub.f32 1.5, %v6408
          %v6410 = vmul.f32 %v6405, %v6409
          %v6411 = vmul.f32 %v6032, %v6410
          %vm6412 = vcmp.eq.f32.partialorder %v6032, inf
          %v6413 = vsel %vm6412, %v6032, %v6411
          %vm6414 = vcmp.eq.f32.partialorder %v6032, 0.0
          %v6415 = vand.u32 %v6032, 2147483648
          %v6416 = vsel %vm6414, %v6415, %v6413
          %v6417 = vadd.f32 %v6044, 1e-08
          %v6418 = vadd.f32 %v6056, 1e-08
          %v6419 = vadd.f32 %v6068, 1e-08
          %v6420 = vadd.f32 %v6080, 1e-08
          %v6421 = vadd.f32 %v6092, 1e-08
          %v6422 = vadd.f32 %v6104, 1e-08
          %v6423 = vadd.f32 %v6116, 1e-08
          %v6424 = vadd.f32 %v6128, 1e-08
          %v6425 = vadd.f32 %v6140, 1e-08
          %v6426 = vadd.f32 %v6152, 1e-08
          %v6427 = vadd.f32 %v6164, 1e-08
          %v6428 = vadd.f32 %v6176, 1e-08
          %v6429 = vadd.f32 %v6188, 1e-08
          %v6430 = vadd.f32 %v6200, 1e-08
          %v6431 = vadd.f32 %v6212, 1e-08
          %v6432 = vadd.f32 %v6224, 1e-08
          %v6433 = vadd.f32 %v6236, 1e-08
          %v6434 = vadd.f32 %v6248, 1e-08
          %v6435 = vadd.f32 %v6260, 1e-08
          %v6436 = vadd.f32 %v6272, 1e-08
          %v6437 = vadd.f32 %v6284, 1e-08
          %v6438 = vadd.f32 %v6296, 1e-08
          %v6439 = vadd.f32 %v6308, 1e-08
          %v6440 = vadd.f32 %v6320, 1e-08
          %v6441 = vadd.f32 %v6332, 1e-08
          %v6442 = vadd.f32 %v6344, 1e-08
          %v6443 = vadd.f32 %v6356, 1e-08
          %v6444 = vadd.f32 %v6368, 1e-08
          %v6445 = vadd.f32 %v6380, 1e-08
          %v6446 = vadd.f32 %v6392, 1e-08
          %v6447 = vadd.f32 %v6404, 1e-08
          %v6448 = vadd.f32 %v6416, 1e-08
          %v6449 = vrcp.pop %v6417
          %v6450 = vrcp.pop %v6418
          %v6451 = vrcp.pop %v6419
          %v6452 = vrcp.pop %v6420
          %v6453 = vrcp.pop %v6421
          %v6454 = vrcp.pop %v6422
          %v6455 = vrcp.pop %v6423
          %v6456 = vrcp.pop %v6424
          %v6457 = vrcp.pop %v6425
          %v6458 = vrcp.pop %v6426
          %v6459 = vrcp.pop %v6427
          %v6460 = vrcp.pop %v6428
          %v6461 = vrcp.pop %v6429
          %v6462 = vrcp.pop %v6430
          %v6463 = vrcp.pop %v6431
          %v6464 = vrcp.pop %v6432
          %v6465 = vrcp.pop %v6433
          %v6466 = vrcp.pop %v6434
          %v6467 = vrcp.pop %v6435
          %v6468 = vrcp.pop %v6436
          %v6469 = vrcp.pop %v6437
          %v6470 = vrcp.pop %v6438
          %v6471 = vrcp.pop %v6439
          %v6472 = vrcp.pop %v6440
          %v6473 = vrcp.pop %v6441
          %v6474 = vrcp.pop %v6442
          %v6475 = vrcp.pop %v6443
          %v6476 = vrcp.pop %v6444
          %v6477 = vrcp.pop %v6445
          %v6478 = vrcp.pop %v6446
          %v6479 = vrcp.pop %v6447
          %v6480 = vrcp.pop %v6448
          %v6481 = vadd.f32 %v5489, %v5969
          %v6482 = vadd.f32 %v5490, %v5970
          %v6483 = vadd.f32 %v5491, %v5971
          %v6484 = vadd.f32 %v5492, %v5972
          %v6485 = vadd.f32 %v5493, %v5973
          %v6486 = vadd.f32 %v5494, %v5974
          %v6487 = vadd.f32 %v5495, %v5975
          %v6488 = vadd.f32 %v5496, %v5976
          %v6489 = vadd.f32 %v5497, %v5977
          %v6490 = vadd.f32 %v5498, %v5978
          %v6491 = vadd.f32 %v5499, %v5979
          %v6492 = vadd.f32 %v5500, %v5980
          %v6493 = vadd.f32 %v5501, %v5981
          %v6494 = vadd.f32 %v5502, %v5982
          %v6495 = vadd.f32 %v5503, %v5983
          %v6496 = vadd.f32 %v5504, %v5984
          %v6497 = vadd.f32 %v5505, %v5985
          %v6498 = vadd.f32 %v5506, %v5986
          %v6499 = vadd.f32 %v5507, %v5987
          %v6500 = vadd.f32 %v5508, %v5988
          %v6501 = vadd.f32 %v5509, %v5989
          %v6502 = vadd.f32 %v5510, %v5990
          %v6503 = vadd.f32 %v5511, %v5991
          %v6504 = vadd.f32 %v5512, %v5992
          %v6505 = vadd.f32 %v5513, %v5993
          %v6506 = vadd.f32 %v5514, %v5994
          %v6507 = vadd.f32 %v5515, %v5995
          %v6508 = vadd.f32 %v5516, %v5996
          %v6509 = vadd.f32 %v5517, %v5997
          %v6510 = vadd.f32 %v5518, %v5998
          %v6511 = vadd.f32 %v5519, %v5999
          %v6512 = vadd.f32 %v5520, %v6000
          %v6513 = vadd.f32 %v6481, %v6449
          %v6514 = vadd.f32 %v6482, %v6450
          %v6515 = vadd.f32 %v6483, %v6451
          %v6516 = vadd.f32 %v6484, %v6452
          %v6517 = vadd.f32 %v6485, %v6453
          %v6518 = vadd.f32 %v6486, %v6454
          %v6519 = vadd.f32 %v6487, %v6455
          %v6520 = vadd.f32 %v6488, %v6456
          %v6521 = vadd.f32 %v6489, %v6457
          %v6522 = vadd.f32 %v6490, %v6458
          %v6523 = vadd.f32 %v6491, %v6459
          %v6524 = vadd.f32 %v6492, %v6460
          %v6525 = vadd.f32 %v6493, %v6461
          %v6526 = vadd.f32 %v6494, %v6462
          %v6527 = vadd.f32 %v6495, %v6463
          %v6528 = vadd.f32 %v6496, %v6464
          %v6529 = vadd.f32 %v6497, %v6465
          %v6530 = vadd.f32 %v6498, %v6466
          %v6531 = vadd.f32 %v6499, %v6467
          %v6532 = vadd.f32 %v6500, %v6468
          %v6533 = vadd.f32 %v6501, %v6469
          %v6534 = vadd.f32 %v6502, %v6470
          %v6535 = vadd.f32 %v6503, %v6471
          %v6536 = vadd.f32 %v6504, %v6472
          %v6537 = vadd.f32 %v6505, %v6473
          %v6538 = vadd.f32 %v6506, %v6474
          %v6539 = vadd.f32 %v6507, %v6475
          %v6540 = vadd.f32 %v6508, %v6476
          %v6541 = vadd.f32 %v6509, %v6477
          %v6542 = vadd.f32 %v6510, %v6478
          %v6543 = vadd.f32 %v6511, %v6479
          %v6544 = vadd.f32 %v6512, %v6480
          %v6545 = vrcp.pop %v6513
          %v6546 = vrcp.pop %v6514
          %v6547 = vrcp.pop %v6515
          %v6548 = vrcp.pop %v6516
          %v6549 = vrcp.pop %v6517
          %v6550 = vrcp.pop %v6518
          %v6551 = vrcp.pop %v6519
          %v6552 = vrcp.pop %v6520
          %v6553 = vrcp.pop %v6521
          %v6554 = vrcp.pop %v6522
          %v6555 = vrcp.pop %v6523
          %v6556 = vrcp.pop %v6524
          %v6557 = vrcp.pop %v6525
          %v6558 = vrcp.pop %v6526
          %v6559 = vrcp.pop %v6527
          %v6560 = vrcp.pop %v6528
          %v6561 = vrcp.pop %v6529
          %v6562 = vrcp.pop %v6530
          %v6563 = vrcp.pop %v6531
          %v6564 = vrcp.pop %v6532
          %v6565 = vrcp.pop %v6533
          %v6566 = vrcp.pop %v6534
          %v6567 = vrcp.pop %v6535
          %v6568 = vrcp.pop %v6536
          %v6569 = vrcp.pop %v6537
          %v6570 = vrcp.pop %v6538
          %v6571 = vrcp.pop %v6539
          %v6572 = vrcp.pop %v6540
          %v6573 = vrcp.pop %v6541
          %v6574 = vrcp.pop %v6542
          %v6575 = vrcp.pop %v6543
          %v6576 = vrcp.pop %v6544
          %v6577 = vmul.f32 %v5489, %v6545
          %v6578 = vmul.f32 %v5490, %v6546
          %v6579 = vmul.f32 %v5491, %v6547
          %v6580 = vmul.f32 %v5492, %v6548
          %v6581 = vmul.f32 %v5493, %v6549
          %v6582 = vmul.f32 %v5494, %v6550
          %v6583 = vmul.f32 %v5495, %v6551
          %v6584 = vmul.f32 %v5496, %v6552
          %v6585 = vmul.f32 %v5497, %v6553
          %v6586 = vmul.f32 %v5498, %v6554
          %v6587 = vmul.f32 %v5499, %v6555
          %v6588 = vmul.f32 %v5500, %v6556
          %v6589 = vmul.f32 %v5501, %v6557
          %v6590 = vmul.f32 %v5502, %v6558
          %v6591 = vmul.f32 %v5503, %v6559
          %v6592 = vmul.f32 %v5504, %v6560
          %v6593 = vmul.f32 %v5505, %v6561
          %v6594 = vmul.f32 %v5506, %v6562
          %v6595 = vmul.f32 %v5507, %v6563
          %v6596 = vmul.f32 %v5508, %v6564
          %v6597 = vmul.f32 %v5509, %v6565
          %v6598 = vmul.f32 %v5510, %v6566
          %v6599 = vmul.f32 %v5511, %v6567
          %v6600 = vmul.f32 %v5512, %v6568
          %v6601 = vmul.f32 %v5513, %v6569
          %v6602 = vmul.f32 %v5514, %v6570
          %v6603 = vmul.f32 %v5515, %v6571
          %v6604 = vmul.f32 %v5516, %v6572
          %v6605 = vmul.f32 %v5517, %v6573
          %v6606 = vmul.f32 %v5518, %v6574
          %v6607 = vmul.f32 %v5519, %v6575
          %v6608 = vmul.f32 %v5520, %v6576
          %vm6609 = vcmask 7168
          %6610 = vst.msk [vmem:[#allocation2] sm:$0xff] %vm6609, %v6577
          %6611 = vst.msk [vmem:[#allocation2 + $0x8] sm:$0xff] %vm6609, %v6578
          %6612 = vst.msk [vmem:[#allocation2 + $0x10] sm:$0xff] %vm6609, %v6579
          %6613 = vst.msk [vmem:[#allocation2 + $0x18] sm:$0xff] %vm6609, %v6580
          %6614 = vst.msk [vmem:[#allocation2 + $0x20] sm:$0xff] %vm6609, %v6581
          %6615 = vst.msk [vmem:[#allocation2 + $0x28] sm:$0xff] %vm6609, %v6582
          %6616 = vst.msk [vmem:[#allocation2 + $0x30] sm:$0xff] %vm6609, %v6583
          %6617 = vst.msk [vmem:[#allocation2 + $0x38] sm:$0xff] %vm6609, %v6584
          %6618 = vst.msk [vmem:[#allocation2 + $0x40] sm:$0xff] %vm6609, %v6585
          %6619 = vst.msk [vmem:[#allocation2 + $0x48] sm:$0xff] %vm6609, %v6586
          %6620 = vst.msk [vmem:[#allocation2 + $0x50] sm:$0xff] %vm6609, %v6587
          %6621 = vst.msk [vmem:[#allocation2 + $0x58] sm:$0xff] %vm6609, %v6588
          %6622 = vst.msk [vmem:[#allocation2 + $0x60] sm:$0xff] %vm6609, %v6589
          %6623 = vst.msk [vmem:[#allocation2 + $0x68] sm:$0xff] %vm6609, %v6590
          %6624 = vst.msk [vmem:[#allocation2 + $0x70] sm:$0xff] %vm6609, %v6591
          %6625 = vst.msk [vmem:[#allocation2 + $0x78] sm:$0xff] %vm6609, %v6592
          %6626 = vst.msk [vmem:[#allocation2 + $0x80] sm:$0xff] %vm6609, %v6593
          %6627 = vst.msk [vmem:[#allocation2 + $0x88] sm:$0xff] %vm6609, %v6594
          %6628 = vst.msk [vmem:[#allocation2 + $0x90] sm:$0xff] %vm6609, %v6595
          %6629 = vst.msk [vmem:[#allocation2 + $0x98] sm:$0xff] %vm6609, %v6596
          %6630 = vst.msk [vmem:[#allocation2 + $0xa0] sm:$0xff] %vm6609, %v6597
          %6631 = vst.msk [vmem:[#allocation2 + $0xa8] sm:$0xff] %vm6609, %v6598
          %6632 = vst.msk [vmem:[#allocation2 + $0xb0] sm:$0xff] %vm6609, %v6599
          %6633 = vst.msk [vmem:[#allocation2 + $0xb8] sm:$0xff] %vm6609, %v6600
          %6634 = vst.msk [vmem:[#allocation2 + $0xc0] sm:$0xff] %vm6609, %v6601
          %6635 = vst.msk [vmem:[#allocation2 + $0xc8] sm:$0xff] %vm6609, %v6602
          %6636 = vst.msk [vmem:[#allocation2 + $0xd0] sm:$0xff] %vm6609, %v6603
          %6637 = vst.msk [vmem:[#allocation2 + $0xd8] sm:$0xff] %vm6609, %v6604
          %6638 = vst.msk [vmem:[#allocation2 + $0xe0] sm:$0xff] %vm6609, %v6605
          %6639 = vst.msk [vmem:[#allocation2 + $0xe8] sm:$0xff] %vm6609, %v6606
          %6640 = vst.msk [vmem:[#allocation2 + $0xf0] sm:$0xff] %vm6609, %v6607
          %6641 = vst.msk [vmem:[#allocation2 + $0xf8] sm:$0xff] %vm6609, %v6608
          %v6642 = vmul.f32 %v5969, %v6545
          %v6643 = vmul.f32 %v5970, %v6546
          %v6644 = vmul.f32 %v5971, %v6547
          %v6645 = vmul.f32 %v5972, %v6548
          %v6646 = vmul.f32 %v5973, %v6549
          %v6647 = vmul.f32 %v5974, %v6550
          %v6648 = vmul.f32 %v5975, %v6551
          %v6649 = vmul.f32 %v5976, %v6552
          %v6650 = vmul.f32 %v5977, %v6553
          %v6651 = vmul.f32 %v5978, %v6554
          %v6652 = vmul.f32 %v5979, %v6555
          %v6653 = vmul.f32 %v5980, %v6556
          %v6654 = vmul.f32 %v5981, %v6557
          %v6655 = vmul.f32 %v5982, %v6558
          %v6656 = vmul.f32 %v5983, %v6559
          %v6657 = vmul.f32 %v5984, %v6560
          %v6658 = vmul.f32 %v5985, %v6561
          %v6659 = vmul.f32 %v5986, %v6562
          %v6660 = vmul.f32 %v5987, %v6563
          %v6661 = vmul.f32 %v5988, %v6564
          %v6662 = vmul.f32 %v5989, %v6565
          %v6663 = vmul.f32 %v5990, %v6566
          %v6664 = vmul.f32 %v5991, %v6567
          %v6665 = vmul.f32 %v5992, %v6568
          %v6666 = vmul.f32 %v5993, %v6569
          %v6667 = vmul.f32 %v5994, %v6570
          %v6668 = vmul.f32 %v5995, %v6571
          %v6669 = vmul.f32 %v5996, %v6572
          %v6670 = vmul.f32 %v5997, %v6573
          %v6671 = vmul.f32 %v5998, %v6574
          %v6672 = vmul.f32 %v5999, %v6575
          %v6673 = vmul.f32 %v6000, %v6576
          %6674 = vst.msk [vmem:[#allocation3] sm:$0xff] %vm6609, %v6642
          %6675 = vst.msk [vmem:[#allocation3 + $0x8] sm:$0xff] %vm6609, %v6643
          %6676 = vst.msk [vmem:[#allocation3 + $0x10] sm:$0xff] %vm6609, %v6644
          %6677 = vst.msk [vmem:[#allocation3 + $0x18] sm:$0xff] %vm6609, %v6645
          %6678 = vst.msk [vmem:[#allocation3 + $0x20] sm:$0xff] %vm6609, %v6646
          %6679 = vst.msk [vmem:[#allocation3 + $0x28] sm:$0xff] %vm6609, %v6647
          %6680 = vst.msk [vmem:[#allocation3 + $0x30] sm:$0xff] %vm6609, %v6648
          %6681 = vst.msk [vmem:[#allocation3 + $0x38] sm:$0xff] %vm6609, %v6649
          %6682 = vst.msk [vmem:[#allocation3 + $0x40] sm:$0xff] %vm6609, %v6650
          %6683 = vst.msk [vmem:[#allocation3 + $0x48] sm:$0xff] %vm6609, %v6651
          %6684 = vst.msk [vmem:[#allocation3 + $0x50] sm:$0xff] %vm6609, %v6652
          %6685 = vst.msk [vmem:[#allocation3 + $0x58] sm:$0xff] %vm6609, %v6653
          %6686 = vst.msk [vmem:[#allocation3 + $0x60] sm:$0xff] %vm6609, %v6654
          %6687 = vst.msk [vmem:[#allocation3 + $0x68] sm:$0xff] %vm6609, %v6655
          %6688 = vst.msk [vmem:[#allocation3 + $0x70] sm:$0xff] %vm6609, %v6656
          %6689 = vst.msk [vmem:[#allocation3 + $0x78] sm:$0xff] %vm6609, %v6657
          %6690 = vst.msk [vmem:[#allocation3 + $0x80] sm:$0xff] %vm6609, %v6658
          %6691 = vst.msk [vmem:[#allocation3 + $0x88] sm:$0xff] %vm6609, %v6659
          %6692 = vst.msk [vmem:[#allocation3 + $0x90] sm:$0xff] %vm6609, %v6660
          %6693 = vst.msk [vmem:[#allocation3 + $0x98] sm:$0xff] %vm6609, %v6661
          %6694 = vst.msk [vmem:[#allocation3 + $0xa0] sm:$0xff] %vm6609, %v6662
          %6695 = vst.msk [vmem:[#allocation3 + $0xa8] sm:$0xff] %vm6609, %v6663
          %6696 = vst.msk [vmem:[#allocation3 + $0xb0] sm:$0xff] %vm6609, %v6664
          %6697 = vst.msk [vmem:[#allocation3 + $0xb8] sm:$0xff] %vm6609, %v6665
          %6698 = vst.msk [vmem:[#allocation3 + $0xc0] sm:$0xff] %vm6609, %v6666
          %6699 = vst.msk [vmem:[#allocation3 + $0xc8] sm:$0xff] %vm6609, %v6667
          %6700 = vst.msk [vmem:[#allocation3 + $0xd0] sm:$0xff] %vm6609, %v6668
          %6701 = vst.msk [vmem:[#allocation3 + $0xd8] sm:$0xff] %vm6609, %v6669
          %6702 = vst.msk [vmem:[#allocation3 + $0xe0] sm:$0xff] %vm6609, %v6670
          %6703 = vst.msk [vmem:[#allocation3 + $0xe8] sm:$0xff] %vm6609, %v6671
          %6704 = vst.msk [vmem:[#allocation3 + $0xf0] sm:$0xff] %vm6609, %v6672
          %6705 = vst.msk [vmem:[#allocation3 + $0xf8] sm:$0xff] %vm6609, %v6673
          %v6706 = vmul.f32 %v6449, %v6545
          %v6707 = vmul.f32 %v6450, %v6546
          %v6708 = vmul.f32 %v6451, %v6547
          %v6709 = vmul.f32 %v6452, %v6548
          %v6710 = vmul.f32 %v6453, %v6549
          %v6711 = vmul.f32 %v6454, %v6550
          %v6712 = vmul.f32 %v6455, %v6551
          %v6713 = vmul.f32 %v6456, %v6552
          %v6714 = vmul.f32 %v6457, %v6553
          %v6715 = vmul.f32 %v6458, %v6554
          %v6716 = vmul.f32 %v6459, %v6555
          %v6717 = vmul.f32 %v6460, %v6556
          %v6718 = vmul.f32 %v6461, %v6557
          %v6719 = vmul.f32 %v6462, %v6558
          %v6720 = vmul.f32 %v6463, %v6559
          %v6721 = vmul.f32 %v6464, %v6560
          %v6722 = vmul.f32 %v6465, %v6561
          %v6723 = vmul.f32 %v6466, %v6562
          %v6724 = vmul.f32 %v6467, %v6563
          %v6725 = vmul.f32 %v6468, %v6564
          %v6726 = vmul.f32 %v6469, %v6565
          %v6727 = vmul.f32 %v6470, %v6566
          %v6728 = vmul.f32 %v6471, %v6567
          %v6729 = vmul.f32 %v6472, %v6568
          %v6730 = vmul.f32 %v6473, %v6569
          %v6731 = vmul.f32 %v6474, %v6570
          %v6732 = vmul.f32 %v6475, %v6571
          %v6733 = vmul.f32 %v6476, %v6572
          %v6734 = vmul.f32 %v6477, %v6573
          %v6735 = vmul.f32 %v6478, %v6574
          %v6736 = vmul.f32 %v6479, %v6575
          %v6737 = vmul.f32 %v6480, %v6576
          %6738 = vst.msk [vmem:[#allocation4] sm:$0xff] %vm6609, %v6706
          %6739 = vst.msk [vmem:[#allocation4 + $0x8] sm:$0xff] %vm6609, %v6707
          %6740 = vst.msk [vmem:[#allocation4 + $0x10] sm:$0xff] %vm6609, %v6708
          %6741 = vst.msk [vmem:[#allocation4 + $0x18] sm:$0xff] %vm6609, %v6709
          %6742 = vst.msk [vmem:[#allocation4 + $0x20] sm:$0xff] %vm6609, %v6710
          %6743 = vst.msk [vmem:[#allocation4 + $0x28] sm:$0xff] %vm6609, %v6711
          %6744 = vst.msk [vmem:[#allocation4 + $0x30] sm:$0xff] %vm6609, %v6712
          %6745 = vst.msk [vmem:[#allocation4 + $0x38] sm:$0xff] %vm6609, %v6713
          %6746 = vst.msk [vmem:[#allocation4 + $0x40] sm:$0xff] %vm6609, %v6714
          %6747 = vst.msk [vmem:[#allocation4 + $0x48] sm:$0xff] %vm6609, %v6715
          %6748 = vst.msk [vmem:[#allocation4 + $0x50] sm:$0xff] %vm6609, %v6716
          %6749 = vst.msk [vmem:[#allocation4 + $0x58] sm:$0xff] %vm6609, %v6717
          %6750 = vst.msk [vmem:[#allocation4 + $0x60] sm:$0xff] %vm6609, %v6718
          %6751 = vst.msk [vmem:[#allocation4 + $0x68] sm:$0xff] %vm6609, %v6719
          %6752 = vst.msk [vmem:[#allocation4 + $0x70] sm:$0xff] %vm6609, %v6720
          %6753 = vst.msk [vmem:[#allocation4 + $0x78] sm:$0xff] %vm6609, %v6721
          %6754 = vst.msk [vmem:[#allocation4 + $0x80] sm:$0xff] %vm6609, %v6722
          %6755 = vst.msk [vmem:[#allocation4 + $0x88] sm:$0xff] %vm6609, %v6723
          %6756 = vst.msk [vmem:[#allocation4 + $0x90] sm:$0xff] %vm6609, %v6724
          %6757 = vst.msk [vmem:[#allocation4 + $0x98] sm:$0xff] %vm6609, %v6725
          %6758 = vst.msk [vmem:[#allocation4 + $0xa0] sm:$0xff] %vm6609, %v6726
          %6759 = vst.msk [vmem:[#allocation4 + $0xa8] sm:$0xff] %vm6609, %v6727
          %6760 = vst.msk [vmem:[#allocation4 + $0xb0] sm:$0xff] %vm6609, %v6728
          %6761 = vst.msk [vmem:[#allocation4 + $0xb8] sm:$0xff] %vm6609, %v6729
          %6762 = vst.msk [vmem:[#allocation4 + $0xc0] sm:$0xff] %vm6609, %v6730
          %6763 = vst.msk [vmem:[#allocation4 + $0xc8] sm:$0xff] %vm6609, %v6731
          %6764 = vst.msk [vmem:[#allocation4 + $0xd0] sm:$0xff] %vm6609, %v6732
          %6765 = vst.msk [vmem:[#allocation4 + $0xd8] sm:$0xff] %vm6609, %v6733
          %6766 = vst.msk [vmem:[#allocation4 + $0xe0] sm:$0xff] %vm6609, %v6734
          %6767 = vst.msk [vmem:[#allocation4 + $0xe8] sm:$0xff] %vm6609, %v6735
          %6768 = vst.msk [vmem:[#allocation4 + $0xf0] sm:$0xff] %vm6609, %v6736
          %6769 = vst.msk [vmem:[#allocation4 + $0xf8] sm:$0xff] %vm6609, %v6737
          %vm6770 = vcmask 261120
          %6771 = vst.msk [vmem:[#allocation8] sm:$0xff] %vm6770, 0.0
          %6772 = vst.msk [vmem:[#allocation8 + $0x8] sm:$0xff] %vm6770, 0.0
          %6773 = vst.msk [vmem:[#allocation8 + $0x10] sm:$0xff] %vm6770, 0.0
          %6774 = vst.msk [vmem:[#allocation8 + $0x18] sm:$0xff] %vm6770, 0.0
          %6775 = vst.msk [vmem:[#allocation8 + $0x20] sm:$0xff] %vm6770, 0.0
          %6776 = vst.msk [vmem:[#allocation8 + $0x28] sm:$0xff] %vm6770, 0.0
          %6777 = vst.msk [vmem:[#allocation8 + $0x30] sm:$0xff] %vm6770, 0.0
          %6778 = vst.msk [vmem:[#allocation8 + $0x38] sm:$0xff] %vm6770, 0.0
          %6779 = vst.msk [vmem:[#allocation8 + $0x40] sm:$0xff] %vm6770, 0.0
          %6780 = vst.msk [vmem:[#allocation8 + $0x48] sm:$0xff] %vm6770, 0.0
          %6781 = vst.msk [vmem:[#allocation8 + $0x50] sm:$0xff] %vm6770, 0.0
          %6782 = vst.msk [vmem:[#allocation8 + $0x58] sm:$0xff] %vm6770, 0.0
          %6783 = vst.msk [vmem:[#allocation8 + $0x60] sm:$0xff] %vm6770, 0.0
          %6784 = vst.msk [vmem:[#allocation8 + $0x68] sm:$0xff] %vm6770, 0.0
          %6785 = vst.msk [vmem:[#allocation8 + $0x70] sm:$0xff] %vm6770, 0.0
          %6786 = vst.msk [vmem:[#allocation8 + $0x78] sm:$0xff] %vm6770, 0.0
          %6787 = vst.msk [vmem:[#allocation8 + $0x80] sm:$0xff] %vm6770, 0.0
          %6788 = vst.msk [vmem:[#allocation8 + $0x88] sm:$0xff] %vm6770, 0.0
          %6789 = vst.msk [vmem:[#allocation8 + $0x90] sm:$0xff] %vm6770, 0.0
          %6790 = vst.msk [vmem:[#allocation8 + $0x98] sm:$0xff] %vm6770, 0.0
          %6791 = vst.msk [vmem:[#allocation8 + $0xa0] sm:$0xff] %vm6770, 0.0
          %6792 = vst.msk [vmem:[#allocation8 + $0xa8] sm:$0xff] %vm6770, 0.0
          %6793 = vst.msk [vmem:[#allocation8 + $0xb0] sm:$0xff] %vm6770, 0.0
          %6794 = vst.msk [vmem:[#allocation8 + $0xb8] sm:$0xff] %vm6770, 0.0
          %6795 = vst.msk [vmem:[#allocation8 + $0xc0] sm:$0xff] %vm6770, 0.0
          %6796 = vst.msk [vmem:[#allocation8 + $0xc8] sm:$0xff] %vm6770, 0.0
          %6797 = vst.msk [vmem:[#allocation8 + $0xd0] sm:$0xff] %vm6770, 0.0
          %6798 = vst.msk [vmem:[#allocation8 + $0xd8] sm:$0xff] %vm6770, 0.0
          %6799 = vst.msk [vmem:[#allocation8 + $0xe0] sm:$0xff] %vm6770, 0.0
          %6800 = vst.msk [vmem:[#allocation8 + $0xe8] sm:$0xff] %vm6770, 0.0
          %6801 = vst.msk [vmem:[#allocation8 + $0xf0] sm:$0xff] %vm6770, 0.0
          %6802 = vst.msk [vmem:[#allocation8 + $0xf8] sm:$0xff] %vm6770, 0.0
        $region76: #{tpu_custom_call.1} parent=63 // pred_fallthru
          _
        %p6803 = scmp.ge.s32.totalorder %s30, 3
        // Predicated region
        $region77: #{tpu_custom_call.1} parent=63 // pred_check
          %p6804 = pneg %p6803
        $region78: #{tpu_custom_call.1} parent=63 // pred_check_branch
          %6806 = sbr.rel (%p6804) target = $region80
        $region79: #{tpu_custom_call.1} parent=63 // pred_region
          %v6807 = vld [vmem:[%s534] sm:$0xf]
          %v6808 = vld [vmem:[%s534 + $0x4] sm:$0xf]
          %v6809 = vld [vmem:[%s534 + $0x8] sm:$0xf]
          %v6810 = vld [vmem:[%s534 + $0xc] sm:$0xf]
          %v6811 = vld [vmem:[%s534 + $0x10] sm:$0xf]
          %v6812 = vld [vmem:[%s534 + $0x14] sm:$0xf]
          %v6813 = vld [vmem:[%s534 + $0x18] sm:$0xf]
          %v6814 = vld [vmem:[%s534 + $0x1c] sm:$0xf]
          %v6815 = vld [vmem:[%s534 + $0x20] sm:$0xf]
          %v6816 = vld [vmem:[%s534 + $0x24] sm:$0xf]
          %v6817 = vld [vmem:[%s534 + $0x28] sm:$0xf]
          %v6818 = vld [vmem:[%s534 + $0x2c] sm:$0xf]
          %v6819 = vld [vmem:[%s534 + $0x30] sm:$0xf]
          %v6820 = vld [vmem:[%s534 + $0x34] sm:$0xf]
          %v6821 = vld [vmem:[%s534 + $0x38] sm:$0xf]
          %v6822 = vld [vmem:[%s534 + $0x3c] sm:$0xf]
          %s6823 = ssub.s32 %s30, 3
          %s6824 = smul.u32 %s6823, 128
          %v6825 = vlaneseq
          %v6826 = vand.u32 %v6825, 127
          %v6827 = vstv %s6824
          %v6828 = vadd.s32 %v6827, %v6826
          %v6829 = vld [vmem:[#allocation5] sm:$0xff]
          %v6830 = vld [vmem:[#allocation5 + $0x8] sm:$0xff]
          %v6831 = vld [vmem:[#allocation5 + $0x10] sm:$0xff]
          %v6832 = vld [vmem:[#allocation5 + $0x18] sm:$0xff]
          %v6833 = vld [vmem:[#allocation5 + $0x20] sm:$0xff]
          %v6834 = vld [vmem:[#allocation5 + $0x28] sm:$0xff]
          %v6835 = vld [vmem:[#allocation5 + $0x30] sm:$0xff]
          %v6836 = vld [vmem:[#allocation5 + $0x38] sm:$0xff]
          %v6837 = vld [vmem:[#allocation5 + $0x40] sm:$0xff]
          %v6838 = vld [vmem:[#allocation5 + $0x48] sm:$0xff]
          %v6839 = vld [vmem:[#allocation5 + $0x50] sm:$0xff]
          %v6840 = vld [vmem:[#allocation5 + $0x58] sm:$0xff]
          %v6841 = vld [vmem:[#allocation5 + $0x60] sm:$0xff]
          %v6842 = vld [vmem:[#allocation5 + $0x68] sm:$0xff]
          %v6843 = vld [vmem:[#allocation5 + $0x70] sm:$0xff]
          %v6844 = vld [vmem:[#allocation5 + $0x78] sm:$0xff]
          %v6845 = vld [vmem:[#allocation5 + $0x80] sm:$0xff]
          %v6846 = vld [vmem:[#allocation5 + $0x88] sm:$0xff]
          %v6847 = vld [vmem:[#allocation5 + $0x90] sm:$0xff]
          %v6848 = vld [vmem:[#allocation5 + $0x98] sm:$0xff]
          %v6849 = vld [vmem:[#allocation5 + $0xa0] sm:$0xff]
          %v6850 = vld [vmem:[#allocation5 + $0xa8] sm:$0xff]
          %v6851 = vld [vmem:[#allocation5 + $0xb0] sm:$0xff]
          %v6852 = vld [vmem:[#allocation5 + $0xb8] sm:$0xff]
          %v6853 = vld [vmem:[#allocation5 + $0xc0] sm:$0xff]
          %v6854 = vld [vmem:[#allocation5 + $0xc8] sm:$0xff]
          %v6855 = vld [vmem:[#allocation5 + $0xd0] sm:$0xff]
          %v6856 = vld [vmem:[#allocation5 + $0xd8] sm:$0xff]
          %v6857 = vld [vmem:[#allocation5 + $0xe0] sm:$0xff]
          %v6858 = vld [vmem:[#allocation5 + $0xe8] sm:$0xff]
          %v6859 = vld [vmem:[#allocation5 + $0xf0] sm:$0xff]
          %v6860 = vld [vmem:[#allocation5 + $0xf8] sm:$0xff]
          %6861 = vset.pattern.permute.xlu0 0
          %6862 = vperm.xlu0 %6861, %v6829
          %v6863 = vpop.permute.xlu0 %6862
          %6864 = vset.pattern.permute.xlu0 0
          %6865 = vperm.xlu0 %6864, %v6830
          %v6866 = vpop.permute.xlu0 %6865
          %6867 = vset.pattern.permute.xlu0 0
          %6868 = vperm.xlu0 %6867, %v6831
          %v6869 = vpop.permute.xlu0 %6868
          %6870 = vset.pattern.permute.xlu0 0
          %6871 = vperm.xlu0 %6870, %v6832
          %v6872 = vpop.permute.xlu0 %6871
          %6873 = vset.pattern.permute.xlu0 0
          %6874 = vperm.xlu0 %6873, %v6833
          %v6875 = vpop.permute.xlu0 %6874
          %6876 = vset.pattern.permute.xlu0 0
          %6877 = vperm.xlu0 %6876, %v6834
          %v6878 = vpop.permute.xlu0 %6877
          %6879 = vset.pattern.permute.xlu0 0
          %6880 = vperm.xlu0 %6879, %v6835
          %v6881 = vpop.permute.xlu0 %6880
          %6882 = vset.pattern.permute.xlu0 0
          %6883 = vperm.xlu0 %6882, %v6836
          %v6884 = vpop.permute.xlu0 %6883
          %6885 = vset.pattern.permute.xlu0 0
          %6886 = vperm.xlu0 %6885, %v6837
          %v6887 = vpop.permute.xlu0 %6886
          %6888 = vset.pattern.permute.xlu0 0
          %6889 = vperm.xlu0 %6888, %v6838
          %v6890 = vpop.permute.xlu0 %6889
          %6891 = vset.pattern.permute.xlu0 0
          %6892 = vperm.xlu0 %6891, %v6839
          %v6893 = vpop.permute.xlu0 %6892
          %6894 = vset.pattern.permute.xlu0 0
          %6895 = vperm.xlu0 %6894, %v6840
          %v6896 = vpop.permute.xlu0 %6895
          %6897 = vset.pattern.permute.xlu0 0
          %6898 = vperm.xlu0 %6897, %v6841
          %v6899 = vpop.permute.xlu0 %6898
          %6900 = vset.pattern.permute.xlu0 0
          %6901 = vperm.xlu0 %6900, %v6842
          %v6902 = vpop.permute.xlu0 %6901
          %6903 = vset.pattern.permute.xlu0 0
          %6904 = vperm.xlu0 %6903, %v6843
          %v6905 = vpop.permute.xlu0 %6904
          %6906 = vset.pattern.permute.xlu0 0
          %6907 = vperm.xlu0 %6906, %v6844
          %v6908 = vpop.permute.xlu0 %6907
          %6909 = vset.pattern.permute.xlu0 0
          %6910 = vperm.xlu0 %6909, %v6845
          %v6911 = vpop.permute.xlu0 %6910
          %6912 = vset.pattern.permute.xlu0 0
          %6913 = vperm.xlu0 %6912, %v6846
          %v6914 = vpop.permute.xlu0 %6913
          %6915 = vset.pattern.permute.xlu0 0
          %6916 = vperm.xlu0 %6915, %v6847
          %v6917 = vpop.permute.xlu0 %6916
          %6918 = vset.pattern.permute.xlu0 0
          %6919 = vperm.xlu0 %6918, %v6848
          %v6920 = vpop.permute.xlu0 %6919
          %6921 = vset.pattern.permute.xlu0 0
          %6922 = vperm.xlu0 %6921, %v6849
          %v6923 = vpop.permute.xlu0 %6922
          %6924 = vset.pattern.permute.xlu0 0
          %6925 = vperm.xlu0 %6924, %v6850
          %v6926 = vpop.permute.xlu0 %6925
          %6927 = vset.pattern.permute.xlu0 0
          %6928 = vperm.xlu0 %6927, %v6851
          %v6929 = vpop.permute.xlu0 %6928
          %6930 = vset.pattern.permute.xlu0 0
          %6931 = vperm.xlu0 %6930, %v6852
          %v6932 = vpop.permute.xlu0 %6931
          %6933 = vset.pattern.permute.xlu0 0
          %6934 = vperm.xlu0 %6933, %v6853
          %v6935 = vpop.permute.xlu0 %6934
          %6936 = vset.pattern.permute.xlu0 0
          %6937 = vperm.xlu0 %6936, %v6854
          %v6938 = vpop.permute.xlu0 %6937
          %6939 = vset.pattern.permute.xlu0 0
          %6940 = vperm.xlu0 %6939, %v6855
          %v6941 = vpop.permute.xlu0 %6940
          %6942 = vset.pattern.permute.xlu0 0
          %6943 = vperm.xlu0 %6942, %v6856
          %v6944 = vpop.permute.xlu0 %6943
          %6945 = vset.pattern.permute.xlu0 0
          %6946 = vperm.xlu0 %6945, %v6857
          %v6947 = vpop.permute.xlu0 %6946
          %6948 = vset.pattern.permute.xlu0 0
          %6949 = vperm.xlu0 %6948, %v6858
          %v6950 = vpop.permute.xlu0 %6949
          %6951 = vset.pattern.permute.xlu0 0
          %6952 = vperm.xlu0 %6951, %v6859
          %v6953 = vpop.permute.xlu0 %6952
          %6954 = vset.pattern.permute.xlu0 0
          %6955 = vperm.xlu0 %6954, %v6860
          %v6956 = vpop.permute.xlu0 %6955
          %vm6957 = vcmp.eq.s32.totalorder %v6828, %v6863
          %vm6958 = vcmp.eq.s32.totalorder %v6828, %v6866
          %vm6959 = vcmp.eq.s32.totalorder %v6828, %v6869
          %vm6960 = vcmp.eq.s32.totalorder %v6828, %v6872
          %vm6961 = vcmp.eq.s32.totalorder %v6828, %v6875
          %vm6962 = vcmp.eq.s32.totalorder %v6828, %v6878
          %vm6963 = vcmp.eq.s32.totalorder %v6828, %v6881
          %vm6964 = vcmp.eq.s32.totalorder %v6828, %v6884
          %vm6965 = vcmp.eq.s32.totalorder %v6828, %v6887
          %vm6966 = vcmp.eq.s32.totalorder %v6828, %v6890
          %vm6967 = vcmp.eq.s32.totalorder %v6828, %v6893
          %vm6968 = vcmp.eq.s32.totalorder %v6828, %v6896
          %vm6969 = vcmp.eq.s32.totalorder %v6828, %v6899
          %vm6970 = vcmp.eq.s32.totalorder %v6828, %v6902
          %vm6971 = vcmp.eq.s32.totalorder %v6828, %v6905
          %vm6972 = vcmp.eq.s32.totalorder %v6828, %v6908
          %vm6973 = vcmp.eq.s32.totalorder %v6828, %v6911
          %vm6974 = vcmp.eq.s32.totalorder %v6828, %v6914
          %vm6975 = vcmp.eq.s32.totalorder %v6828, %v6917
          %vm6976 = vcmp.eq.s32.totalorder %v6828, %v6920
          %vm6977 = vcmp.eq.s32.totalorder %v6828, %v6923
          %vm6978 = vcmp.eq.s32.totalorder %v6828, %v6926
          %vm6979 = vcmp.eq.s32.totalorder %v6828, %v6929
          %vm6980 = vcmp.eq.s32.totalorder %v6828, %v6932
          %vm6981 = vcmp.eq.s32.totalorder %v6828, %v6935
          %vm6982 = vcmp.eq.s32.totalorder %v6828, %v6938
          %vm6983 = vcmp.eq.s32.totalorder %v6828, %v6941
          %vm6984 = vcmp.eq.s32.totalorder %v6828, %v6944
          %vm6985 = vcmp.eq.s32.totalorder %v6828, %v6947
          %vm6986 = vcmp.eq.s32.totalorder %v6828, %v6950
          %vm6987 = vcmp.eq.s32.totalorder %v6828, %v6953
          %vm6988 = vcmp.eq.s32.totalorder %v6828, %v6956
          %v6989 = vld [vmem:[#allocation2] sm:$0xff]
          %v6990 = vld [vmem:[#allocation2 + $0x8] sm:$0xff]
          %v6991 = vld [vmem:[#allocation2 + $0x10] sm:$0xff]
          %v6992 = vld [vmem:[#allocation2 + $0x18] sm:$0xff]
          %v6993 = vld [vmem:[#allocation2 + $0x20] sm:$0xff]
          %v6994 = vld [vmem:[#allocation2 + $0x28] sm:$0xff]
          %v6995 = vld [vmem:[#allocation2 + $0x30] sm:$0xff]
          %v6996 = vld [vmem:[#allocation2 + $0x38] sm:$0xff]
          %v6997 = vld [vmem:[#allocation2 + $0x40] sm:$0xff]
          %v6998 = vld [vmem:[#allocation2 + $0x48] sm:$0xff]
          %v6999 = vld [vmem:[#allocation2 + $0x50] sm:$0xff]
          %v7000 = vld [vmem:[#allocation2 + $0x58] sm:$0xff]
          %v7001 = vld [vmem:[#allocation2 + $0x60] sm:$0xff]
          %v7002 = vld [vmem:[#allocation2 + $0x68] sm:$0xff]
          %v7003 = vld [vmem:[#allocation2 + $0x70] sm:$0xff]
          %v7004 = vld [vmem:[#allocation2 + $0x78] sm:$0xff]
          %v7005 = vld [vmem:[#allocation2 + $0x80] sm:$0xff]
          %v7006 = vld [vmem:[#allocation2 + $0x88] sm:$0xff]
          %v7007 = vld [vmem:[#allocation2 + $0x90] sm:$0xff]
          %v7008 = vld [vmem:[#allocation2 + $0x98] sm:$0xff]
          %v7009 = vld [vmem:[#allocation2 + $0xa0] sm:$0xff]
          %v7010 = vld [vmem:[#allocation2 + $0xa8] sm:$0xff]
          %v7011 = vld [vmem:[#allocation2 + $0xb0] sm:$0xff]
          %v7012 = vld [vmem:[#allocation2 + $0xb8] sm:$0xff]
          %v7013 = vld [vmem:[#allocation2 + $0xc0] sm:$0xff]
          %v7014 = vld [vmem:[#allocation2 + $0xc8] sm:$0xff]
          %v7015 = vld [vmem:[#allocation2 + $0xd0] sm:$0xff]
          %v7016 = vld [vmem:[#allocation2 + $0xd8] sm:$0xff]
          %v7017 = vld [vmem:[#allocation2 + $0xe0] sm:$0xff]
          %v7018 = vld [vmem:[#allocation2 + $0xe8] sm:$0xff]
          %v7019 = vld [vmem:[#allocation2 + $0xf0] sm:$0xff]
          %v7020 = vld [vmem:[#allocation2 + $0xf8] sm:$0xff]
          %7022 = vset.pattern.permute.xlu0 0
          %7023 = vperm.xlu0 %7022, %v6989
          %v7024 = vpop.permute.xlu0 %7023
          %7027 = vset.pattern.permute.xlu0 0
          %7028 = vperm.xlu0 %7027, %v6990
          %v7029 = vpop.permute.xlu0 %7028
          %7032 = vset.pattern.permute.xlu0 0
          %7033 = vperm.xlu0 %7032, %v6991
          %v7034 = vpop.permute.xlu0 %7033
          %7037 = vset.pattern.permute.xlu0 0
          %7038 = vperm.xlu0 %7037, %v6992
          %v7039 = vpop.permute.xlu0 %7038
          %7042 = vset.pattern.permute.xlu0 0
          %7043 = vperm.xlu0 %7042, %v6993
          %v7044 = vpop.permute.xlu0 %7043
          %7047 = vset.pattern.permute.xlu0 0
          %7048 = vperm.xlu0 %7047, %v6994
          %v7049 = vpop.permute.xlu0 %7048
          %7052 = vset.pattern.permute.xlu0 0
          %7053 = vperm.xlu0 %7052, %v6995
          %v7054 = vpop.permute.xlu0 %7053
          %7057 = vset.pattern.permute.xlu0 0
          %7058 = vperm.xlu0 %7057, %v6996
          %v7059 = vpop.permute.xlu0 %7058
          %7062 = vset.pattern.permute.xlu0 0
          %7063 = vperm.xlu0 %7062, %v6997
          %v7064 = vpop.permute.xlu0 %7063
          %7067 = vset.pattern.permute.xlu0 0
          %7068 = vperm.xlu0 %7067, %v6998
          %v7069 = vpop.permute.xlu0 %7068
          %7072 = vset.pattern.permute.xlu0 0
          %7073 = vperm.xlu0 %7072, %v6999
          %v7074 = vpop.permute.xlu0 %7073
          %7077 = vset.pattern.permute.xlu0 0
          %7078 = vperm.xlu0 %7077, %v7000
          %v7079 = vpop.permute.xlu0 %7078
          %7082 = vset.pattern.permute.xlu0 0
          %7083 = vperm.xlu0 %7082, %v7001
          %v7084 = vpop.permute.xlu0 %7083
          %7087 = vset.pattern.permute.xlu0 0
          %7088 = vperm.xlu0 %7087, %v7002
          %v7089 = vpop.permute.xlu0 %7088
          %7092 = vset.pattern.permute.xlu0 0
          %7093 = vperm.xlu0 %7092, %v7003
          %v7094 = vpop.permute.xlu0 %7093
          %7097 = vset.pattern.permute.xlu0 0
          %7098 = vperm.xlu0 %7097, %v7004
          %v7099 = vpop.permute.xlu0 %7098
          %7102 = vset.pattern.permute.xlu0 0
          %7103 = vperm.xlu0 %7102, %v7005
          %v7104 = vpop.permute.xlu0 %7103
          %7107 = vset.pattern.permute.xlu0 0
          %7108 = vperm.xlu0 %7107, %v7006
          %v7109 = vpop.permute.xlu0 %7108
          %7112 = vset.pattern.permute.xlu0 0
          %7113 = vperm.xlu0 %7112, %v7007
          %v7114 = vpop.permute.xlu0 %7113
          %7117 = vset.pattern.permute.xlu0 0
          %7118 = vperm.xlu0 %7117, %v7008
          %v7119 = vpop.permute.xlu0 %7118
          %7122 = vset.pattern.permute.xlu0 0
          %7123 = vperm.xlu0 %7122, %v7009
          %v7124 = vpop.permute.xlu0 %7123
          %7127 = vset.pattern.permute.xlu0 0
          %7128 = vperm.xlu0 %7127, %v7010
          %v7129 = vpop.permute.xlu0 %7128
          %7132 = vset.pattern.permute.xlu0 0
          %7133 = vperm.xlu0 %7132, %v7011
          %v7134 = vpop.permute.xlu0 %7133
          %7137 = vset.pattern.permute.xlu0 0
          %7138 = vperm.xlu0 %7137, %v7012
          %v7139 = vpop.permute.xlu0 %7138
          %7142 = vset.pattern.permute.xlu0 0
          %7143 = vperm.xlu0 %7142, %v7013
          %v7144 = vpop.permute.xlu0 %7143
          %7147 = vset.pattern.permute.xlu0 0
          %7148 = vperm.xlu0 %7147, %v7014
          %v7149 = vpop.permute.xlu0 %7148
          %7152 = vset.pattern.permute.xlu0 0
          %7153 = vperm.xlu0 %7152, %v7015
          %v7154 = vpop.permute.xlu0 %7153
          %7157 = vset.pattern.permute.xlu0 0
          %7158 = vperm.xlu0 %7157, %v7016
          %v7159 = vpop.permute.xlu0 %7158
          %7162 = vset.pattern.permute.xlu0 0
          %7163 = vperm.xlu0 %7162, %v7017
          %v7164 = vpop.permute.xlu0 %7163
          %7167 = vset.pattern.permute.xlu0 0
          %7168 = vperm.xlu0 %7167, %v7018
          %v7169 = vpop.permute.xlu0 %7168
          %7172 = vset.pattern.permute.xlu0 0
          %7173 = vperm.xlu0 %7172, %v7019
          %v7174 = vpop.permute.xlu0 %7173
          %7177 = vset.pattern.permute.xlu0 0
          %7178 = vperm.xlu0 %7177, %v7020
          %v7179 = vpop.permute.xlu0 %7178
          %v7181 = vsel %vm6957, %v7024, 0.0
          %v7182 = vsel %vm6958, %v7029, 0.0
          %v7183 = vsel %vm6959, %v7034, 0.0
          %v7184 = vsel %vm6960, %v7039, 0.0
          %v7185 = vsel %vm6961, %v7044, 0.0
          %v7186 = vsel %vm6962, %v7049, 0.0
          %v7187 = vsel %vm6963, %v7054, 0.0
          %v7188 = vsel %vm6964, %v7059, 0.0
          %v7189 = vsel %vm6965, %v7064, 0.0
          %v7190 = vsel %vm6966, %v7069, 0.0
          %v7191 = vsel %vm6967, %v7074, 0.0
          %v7192 = vsel %vm6968, %v7079, 0.0
          %v7193 = vsel %vm6969, %v7084, 0.0
          %v7194 = vsel %vm6970, %v7089, 0.0
          %v7195 = vsel %vm6971, %v7094, 0.0
          %v7196 = vsel %vm6972, %v7099, 0.0
          %v7197 = vsel %vm6973, %v7104, 0.0
          %v7198 = vsel %vm6974, %v7109, 0.0
          %v7199 = vsel %vm6975, %v7114, 0.0
          %v7200 = vsel %vm6976, %v7119, 0.0
          %v7201 = vsel %vm6977, %v7124, 0.0
          %v7202 = vsel %vm6978, %v7129, 0.0
          %v7203 = vsel %vm6979, %v7134, 0.0
          %v7204 = vsel %vm6980, %v7139, 0.0
          %v7205 = vsel %vm6981, %v7144, 0.0
          %v7206 = vsel %vm6982, %v7149, 0.0
          %v7207 = vsel %vm6983, %v7154, 0.0
          %v7208 = vsel %vm6984, %v7159, 0.0
          %v7209 = vsel %vm6985, %v7164, 0.0
          %v7210 = vsel %vm6986, %v7169, 0.0
          %v7211 = vsel %vm6987, %v7174, 0.0
          %v7212 = vsel %vm6988, %v7179, 0.0
          %v7213 = vld [vmem:[#allocation6] sm:$0xff]
          %v7214 = vld [vmem:[#allocation6 + $0x8] sm:$0xff]
          %v7215 = vld [vmem:[#allocation6 + $0x10] sm:$0xff]
          %v7216 = vld [vmem:[#allocation6 + $0x18] sm:$0xff]
          %v7217 = vld [vmem:[#allocation6 + $0x20] sm:$0xff]
          %v7218 = vld [vmem:[#allocation6 + $0x28] sm:$0xff]
          %v7219 = vld [vmem:[#allocation6 + $0x30] sm:$0xff]
          %v7220 = vld [vmem:[#allocation6 + $0x38] sm:$0xff]
          %v7221 = vld [vmem:[#allocation6 + $0x40] sm:$0xff]
          %v7222 = vld [vmem:[#allocation6 + $0x48] sm:$0xff]
          %v7223 = vld [vmem:[#allocation6 + $0x50] sm:$0xff]
          %v7224 = vld [vmem:[#allocation6 + $0x58] sm:$0xff]
          %v7225 = vld [vmem:[#allocation6 + $0x60] sm:$0xff]
          %v7226 = vld [vmem:[#allocation6 + $0x68] sm:$0xff]
          %v7227 = vld [vmem:[#allocation6 + $0x70] sm:$0xff]
          %v7228 = vld [vmem:[#allocation6 + $0x78] sm:$0xff]
          %v7229 = vld [vmem:[#allocation6 + $0x80] sm:$0xff]
          %v7230 = vld [vmem:[#allocation6 + $0x88] sm:$0xff]
          %v7231 = vld [vmem:[#allocation6 + $0x90] sm:$0xff]
          %v7232 = vld [vmem:[#allocation6 + $0x98] sm:$0xff]
          %v7233 = vld [vmem:[#allocation6 + $0xa0] sm:$0xff]
          %v7234 = vld [vmem:[#allocation6 + $0xa8] sm:$0xff]
          %v7235 = vld [vmem:[#allocation6 + $0xb0] sm:$0xff]
          %v7236 = vld [vmem:[#allocation6 + $0xb8] sm:$0xff]
          %v7237 = vld [vmem:[#allocation6 + $0xc0] sm:$0xff]
          %v7238 = vld [vmem:[#allocation6 + $0xc8] sm:$0xff]
          %v7239 = vld [vmem:[#allocation6 + $0xd0] sm:$0xff]
          %v7240 = vld [vmem:[#allocation6 + $0xd8] sm:$0xff]
          %v7241 = vld [vmem:[#allocation6 + $0xe0] sm:$0xff]
          %v7242 = vld [vmem:[#allocation6 + $0xe8] sm:$0xff]
          %v7243 = vld [vmem:[#allocation6 + $0xf0] sm:$0xff]
          %v7244 = vld [vmem:[#allocation6 + $0xf8] sm:$0xff]
          %7245 = vset.pattern.permute.xlu0 0
          %7246 = vperm.xlu0 %7245, %v7213
          %v7247 = vpop.permute.xlu0 %7246
          %7248 = vset.pattern.permute.xlu0 0
          %7249 = vperm.xlu0 %7248, %v7214
          %v7250 = vpop.permute.xlu0 %7249
          %7251 = vset.pattern.permute.xlu0 0
          %7252 = vperm.xlu0 %7251, %v7215
          %v7253 = vpop.permute.xlu0 %7252
          %7254 = vset.pattern.permute.xlu0 0
          %7255 = vperm.xlu0 %7254, %v7216
          %v7256 = vpop.permute.xlu0 %7255
          %7257 = vset.pattern.permute.xlu0 0
          %7258 = vperm.xlu0 %7257, %v7217
          %v7259 = vpop.permute.xlu0 %7258
          %7260 = vset.pattern.permute.xlu0 0
          %7261 = vperm.xlu0 %7260, %v7218
          %v7262 = vpop.permute.xlu0 %7261
          %7263 = vset.pattern.permute.xlu0 0
          %7264 = vperm.xlu0 %7263, %v7219
          %v7265 = vpop.permute.xlu0 %7264
          %7266 = vset.pattern.permute.xlu0 0
          %7267 = vperm.xlu0 %7266, %v7220
          %v7268 = vpop.permute.xlu0 %7267
          %7269 = vset.pattern.permute.xlu0 0
          %7270 = vperm.xlu0 %7269, %v7221
          %v7271 = vpop.permute.xlu0 %7270
          %7272 = vset.pattern.permute.xlu0 0
          %7273 = vperm.xlu0 %7272, %v7222
          %v7274 = vpop.permute.xlu0 %7273
          %7275 = vset.pattern.permute.xlu0 0
          %7276 = vperm.xlu0 %7275, %v7223
          %v7277 = vpop.permute.xlu0 %7276
          %7278 = vset.pattern.permute.xlu0 0
          %7279 = vperm.xlu0 %7278, %v7224
          %v7280 = vpop.permute.xlu0 %7279
          %7281 = vset.pattern.permute.xlu0 0
          %7282 = vperm.xlu0 %7281, %v7225
          %v7283 = vpop.permute.xlu0 %7282
          %7284 = vset.pattern.permute.xlu0 0
          %7285 = vperm.xlu0 %7284, %v7226
          %v7286 = vpop.permute.xlu0 %7285
          %7287 = vset.pattern.permute.xlu0 0
          %7288 = vperm.xlu0 %7287, %v7227
          %v7289 = vpop.permute.xlu0 %7288
          %7290 = vset.pattern.permute.xlu0 0
          %7291 = vperm.xlu0 %7290, %v7228
          %v7292 = vpop.permute.xlu0 %7291
          %7293 = vset.pattern.permute.xlu0 0
          %7294 = vperm.xlu0 %7293, %v7229
          %v7295 = vpop.permute.xlu0 %7294
          %7296 = vset.pattern.permute.xlu0 0
          %7297 = vperm.xlu0 %7296, %v7230
          %v7298 = vpop.permute.xlu0 %7297
          %7299 = vset.pattern.permute.xlu0 0
          %7300 = vperm.xlu0 %7299, %v7231
          %v7301 = vpop.permute.xlu0 %7300
          %7302 = vset.pattern.permute.xlu0 0
          %7303 = vperm.xlu0 %7302, %v7232
          %v7304 = vpop.permute.xlu0 %7303
          %7305 = vset.pattern.permute.xlu0 0
          %7306 = vperm.xlu0 %7305, %v7233
          %v7307 = vpop.permute.xlu0 %7306
          %7308 = vset.pattern.permute.xlu0 0
          %7309 = vperm.xlu0 %7308, %v7234
          %v7310 = vpop.permute.xlu0 %7309
          %7311 = vset.pattern.permute.xlu0 0
          %7312 = vperm.xlu0 %7311, %v7235
          %v7313 = vpop.permute.xlu0 %7312
          %7314 = vset.pattern.permute.xlu0 0
          %7315 = vperm.xlu0 %7314, %v7236
          %v7316 = vpop.permute.xlu0 %7315
          %7317 = vset.pattern.permute.xlu0 0
          %7318 = vperm.xlu0 %7317, %v7237
          %v7319 = vpop.permute.xlu0 %7318
          %7320 = vset.pattern.permute.xlu0 0
          %7321 = vperm.xlu0 %7320, %v7238
          %v7322 = vpop.permute.xlu0 %7321
          %7323 = vset.pattern.permute.xlu0 0
          %7324 = vperm.xlu0 %7323, %v7239
          %v7325 = vpop.permute.xlu0 %7324
          %7326 = vset.pattern.permute.xlu0 0
          %7327 = vperm.xlu0 %7326, %v7240
          %v7328 = vpop.permute.xlu0 %7327
          %7329 = vset.pattern.permute.xlu0 0
          %7330 = vperm.xlu0 %7329, %v7241
          %v7331 = vpop.permute.xlu0 %7330
          %7332 = vset.pattern.permute.xlu0 0
          %7333 = vperm.xlu0 %7332, %v7242
          %v7334 = vpop.permute.xlu0 %7333
          %7335 = vset.pattern.permute.xlu0 0
          %7336 = vperm.xlu0 %7335, %v7243
          %v7337 = vpop.permute.xlu0 %7336
          %7338 = vset.pattern.permute.xlu0 0
          %7339 = vperm.xlu0 %7338, %v7244
          %v7340 = vpop.permute.xlu0 %7339
          %vm7341 = vcmp.eq.s32.totalorder %v6828, %v7247
          %vm7342 = vcmp.eq.s32.totalorder %v6828, %v7250
          %vm7343 = vcmp.eq.s32.totalorder %v6828, %v7253
          %vm7344 = vcmp.eq.s32.totalorder %v6828, %v7256
          %vm7345 = vcmp.eq.s32.totalorder %v6828, %v7259
          %vm7346 = vcmp.eq.s32.totalorder %v6828, %v7262
          %vm7347 = vcmp.eq.s32.totalorder %v6828, %v7265
          %vm7348 = vcmp.eq.s32.totalorder %v6828, %v7268
          %vm7349 = vcmp.eq.s32.totalorder %v6828, %v7271
          %vm7350 = vcmp.eq.s32.totalorder %v6828, %v7274
          %vm7351 = vcmp.eq.s32.totalorder %v6828, %v7277
          %vm7352 = vcmp.eq.s32.totalorder %v6828, %v7280
          %vm7353 = vcmp.eq.s32.totalorder %v6828, %v7283
          %vm7354 = vcmp.eq.s32.totalorder %v6828, %v7286
          %vm7355 = vcmp.eq.s32.totalorder %v6828, %v7289
          %vm7356 = vcmp.eq.s32.totalorder %v6828, %v7292
          %vm7357 = vcmp.eq.s32.totalorder %v6828, %v7295
          %vm7358 = vcmp.eq.s32.totalorder %v6828, %v7298
          %vm7359 = vcmp.eq.s32.totalorder %v6828, %v7301
          %vm7360 = vcmp.eq.s32.totalorder %v6828, %v7304
          %vm7361 = vcmp.eq.s32.totalorder %v6828, %v7307
          %vm7362 = vcmp.eq.s32.totalorder %v6828, %v7310
          %vm7363 = vcmp.eq.s32.totalorder %v6828, %v7313
          %vm7364 = vcmp.eq.s32.totalorder %v6828, %v7316
          %vm7365 = vcmp.eq.s32.totalorder %v6828, %v7319
          %vm7366 = vcmp.eq.s32.totalorder %v6828, %v7322
          %vm7367 = vcmp.eq.s32.totalorder %v6828, %v7325
          %vm7368 = vcmp.eq.s32.totalorder %v6828, %v7328
          %vm7369 = vcmp.eq.s32.totalorder %v6828, %v7331
          %vm7370 = vcmp.eq.s32.totalorder %v6828, %v7334
          %vm7371 = vcmp.eq.s32.totalorder %v6828, %v7337
          %vm7372 = vcmp.eq.s32.totalorder %v6828, %v7340
          %v7373 = vld [vmem:[#allocation3] sm:$0xff]
          %v7374 = vld [vmem:[#allocation3 + $0x8] sm:$0xff]
          %v7375 = vld [vmem:[#allocation3 + $0x10] sm:$0xff]
          %v7376 = vld [vmem:[#allocation3 + $0x18] sm:$0xff]
          %v7377 = vld [vmem:[#allocation3 + $0x20] sm:$0xff]
          %v7378 = vld [vmem:[#allocation3 + $0x28] sm:$0xff]
          %v7379 = vld [vmem:[#allocation3 + $0x30] sm:$0xff]
          %v7380 = vld [vmem:[#allocation3 + $0x38] sm:$0xff]
          %v7381 = vld [vmem:[#allocation3 + $0x40] sm:$0xff]
          %v7382 = vld [vmem:[#allocation3 + $0x48] sm:$0xff]
          %v7383 = vld [vmem:[#allocation3 + $0x50] sm:$0xff]
          %v7384 = vld [vmem:[#allocation3 + $0x58] sm:$0xff]
          %v7385 = vld [vmem:[#allocation3 + $0x60] sm:$0xff]
          %v7386 = vld [vmem:[#allocation3 + $0x68] sm:$0xff]
          %v7387 = vld [vmem:[#allocation3 + $0x70] sm:$0xff]
          %v7388 = vld [vmem:[#allocation3 + $0x78] sm:$0xff]
          %v7389 = vld [vmem:[#allocation3 + $0x80] sm:$0xff]
          %v7390 = vld [vmem:[#allocation3 + $0x88] sm:$0xff]
          %v7391 = vld [vmem:[#allocation3 + $0x90] sm:$0xff]
          %v7392 = vld [vmem:[#allocation3 + $0x98] sm:$0xff]
          %v7393 = vld [vmem:[#allocation3 + $0xa0] sm:$0xff]
          %v7394 = vld [vmem:[#allocation3 + $0xa8] sm:$0xff]
          %v7395 = vld [vmem:[#allocation3 + $0xb0] sm:$0xff]
          %v7396 = vld [vmem:[#allocation3 + $0xb8] sm:$0xff]
          %v7397 = vld [vmem:[#allocation3 + $0xc0] sm:$0xff]
          %v7398 = vld [vmem:[#allocation3 + $0xc8] sm:$0xff]
          %v7399 = vld [vmem:[#allocation3 + $0xd0] sm:$0xff]
          %v7400 = vld [vmem:[#allocation3 + $0xd8] sm:$0xff]
          %v7401 = vld [vmem:[#allocation3 + $0xe0] sm:$0xff]
          %v7402 = vld [vmem:[#allocation3 + $0xe8] sm:$0xff]
          %v7403 = vld [vmem:[#allocation3 + $0xf0] sm:$0xff]
          %v7404 = vld [vmem:[#allocation3 + $0xf8] sm:$0xff]
          %7406 = vset.pattern.permute.xlu0 0
          %7407 = vperm.xlu0 %7406, %v7373
          %v7408 = vpop.permute.xlu0 %7407
          %7411 = vset.pattern.permute.xlu0 0
          %7412 = vperm.xlu0 %7411, %v7374
          %v7413 = vpop.permute.xlu0 %7412
          %7416 = vset.pattern.permute.xlu0 0
          %7417 = vperm.xlu0 %7416, %v7375
          %v7418 = vpop.permute.xlu0 %7417
          %7421 = vset.pattern.permute.xlu0 0
          %7422 = vperm.xlu0 %7421, %v7376
          %v7423 = vpop.permute.xlu0 %7422
          %7426 = vset.pattern.permute.xlu0 0
          %7427 = vperm.xlu0 %7426, %v7377
          %v7428 = vpop.permute.xlu0 %7427
          %7431 = vset.pattern.permute.xlu0 0
          %7432 = vperm.xlu0 %7431, %v7378
          %v7433 = vpop.permute.xlu0 %7432
          %7436 = vset.pattern.permute.xlu0 0
          %7437 = vperm.xlu0 %7436, %v7379
          %v7438 = vpop.permute.xlu0 %7437
          %7441 = vset.pattern.permute.xlu0 0
          %7442 = vperm.xlu0 %7441, %v7380
          %v7443 = vpop.permute.xlu0 %7442
          %7446 = vset.pattern.permute.xlu0 0
          %7447 = vperm.xlu0 %7446, %v7381
          %v7448 = vpop.permute.xlu0 %7447
          %7451 = vset.pattern.permute.xlu0 0
          %7452 = vperm.xlu0 %7451, %v7382
          %v7453 = vpop.permute.xlu0 %7452
          %7456 = vset.pattern.permute.xlu0 0
          %7457 = vperm.xlu0 %7456, %v7383
          %v7458 = vpop.permute.xlu0 %7457
          %7461 = vset.pattern.permute.xlu0 0
          %7462 = vperm.xlu0 %7461, %v7384
          %v7463 = vpop.permute.xlu0 %7462
          %7466 = vset.pattern.permute.xlu0 0
          %7467 = vperm.xlu0 %7466, %v7385
          %v7468 = vpop.permute.xlu0 %7467
          %7471 = vset.pattern.permute.xlu0 0
          %7472 = vperm.xlu0 %7471, %v7386
          %v7473 = vpop.permute.xlu0 %7472
          %7476 = vset.pattern.permute.xlu0 0
          %7477 = vperm.xlu0 %7476, %v7387
          %v7478 = vpop.permute.xlu0 %7477
          %7481 = vset.pattern.permute.xlu0 0
          %7482 = vperm.xlu0 %7481, %v7388
          %v7483 = vpop.permute.xlu0 %7482
          %7486 = vset.pattern.permute.xlu0 0
          %7487 = vperm.xlu0 %7486, %v7389
          %v7488 = vpop.permute.xlu0 %7487
          %7491 = vset.pattern.permute.xlu0 0
          %7492 = vperm.xlu0 %7491, %v7390
          %v7493 = vpop.permute.xlu0 %7492
          %7496 = vset.pattern.permute.xlu0 0
          %7497 = vperm.xlu0 %7496, %v7391
          %v7498 = vpop.permute.xlu0 %7497
          %7501 = vset.pattern.permute.xlu0 0
          %7502 = vperm.xlu0 %7501, %v7392
          %v7503 = vpop.permute.xlu0 %7502
          %7506 = vset.pattern.permute.xlu0 0
          %7507 = vperm.xlu0 %7506, %v7393
          %v7508 = vpop.permute.xlu0 %7507
          %7511 = vset.pattern.permute.xlu0 0
          %7512 = vperm.xlu0 %7511, %v7394
          %v7513 = vpop.permute.xlu0 %7512
          %7516 = vset.pattern.permute.xlu0 0
          %7517 = vperm.xlu0 %7516, %v7395
          %v7518 = vpop.permute.xlu0 %7517
          %7521 = vset.pattern.permute.xlu0 0
          %7522 = vperm.xlu0 %7521, %v7396
          %v7523 = vpop.permute.xlu0 %7522
          %7526 = vset.pattern.permute.xlu0 0
          %7527 = vperm.xlu0 %7526, %v7397
          %v7528 = vpop.permute.xlu0 %7527
          %7531 = vset.pattern.permute.xlu0 0
          %7532 = vperm.xlu0 %7531, %v7398
          %v7533 = vpop.permute.xlu0 %7532
          %7536 = vset.pattern.permute.xlu0 0
          %7537 = vperm.xlu0 %7536, %v7399
          %v7538 = vpop.permute.xlu0 %7537
          %7541 = vset.pattern.permute.xlu0 0
          %7542 = vperm.xlu0 %7541, %v7400
          %v7543 = vpop.permute.xlu0 %7542
          %7546 = vset.pattern.permute.xlu0 0
          %7547 = vperm.xlu0 %7546, %v7401
          %v7548 = vpop.permute.xlu0 %7547
          %7551 = vset.pattern.permute.xlu0 0
          %7552 = vperm.xlu0 %7551, %v7402
          %v7553 = vpop.permute.xlu0 %7552
          %7556 = vset.pattern.permute.xlu0 0
          %7557 = vperm.xlu0 %7556, %v7403
          %v7558 = vpop.permute.xlu0 %7557
          %7561 = vset.pattern.permute.xlu0 0
          %7562 = vperm.xlu0 %7561, %v7404
          %v7563 = vpop.permute.xlu0 %7562
          %v7565 = vsel %vm7341, %v7408, %v7181
          %v7566 = vsel %vm7342, %v7413, %v7182
          %v7567 = vsel %vm7343, %v7418, %v7183
          %v7568 = vsel %vm7344, %v7423, %v7184
          %v7569 = vsel %vm7345, %v7428, %v7185
          %v7570 = vsel %vm7346, %v7433, %v7186
          %v7571 = vsel %vm7347, %v7438, %v7187
          %v7572 = vsel %vm7348, %v7443, %v7188
          %v7573 = vsel %vm7349, %v7448, %v7189
          %v7574 = vsel %vm7350, %v7453, %v7190
          %v7575 = vsel %vm7351, %v7458, %v7191
          %v7576 = vsel %vm7352, %v7463, %v7192
          %v7577 = vsel %vm7353, %v7468, %v7193
          %v7578 = vsel %vm7354, %v7473, %v7194
          %v7579 = vsel %vm7355, %v7478, %v7195
          %v7580 = vsel %vm7356, %v7483, %v7196
          %v7581 = vsel %vm7357, %v7488, %v7197
          %v7582 = vsel %vm7358, %v7493, %v7198
          %v7583 = vsel %vm7359, %v7498, %v7199
          %v7584 = vsel %vm7360, %v7503, %v7200
          %v7585 = vsel %vm7361, %v7508, %v7201
          %v7586 = vsel %vm7362, %v7513, %v7202
          %v7587 = vsel %vm7363, %v7518, %v7203
          %v7588 = vsel %vm7364, %v7523, %v7204
          %v7589 = vsel %vm7365, %v7528, %v7205
          %v7590 = vsel %vm7366, %v7533, %v7206
          %v7591 = vsel %vm7367, %v7538, %v7207
          %v7592 = vsel %vm7368, %v7543, %v7208
          %v7593 = vsel %vm7369, %v7548, %v7209
          %v7594 = vsel %vm7370, %v7553, %v7210
          %v7595 = vsel %vm7371, %v7558, %v7211
          %v7596 = vsel %vm7372, %v7563, %v7212
          %v7597 = vld [vmem:[#allocation7] sm:$0xff]
          %v7598 = vld [vmem:[#allocation7 + $0x8] sm:$0xff]
          %v7599 = vld [vmem:[#allocation7 + $0x10] sm:$0xff]
          %v7600 = vld [vmem:[#allocation7 + $0x18] sm:$0xff]
          %v7601 = vld [vmem:[#allocation7 + $0x20] sm:$0xff]
          %v7602 = vld [vmem:[#allocation7 + $0x28] sm:$0xff]
          %v7603 = vld [vmem:[#allocation7 + $0x30] sm:$0xff]
          %v7604 = vld [vmem:[#allocation7 + $0x38] sm:$0xff]
          %v7605 = vld [vmem:[#allocation7 + $0x40] sm:$0xff]
          %v7606 = vld [vmem:[#allocation7 + $0x48] sm:$0xff]
          %v7607 = vld [vmem:[#allocation7 + $0x50] sm:$0xff]
          %v7608 = vld [vmem:[#allocation7 + $0x58] sm:$0xff]
          %v7609 = vld [vmem:[#allocation7 + $0x60] sm:$0xff]
          %v7610 = vld [vmem:[#allocation7 + $0x68] sm:$0xff]
          %v7611 = vld [vmem:[#allocation7 + $0x70] sm:$0xff]
          %v7612 = vld [vmem:[#allocation7 + $0x78] sm:$0xff]
          %v7613 = vld [vmem:[#allocation7 + $0x80] sm:$0xff]
          %v7614 = vld [vmem:[#allocation7 + $0x88] sm:$0xff]
          %v7615 = vld [vmem:[#allocation7 + $0x90] sm:$0xff]
          %v7616 = vld [vmem:[#allocation7 + $0x98] sm:$0xff]
          %v7617 = vld [vmem:[#allocation7 + $0xa0] sm:$0xff]
          %v7618 = vld [vmem:[#allocation7 + $0xa8] sm:$0xff]
          %v7619 = vld [vmem:[#allocation7 + $0xb0] sm:$0xff]
          %v7620 = vld [vmem:[#allocation7 + $0xb8] sm:$0xff]
          %v7621 = vld [vmem:[#allocation7 + $0xc0] sm:$0xff]
          %v7622 = vld [vmem:[#allocation7 + $0xc8] sm:$0xff]
          %v7623 = vld [vmem:[#allocation7 + $0xd0] sm:$0xff]
          %v7624 = vld [vmem:[#allocation7 + $0xd8] sm:$0xff]
          %v7625 = vld [vmem:[#allocation7 + $0xe0] sm:$0xff]
          %v7626 = vld [vmem:[#allocation7 + $0xe8] sm:$0xff]
          %v7627 = vld [vmem:[#allocation7 + $0xf0] sm:$0xff]
          %v7628 = vld [vmem:[#allocation7 + $0xf8] sm:$0xff]
          %7629 = vset.pattern.permute.xlu0 0
          %7630 = vperm.xlu0 %7629, %v7597
          %v7631 = vpop.permute.xlu0 %7630
          %7632 = vset.pattern.permute.xlu0 0
          %7633 = vperm.xlu0 %7632, %v7598
          %v7634 = vpop.permute.xlu0 %7633
          %7635 = vset.pattern.permute.xlu0 0
          %7636 = vperm.xlu0 %7635, %v7599
          %v7637 = vpop.permute.xlu0 %7636
          %7638 = vset.pattern.permute.xlu0 0
          %7639 = vperm.xlu0 %7638, %v7600
          %v7640 = vpop.permute.xlu0 %7639
          %7641 = vset.pattern.permute.xlu0 0
          %7642 = vperm.xlu0 %7641, %v7601
          %v7643 = vpop.permute.xlu0 %7642
          %7644 = vset.pattern.permute.xlu0 0
          %7645 = vperm.xlu0 %7644, %v7602
          %v7646 = vpop.permute.xlu0 %7645
          %7647 = vset.pattern.permute.xlu0 0
          %7648 = vperm.xlu0 %7647, %v7603
          %v7649 = vpop.permute.xlu0 %7648
          %7650 = vset.pattern.permute.xlu0 0
          %7651 = vperm.xlu0 %7650, %v7604
          %v7652 = vpop.permute.xlu0 %7651
          %7653 = vset.pattern.permute.xlu0 0
          %7654 = vperm.xlu0 %7653, %v7605
          %v7655 = vpop.permute.xlu0 %7654
          %7656 = vset.pattern.permute.xlu0 0
          %7657 = vperm.xlu0 %7656, %v7606
          %v7658 = vpop.permute.xlu0 %7657
          %7659 = vset.pattern.permute.xlu0 0
          %7660 = vperm.xlu0 %7659, %v7607
          %v7661 = vpop.permute.xlu0 %7660
          %7662 = vset.pattern.permute.xlu0 0
          %7663 = vperm.xlu0 %7662, %v7608
          %v7664 = vpop.permute.xlu0 %7663
          %7665 = vset.pattern.permute.xlu0 0
          %7666 = vperm.xlu0 %7665, %v7609
          %v7667 = vpop.permute.xlu0 %7666
          %7668 = vset.pattern.permute.xlu0 0
          %7669 = vperm.xlu0 %7668, %v7610
          %v7670 = vpop.permute.xlu0 %7669
          %7671 = vset.pattern.permute.xlu0 0
          %7672 = vperm.xlu0 %7671, %v7611
          %v7673 = vpop.permute.xlu0 %7672
          %7674 = vset.pattern.permute.xlu0 0
          %7675 = vperm.xlu0 %7674, %v7612
          %v7676 = vpop.permute.xlu0 %7675
          %7677 = vset.pattern.permute.xlu0 0
          %7678 = vperm.xlu0 %7677, %v7613
          %v7679 = vpop.permute.xlu0 %7678
          %7680 = vset.pattern.permute.xlu0 0
          %7681 = vperm.xlu0 %7680, %v7614
          %v7682 = vpop.permute.xlu0 %7681
          %7683 = vset.pattern.permute.xlu0 0
          %7684 = vperm.xlu0 %7683, %v7615
          %v7685 = vpop.permute.xlu0 %7684
          %7686 = vset.pattern.permute.xlu0 0
          %7687 = vperm.xlu0 %7686, %v7616
          %v7688 = vpop.permute.xlu0 %7687
          %7689 = vset.pattern.permute.xlu0 0
          %7690 = vperm.xlu0 %7689, %v7617
          %v7691 = vpop.permute.xlu0 %7690
          %7692 = vset.pattern.permute.xlu0 0
          %7693 = vperm.xlu0 %7692, %v7618
          %v7694 = vpop.permute.xlu0 %7693
          %7695 = vset.pattern.permute.xlu0 0
          %7696 = vperm.xlu0 %7695, %v7619
          %v7697 = vpop.permute.xlu0 %7696
          %7698 = vset.pattern.permute.xlu0 0
          %7699 = vperm.xlu0 %7698, %v7620
          %v7700 = vpop.permute.xlu0 %7699
          %7701 = vset.pattern.permute.xlu0 0
          %7702 = vperm.xlu0 %7701, %v7621
          %v7703 = vpop.permute.xlu0 %7702
          %7704 = vset.pattern.permute.xlu0 0
          %7705 = vperm.xlu0 %7704, %v7622
          %v7706 = vpop.permute.xlu0 %7705
          %7707 = vset.pattern.permute.xlu0 0
          %7708 = vperm.xlu0 %7707, %v7623
          %v7709 = vpop.permute.xlu0 %7708
          %7710 = vset.pattern.permute.xlu0 0
          %7711 = vperm.xlu0 %7710, %v7624
          %v7712 = vpop.permute.xlu0 %7711
          %7713 = vset.pattern.permute.xlu0 0
          %7714 = vperm.xlu0 %7713, %v7625
          %v7715 = vpop.permute.xlu0 %7714
          %7716 = vset.pattern.permute.xlu0 0
          %7717 = vperm.xlu0 %7716, %v7626
          %v7718 = vpop.permute.xlu0 %7717
          %7719 = vset.pattern.permute.xlu0 0
          %7720 = vperm.xlu0 %7719, %v7627
          %v7721 = vpop.permute.xlu0 %7720
          %7722 = vset.pattern.permute.xlu0 0
          %7723 = vperm.xlu0 %7722, %v7628
          %v7724 = vpop.permute.xlu0 %7723
          %vm7725 = vcmp.eq.s32.totalorder %v6828, %v7631
          %vm7726 = vcmp.eq.s32.totalorder %v6828, %v7634
          %vm7727 = vcmp.eq.s32.totalorder %v6828, %v7637
          %vm7728 = vcmp.eq.s32.totalorder %v6828, %v7640
          %vm7729 = vcmp.eq.s32.totalorder %v6828, %v7643
          %vm7730 = vcmp.eq.s32.totalorder %v6828, %v7646
          %vm7731 = vcmp.eq.s32.totalorder %v6828, %v7649
          %vm7732 = vcmp.eq.s32.totalorder %v6828, %v7652
          %vm7733 = vcmp.eq.s32.totalorder %v6828, %v7655
          %vm7734 = vcmp.eq.s32.totalorder %v6828, %v7658
          %vm7735 = vcmp.eq.s32.totalorder %v6828, %v7661
          %vm7736 = vcmp.eq.s32.totalorder %v6828, %v7664
          %vm7737 = vcmp.eq.s32.totalorder %v6828, %v7667
          %vm7738 = vcmp.eq.s32.totalorder %v6828, %v7670
          %vm7739 = vcmp.eq.s32.totalorder %v6828, %v7673
          %vm7740 = vcmp.eq.s32.totalorder %v6828, %v7676
          %vm7741 = vcmp.eq.s32.totalorder %v6828, %v7679
          %vm7742 = vcmp.eq.s32.totalorder %v6828, %v7682
          %vm7743 = vcmp.eq.s32.totalorder %v6828, %v7685
          %vm7744 = vcmp.eq.s32.totalorder %v6828, %v7688
          %vm7745 = vcmp.eq.s32.totalorder %v6828, %v7691
          %vm7746 = vcmp.eq.s32.totalorder %v6828, %v7694
          %vm7747 = vcmp.eq.s32.totalorder %v6828, %v7697
          %vm7748 = vcmp.eq.s32.totalorder %v6828, %v7700
          %vm7749 = vcmp.eq.s32.totalorder %v6828, %v7703
          %vm7750 = vcmp.eq.s32.totalorder %v6828, %v7706
          %vm7751 = vcmp.eq.s32.totalorder %v6828, %v7709
          %vm7752 = vcmp.eq.s32.totalorder %v6828, %v7712
          %vm7753 = vcmp.eq.s32.totalorder %v6828, %v7715
          %vm7754 = vcmp.eq.s32.totalorder %v6828, %v7718
          %vm7755 = vcmp.eq.s32.totalorder %v6828, %v7721
          %vm7756 = vcmp.eq.s32.totalorder %v6828, %v7724
          %v7757 = vld [vmem:[#allocation4] sm:$0xff]
          %v7758 = vld [vmem:[#allocation4 + $0x8] sm:$0xff]
          %v7759 = vld [vmem:[#allocation4 + $0x10] sm:$0xff]
          %v7760 = vld [vmem:[#allocation4 + $0x18] sm:$0xff]
          %v7761 = vld [vmem:[#allocation4 + $0x20] sm:$0xff]
          %v7762 = vld [vmem:[#allocation4 + $0x28] sm:$0xff]
          %v7763 = vld [vmem:[#allocation4 + $0x30] sm:$0xff]
          %v7764 = vld [vmem:[#allocation4 + $0x38] sm:$0xff]
          %v7765 = vld [vmem:[#allocation4 + $0x40] sm:$0xff]
          %v7766 = vld [vmem:[#allocation4 + $0x48] sm:$0xff]
          %v7767 = vld [vmem:[#allocation4 + $0x50] sm:$0xff]
          %v7768 = vld [vmem:[#allocation4 + $0x58] sm:$0xff]
          %v7769 = vld [vmem:[#allocation4 + $0x60] sm:$0xff]
          %v7770 = vld [vmem:[#allocation4 + $0x68] sm:$0xff]
          %v7771 = vld [vmem:[#allocation4 + $0x70] sm:$0xff]
          %v7772 = vld [vmem:[#allocation4 + $0x78] sm:$0xff]
          %v7773 = vld [vmem:[#allocation4 + $0x80] sm:$0xff]
          %v7774 = vld [vmem:[#allocation4 + $0x88] sm:$0xff]
          %v7775 = vld [vmem:[#allocation4 + $0x90] sm:$0xff]
          %v7776 = vld [vmem:[#allocation4 + $0x98] sm:$0xff]
          %v7777 = vld [vmem:[#allocation4 + $0xa0] sm:$0xff]
          %v7778 = vld [vmem:[#allocation4 + $0xa8] sm:$0xff]
          %v7779 = vld [vmem:[#allocation4 + $0xb0] sm:$0xff]
          %v7780 = vld [vmem:[#allocation4 + $0xb8] sm:$0xff]
          %v7781 = vld [vmem:[#allocation4 + $0xc0] sm:$0xff]
          %v7782 = vld [vmem:[#allocation4 + $0xc8] sm:$0xff]
          %v7783 = vld [vmem:[#allocation4 + $0xd0] sm:$0xff]
          %v7784 = vld [vmem:[#allocation4 + $0xd8] sm:$0xff]
          %v7785 = vld [vmem:[#allocation4 + $0xe0] sm:$0xff]
          %v7786 = vld [vmem:[#allocation4 + $0xe8] sm:$0xff]
          %v7787 = vld [vmem:[#allocation4 + $0xf0] sm:$0xff]
          %v7788 = vld [vmem:[#allocation4 + $0xf8] sm:$0xff]
          %7790 = vset.pattern.permute.xlu0 0
          %7791 = vperm.xlu0 %7790, %v7757
          %v7792 = vpop.permute.xlu0 %7791
          %7795 = vset.pattern.permute.xlu0 0
          %7796 = vperm.xlu0 %7795, %v7758
          %v7797 = vpop.permute.xlu0 %7796
          %7800 = vset.pattern.permute.xlu0 0
          %7801 = vperm.xlu0 %7800, %v7759
          %v7802 = vpop.permute.xlu0 %7801
          %7805 = vset.pattern.permute.xlu0 0
          %7806 = vperm.xlu0 %7805, %v7760
          %v7807 = vpop.permute.xlu0 %7806
          %7810 = vset.pattern.permute.xlu0 0
          %7811 = vperm.xlu0 %7810, %v7761
          %v7812 = vpop.permute.xlu0 %7811
          %7815 = vset.pattern.permute.xlu0 0
          %7816 = vperm.xlu0 %7815, %v7762
          %v7817 = vpop.permute.xlu0 %7816
          %7820 = vset.pattern.permute.xlu0 0
          %7821 = vperm.xlu0 %7820, %v7763
          %v7822 = vpop.permute.xlu0 %7821
          %7825 = vset.pattern.permute.xlu0 0
          %7826 = vperm.xlu0 %7825, %v7764
          %v7827 = vpop.permute.xlu0 %7826
          %7830 = vset.pattern.permute.xlu0 0
          %7831 = vperm.xlu0 %7830, %v7765
          %v7832 = vpop.permute.xlu0 %7831
          %7835 = vset.pattern.permute.xlu0 0
          %7836 = vperm.xlu0 %7835, %v7766
          %v7837 = vpop.permute.xlu0 %7836
          %7840 = vset.pattern.permute.xlu0 0
          %7841 = vperm.xlu0 %7840, %v7767
          %v7842 = vpop.permute.xlu0 %7841
          %7845 = vset.pattern.permute.xlu0 0
          %7846 = vperm.xlu0 %7845, %v7768
          %v7847 = vpop.permute.xlu0 %7846
          %7850 = vset.pattern.permute.xlu0 0
          %7851 = vperm.xlu0 %7850, %v7769
          %v7852 = vpop.permute.xlu0 %7851
          %7855 = vset.pattern.permute.xlu0 0
          %7856 = vperm.xlu0 %7855, %v7770
          %v7857 = vpop.permute.xlu0 %7856
          %7860 = vset.pattern.permute.xlu0 0
          %7861 = vperm.xlu0 %7860, %v7771
          %v7862 = vpop.permute.xlu0 %7861
          %7865 = vset.pattern.permute.xlu0 0
          %7866 = vperm.xlu0 %7865, %v7772
          %v7867 = vpop.permute.xlu0 %7866
          %7870 = vset.pattern.permute.xlu0 0
          %7871 = vperm.xlu0 %7870, %v7773
          %v7872 = vpop.permute.xlu0 %7871
          %7875 = vset.pattern.permute.xlu0 0
          %7876 = vperm.xlu0 %7875, %v7774
          %v7877 = vpop.permute.xlu0 %7876
          %7880 = vset.pattern.permute.xlu0 0
          %7881 = vperm.xlu0 %7880, %v7775
          %v7882 = vpop.permute.xlu0 %7881
          %7885 = vset.pattern.permute.xlu0 0
          %7886 = vperm.xlu0 %7885, %v7776
          %v7887 = vpop.permute.xlu0 %7886
          %7890 = vset.pattern.permute.xlu0 0
          %7891 = vperm.xlu0 %7890, %v7777
          %v7892 = vpop.permute.xlu0 %7891
          %7895 = vset.pattern.permute.xlu0 0
          %7896 = vperm.xlu0 %7895, %v7778
          %v7897 = vpop.permute.xlu0 %7896
          %7900 = vset.pattern.permute.xlu0 0
          %7901 = vperm.xlu0 %7900, %v7779
          %v7902 = vpop.permute.xlu0 %7901
          %7905 = vset.pattern.permute.xlu0 0
          %7906 = vperm.xlu0 %7905, %v7780
          %v7907 = vpop.permute.xlu0 %7906
          %7910 = vset.pattern.permute.xlu0 0
          %7911 = vperm.xlu0 %7910, %v7781
          %v7912 = vpop.permute.xlu0 %7911
          %7915 = vset.pattern.permute.xlu0 0
          %7916 = vperm.xlu0 %7915, %v7782
          %v7917 = vpop.permute.xlu0 %7916
          %7920 = vset.pattern.permute.xlu0 0
          %7921 = vperm.xlu0 %7920, %v7783
          %v7922 = vpop.permute.xlu0 %7921
          %7925 = vset.pattern.permute.xlu0 0
          %7926 = vperm.xlu0 %7925, %v7784
          %v7927 = vpop.permute.xlu0 %7926
          %7930 = vset.pattern.permute.xlu0 0
          %7931 = vperm.xlu0 %7930, %v7785
          %v7932 = vpop.permute.xlu0 %7931
          %7935 = vset.pattern.permute.xlu0 0
          %7936 = vperm.xlu0 %7935, %v7786
          %v7937 = vpop.permute.xlu0 %7936
          %7940 = vset.pattern.permute.xlu0 0
          %7941 = vperm.xlu0 %7940, %v7787
          %v7942 = vpop.permute.xlu0 %7941
          %7945 = vset.pattern.permute.xlu0 0
          %7946 = vperm.xlu0 %7945, %v7788
          %v7947 = vpop.permute.xlu0 %7946
          %v7949 = vsel %vm7725, %v7792, %v7565
          %v7950 = vsel %vm7726, %v7797, %v7566
          %v7951 = vsel %vm7727, %v7802, %v7567
          %v7952 = vsel %vm7728, %v7807, %v7568
          %v7953 = vsel %vm7729, %v7812, %v7569
          %v7954 = vsel %vm7730, %v7817, %v7570
          %v7955 = vsel %vm7731, %v7822, %v7571
          %v7956 = vsel %vm7732, %v7827, %v7572
          %v7957 = vsel %vm7733, %v7832, %v7573
          %v7958 = vsel %vm7734, %v7837, %v7574
          %v7959 = vsel %vm7735, %v7842, %v7575
          %v7960 = vsel %vm7736, %v7847, %v7576
          %v7961 = vsel %vm7737, %v7852, %v7577
          %v7962 = vsel %vm7738, %v7857, %v7578
          %v7963 = vsel %vm7739, %v7862, %v7579
          %v7964 = vsel %vm7740, %v7867, %v7580
          %v7965 = vsel %vm7741, %v7872, %v7581
          %v7966 = vsel %vm7742, %v7877, %v7582
          %v7967 = vsel %vm7743, %v7882, %v7583
          %v7968 = vsel %vm7744, %v7887, %v7584
          %v7969 = vsel %vm7745, %v7892, %v7585
          %v7970 = vsel %vm7746, %v7897, %v7586
          %v7971 = vsel %vm7747, %v7902, %v7587
          %v7972 = vsel %vm7748, %v7907, %v7588
          %v7973 = vsel %vm7749, %v7912, %v7589
          %v7974 = vsel %vm7750, %v7917, %v7590
          %v7975 = vsel %vm7751, %v7922, %v7591
          %v7976 = vsel %vm7752, %v7927, %v7592
          %v7977 = vsel %vm7753, %v7932, %v7593
          %v7978 = vsel %vm7754, %v7937, %v7594
          %v7979 = vsel %vm7755, %v7942, %v7595
          %v7980 = vsel %vm7756, %v7947, %v7596
          %v7981 = vld [vmem:[#allocation8] sm:$0xff]
          %v7982 = vld [vmem:[#allocation8 + $0x8] sm:$0xff]
          %v7983 = vld [vmem:[#allocation8 + $0x10] sm:$0xff]
          %v7984 = vld [vmem:[#allocation8 + $0x18] sm:$0xff]
          %v7985 = vld [vmem:[#allocation8 + $0x20] sm:$0xff]
          %v7986 = vld [vmem:[#allocation8 + $0x28] sm:$0xff]
          %v7987 = vld [vmem:[#allocation8 + $0x30] sm:$0xff]
          %v7988 = vld [vmem:[#allocation8 + $0x38] sm:$0xff]
          %v7989 = vld [vmem:[#allocation8 + $0x40] sm:$0xff]
          %v7990 = vld [vmem:[#allocation8 + $0x48] sm:$0xff]
          %v7991 = vld [vmem:[#allocation8 + $0x50] sm:$0xff]
          %v7992 = vld [vmem:[#allocation8 + $0x58] sm:$0xff]
          %v7993 = vld [vmem:[#allocation8 + $0x60] sm:$0xff]
          %v7994 = vld [vmem:[#allocation8 + $0x68] sm:$0xff]
          %v7995 = vld [vmem:[#allocation8 + $0x70] sm:$0xff]
          %v7996 = vld [vmem:[#allocation8 + $0x78] sm:$0xff]
          %v7997 = vld [vmem:[#allocation8 + $0x80] sm:$0xff]
          %v7998 = vld [vmem:[#allocation8 + $0x88] sm:$0xff]
          %v7999 = vld [vmem:[#allocation8 + $0x90] sm:$0xff]
          %v8000 = vld [vmem:[#allocation8 + $0x98] sm:$0xff]
          %v8001 = vld [vmem:[#allocation8 + $0xa0] sm:$0xff]
          %v8002 = vld [vmem:[#allocation8 + $0xa8] sm:$0xff]
          %v8003 = vld [vmem:[#allocation8 + $0xb0] sm:$0xff]
          %v8004 = vld [vmem:[#allocation8 + $0xb8] sm:$0xff]
          %v8005 = vld [vmem:[#allocation8 + $0xc0] sm:$0xff]
          %v8006 = vld [vmem:[#allocation8 + $0xc8] sm:$0xff]
          %v8007 = vld [vmem:[#allocation8 + $0xd0] sm:$0xff]
          %v8008 = vld [vmem:[#allocation8 + $0xd8] sm:$0xff]
          %v8009 = vld [vmem:[#allocation8 + $0xe0] sm:$0xff]
          %v8010 = vld [vmem:[#allocation8 + $0xe8] sm:$0xff]
          %v8011 = vld [vmem:[#allocation8 + $0xf0] sm:$0xff]
          %v8012 = vld [vmem:[#allocation8 + $0xf8] sm:$0xff]
          %v8013 = vpack.c.bf16 %v7950, %v7949
          %v8014 = vpack.c.bf16 %v7952, %v7951
          %v8015 = vpack.c.bf16 %v7954, %v7953
          %v8016 = vpack.c.bf16 %v7956, %v7955
          %v8017 = vpack.c.bf16 %v7958, %v7957
          %v8018 = vpack.c.bf16 %v7960, %v7959
          %v8019 = vpack.c.bf16 %v7962, %v7961
          %v8020 = vpack.c.bf16 %v7964, %v7963
          %v8021 = vpack.c.bf16 %v7966, %v7965
          %v8022 = vpack.c.bf16 %v7968, %v7967
          %v8023 = vpack.c.bf16 %v7970, %v7969
          %v8024 = vpack.c.bf16 %v7972, %v7971
          %v8025 = vpack.c.bf16 %v7974, %v7973
          %v8026 = vpack.c.bf16 %v7976, %v7975
          %v8027 = vpack.c.bf16 %v7978, %v7977
          %v8028 = vpack.c.bf16 %v7980, %v7979
          %v8045 = vunpack.c.l.b16 %v6807
          %v8046 = vunpack.c.l.b16 %v6808
          %v8047 = vunpack.c.l.b16 %v6809
          %v8048 = vunpack.c.l.b16 %v6810
          %v8049 = vunpack.c.l.b16 %v6811
          %v8050 = vunpack.c.l.b16 %v6812
          %v8051 = vunpack.c.l.b16 %v6813
          %v8052 = vunpack.c.l.b16 %v6814
          %v8053 = vunpack.c.l.b16 %v6815
          %v8054 = vunpack.c.l.b16 %v6816
          %v8055 = vunpack.c.l.b16 %v6817
          %v8056 = vunpack.c.l.b16 %v6818
          %v8057 = vunpack.c.l.b16 %v6819
          %v8058 = vunpack.c.l.b16 %v6820
          %v8059 = vunpack.c.l.b16 %v6821
          %v8060 = vunpack.c.l.b16 %v6822
          %v8061 = vpack.c.b16 %v8046, %v8045
          %v8062 = vpack.c.b16 %v8048, %v8047
          %v8063 = vpack.c.b16 %v8050, %v8049
          %v8064 = vpack.c.b16 %v8052, %v8051
          %v8065 = vpack.c.b16 %v8054, %v8053
          %v8066 = vpack.c.b16 %v8056, %v8055
          %v8067 = vpack.c.b16 %v8058, %v8057
          %v8068 = vpack.c.b16 %v8060, %v8059
          %8077 = vmatpush.bf16.msra.mxu0 %v8068
          %8078 = vmatpush.bf16.msra.mxu0 %v8067
          %8079 = vmatpush.bf16.msra.mxu0 %v8066
          %8080 = vmatpush.bf16.msra.mxu0 %v8065
          %8081 = vmatpush.bf16.msra.mxu0 %v8064
          %8082 = vmatpush.bf16.msra.mxu0 %v8063
          %8083 = vmatpush.bf16.msra.mxu0 %v8062
          %8084 = vmatpush.bf16.msra.mxu0 %v8061
          %8085 = vmatmul.bf16.gmra.mxu0 %v8013
          %v8086 = vpop.f32.mrf.mxu0
          %v8087 = vadd.f32 0.0, %v8086
          %v8088 = vpop.f32.mrf.mxu0
          %v8089 = vadd.f32 0.0, %v8088
          %8090 = vmatmul.bf16.gmra.mxu0 %v8014
          %v8091 = vpop.f32.mrf.mxu0
          %v8092 = vadd.f32 0.0, %v8091
          %v8093 = vpop.f32.mrf.mxu0
          %v8094 = vadd.f32 0.0, %v8093
          %8095 = vmatmul.bf16.gmra.mxu0 %v8015
          %v8096 = vpop.f32.mrf.mxu0
          %v8097 = vadd.f32 0.0, %v8096
          %v8098 = vpop.f32.mrf.mxu0
          %v8099 = vadd.f32 0.0, %v8098
          %8100 = vmatmul.bf16.gmra.mxu0 %v8016
          %v8101 = vpop.f32.mrf.mxu0
          %v8102 = vadd.f32 0.0, %v8101
          %v8103 = vpop.f32.mrf.mxu0
          %v8104 = vadd.f32 0.0, %v8103
          %8105 = vmatmul.bf16.gmra.mxu0 %v8017
          %v8106 = vpop.f32.mrf.mxu0
          %v8107 = vadd.f32 0.0, %v8106
          %v8108 = vpop.f32.mrf.mxu0
          %v8109 = vadd.f32 0.0, %v8108
          %8110 = vmatmul.bf16.gmra.mxu0 %v8018
          %v8111 = vpop.f32.mrf.mxu0
          %v8112 = vadd.f32 0.0, %v8111
          %v8113 = vpop.f32.mrf.mxu0
          %v8114 = vadd.f32 0.0, %v8113
          %8115 = vmatmul.bf16.gmra.mxu0 %v8019
          %v8116 = vpop.f32.mrf.mxu0
          %v8117 = vadd.f32 0.0, %v8116
          %v8118 = vpop.f32.mrf.mxu0
          %v8119 = vadd.f32 0.0, %v8118
          %8120 = vmatmul.bf16.gmra.mxu0 %v8020
          %v8121 = vpop.f32.mrf.mxu0
          %v8122 = vadd.f32 0.0, %v8121
          %v8123 = vpop.f32.mrf.mxu0
          %v8124 = vadd.f32 0.0, %v8123
          %8125 = vmatmul.bf16.gmra.mxu0 %v8021
          %v8126 = vpop.f32.mrf.mxu0
          %v8127 = vadd.f32 0.0, %v8126
          %v8128 = vpop.f32.mrf.mxu0
          %v8129 = vadd.f32 0.0, %v8128
          %8130 = vmatmul.bf16.gmra.mxu0 %v8022
          %v8131 = vpop.f32.mrf.mxu0
          %v8132 = vadd.f32 0.0, %v8131
          %v8133 = vpop.f32.mrf.mxu0
          %v8134 = vadd.f32 0.0, %v8133
          %8135 = vmatmul.bf16.gmra.mxu0 %v8023
          %v8136 = vpop.f32.mrf.mxu0
          %v8137 = vadd.f32 0.0, %v8136
          %v8138 = vpop.f32.mrf.mxu0
          %v8139 = vadd.f32 0.0, %v8138
          %8140 = vmatmul.bf16.gmra.mxu0 %v8024
          %v8141 = vpop.f32.mrf.mxu0
          %v8142 = vadd.f32 0.0, %v8141
          %v8143 = vpop.f32.mrf.mxu0
          %v8144 = vadd.f32 0.0, %v8143
          %8145 = vmatmul.bf16.gmra.mxu0 %v8025
          %v8146 = vpop.f32.mrf.mxu0
          %v8147 = vadd.f32 0.0, %v8146
          %v8148 = vpop.f32.mrf.mxu0
          %v8149 = vadd.f32 0.0, %v8148
          %8150 = vmatmul.bf16.gmra.mxu0 %v8026
          %v8151 = vpop.f32.mrf.mxu0
          %v8152 = vadd.f32 0.0, %v8151
          %v8153 = vpop.f32.mrf.mxu0
          %v8154 = vadd.f32 0.0, %v8153
          %8155 = vmatmul.bf16.gmra.mxu0 %v8027
          %v8156 = vpop.f32.mrf.mxu0
          %v8157 = vadd.f32 0.0, %v8156
          %v8158 = vpop.f32.mrf.mxu0
          %v8159 = vadd.f32 0.0, %v8158
          %8160 = vmatmul.bf16.gmra.mxu0 %v8028
          %v8161 = vpop.f32.mrf.mxu0
          %v8162 = vadd.f32 0.0, %v8161
          %v8163 = vpop.f32.mrf.mxu0
          %v8164 = vadd.f32 0.0, %v8163
          %8165 = vdwg.mxu0
          %v8166 = vadd.f32 %v7981, %v8087
          %v8167 = vadd.f32 %v7982, %v8089
          %v8168 = vadd.f32 %v7983, %v8092
          %v8169 = vadd.f32 %v7984, %v8094
          %v8170 = vadd.f32 %v7985, %v8097
          %v8171 = vadd.f32 %v7986, %v8099
          %v8172 = vadd.f32 %v7987, %v8102
          %v8173 = vadd.f32 %v7988, %v8104
          %v8174 = vadd.f32 %v7989, %v8107
          %v8175 = vadd.f32 %v7990, %v8109
          %v8176 = vadd.f32 %v7991, %v8112
          %v8177 = vadd.f32 %v7992, %v8114
          %v8178 = vadd.f32 %v7993, %v8117
          %v8179 = vadd.f32 %v7994, %v8119
          %v8180 = vadd.f32 %v7995, %v8122
          %v8181 = vadd.f32 %v7996, %v8124
          %v8182 = vadd.f32 %v7997, %v8127
          %v8183 = vadd.f32 %v7998, %v8129
          %v8184 = vadd.f32 %v7999, %v8132
          %v8185 = vadd.f32 %v8000, %v8134
          %v8186 = vadd.f32 %v8001, %v8137
          %v8187 = vadd.f32 %v8002, %v8139
          %v8188 = vadd.f32 %v8003, %v8142
          %v8189 = vadd.f32 %v8004, %v8144
          %v8190 = vadd.f32 %v8005, %v8147
          %v8191 = vadd.f32 %v8006, %v8149
          %v8192 = vadd.f32 %v8007, %v8152
          %v8193 = vadd.f32 %v8008, %v8154
          %v8194 = vadd.f32 %v8009, %v8157
          %v8195 = vadd.f32 %v8010, %v8159
          %v8196 = vadd.f32 %v8011, %v8162
          %v8197 = vadd.f32 %v8012, %v8164
          %vm8198 = vcmask 261120
          %8199 = vst.msk [vmem:[#allocation8] sm:$0xff] %vm8198, %v8166
          %8200 = vst.msk [vmem:[#allocation8 + $0x8] sm:$0xff] %vm8198, %v8167
          %8201 = vst.msk [vmem:[#allocation8 + $0x10] sm:$0xff] %vm8198, %v8168
          %8202 = vst.msk [vmem:[#allocation8 + $0x18] sm:$0xff] %vm8198, %v8169
          %8203 = vst.msk [vmem:[#allocation8 + $0x20] sm:$0xff] %vm8198, %v8170
          %8204 = vst.msk [vmem:[#allocation8 + $0x28] sm:$0xff] %vm8198, %v8171
          %8205 = vst.msk [vmem:[#allocation8 + $0x30] sm:$0xff] %vm8198, %v8172
          %8206 = vst.msk [vmem:[#allocation8 + $0x38] sm:$0xff] %vm8198, %v8173
          %8207 = vst.msk [vmem:[#allocation8 + $0x40] sm:$0xff] %vm8198, %v8174
          %8208 = vst.msk [vmem:[#allocation8 + $0x48] sm:$0xff] %vm8198, %v8175
          %8209 = vst.msk [vmem:[#allocation8 + $0x50] sm:$0xff] %vm8198, %v8176
          %8210 = vst.msk [vmem:[#allocation8 + $0x58] sm:$0xff] %vm8198, %v8177
          %8211 = vst.msk [vmem:[#allocation8 + $0x60] sm:$0xff] %vm8198, %v8178
          %8212 = vst.msk [vmem:[#allocation8 + $0x68] sm:$0xff] %vm8198, %v8179
          %8213 = vst.msk [vmem:[#allocation8 + $0x70] sm:$0xff] %vm8198, %v8180
          %8214 = vst.msk [vmem:[#allocation8 + $0x78] sm:$0xff] %vm8198, %v8181
          %8215 = vst.msk [vmem:[#allocation8 + $0x80] sm:$0xff] %vm8198, %v8182
          %8216 = vst.msk [vmem:[#allocation8 + $0x88] sm:$0xff] %vm8198, %v8183
          %8217 = vst.msk [vmem:[#allocation8 + $0x90] sm:$0xff] %vm8198, %v8184
          %8218 = vst.msk [vmem:[#allocation8 + $0x98] sm:$0xff] %vm8198, %v8185
          %8219 = vst.msk [vmem:[#allocation8 + $0xa0] sm:$0xff] %vm8198, %v8186
          %8220 = vst.msk [vmem:[#allocation8 + $0xa8] sm:$0xff] %vm8198, %v8187
          %8221 = vst.msk [vmem:[#allocation8 + $0xb0] sm:$0xff] %vm8198, %v8188
          %8222 = vst.msk [vmem:[#allocation8 + $0xb8] sm:$0xff] %vm8198, %v8189
          %8223 = vst.msk [vmem:[#allocation8 + $0xc0] sm:$0xff] %vm8198, %v8190
          %8224 = vst.msk [vmem:[#allocation8 + $0xc8] sm:$0xff] %vm8198, %v8191
          %8225 = vst.msk [vmem:[#allocation8 + $0xd0] sm:$0xff] %vm8198, %v8192
          %8226 = vst.msk [vmem:[#allocation8 + $0xd8] sm:$0xff] %vm8198, %v8193
          %8227 = vst.msk [vmem:[#allocation8 + $0xe0] sm:$0xff] %vm8198, %v8194
          %8228 = vst.msk [vmem:[#allocation8 + $0xe8] sm:$0xff] %vm8198, %v8195
          %8229 = vst.msk [vmem:[#allocation8 + $0xf0] sm:$0xff] %vm8198, %v8196
          %8230 = vst.msk [vmem:[#allocation8 + $0xf8] sm:$0xff] %vm8198, %v8197
        $region80: #{tpu_custom_call.1} parent=63 // pred_fallthru
          _
        %p8231 = scmp.eq.s32.totalorder %s30, 5
        // Predicated region
        $region81: #{tpu_custom_call.1} parent=63 // pred_check
          %p8232 = pneg %p8231
        $region82: #{tpu_custom_call.1} parent=63 // pred_check_branch
          %8234 = sbr.rel (%p8232) target = $region84
        $region83: #{tpu_custom_call.1} parent=63 // pred_region
          %v8235 = vld [vmem:[%s543] sm:$0xf]
          %v8236 = vld [vmem:[%s543 + $0x4] sm:$0xf]
          %v8237 = vld [vmem:[%s543 + $0x8] sm:$0xf]
          %v8238 = vld [vmem:[%s543 + $0xc] sm:$0xf]
          %v8239 = vld [vmem:[%s543 + $0x10] sm:$0xf]
          %v8240 = vld [vmem:[%s543 + $0x14] sm:$0xf]
          %v8241 = vld [vmem:[%s543 + $0x18] sm:$0xf]
          %v8242 = vld [vmem:[%s543 + $0x1c] sm:$0xf]
          %v8243 = vld [vmem:[%s543 + $0x20] sm:$0xf]
          %v8244 = vld [vmem:[%s543 + $0x24] sm:$0xf]
          %v8245 = vld [vmem:[%s543 + $0x28] sm:$0xf]
          %v8246 = vld [vmem:[%s543 + $0x2c] sm:$0xf]
          %v8247 = vld [vmem:[%s543 + $0x30] sm:$0xf]
          %v8248 = vld [vmem:[%s543 + $0x34] sm:$0xf]
          %v8249 = vld [vmem:[%s543 + $0x38] sm:$0xf]
          %v8250 = vld [vmem:[%s543 + $0x3c] sm:$0xf]
          %v8251 = vld [vmem:[%s543 + $0x40] sm:$0xf]
          %v8252 = vld [vmem:[%s543 + $0x44] sm:$0xf]
          %v8253 = vld [vmem:[%s543 + $0x48] sm:$0xf]
          %v8254 = vld [vmem:[%s543 + $0x4c] sm:$0xf]
          %v8255 = vld [vmem:[%s543 + $0x50] sm:$0xf]
          %v8256 = vld [vmem:[%s543 + $0x54] sm:$0xf]
          %v8257 = vld [vmem:[%s543 + $0x58] sm:$0xf]
          %v8258 = vld [vmem:[%s543 + $0x5c] sm:$0xf]
          %v8259 = vld [vmem:[%s543 + $0x60] sm:$0xf]
          %v8260 = vld [vmem:[%s543 + $0x64] sm:$0xf]
          %v8261 = vld [vmem:[%s543 + $0x68] sm:$0xf]
          %v8262 = vld [vmem:[%s543 + $0x6c] sm:$0xf]
          %v8263 = vld [vmem:[%s543 + $0x70] sm:$0xf]
          %v8264 = vld [vmem:[%s543 + $0x74] sm:$0xf]
          %v8265 = vld [vmem:[%s543 + $0x78] sm:$0xf]
          %v8266 = vld [vmem:[%s543 + $0x7c] sm:$0xf]
          %v8267 = vld [vmem:[%s6] sm:$0xf]
          %v8268 = vld [vmem:[%s6 + $0x4] sm:$0xf]
          %v8269 = vld [vmem:[%s6 + $0x8] sm:$0xf]
          %v8270 = vld [vmem:[%s6 + $0xc] sm:$0xf]
          %v8271 = vld [vmem:[%s7] sm:$0xf]
          %v8272 = vld [vmem:[%s7 + $0x4] sm:$0xf]
          %v8273 = vld [vmem:[%s8] sm:$0x1]
          %v8274 = vld [vmem:[#allocation8] sm:$0xff]
          %v8275 = vld [vmem:[#allocation8 + $0x8] sm:$0xff]
          %v8276 = vld [vmem:[#allocation8 + $0x10] sm:$0xff]
          %v8277 = vld [vmem:[#allocation8 + $0x18] sm:$0xff]
          %v8278 = vld [vmem:[#allocation8 + $0x20] sm:$0xff]
          %v8279 = vld [vmem:[#allocation8 + $0x28] sm:$0xff]
          %v8280 = vld [vmem:[#allocation8 + $0x30] sm:$0xff]
          %v8281 = vld [vmem:[#allocation8 + $0x38] sm:$0xff]
          %v8282 = vld [vmem:[#allocation8 + $0x40] sm:$0xff]
          %v8283 = vld [vmem:[#allocation8 + $0x48] sm:$0xff]
          %v8284 = vld [vmem:[#allocation8 + $0x50] sm:$0xff]
          %v8285 = vld [vmem:[#allocation8 + $0x58] sm:$0xff]
          %v8286 = vld [vmem:[#allocation8 + $0x60] sm:$0xff]
          %v8287 = vld [vmem:[#allocation8 + $0x68] sm:$0xff]
          %v8288 = vld [vmem:[#allocation8 + $0x70] sm:$0xff]
          %v8289 = vld [vmem:[#allocation8 + $0x78] sm:$0xff]
          %v8290 = vld [vmem:[#allocation8 + $0x80] sm:$0xff]
          %v8291 = vld [vmem:[#allocation8 + $0x88] sm:$0xff]
          %v8292 = vld [vmem:[#allocation8 + $0x90] sm:$0xff]
          %v8293 = vld [vmem:[#allocation8 + $0x98] sm:$0xff]
          %v8294 = vld [vmem:[#allocation8 + $0xa0] sm:$0xff]
          %v8295 = vld [vmem:[#allocation8 + $0xa8] sm:$0xff]
          %v8296 = vld [vmem:[#allocation8 + $0xb0] sm:$0xff]
          %v8297 = vld [vmem:[#allocation8 + $0xb8] sm:$0xff]
          %v8298 = vld [vmem:[#allocation8 + $0xc0] sm:$0xff]
          %v8299 = vld [vmem:[#allocation8 + $0xc8] sm:$0xff]
          %v8300 = vld [vmem:[#allocation8 + $0xd0] sm:$0xff]
          %v8301 = vld [vmem:[#allocation8 + $0xd8] sm:$0xff]
          %v8302 = vld [vmem:[#allocation8 + $0xe0] sm:$0xff]
          %v8303 = vld [vmem:[#allocation8 + $0xe8] sm:$0xff]
          %v8304 = vld [vmem:[#allocation8 + $0xf0] sm:$0xff]
          %v8305 = vld [vmem:[#allocation8 + $0xf8] sm:$0xff]
          %v8306 = vpack.c.bf16 %v8275, %v8274
          %v8307 = vpack.c.bf16 %v8277, %v8276
          %v8308 = vpack.c.bf16 %v8279, %v8278
          %v8309 = vpack.c.bf16 %v8281, %v8280
          %v8310 = vpack.c.bf16 %v8283, %v8282
          %v8311 = vpack.c.bf16 %v8285, %v8284
          %v8312 = vpack.c.bf16 %v8287, %v8286
          %v8313 = vpack.c.bf16 %v8289, %v8288
          %v8314 = vpack.c.bf16 %v8291, %v8290
          %v8315 = vpack.c.bf16 %v8293, %v8292
          %v8316 = vpack.c.bf16 %v8295, %v8294
          %v8317 = vpack.c.bf16 %v8297, %v8296
          %v8318 = vpack.c.bf16 %v8299, %v8298
          %v8319 = vpack.c.bf16 %v8301, %v8300
          %v8320 = vpack.c.bf16 %v8303, %v8302
          %v8321 = vpack.c.bf16 %v8305, %v8304
          %v8354 = vunpack.c.l.b16 %v8235
          %v8355 = vunpack.c.l.b16 %v8236
          %v8356 = vunpack.c.l.b16 %v8237
          %v8357 = vunpack.c.l.b16 %v8238
          %v8358 = vunpack.c.l.b16 %v8239
          %v8359 = vunpack.c.l.b16 %v8240
          %v8360 = vunpack.c.l.b16 %v8241
          %v8361 = vunpack.c.l.b16 %v8242
          %v8362 = vunpack.c.l.b16 %v8243
          %v8363 = vunpack.c.l.b16 %v8244
          %v8364 = vunpack.c.l.b16 %v8245
          %v8365 = vunpack.c.l.b16 %v8246
          %v8366 = vunpack.c.l.b16 %v8247
          %v8367 = vunpack.c.l.b16 %v8248
          %v8368 = vunpack.c.l.b16 %v8249
          %v8369 = vunpack.c.l.b16 %v8250
          %v8370 = vunpack.c.l.b16 %v8251
          %v8371 = vunpack.c.l.b16 %v8252
          %v8372 = vunpack.c.l.b16 %v8253
          %v8373 = vunpack.c.l.b16 %v8254
          %v8374 = vunpack.c.l.b16 %v8255
          %v8375 = vunpack.c.l.b16 %v8256
          %v8376 = vunpack.c.l.b16 %v8257
          %v8377 = vunpack.c.l.b16 %v8258
          %v8378 = vunpack.c.l.b16 %v8259
          %v8379 = vunpack.c.l.b16 %v8260
          %v8380 = vunpack.c.l.b16 %v8261
          %v8381 = vunpack.c.l.b16 %v8262
          %v8382 = vunpack.c.l.b16 %v8263
          %v8383 = vunpack.c.l.b16 %v8264
          %v8384 = vunpack.c.l.b16 %v8265
          %v8385 = vunpack.c.l.b16 %v8266
          %v8386 = vpack.c.b16 %v8355, %v8354
          %v8387 = vpack.c.b16 %v8357, %v8356
          %v8388 = vpack.c.b16 %v8359, %v8358
          %v8389 = vpack.c.b16 %v8361, %v8360
          %v8390 = vpack.c.b16 %v8363, %v8362
          %v8391 = vpack.c.b16 %v8365, %v8364
          %v8392 = vpack.c.b16 %v8367, %v8366
          %v8393 = vpack.c.b16 %v8369, %v8368
          %v8394 = vpack.c.b16 %v8371, %v8370
          %v8395 = vpack.c.b16 %v8373, %v8372
          %v8396 = vpack.c.b16 %v8375, %v8374
          %v8397 = vpack.c.b16 %v8377, %v8376
          %v8398 = vpack.c.b16 %v8379, %v8378
          %v8399 = vpack.c.b16 %v8381, %v8380
          %v8400 = vpack.c.b16 %v8383, %v8382
          %v8401 = vpack.c.b16 %v8385, %v8384
          %v8404 = vunpack.c.l.b16 %v8271
          %v8405 = vunpack.c.l.b16 %v8272
          %v8406 = vpack.c.b16 %v8405, %v8404
          %vm8408 = vcmask 130048
          %v8410 = vsel %vm8408, %v8386, 0
          %v8413 = vsel %vm8408, %v8387, 0
          %v8416 = vsel %vm8408, %v8388, 0
          %v8419 = vsel %vm8408, %v8389, 0
          %v8422 = vsel %vm8408, %v8390, 0
          %v8425 = vsel %vm8408, %v8391, 0
          %v8428 = vsel %vm8408, %v8392, 0
          %v8431 = vsel %vm8408, %v8393, 0
          %v8434 = vsel %vm8408, %v8394, 0
          %v8437 = vsel %vm8408, %v8395, 0
          %v8440 = vsel %vm8408, %v8396, 0
          %v8443 = vsel %vm8408, %v8397, 0
          %v8446 = vsel %vm8408, %v8398, 0
          %v8449 = vsel %vm8408, %v8399, 0
          %v8452 = vsel %vm8408, %v8400, 0
          %v8455 = vsel %vm8408, %v8401, 0
          %8457 = vmatpush.bf16.msra.mxu0 0
          %8458 = vmatpush.bf16.msra.mxu0 0
          %8459 = vmatpush.bf16.msra.mxu0 0
          %8460 = vmatpush.bf16.msra.mxu0 0
          %8461 = vmatpush.bf16.msra.mxu0 0
          %8462 = vmatpush.bf16.msra.mxu0 0
          %8463 = vmatpush.bf16.msra.mxu0 0
          %8464 = vmatpush.bf16.msra.mxu0 %v8406
          %8465 = vmatmul.bf16.gmra.mxu0 %v8410
          %v8466 = vpop.f32.mrf.mxu0
          %v8467 = vadd.f32 0.0, %v8466
          %v8468 = vpop.f32.mrf.mxu0
          %v8469 = vadd.f32 0.0, %v8468
          %8470 = vmatmul.bf16.gmra.mxu0 %v8413
          %v8471 = vpop.f32.mrf.mxu0
          %v8472 = vadd.f32 0.0, %v8471
          %v8473 = vpop.f32.mrf.mxu0
          %v8474 = vadd.f32 0.0, %v8473
          %8475 = vmatmul.bf16.gmra.mxu0 %v8416
          %v8476 = vpop.f32.mrf.mxu0
          %v8477 = vadd.f32 0.0, %v8476
          %v8478 = vpop.f32.mrf.mxu0
          %v8479 = vadd.f32 0.0, %v8478
          %8480 = vmatmul.bf16.gmra.mxu0 %v8419
          %v8481 = vpop.f32.mrf.mxu0
          %v8482 = vadd.f32 0.0, %v8481
          %v8483 = vpop.f32.mrf.mxu0
          %v8484 = vadd.f32 0.0, %v8483
          %8485 = vmatmul.bf16.gmra.mxu0 %v8422
          %v8486 = vpop.f32.mrf.mxu0
          %v8487 = vadd.f32 0.0, %v8486
          %v8488 = vpop.f32.mrf.mxu0
          %v8489 = vadd.f32 0.0, %v8488
          %8490 = vmatmul.bf16.gmra.mxu0 %v8425
          %v8491 = vpop.f32.mrf.mxu0
          %v8492 = vadd.f32 0.0, %v8491
          %v8493 = vpop.f32.mrf.mxu0
          %v8494 = vadd.f32 0.0, %v8493
          %8495 = vmatmul.bf16.gmra.mxu0 %v8428
          %v8496 = vpop.f32.mrf.mxu0
          %v8497 = vadd.f32 0.0, %v8496
          %v8498 = vpop.f32.mrf.mxu0
          %v8499 = vadd.f32 0.0, %v8498
          %8500 = vmatmul.bf16.gmra.mxu0 %v8431
          %v8501 = vpop.f32.mrf.mxu0
          %v8502 = vadd.f32 0.0, %v8501
          %v8503 = vpop.f32.mrf.mxu0
          %v8504 = vadd.f32 0.0, %v8503
          %8505 = vmatmul.bf16.gmra.mxu0 %v8434
          %v8506 = vpop.f32.mrf.mxu0
          %v8507 = vadd.f32 0.0, %v8506
          %v8508 = vpop.f32.mrf.mxu0
          %v8509 = vadd.f32 0.0, %v8508
          %8510 = vmatmul.bf16.gmra.mxu0 %v8437
          %v8511 = vpop.f32.mrf.mxu0
          %v8512 = vadd.f32 0.0, %v8511
          %v8513 = vpop.f32.mrf.mxu0
          %v8514 = vadd.f32 0.0, %v8513
          %8515 = vmatmul.bf16.gmra.mxu0 %v8440
          %v8516 = vpop.f32.mrf.mxu0
          %v8517 = vadd.f32 0.0, %v8516
          %v8518 = vpop.f32.mrf.mxu0
          %v8519 = vadd.f32 0.0, %v8518
          %8520 = vmatmul.bf16.gmra.mxu0 %v8443
          %v8521 = vpop.f32.mrf.mxu0
          %v8522 = vadd.f32 0.0, %v8521
          %v8523 = vpop.f32.mrf.mxu0
          %v8524 = vadd.f32 0.0, %v8523
          %8525 = vmatmul.bf16.gmra.mxu0 %v8446
          %v8526 = vpop.f32.mrf.mxu0
          %v8527 = vadd.f32 0.0, %v8526
          %v8528 = vpop.f32.mrf.mxu0
          %v8529 = vadd.f32 0.0, %v8528
          %8530 = vmatmul.bf16.gmra.mxu0 %v8449
          %v8531 = vpop.f32.mrf.mxu0
          %v8532 = vadd.f32 0.0, %v8531
          %v8533 = vpop.f32.mrf.mxu0
          %v8534 = vadd.f32 0.0, %v8533
          %8535 = vmatmul.bf16.gmra.mxu0 %v8452
          %v8536 = vpop.f32.mrf.mxu0
          %v8537 = vadd.f32 0.0, %v8536
          %v8538 = vpop.f32.mrf.mxu0
          %v8539 = vadd.f32 0.0, %v8538
          %8540 = vmatmul.bf16.gmra.mxu0 %v8455
          %v8541 = vpop.f32.mrf.mxu0
          %v8542 = vadd.f32 0.0, %v8541
          %v8543 = vpop.f32.mrf.mxu0
          %v8544 = vadd.f32 0.0, %v8543
          %8545 = vdwg.mxu0
          %v8550 = vunpack.c.l.b16 %v8267
          %v8551 = vunpack.c.l.b16 %v8268
          %v8552 = vunpack.c.l.b16 %v8269
          %v8553 = vunpack.c.l.b16 %v8270
          %v8554 = vpack.c.b16 %v8551, %v8550
          %v8555 = vpack.c.b16 %v8553, %v8552
          %vm8558 = vcmask 261120
          %v8560 = vsel %vm8558, %v8306, 0
          %v8563 = vsel %vm8558, %v8307, 0
          %v8566 = vsel %vm8558, %v8308, 0
          %v8569 = vsel %vm8558, %v8309, 0
          %v8572 = vsel %vm8558, %v8310, 0
          %v8575 = vsel %vm8558, %v8311, 0
          %v8578 = vsel %vm8558, %v8312, 0
          %v8581 = vsel %vm8558, %v8313, 0
          %v8584 = vsel %vm8558, %v8314, 0
          %v8587 = vsel %vm8558, %v8315, 0
          %v8590 = vsel %vm8558, %v8316, 0
          %v8593 = vsel %vm8558, %v8317, 0
          %v8596 = vsel %vm8558, %v8318, 0
          %v8599 = vsel %vm8558, %v8319, 0
          %v8602 = vsel %vm8558, %v8320, 0
          %v8605 = vsel %vm8558, %v8321, 0
          %8607 = vmatpush.bf16.msra.mxu0 0
          %8608 = vmatpush.bf16.msra.mxu0 0
          %8609 = vmatpush.bf16.msra.mxu0 0
          %8610 = vmatpush.bf16.msra.mxu0 0
          %8611 = vmatpush.bf16.msra.mxu0 0
          %8612 = vmatpush.bf16.msra.mxu0 0
          %8613 = vmatpush.bf16.msra.mxu0 %v8555
          %8614 = vmatpush.bf16.msra.mxu0 %v8554
          %8615 = vmatmul.bf16.gmra.mxu0 %v8560
          %v8616 = vpop.f32.mrf.mxu0
          %v8617 = vadd.f32 %v8467, %v8616
          %v8618 = vpop.f32.mrf.mxu0
          %v8619 = vadd.f32 %v8469, %v8618
          %8620 = vmatmul.bf16.gmra.mxu0 %v8563
          %v8621 = vpop.f32.mrf.mxu0
          %v8622 = vadd.f32 %v8472, %v8621
          %v8623 = vpop.f32.mrf.mxu0
          %v8624 = vadd.f32 %v8474, %v8623
          %8625 = vmatmul.bf16.gmra.mxu0 %v8566
          %v8626 = vpop.f32.mrf.mxu0
          %v8627 = vadd.f32 %v8477, %v8626
          %v8628 = vpop.f32.mrf.mxu0
          %v8629 = vadd.f32 %v8479, %v8628
          %8630 = vmatmul.bf16.gmra.mxu0 %v8569
          %v8631 = vpop.f32.mrf.mxu0
          %v8632 = vadd.f32 %v8482, %v8631
          %v8633 = vpop.f32.mrf.mxu0
          %v8634 = vadd.f32 %v8484, %v8633
          %8635 = vmatmul.bf16.gmra.mxu0 %v8572
          %v8636 = vpop.f32.mrf.mxu0
          %v8637 = vadd.f32 %v8487, %v8636
          %v8638 = vpop.f32.mrf.mxu0
          %v8639 = vadd.f32 %v8489, %v8638
          %8640 = vmatmul.bf16.gmra.mxu0 %v8575
          %v8641 = vpop.f32.mrf.mxu0
          %v8642 = vadd.f32 %v8492, %v8641
          %v8643 = vpop.f32.mrf.mxu0
          %v8644 = vadd.f32 %v8494, %v8643
          %8645 = vmatmul.bf16.gmra.mxu0 %v8578
          %v8646 = vpop.f32.mrf.mxu0
          %v8647 = vadd.f32 %v8497, %v8646
          %v8648 = vpop.f32.mrf.mxu0
          %v8649 = vadd.f32 %v8499, %v8648
          %8650 = vmatmul.bf16.gmra.mxu0 %v8581
          %v8651 = vpop.f32.mrf.mxu0
          %v8652 = vadd.f32 %v8502, %v8651
          %v8653 = vpop.f32.mrf.mxu0
          %v8654 = vadd.f32 %v8504, %v8653
          %8655 = vmatmul.bf16.gmra.mxu0 %v8584
          %v8656 = vpop.f32.mrf.mxu0
          %v8657 = vadd.f32 %v8507, %v8656
          %v8658 = vpop.f32.mrf.mxu0
          %v8659 = vadd.f32 %v8509, %v8658
          %8660 = vmatmul.bf16.gmra.mxu0 %v8587
          %v8661 = vpop.f32.mrf.mxu0
          %v8662 = vadd.f32 %v8512, %v8661
          %v8663 = vpop.f32.mrf.mxu0
          %v8664 = vadd.f32 %v8514, %v8663
          %8665 = vmatmul.bf16.gmra.mxu0 %v8590
          %v8666 = vpop.f32.mrf.mxu0
          %v8667 = vadd.f32 %v8517, %v8666
          %v8668 = vpop.f32.mrf.mxu0
          %v8669 = vadd.f32 %v8519, %v8668
          %8670 = vmatmul.bf16.gmra.mxu0 %v8593
          %v8671 = vpop.f32.mrf.mxu0
          %v8672 = vadd.f32 %v8522, %v8671
          %v8673 = vpop.f32.mrf.mxu0
          %v8674 = vadd.f32 %v8524, %v8673
          %8675 = vmatmul.bf16.gmra.mxu0 %v8596
          %v8676 = vpop.f32.mrf.mxu0
          %v8677 = vadd.f32 %v8527, %v8676
          %v8678 = vpop.f32.mrf.mxu0
          %v8679 = vadd.f32 %v8529, %v8678
          %8680 = vmatmul.bf16.gmra.mxu0 %v8599
          %v8681 = vpop.f32.mrf.mxu0
          %v8682 = vadd.f32 %v8532, %v8681
          %v8683 = vpop.f32.mrf.mxu0
          %v8684 = vadd.f32 %v8534, %v8683
          %8685 = vmatmul.bf16.gmra.mxu0 %v8602
          %v8686 = vpop.f32.mrf.mxu0
          %v8687 = vadd.f32 %v8537, %v8686
          %v8688 = vpop.f32.mrf.mxu0
          %v8689 = vadd.f32 %v8539, %v8688
          %8690 = vmatmul.bf16.gmra.mxu0 %v8605
          %v8691 = vpop.f32.mrf.mxu0
          %v8692 = vadd.f32 %v8542, %v8691
          %v8693 = vpop.f32.mrf.mxu0
          %v8694 = vadd.f32 %v8544, %v8693
          %8695 = vdwg.mxu0
          %v8697 = vperm.slane %v8273, 0
          %v8699 = vadd.f32 %v8617, %v8697
          %v8700 = vadd.f32 %v8619, %v8697
          %v8701 = vadd.f32 %v8622, %v8697
          %v8702 = vadd.f32 %v8624, %v8697
          %v8703 = vadd.f32 %v8627, %v8697
          %v8704 = vadd.f32 %v8629, %v8697
          %v8705 = vadd.f32 %v8632, %v8697
          %v8706 = vadd.f32 %v8634, %v8697
          %v8707 = vadd.f32 %v8637, %v8697
          %v8708 = vadd.f32 %v8639, %v8697
          %v8709 = vadd.f32 %v8642, %v8697
          %v8710 = vadd.f32 %v8644, %v8697
          %v8711 = vadd.f32 %v8647, %v8697
          %v8712 = vadd.f32 %v8649, %v8697
          %v8713 = vadd.f32 %v8652, %v8697
          %v8714 = vadd.f32 %v8654, %v8697
          %v8715 = vadd.f32 %v8657, %v8697
          %v8716 = vadd.f32 %v8659, %v8697
          %v8717 = vadd.f32 %v8662, %v8697
          %v8718 = vadd.f32 %v8664, %v8697
          %v8719 = vadd.f32 %v8667, %v8697
          %v8720 = vadd.f32 %v8669, %v8697
          %v8721 = vadd.f32 %v8672, %v8697
          %v8722 = vadd.f32 %v8674, %v8697
          %v8723 = vadd.f32 %v8677, %v8697
          %v8724 = vadd.f32 %v8679, %v8697
          %v8725 = vadd.f32 %v8682, %v8697
          %v8726 = vadd.f32 %v8684, %v8697
          %v8727 = vadd.f32 %v8687, %v8697
          %v8728 = vadd.f32 %v8689, %v8697
          %v8729 = vadd.f32 %v8692, %v8697
          %v8730 = vadd.f32 %v8694, %v8697
          %v8731 = vmax.f32 %v8699, 0.0
          %v8732 = vmax.f32 %v8700, 0.0
          %v8733 = vmax.f32 %v8701, 0.0
          %v8734 = vmax.f32 %v8702, 0.0
          %v8735 = vmax.f32 %v8703, 0.0
          %v8736 = vmax.f32 %v8704, 0.0
          %v8737 = vmax.f32 %v8705, 0.0
          %v8738 = vmax.f32 %v8706, 0.0
          %v8739 = vmax.f32 %v8707, 0.0
          %v8740 = vmax.f32 %v8708, 0.0
          %v8741 = vmax.f32 %v8709, 0.0
          %v8742 = vmax.f32 %v8710, 0.0
          %v8743 = vmax.f32 %v8711, 0.0
          %v8744 = vmax.f32 %v8712, 0.0
          %v8745 = vmax.f32 %v8713, 0.0
          %v8746 = vmax.f32 %v8714, 0.0
          %v8747 = vmax.f32 %v8715, 0.0
          %v8748 = vmax.f32 %v8716, 0.0
          %v8749 = vmax.f32 %v8717, 0.0
          %v8750 = vmax.f32 %v8718, 0.0
          %v8751 = vmax.f32 %v8719, 0.0
          %v8752 = vmax.f32 %v8720, 0.0
          %v8753 = vmax.f32 %v8721, 0.0
          %v8754 = vmax.f32 %v8722, 0.0
          %v8755 = vmax.f32 %v8723, 0.0
          %v8756 = vmax.f32 %v8724, 0.0
          %v8757 = vmax.f32 %v8725, 0.0
          %v8758 = vmax.f32 %v8726, 0.0
          %v8759 = vmax.f32 %v8727, 0.0
          %v8760 = vmax.f32 %v8728, 0.0
          %v8761 = vmax.f32 %v8729, 0.0
          %v8762 = vmax.f32 %v8730, 0.0
          %v8763 = vld [vmem:[%s9] sm:$0xf]
          %v8764 = vld [vmem:[%s9 + $0x4] sm:$0xf]
          %v8765 = vld [vmem:[%s9 + $0x8] sm:$0xf]
          %v8766 = vld [vmem:[%s9 + $0xc] sm:$0xf]
          %v8767 = vld [vmem:[%s9 + $0x10] sm:$0xf]
          %v8768 = vld [vmem:[%s9 + $0x14] sm:$0xf]
          %v8769 = vld [vmem:[%s9 + $0x18] sm:$0xf]
          %v8770 = vld [vmem:[%s9 + $0x1c] sm:$0xf]
          %v8771 = vld [vmem:[%s10] sm:$0x1]
          %v8772 = vpack.c.bf16 %v8732, %v8731
          %v8773 = vpack.c.bf16 %v8734, %v8733
          %v8774 = vpack.c.bf16 %v8736, %v8735
          %v8775 = vpack.c.bf16 %v8738, %v8737
          %v8776 = vpack.c.bf16 %v8740, %v8739
          %v8777 = vpack.c.bf16 %v8742, %v8741
          %v8778 = vpack.c.bf16 %v8744, %v8743
          %v8779 = vpack.c.bf16 %v8746, %v8745
          %v8780 = vpack.c.bf16 %v8748, %v8747
          %v8781 = vpack.c.bf16 %v8750, %v8749
          %v8782 = vpack.c.bf16 %v8752, %v8751
          %v8783 = vpack.c.bf16 %v8754, %v8753
          %v8784 = vpack.c.bf16 %v8756, %v8755
          %v8785 = vpack.c.bf16 %v8758, %v8757
          %v8786 = vpack.c.bf16 %v8760, %v8759
          %v8787 = vpack.c.bf16 %v8762, %v8761
          %v8789 = vperm.slane %v8771, 0
          %v8799 = vunpack.c.l.b16 %v8763
          %v8800 = vunpack.c.l.b16 %v8764
          %v8801 = vunpack.c.l.b16 %v8765
          %v8802 = vunpack.c.l.b16 %v8766
          %v8803 = vunpack.c.l.b16 %v8767
          %v8804 = vunpack.c.l.b16 %v8768
          %v8805 = vunpack.c.l.b16 %v8769
          %v8806 = vunpack.c.l.b16 %v8770
          %v8807 = vpack.c.b16 %v8800, %v8799
          %v8808 = vpack.c.b16 %v8802, %v8801
          %v8809 = vpack.c.b16 %v8804, %v8803
          %v8810 = vpack.c.b16 %v8806, %v8805
          %vm8815 = vcmask 523264
          %v8817 = vsel %vm8815, %v8772, 0
          %v8820 = vsel %vm8815, %v8773, 0
          %v8823 = vsel %vm8815, %v8774, 0
          %v8826 = vsel %vm8815, %v8775, 0
          %v8829 = vsel %vm8815, %v8776, 0
          %v8832 = vsel %vm8815, %v8777, 0
          %v8835 = vsel %vm8815, %v8778, 0
          %v8838 = vsel %vm8815, %v8779, 0
          %v8841 = vsel %vm8815, %v8780, 0
          %v8844 = vsel %vm8815, %v8781, 0
          %v8847 = vsel %vm8815, %v8782, 0
          %v8850 = vsel %vm8815, %v8783, 0
          %v8853 = vsel %vm8815, %v8784, 0
          %v8856 = vsel %vm8815, %v8785, 0
          %v8859 = vsel %vm8815, %v8786, 0
          %v8862 = vsel %vm8815, %v8787, 0
          %8864 = vmatpush.bf16.msra.mxu0 0
          %8865 = vmatpush.bf16.msra.mxu0 0
          %8866 = vmatpush.bf16.msra.mxu0 0
          %8867 = vmatpush.bf16.msra.mxu0 0
          %8868 = vmatpush.bf16.msra.mxu0 %v8810
          %8869 = vmatpush.bf16.msra.mxu0 %v8809
          %8870 = vmatpush.bf16.msra.mxu0 %v8808
          %8871 = vmatpush.bf16.msra.mxu0 %v8807
          %8872 = vmatmul.bf16.gmra.mxu0 %v8817
          %v8873 = vpop.f32.mrf.mxu0
          %v8874 = vadd.f32 %v8789, %v8873
          %v8875 = vpop.f32.mrf.mxu0
          %v8876 = vadd.f32 %v8789, %v8875
          %8877 = vmatmul.bf16.gmra.mxu0 %v8820
          %v8878 = vpop.f32.mrf.mxu0
          %v8879 = vadd.f32 %v8789, %v8878
          %v8880 = vpop.f32.mrf.mxu0
          %v8881 = vadd.f32 %v8789, %v8880
          %8882 = vmatmul.bf16.gmra.mxu0 %v8823
          %v8883 = vpop.f32.mrf.mxu0
          %v8884 = vadd.f32 %v8789, %v8883
          %v8885 = vpop.f32.mrf.mxu0
          %v8886 = vadd.f32 %v8789, %v8885
          %8887 = vmatmul.bf16.gmra.mxu0 %v8826
          %v8888 = vpop.f32.mrf.mxu0
          %v8889 = vadd.f32 %v8789, %v8888
          %v8890 = vpop.f32.mrf.mxu0
          %v8891 = vadd.f32 %v8789, %v8890
          %8892 = vmatmul.bf16.gmra.mxu0 %v8829
          %v8893 = vpop.f32.mrf.mxu0
          %v8894 = vadd.f32 %v8789, %v8893
          %v8895 = vpop.f32.mrf.mxu0
          %v8896 = vadd.f32 %v8789, %v8895
          %8897 = vmatmul.bf16.gmra.mxu0 %v8832
          %v8898 = vpop.f32.mrf.mxu0
          %v8899 = vadd.f32 %v8789, %v8898
          %v8900 = vpop.f32.mrf.mxu0
          %v8901 = vadd.f32 %v8789, %v8900
          %8902 = vmatmul.bf16.gmra.mxu0 %v8835
          %v8903 = vpop.f32.mrf.mxu0
          %v8904 = vadd.f32 %v8789, %v8903
          %v8905 = vpop.f32.mrf.mxu0
          %v8906 = vadd.f32 %v8789, %v8905
          %8907 = vmatmul.bf16.gmra.mxu0 %v8838
          %v8908 = vpop.f32.mrf.mxu0
          %v8909 = vadd.f32 %v8789, %v8908
          %v8910 = vpop.f32.mrf.mxu0
          %v8911 = vadd.f32 %v8789, %v8910
          %8912 = vmatmul.bf16.gmra.mxu0 %v8841
          %v8913 = vpop.f32.mrf.mxu0
          %v8914 = vadd.f32 %v8789, %v8913
          %v8915 = vpop.f32.mrf.mxu0
          %v8916 = vadd.f32 %v8789, %v8915
          %8917 = vmatmul.bf16.gmra.mxu0 %v8844
          %v8918 = vpop.f32.mrf.mxu0
          %v8919 = vadd.f32 %v8789, %v8918
          %v8920 = vpop.f32.mrf.mxu0
          %v8921 = vadd.f32 %v8789, %v8920
          %8922 = vmatmul.bf16.gmra.mxu0 %v8847
          %v8923 = vpop.f32.mrf.mxu0
          %v8924 = vadd.f32 %v8789, %v8923
          %v8925 = vpop.f32.mrf.mxu0
          %v8926 = vadd.f32 %v8789, %v8925
          %8927 = vmatmul.bf16.gmra.mxu0 %v8850
          %v8928 = vpop.f32.mrf.mxu0
          %v8929 = vadd.f32 %v8789, %v8928
          %v8930 = vpop.f32.mrf.mxu0
          %v8931 = vadd.f32 %v8789, %v8930
          %8932 = vmatmul.bf16.gmra.mxu0 %v8853
          %v8933 = vpop.f32.mrf.mxu0
          %v8934 = vadd.f32 %v8789, %v8933
          %v8935 = vpop.f32.mrf.mxu0
          %v8936 = vadd.f32 %v8789, %v8935
          %8937 = vmatmul.bf16.gmra.mxu0 %v8856
          %v8938 = vpop.f32.mrf.mxu0
          %v8939 = vadd.f32 %v8789, %v8938
          %v8940 = vpop.f32.mrf.mxu0
          %v8941 = vadd.f32 %v8789, %v8940
          %8942 = vmatmul.bf16.gmra.mxu0 %v8859
          %v8943 = vpop.f32.mrf.mxu0
          %v8944 = vadd.f32 %v8789, %v8943
          %v8945 = vpop.f32.mrf.mxu0
          %v8946 = vadd.f32 %v8789, %v8945
          %8947 = vmatmul.bf16.gmra.mxu0 %v8862
          %v8948 = vpop.f32.mrf.mxu0
          %v8949 = vadd.f32 %v8789, %v8948
          %v8950 = vpop.f32.mrf.mxu0
          %v8951 = vadd.f32 %v8789, %v8950
          %8952 = vdwg.mxu0
          %v8953 = vmax.f32 %v8874, 0.0
          %v8954 = vmax.f32 %v8876, 0.0
          %v8955 = vmax.f32 %v8879, 0.0
          %v8956 = vmax.f32 %v8881, 0.0
          %v8957 = vmax.f32 %v8884, 0.0
          %v8958 = vmax.f32 %v8886, 0.0
          %v8959 = vmax.f32 %v8889, 0.0
          %v8960 = vmax.f32 %v8891, 0.0
          %v8961 = vmax.f32 %v8894, 0.0
          %v8962 = vmax.f32 %v8896, 0.0
          %v8963 = vmax.f32 %v8899, 0.0
          %v8964 = vmax.f32 %v8901, 0.0
          %v8965 = vmax.f32 %v8904, 0.0
          %v8966 = vmax.f32 %v8906, 0.0
          %v8967 = vmax.f32 %v8909, 0.0
          %v8968 = vmax.f32 %v8911, 0.0
          %v8969 = vmax.f32 %v8914, 0.0
          %v8970 = vmax.f32 %v8916, 0.0
          %v8971 = vmax.f32 %v8919, 0.0
          %v8972 = vmax.f32 %v8921, 0.0
          %v8973 = vmax.f32 %v8924, 0.0
          %v8974 = vmax.f32 %v8926, 0.0
          %v8975 = vmax.f32 %v8929, 0.0
          %v8976 = vmax.f32 %v8931, 0.0
          %v8977 = vmax.f32 %v8934, 0.0
          %v8978 = vmax.f32 %v8936, 0.0
          %v8979 = vmax.f32 %v8939, 0.0
          %v8980 = vmax.f32 %v8941, 0.0
          %v8981 = vmax.f32 %v8944, 0.0
          %v8982 = vmax.f32 %v8946, 0.0
          %v8983 = vmax.f32 %v8949, 0.0
          %v8984 = vmax.f32 %v8951, 0.0
          %v8985 = vpack.c.bf16 %v8953, %v8953
          %v8986 = vpack.c.bf16 %v8954, %v8954
          %v8987 = vpack.c.bf16 %v8955, %v8955
          %v8988 = vpack.c.bf16 %v8956, %v8956
          %v8989 = vpack.c.bf16 %v8957, %v8957
          %v8990 = vpack.c.bf16 %v8958, %v8958
          %v8991 = vpack.c.bf16 %v8959, %v8959
          %v8992 = vpack.c.bf16 %v8960, %v8960
          %v8993 = vpack.c.bf16 %v8961, %v8961
          %v8994 = vpack.c.bf16 %v8962, %v8962
          %v8995 = vpack.c.bf16 %v8963, %v8963
          %v8996 = vpack.c.bf16 %v8964, %v8964
          %v8997 = vpack.c.bf16 %v8965, %v8965
          %v8998 = vpack.c.bf16 %v8966, %v8966
          %v8999 = vpack.c.bf16 %v8967, %v8967
          %v9000 = vpack.c.bf16 %v8968, %v8968
          %v9001 = vpack.c.bf16 %v8969, %v8969
          %v9002 = vpack.c.bf16 %v8970, %v8970
          %v9003 = vpack.c.bf16 %v8971, %v8971
          %v9004 = vpack.c.bf16 %v8972, %v8972
          %v9005 = vpack.c.bf16 %v8973, %v8973
          %v9006 = vpack.c.bf16 %v8974, %v8974
          %v9007 = vpack.c.bf16 %v8975, %v8975
          %v9008 = vpack.c.bf16 %v8976, %v8976
          %v9009 = vpack.c.bf16 %v8977, %v8977
          %v9010 = vpack.c.bf16 %v8978, %v8978
          %v9011 = vpack.c.bf16 %v8979, %v8979
          %v9012 = vpack.c.bf16 %v8980, %v8980
          %v9013 = vpack.c.bf16 %v8981, %v8981
          %v9014 = vpack.c.bf16 %v8982, %v8982
          %v9015 = vpack.c.bf16 %v8983, %v8983
          %v9016 = vpack.c.bf16 %v8984, %v8984
          %9017 = vst [vmem:[%s499] sm:$0xf] %v8985
          %9018 = vst [vmem:[%s499 + $0x4] sm:$0xf] %v8986
          %9019 = vst [vmem:[%s499 + $0x8] sm:$0xf] %v8987
          %9020 = vst [vmem:[%s499 + $0xc] sm:$0xf] %v8988
          %9021 = vst [vmem:[%s499 + $0x10] sm:$0xf] %v8989
          %9022 = vst [vmem:[%s499 + $0x14] sm:$0xf] %v8990
          %9023 = vst [vmem:[%s499 + $0x18] sm:$0xf] %v8991
          %9024 = vst [vmem:[%s499 + $0x1c] sm:$0xf] %v8992
          %9025 = vst [vmem:[%s499 + $0x20] sm:$0xf] %v8993
          %9026 = vst [vmem:[%s499 + $0x24] sm:$0xf] %v8994
          %9027 = vst [vmem:[%s499 + $0x28] sm:$0xf] %v8995
          %9028 = vst [vmem:[%s499 + $0x2c] sm:$0xf] %v8996
          %9029 = vst [vmem:[%s499 + $0x30] sm:$0xf] %v8997
          %9030 = vst [vmem:[%s499 + $0x34] sm:$0xf] %v8998
          %9031 = vst [vmem:[%s499 + $0x38] sm:$0xf] %v8999
          %9032 = vst [vmem:[%s499 + $0x3c] sm:$0xf] %v9000
          %9033 = vst [vmem:[%s499 + $0x40] sm:$0xf] %v9001
          %9034 = vst [vmem:[%s499 + $0x44] sm:$0xf] %v9002
          %9035 = vst [vmem:[%s499 + $0x48] sm:$0xf] %v9003
          %9036 = vst [vmem:[%s499 + $0x4c] sm:$0xf] %v9004
          %9037 = vst [vmem:[%s499 + $0x50] sm:$0xf] %v9005
          %9038 = vst [vmem:[%s499 + $0x54] sm:$0xf] %v9006
          %9039 = vst [vmem:[%s499 + $0x58] sm:$0xf] %v9007
          %9040 = vst [vmem:[%s499 + $0x5c] sm:$0xf] %v9008
          %9041 = vst [vmem:[%s499 + $0x60] sm:$0xf] %v9009
          %9042 = vst [vmem:[%s499 + $0x64] sm:$0xf] %v9010
          %9043 = vst [vmem:[%s499 + $0x68] sm:$0xf] %v9011
          %9044 = vst [vmem:[%s499 + $0x6c] sm:$0xf] %v9012
          %9045 = vst [vmem:[%s499 + $0x70] sm:$0xf] %v9013
          %9046 = vst [vmem:[%s499 + $0x74] sm:$0xf] %v9014
          %9047 = vst [vmem:[%s499 + $0x78] sm:$0xf] %v9015
          %9048 = vst [vmem:[%s499 + $0x7c] sm:$0xf] %v9016
        $region84: #{tpu_custom_call.1} parent=63 // pred_fallthru
          _
        %s9049 = sand.u32 %s320, 1
        %s9050 = scalar_lea.sflag [#allocation10], %s9049
        %s9051 = sand.u32 %s320, 1
        %s9052 = smul.addr %s9051, 128
        %s9053 = scalar_lea.vmem [#allocation9], %s9052
        // Predicated region
        $region85: #{tpu_custom_call.1} parent=63 // pred_check
          %p9054 = pneg %p330
        $region86: #{tpu_custom_call.1} parent=63 // pred_check_branch
          %9056 = sbr.rel (%p9054) target = $region88
        $region87: #{tpu_custom_call.1} parent=63 // pred_region
          %s9057 = smul.u32 32, %s29
          %9059 = vsyncadd %s9050, 0
          %s9060 = smul.addr %s9057, 4
          %s9061 = scalar_lea.hbm %s11, %s9060
          %s9062 = sshll.u32 %s9053, 4
          %s9063 = int_to_ptr.vmem [resolvable:$true] %s9062
          %s9064 = sshll.u32 %s9061, 4
          %s9065 = int_to_ptr.hbm [resolvable:$true] %s9064
          %9070 = dma.vmem_to_hbm [thread:$0]  %s9063, 2048, %s9065, %s9050, 64, 64, 4
        $region88: #{tpu_custom_call.1} parent=63 // pred_fallthru
          _
      $region64: #{tpu_custom_call.1} parent=5 // pred_fallthru
        _
      %p9071 = scmp.le.s32.totalorder 2, %s20
      // Predicated region
      $region89: #{tpu_custom_call.1} parent=5 // pred_check
        %p9072 = pneg %p9071
      $region90: #{tpu_custom_call.1} parent=5 // pred_check_branch
        %9074 = sbr.rel (%p9072) target = $region92
      $region91: #{tpu_custom_call.1} parent=5 // pred_region
        %s9075 = ssub.s32 %s20, 2
        // Predicated region
        $region93: #{tpu_custom_call.1} parent=91 // pred_check
          %p9076 = pneg %p336
        $region94: #{tpu_custom_call.1} parent=91 // pred_check_branch
          %9078 = sbr.rel (%p9076) target = $region96
        $region95: #{tpu_custom_call.1} parent=91 // pred_region
          %s9079 = sand.u32 %s321, 1
          %s9080 = scalar_lea.sflag [#allocation10], %s9079
          %s9081 = sand.u32 %s321, 1
          %s9082 = smul.addr %s9081, 128
          %s9083 = scalar_lea.vmem [#allocation9], %s9082
          %9085 = dma.done %s9080, 2048
        $region96: #{tpu_custom_call.1} parent=91 // pred_fallthru
          _
      $region92: #{tpu_custom_call.1} parent=5 // pred_fallthru
        _
    $region6: #{tpu_custom_call.1} parent=1 // loop_footer
      %s24 = sadd.s32 1, %s20
    $region7: #{tpu_custom_call.1} parent=1 // loop_footer_branch
      %19 = sbr.rel target = $region3
    $region8: #{tpu_custom_call.1} parent=1 // loop_exit
      _
    %9086 = vsyncpa [#allocation10], 1
    %s9087 = scalar_lea.sflag [#allocation10], 1
    %9088 = vsyncpa %s9087, 1

</llo_original>
